<compile_context>
chip_gen: v6e
topology: v6e:2x2x1
jax: 0.10.0
libtpu: 0.0.40
codegen_flags: <defaults>
</compile_context>

<pallas_src>
import functools

import jax
import jax.numpy as jnp
from jax.experimental import pallas as pl
from jax.experimental.pallas import tpu as pltpu


def _lstm_classifier_kernel(x_ref,                     # (Tc, D, Bt) bf16 feature-major chunk
                            wih0_ref, whh0_ref,        # (4H, D), (4H, H)   layer 0
                            wih1_ref, whh1_ref,        # (4H, H), (4H, H)   layer 1
                            b0_ref, b1_ref,            # (4H, 1) combined biases
                            wc1_ref, bc1_ref,          # (64, H), (64, 1)   classifier fc1
                            wc2_ref, bc2_ref,          # (C, 64), (C, 1)    classifier fc2
                            out_ref,                   # (C, Bt)
                            h0_s, c0_s, h1_s, c1_s,    # (H, Bt) f32 scratch
                            *, seq_len, mask_tail):
    Tc, _, Bt = x_ref.shape
    H = h0_s.shape[0]
    G = 4 * H
    T_AXIS = 1                                 # grid = (batch_tiles, time_chunks)

    # Zero initial hidden/cell state at the first time chunk of each batch tile
    # (PyTorch default when h0/c0 are not provided).
    @pl.when(pl.program_id(T_AXIS) == 0)
    def _():
        h0_s[...] = jnp.zeros_like(h0_s)
        c0_s[...] = jnp.zeros_like(c0_s)
        h1_s[...] = jnp.zeros_like(h1_s)
        c1_s[...] = jnp.zeros_like(c1_s)

    # Hoist loop-invariant weight loads and bias lane-broadcasts out of the loop.
    wih0 = wih0_ref[...]
    whh0 = whh0_ref[...]
    wih1 = wih1_ref[...]
    whh1 = whh1_ref[...]
    b0 = jnp.broadcast_to(b0_ref[...], (G, Bt))
    b1 = jnp.broadcast_to(b1_ref[...], (G, Bt))

    chunk_start = pl.program_id(T_AXIS) * Tc

    def gates(g, c):
        # i/f/o rows were pre-scaled by 0.5 in the wrapper, so one tanh over
        # the whole (4H, Bt) block gives tanh(x/2) for those gates (-> sigmoid
        # via 0.5*a + 0.5) and tanh(x) for the g gate.  PyTorch order: i, f, g, o.
        a = jnp.tanh(g)
        i = 0.5 * a[0 * H:1 * H, :] + 0.5
        f = 0.5 * a[1 * H:2 * H, :] + 0.5
        gg = a[2 * H:3 * H, :]
        o = 0.5 * a[3 * H:4 * H, :] + 0.5
        c_new = f * c + i * gg
        h_new = o * jnp.tanh(c_new)
        return h_new, c_new

    def body(t, carry):
        h0, c0, h1, c1 = carry
        x_t = x_ref[t].astype(jnp.float32)                       # (D, Bt)
        # Layer 0.  The x-projection dot does not depend on the recurrent
        # state, so the scheduler overlaps it with the serial h-chain.
        g0 = (b0
              + jnp.dot(wih0, x_t, preferred_element_type=jnp.float32)
              + jnp.dot(whh0, h0, preferred_element_type=jnp.float32))
        h0n, c0n = gates(g0, c0)
        # TODO(synk): inter-layer LSTM dropout (p=0.7) is identity in eval-mode forward.
        # Layer 1: two small dots instead of a per-step lane concat of [h0, h1].
        g1 = (b1
              + jnp.dot(wih1, h0n, preferred_element_type=jnp.float32)
              + jnp.dot(whh1, h1, preferred_element_type=jnp.float32))
        h1n, c1n = gates(g1, c1)
        if mask_tail:
            # Exact arithmetic masking of padded tail timesteps (m is 0.0 or 1.0).
            m = ((chunk_start + t) < seq_len).astype(jnp.float32)
            km = 1.0 - m
            h0n = m * h0n + km * h0
            c0n = m * c0n + km * c0
            h1n = m * h1n + km * h1
            c1n = m * c1n + km * c1
        return h0n, c0n, h1n, c1n

    h0, c0, h1, c1 = jax.lax.fori_loop(
        0, Tc, body,
        (h0_s[...], c0_s[...], h1_s[...], c1_s[...]),
        unroll=min(8, Tc))                      # partial unroll: LLO visibility w/o spills

    # Carry state to the next time chunk.
    h0_s[...] = h0
    c0_s[...] = c0
    h1_s[...] = h1
    c1_s[...] = c1

    # Classifier on the final top-layer hidden state (last time chunk only).
    @pl.when(pl.program_id(T_AXIS) == pl.num_programs(T_AXIS) - 1)
    def _():
        z = jnp.dot(wc1_ref[...], h1, preferred_element_type=jnp.float32) + bc1_ref[...]
        z = jnp.maximum(z, 0.0)                  # ReLU
        # TODO(synk): classifier Dropout(p=0.7) is identity in eval-mode forward.
        out_ref[...] = (jnp.dot(wc2_ref[...], z, preferred_element_type=jnp.float32)
                        + bc2_ref[...])


def _round_up(a, m):
    return (a + m - 1) // m * m


def eeg_wavelet_lstm_forward(x, params, *, t_chunk=128, b_tile=128):
    """x: (B, T, D) batch_first float32. Returns (B, num_classes) float32."""
    B, T, D = x.shape
    H = params["whh0"].shape[1]
    C = params["wc2"].shape[0]
    G = 4 * H
    f32 = jnp.float32

    # Pre-scale the i/f/o gate ROWS by 0.5 (feature-major weights are (4H, in))
    # so the kernel evaluates all gate nonlinearities with a single tanh pass.
    row_scale = jnp.concatenate([jnp.full((H,), 0.5, f32),
                                 jnp.full((H,), 0.5, f32),
                                 jnp.ones((H,), f32),
                                 jnp.full((H,), 0.5, f32)])[:, None]      # (4H, 1)
    wih0 = params["wih0"] * row_scale
    whh0 = params["whh0"] * row_scale
    wih1 = params["wih1"] * row_scale
    whh1 = params["whh1"] * row_scale
    b0 = params["b0"] * row_scale
    b1 = params["b1"] * row_scale

    # Batch tile: fill the 128-lane axis when the batch allows (and keep Bt a
    # multiple of 128 for B > 128 so nb >= 2 can shard across v7x TensorCores).
    if B <= 128:
        Bt = _round_up(B, 8)
    else:
        Bt = _round_up(min(b_tile, B), 128)
    Bp = _round_up(B, Bt)
    nb = Bp // Bt

    # Time chunk: pad T up to a multiple of the chunk (no divisor collapse for
    # prime T); padded tail steps are masked exactly inside the kernel.
    Tc = min(t_chunk, T)
    Tp = _round_up(T, Tc)
    nt = Tp // Tc
    mask_tail = (Tp != T)

    # Feature-major, time-leading input, streamed in bf16 (halves HBM bytes).
    # The layer-0 projection happens inside the kernel, so no 4H-wide f32
    # x_proj is ever written to / read back from HBM.
    x_fm = jnp.transpose(x, (1, 2, 0)).astype(jnp.bfloat16)               # (T, D, B)
    x_fm = jnp.pad(x_fm, ((0, Tp - T), (0, 0), (0, Bp - B)))

    kernel = functools.partial(_lstm_classifier_kernel,
                               seq_len=T, mask_tail=mask_tail)

    grid_spec = pltpu.PrefetchScalarGridSpec(
        num_scalar_prefetch=0,
        grid=(nb, nt),                                                    # (batch, time)
        in_specs=[
            pl.BlockSpec((Tc, D, Bt), lambda b, t: (t, 0, b)),            # x chunk
            pl.BlockSpec((G, D), lambda b, t: (0, 0)),                    # wih0
            pl.BlockSpec((G, H), lambda b, t: (0, 0)),                    # whh0
            pl.BlockSpec((G, H), lambda b, t: (0, 0)),                    # wih1
            pl.BlockSpec((G, H), lambda b, t: (0, 0)),                    # whh1
            pl.BlockSpec((G, 1), lambda b, t: (0, 0)),                    # b0
            pl.BlockSpec((G, 1), lambda b, t: (0, 0)),                    # b1
            pl.BlockSpec((64, H), lambda b, t: (0, 0)),                   # wc1
            pl.BlockSpec((64, 1), lambda b, t: (0, 0)),                   # bc1
            pl.BlockSpec((C, 64), lambda b, t: (0, 0)),                   # wc2
            pl.BlockSpec((C, 1), lambda b, t: (0, 0)),                    # bc2
        ],
        out_specs=pl.BlockSpec((C, Bt), lambda b, t: (0, b)),
        scratch_shapes=[pltpu.VMEM((H, Bt), jnp.float32)] * 4,            # h0,c0,h1,c1
    )

    out_fm = pl.pallas_call(
        kernel,
        out_shape=jax.ShapeDtypeStruct((C, Bp), jnp.float32),
        grid_spec=grid_spec,
        compiler_params=pltpu.CompilerParams(
            dimension_semantics=("parallel", "arbitrary"),
            vmem_limit_bytes=32 * 1024 * 1024),
    )(x_fm, wih0, whh0, wih1, whh1, b0, b1,
      params["wc1"], params["bc1"], params["wc2"], params["bc2"])

    return out_fm.T[:B]                                                    # (B, C)


def init_params(key, input_dim, hidden_dim, num_classes):
    """Deterministic init mirroring PyTorch parameter shapes (feature-major)."""
    H = hidden_dim
    ks = jax.random.split(key, 12)
    bound = 1.0 / jnp.sqrt(jnp.float32(H))

    def u(k, shape):
        return jax.random.uniform(k, shape, jnp.float32, -bound, bound)

    return {
        "wih0": u(ks[0], (4 * H, input_dim)),
        "whh0": u(ks[1], (4 * H, H)),
        "b0": (u(ks[2], (4 * H,)) + u(ks[3], (4 * H,)))[:, None],
        "wih1": u(ks[4], (4 * H, H)),
        "whh1": u(ks[5], (4 * H, H)),
        "b1": (u(ks[6], (4 * H,)) + u(ks[7], (4 * H,)))[:, None],
        "wc1": u(ks[8], (64, H)),
        "bc1": u(ks[9], (64,))[:, None],
        "wc2": u(ks[10], (num_classes, 64)),
        "bc2": u(ks[11], (num_classes,))[:, None],
    }


def reference_forward(x, params):
    """Pure-JAX reference (standard sigmoid/tanh formulation) for correctness."""
    B, T, D = x.shape
    H = params["whh0"].shape[1]

    def cell(x_t, h, c, wih, whh, b):
        g = x_t @ wih.T + h @ whh.T + b[:, 0]
        i = jax.nn.sigmoid(g[:, 0 * H:1 * H])
        f = jax.nn.sigmoid(g[:, 1 * H:2 * H])
        gg = jnp.tanh(g[:, 2 * H:3 * H])
        o = jax.nn.sigmoid(g[:, 3 * H:4 * H])
        c_new = f * c + i * gg
        return o * jnp.tanh(c_new), c_new

    h0 = c0 = h1 = c1 = jnp.zeros((B, H), jnp.float32)
    for t in range(T):
        h0, c0 = cell(x[:, t], h0, c0, params["wih0"], params["whh0"], params["b0"])
        h1, c1 = cell(h0, h1, c1, params["wih1"], params["whh1"], params["b1"])
    z = jnp.maximum(h1 @ params["wc1"].T + params["bc1"][:, 0], 0.0)
    return z @ params["wc2"].T + params["bc2"][:, 0]


if __name__ == "__main__":
    B, T, D = 2, 8, 16          # batch, seq_len, input_dim
    H, C = 32, 2                # hidden_dim, num_classes

    key = jax.random.PRNGKey(0)
    kx, kp, kx2 = jax.random.split(key, 3)
    x = jax.random.normal(kx, (B, T, D), jnp.float32)
    params = init_params(kp, D, H, C)

    out = jax.block_until_ready(eeg_wavelet_lstm_forward(x, params))
    assert out.shape == (B, C)

    # Kernel streams x in bf16: compare tightly against a reference fed the
    # same bf16-quantized input, and loosely against the pure-f32 reference.
    xq = x.astype(jnp.bfloat16).astype(jnp.float32)
    ref_q = reference_forward(xq, params)
    ref_f = reference_forward(x, params)
    assert jnp.allclose(out, ref_q, atol=2e-3, rtol=2e-3), (out, ref_q)
    assert jnp.allclose(out, ref_f, atol=2e-2, rtol=2e-2), (out, ref_f)

    # Second config: multi-chunk time axis with padded/masked tail + batch padding.
    B2, T2 = 5, 37
    x2 = jax.random.normal(kx2, (B2, T2, D), jnp.float32)
    out2 = jax.block_until_ready(
        eeg_wavelet_lstm_forward(x2, params, t_chunk=16, b_tile=128))
    x2q = x2.astype(jnp.bfloat16).astype(jnp.float32)
    ref2_q = reference_forward(x2q, params)
    assert out2.shape == (B2, C)
    assert jnp.allclose(out2, ref2_q, atol=2e-3, rtol=2e-3), (out2, ref2_q)

    print("KERNEL_OK")
</pallas_src>

<mosaic_0001>
module attributes {stable_mosaic.version = 11 : i64} {
  func.func @_lstm_classifier_kernel(%arg0: i32, %arg1: i32, %arg2: memref<8x16x8xbf16, #tpu.memory_space<vmem>>, %arg3: memref<128x16xf32, #tpu.memory_space<vmem>>, %arg4: memref<128x32xf32, #tpu.memory_space<vmem>>, %arg5: memref<128x32xf32, #tpu.memory_space<vmem>>, %arg6: memref<128x32xf32, #tpu.memory_space<vmem>>, %arg7: memref<128x1xf32, #tpu.memory_space<vmem>>, %arg8: memref<128x1xf32, #tpu.memory_space<vmem>>, %arg9: memref<64x32xf32, #tpu.memory_space<vmem>>, %arg10: memref<64x1xf32, #tpu.memory_space<vmem>>, %arg11: memref<2x64xf32, #tpu.memory_space<vmem>>, %arg12: memref<2x1xf32, #tpu.memory_space<vmem>>, %arg13: memref<2x8xf32, #tpu.memory_space<vmem>>, %arg14: memref<32x8xf32, #tpu.memory_space<vmem>>, %arg15: memref<32x8xf32, #tpu.memory_space<vmem>>, %arg16: memref<32x8xf32, #tpu.memory_space<vmem>>, %arg17: memref<32x8xf32, #tpu.memory_space<vmem>>) attributes {dimension_semantics = [#tpu.dimension_semantics<parallel>, #tpu.dimension_semantics<arbitrary>], iteration_bounds = array<i64: 1, 1>, scalar_prefetch = 0 : i64, scratch_operands = 4 : i64, tpu.core_type = #tpu.core_type<tc>, window_params = [{transform_indices = @transform_0, window_bounds = array<i64: 8, 16, 8>}, {pipeline_mode = #tpu.pipeline_mode<synchronous>, transform_indices = @transform_1, window_bounds = array<i64: 128, 16>}, {pipeline_mode = #tpu.pipeline_mode<synchronous>, transform_indices = @transform_2, window_bounds = array<i64: 128, 32>}, {pipeline_mode = #tpu.pipeline_mode<synchronous>, transform_indices = @transform_3, window_bounds = array<i64: 128, 32>}, {pipeline_mode = #tpu.pipeline_mode<synchronous>, transform_indices = @transform_4, window_bounds = array<i64: 128, 32>}, {pipeline_mode = #tpu.pipeline_mode<synchronous>, transform_indices = @transform_5, window_bounds = array<i64: 128, 1>}, {pipeline_mode = #tpu.pipeline_mode<synchronous>, transform_indices = @transform_6, window_bounds = array<i64: 128, 1>}, {pipeline_mode = #tpu.pipeline_mode<synchronous>, transform_indices = @transform_7, window_bounds = array<i64: 64, 32>}, {pipeline_mode = #tpu.pipeline_mode<synchronous>, transform_indices = @transform_8, window_bounds = array<i64: 64, 1>}, {pipeline_mode = #tpu.pipeline_mode<synchronous>, transform_indices = @transform_9, window_bounds = array<i64: 2, 64>}, {pipeline_mode = #tpu.pipeline_mode<synchronous>, transform_indices = @transform_10, window_bounds = array<i64: 2, 1>}, {transform_indices = @transform_11, window_bounds = array<i64: 2, 8>}]} {
    %c0_i32 = arith.constant 0 : i32
    %0 = arith.cmpi eq, %arg1, %c0_i32 : i32
    %1 = arith.extui %0 : i1 to i32
    %c0_i32_0 = arith.constant 0 : i32
    %2 = arith.cmpi ne, %1, %c0_i32_0 : i32
    scf.if %2 {
      %cst_174 = arith.constant 0.000000e+00 : f32
      %472 = vector.broadcast %cst_174 : f32 to vector<32x8xf32>
      %c0_175 = arith.constant 0 : index
      %c0_176 = arith.constant 0 : index
      %473 = vector.load %arg14[%c0_175, %c0_176] : memref<32x8xf32, #tpu.memory_space<vmem>>, vector<32x8xf32>
      tpu.vector_store %arg14[%c0_175, %c0_176], %472 {strides = array<i32>} : memref<32x8xf32, #tpu.memory_space<vmem>>, vector<32x8xf32>,
      %cst_177 = arith.constant 0.000000e+00 : f32
      %474 = vector.broadcast %cst_177 : f32 to vector<32x8xf32>
      %c0_178 = arith.constant 0 : index
      %c0_179 = arith.constant 0 : index
      %475 = vector.load %arg15[%c0_178, %c0_179] : memref<32x8xf32, #tpu.memory_space<vmem>>, vector<32x8xf32>
      tpu.vector_store %arg15[%c0_178, %c0_179], %474 {strides = array<i32>} : memref<32x8xf32, #tpu.memory_space<vmem>>, vector<32x8xf32>,
      %cst_180 = arith.constant 0.000000e+00 : f32
      %476 = vector.broadcast %cst_180 : f32 to vector<32x8xf32>
      %c0_181 = arith.constant 0 : index
      %c0_182 = arith.constant 0 : index
      %477 = vector.load %arg16[%c0_181, %c0_182] : memref<32x8xf32, #tpu.memory_space<vmem>>, vector<32x8xf32>
      tpu.vector_store %arg16[%c0_181, %c0_182], %476 {strides = array<i32>} : memref<32x8xf32, #tpu.memory_space<vmem>>, vector<32x8xf32>,
      %cst_183 = arith.constant 0.000000e+00 : f32
      %478 = vector.broadcast %cst_183 : f32 to vector<32x8xf32>
      %c0_184 = arith.constant 0 : index
      %c0_185 = arith.constant 0 : index
      %479 = vector.load %arg17[%c0_184, %c0_185] : memref<32x8xf32, #tpu.memory_space<vmem>>, vector<32x8xf32>
      tpu.vector_store %arg17[%c0_184, %c0_185], %478 {strides = array<i32>} : memref<32x8xf32, #tpu.memory_space<vmem>>, vector<32x8xf32>,
    } else {
    }
    %c0 = arith.constant 0 : index
    %c0_1 = arith.constant 0 : index
    %3 = vector.load %arg3[%c0, %c0_1] : memref<128x16xf32, #tpu.memory_space<vmem>>, vector<128x16xf32>
    %c0_2 = arith.constant 0 : index
    %c0_3 = arith.constant 0 : index
    %4 = vector.load %arg4[%c0_2, %c0_3] : memref<128x32xf32, #tpu.memory_space<vmem>>, vector<128x32xf32>
    %c0_4 = arith.constant 0 : index
    %c0_5 = arith.constant 0 : index
    %5 = vector.load %arg5[%c0_4, %c0_5] : memref<128x32xf32, #tpu.memory_space<vmem>>, vector<128x32xf32>
    %c0_6 = arith.constant 0 : index
    %c0_7 = arith.constant 0 : index
    %6 = vector.load %arg6[%c0_6, %c0_7] : memref<128x32xf32, #tpu.memory_space<vmem>>, vector<128x32xf32>
    %c0_8 = arith.constant 0 : index
    %c0_9 = arith.constant 0 : index
    %7 = vector.load %arg7[%c0_8, %c0_9] : memref<128x1xf32, #tpu.memory_space<vmem>>, vector<128x1xf32>
    %8 = vector.shape_cast %7 : vector<128x1xf32> to vector<128x1xf32>
    %9 = vector.broadcast %8 : vector<128x1xf32> to vector<128x8xf32>
    %c0_10 = arith.constant 0 : index
    %c0_11 = arith.constant 0 : index
    %10 = vector.load %arg8[%c0_10, %c0_11] : memref<128x1xf32, #tpu.memory_space<vmem>>, vector<128x1xf32>
    %11 = vector.shape_cast %10 : vector<128x1xf32> to vector<128x1xf32>
    %12 = vector.broadcast %11 : vector<128x1xf32> to vector<128x8xf32>
    %c0_12 = arith.constant 0 : index
    %c0_13 = arith.constant 0 : index
    %13 = vector.load %arg14[%c0_12, %c0_13] : memref<32x8xf32, #tpu.memory_space<vmem>>, vector<32x8xf32>
    %c0_14 = arith.constant 0 : index
    %c0_15 = arith.constant 0 : index
    %14 = vector.load %arg15[%c0_14, %c0_15] : memref<32x8xf32, #tpu.memory_space<vmem>>, vector<32x8xf32>
    %c0_16 = arith.constant 0 : index
    %c0_17 = arith.constant 0 : index
    %15 = vector.load %arg16[%c0_16, %c0_17] : memref<32x8xf32, #tpu.memory_space<vmem>>, vector<32x8xf32>
    %c0_18 = arith.constant 0 : index
    %c0_19 = arith.constant 0 : index
    %16 = vector.load %arg17[%c0_18, %c0_19] : memref<32x8xf32, #tpu.memory_space<vmem>>, vector<32x8xf32>
    %c0_i32_20 = arith.constant 0 : i32
    %17 = arith.index_cast %c0_i32_20 : i32 to index
    %c0_21 = arith.constant 0 : index
    %c0_22 = arith.constant 0 : index
    %18 = vector.load %arg2[%17, %c0_21, %c0_22] : memref<8x16x8xbf16, #tpu.memory_space<vmem>>, vector<1x16x8xbf16>
    %19 = vector.shape_cast %18 : vector<1x16x8xbf16> to vector<16x8xbf16>
    %20 = arith.extf %19 : vector<16x8xbf16> to vector<16x8xf32>
    %cst = arith.constant dense<0.000000e+00> : vector<128x8xf32>
    %21 = tpu.matmul %3, %20, %cst {dimension_numbers = #tpu.dot_dimension_numbers<[1], [0], [0], [1], [0, 0, 1, 1], [], []>} : vector<128x16xf32>, vector<16x8xf32>, vector<128x8xf32> -> vector<128x8xf32>
    %22 = arith.addf %9, %21 : vector<128x8xf32>
    %cst_23 = arith.constant dense<0.000000e+00> : vector<128x8xf32>
    %23 = tpu.matmul %4, %13, %cst_23 {dimension_numbers = #tpu.dot_dimension_numbers<[1], [0], [0], [1], [0, 0, 1, 1], [], []>} : vector<128x32xf32>, vector<32x8xf32>, vector<128x8xf32> -> vector<128x8xf32>
    %24 = arith.addf %22, %23 : vector<128x8xf32>
    %25 = math.tanh %24 : vector<128x8xf32>
    %26 = vector.extract_strided_slice %25 {offsets = [0, 0], sizes = [32, 8], strides = [1, 1]} : vector<128x8xf32> to vector<32x8xf32>
    %cst_24 = arith.constant 5.000000e-01 : f32
    %27 = vector.broadcast %cst_24 : f32 to vector<32x8xf32>
    %28 = arith.mulf %27, %26 : vector<32x8xf32>
    %cst_25 = arith.constant 5.000000e-01 : f32
    %29 = vector.broadcast %cst_25 : f32 to vector<32x8xf32>
    %30 = arith.addf %28, %29 : vector<32x8xf32>
    %31 = vector.extract_strided_slice %25 {offsets = [32, 0], sizes = [32, 8], strides = [1, 1]} : vector<128x8xf32> to vector<32x8xf32>
    %cst_26 = arith.constant 5.000000e-01 : f32
    %32 = vector.broadcast %cst_26 : f32 to vector<32x8xf32>
    %33 = arith.mulf %32, %31 : vector<32x8xf32>
    %cst_27 = arith.constant 5.000000e-01 : f32
    %34 = vector.broadcast %cst_27 : f32 to vector<32x8xf32>
    %35 = arith.addf %33, %34 : vector<32x8xf32>
    %36 = vector.extract_strided_slice %25 {offsets = [64, 0], sizes = [32, 8], strides = [1, 1]} : vector<128x8xf32> to vector<32x8xf32>
    %37 = vector.extract_strided_slice %25 {offsets = [96, 0], sizes = [32, 8], strides = [1, 1]} : vector<128x8xf32> to vector<32x8xf32>
    %cst_28 = arith.constant 5.000000e-01 : f32
    %38 = vector.broadcast %cst_28 : f32 to vector<32x8xf32>
    %39 = arith.mulf %38, %37 : vector<32x8xf32>
    %cst_29 = arith.constant 5.000000e-01 : f32
    %40 = vector.broadcast %cst_29 : f32 to vector<32x8xf32>
    %41 = arith.addf %39, %40 : vector<32x8xf32>
    %42 = arith.mulf %35, %14 : vector<32x8xf32>
    %43 = arith.mulf %30, %36 : vector<32x8xf32>
    %44 = arith.addf %42, %43 : vector<32x8xf32>
    %45 = math.tanh %44 : vector<32x8xf32>
    %46 = arith.mulf %41, %45 : vector<32x8xf32>
    %cst_30 = arith.constant dense<0.000000e+00> : vector<128x8xf32>
    %47 = tpu.matmul %5, %46, %cst_30 {dimension_numbers = #tpu.dot_dimension_numbers<[1], [0], [0], [1], [0, 0, 1, 1], [], []>} : vector<128x32xf32>, vector<32x8xf32>, vector<128x8xf32> -> vector<128x8xf32>
    %48 = arith.addf %12, %47 : vector<128x8xf32>
    %cst_31 = arith.constant dense<0.000000e+00> : vector<128x8xf32>
    %49 = tpu.matmul %6, %15, %cst_31 {dimension_numbers = #tpu.dot_dimension_numbers<[1], [0], [0], [1], [0, 0, 1, 1], [], []>} : vector<128x32xf32>, vector<32x8xf32>, vector<128x8xf32> -> vector<128x8xf32>
    %50 = arith.addf %48, %49 : vector<128x8xf32>
    %51 = math.tanh %50 : vector<128x8xf32>
    %52 = vector.extract_strided_slice %51 {offsets = [0, 0], sizes = [32, 8], strides = [1, 1]} : vector<128x8xf32> to vector<32x8xf32>
    %cst_32 = arith.constant 5.000000e-01 : f32
    %53 = vector.broadcast %cst_32 : f32 to vector<32x8xf32>
    %54 = arith.mulf %53, %52 : vector<32x8xf32>
    %cst_33 = arith.constant 5.000000e-01 : f32
    %55 = vector.broadcast %cst_33 : f32 to vector<32x8xf32>
    %56 = arith.addf %54, %55 : vector<32x8xf32>
    %57 = vector.extract_strided_slice %51 {offsets = [32, 0], sizes = [32, 8], strides = [1, 1]} : vector<128x8xf32> to vector<32x8xf32>
    %cst_34 = arith.constant 5.000000e-01 : f32
    %58 = vector.broadcast %cst_34 : f32 to vector<32x8xf32>
    %59 = arith.mulf %58, %57 : vector<32x8xf32>
    %cst_35 = arith.constant 5.000000e-01 : f32
    %60 = vector.broadcast %cst_35 : f32 to vector<32x8xf32>
    %61 = arith.addf %59, %60 : vector<32x8xf32>
    %62 = vector.extract_strided_slice %51 {offsets = [64, 0], sizes = [32, 8], strides = [1, 1]} : vector<128x8xf32> to vector<32x8xf32>
    %63 = vector.extract_strided_slice %51 {offsets = [96, 0], sizes = [32, 8], strides = [1, 1]} : vector<128x8xf32> to vector<32x8xf32>
    %cst_36 = arith.constant 5.000000e-01 : f32
    %64 = vector.broadcast %cst_36 : f32 to vector<32x8xf32>
    %65 = arith.mulf %64, %63 : vector<32x8xf32>
    %cst_37 = arith.constant 5.000000e-01 : f32
    %66 = vector.broadcast %cst_37 : f32 to vector<32x8xf32>
    %67 = arith.addf %65, %66 : vector<32x8xf32>
    %68 = arith.mulf %61, %16 : vector<32x8xf32>
    %69 = arith.mulf %56, %62 : vector<32x8xf32>
    %70 = arith.addf %68, %69 : vector<32x8xf32>
    %71 = math.tanh %70 : vector<32x8xf32>
    %72 = arith.mulf %67, %71 : vector<32x8xf32>
    %c1_i32 = arith.constant 1 : i32
    %73 = arith.index_cast %c1_i32 : i32 to index
    %c0_38 = arith.constant 0 : index
    %c0_39 = arith.constant 0 : index
    %74 = vector.load %arg2[%73, %c0_38, %c0_39] : memref<8x16x8xbf16, #tpu.memory_space<vmem>>, vector<1x16x8xbf16>
    %75 = vector.shape_cast %74 : vector<1x16x8xbf16> to vector<16x8xbf16>
    %76 = arith.extf %75 : vector<16x8xbf16> to vector<16x8xf32>
    %cst_40 = arith.constant dense<0.000000e+00> : vector<128x8xf32>
    %77 = tpu.matmul %3, %76, %cst_40 {dimension_numbers = #tpu.dot_dimension_numbers<[1], [0], [0], [1], [0, 0, 1, 1], [], []>} : vector<128x16xf32>, vector<16x8xf32>, vector<128x8xf32> -> vector<128x8xf32>
    %78 = arith.addf %9, %77 : vector<128x8xf32>
    %cst_41 = arith.constant dense<0.000000e+00> : vector<128x8xf32>
    %79 = tpu.matmul %4, %46, %cst_41 {dimension_numbers = #tpu.dot_dimension_numbers<[1], [0], [0], [1], [0, 0, 1, 1], [], []>} : vector<128x32xf32>, vector<32x8xf32>, vector<128x8xf32> -> vector<128x8xf32>
    %80 = arith.addf %78, %79 : vector<128x8xf32>
    %81 = math.tanh %80 : vector<128x8xf32>
    %82 = vector.extract_strided_slice %81 {offsets = [0, 0], sizes = [32, 8], strides = [1, 1]} : vector<128x8xf32> to vector<32x8xf32>
    %cst_42 = arith.constant 5.000000e-01 : f32
    %83 = vector.broadcast %cst_42 : f32 to vector<32x8xf32>
    %84 = arith.mulf %83, %82 : vector<32x8xf32>
    %cst_43 = arith.constant 5.000000e-01 : f32
    %85 = vector.broadcast %cst_43 : f32 to vector<32x8xf32>
    %86 = arith.addf %84, %85 : vector<32x8xf32>
    %87 = vector.extract_strided_slice %81 {offsets = [32, 0], sizes = [32, 8], strides = [1, 1]} : vector<128x8xf32> to vector<32x8xf32>
    %cst_44 = arith.constant 5.000000e-01 : f32
    %88 = vector.broadcast %cst_44 : f32 to vector<32x8xf32>
    %89 = arith.mulf %88, %87 : vector<32x8xf32>
    %cst_45 = arith.constant 5.000000e-01 : f32
    %90 = vector.broadcast %cst_45 : f32 to vector<32x8xf32>
    %91 = arith.addf %89, %90 : vector<32x8xf32>
    %92 = vector.extract_strided_slice %81 {offsets = [64, 0], sizes = [32, 8], strides = [1, 1]} : vector<128x8xf32> to vector<32x8xf32>
    %93 = vector.extract_strided_slice %81 {offsets = [96, 0], sizes = [32, 8], strides = [1, 1]} : vector<128x8xf32> to vector<32x8xf32>
    %cst_46 = arith.constant 5.000000e-01 : f32
    %94 = vector.broadcast %cst_46 : f32 to vector<32x8xf32>
    %95 = arith.mulf %94, %93 : vector<32x8xf32>
    %cst_47 = arith.constant 5.000000e-01 : f32
    %96 = vector.broadcast %cst_47 : f32 to vector<32x8xf32>
    %97 = arith.addf %95, %96 : vector<32x8xf32>
    %98 = arith.mulf %91, %44 : vector<32x8xf32>
    %99 = arith.mulf %86, %92 : vector<32x8xf32>
    %100 = arith.addf %98, %99 : vector<32x8xf32>
    %101 = math.tanh %100 : vector<32x8xf32>
    %102 = arith.mulf %97, %101 : vector<32x8xf32>
    %cst_48 = arith.constant dense<0.000000e+00> : vector<128x8xf32>
    %103 = tpu.matmul %5, %102, %cst_48 {dimension_numbers = #tpu.dot_dimension_numbers<[1], [0], [0], [1], [0, 0, 1, 1], [], []>} : vector<128x32xf32>, vector<32x8xf32>, vector<128x8xf32> -> vector<128x8xf32>
    %104 = arith.addf %12, %103 : vector<128x8xf32>
    %cst_49 = arith.constant dense<0.000000e+00> : vector<128x8xf32>
    %105 = tpu.matmul %6, %72, %cst_49 {dimension_numbers = #tpu.dot_dimension_numbers<[1], [0], [0], [1], [0, 0, 1, 1], [], []>} : vector<128x32xf32>, vector<32x8xf32>, vector<128x8xf32> -> vector<128x8xf32>
    %106 = arith.addf %104, %105 : vector<128x8xf32>
    %107 = math.tanh %106 : vector<128x8xf32>
    %108 = vector.extract_strided_slice %107 {offsets = [0, 0], sizes = [32, 8], strides = [1, 1]} : vector<128x8xf32> to vector<32x8xf32>
    %cst_50 = arith.constant 5.000000e-01 : f32
    %109 = vector.broadcast %cst_50 : f32 to vector<32x8xf32>
    %110 = arith.mulf %109, %108 : vector<32x8xf32>
    %cst_51 = arith.constant 5.000000e-01 : f32
    %111 = vector.broadcast %cst_51 : f32 to vector<32x8xf32>
    %112 = arith.addf %110, %111 : vector<32x8xf32>
    %113 = vector.extract_strided_slice %107 {offsets = [32, 0], sizes = [32, 8], strides = [1, 1]} : vector<128x8xf32> to vector<32x8xf32>
    %cst_52 = arith.constant 5.000000e-01 : f32
    %114 = vector.broadcast %cst_52 : f32 to vector<32x8xf32>
    %115 = arith.mulf %114, %113 : vector<32x8xf32>
    %cst_53 = arith.constant 5.000000e-01 : f32
    %116 = vector.broadcast %cst_53 : f32 to vector<32x8xf32>
    %117 = arith.addf %115, %116 : vector<32x8xf32>
    %118 = vector.extract_strided_slice %107 {offsets = [64, 0], sizes = [32, 8], strides = [1, 1]} : vector<128x8xf32> to vector<32x8xf32>
    %119 = vector.extract_strided_slice %107 {offsets = [96, 0], sizes = [32, 8], strides = [1, 1]} : vector<128x8xf32> to vector<32x8xf32>
    %cst_54 = arith.constant 5.000000e-01 : f32
    %120 = vector.broadcast %cst_54 : f32 to vector<32x8xf32>
    %121 = arith.mulf %120, %119 : vector<32x8xf32>
    %cst_55 = arith.constant 5.000000e-01 : f32
    %122 = vector.broadcast %cst_55 : f32 to vector<32x8xf32>
    %123 = arith.addf %121, %122 : vector<32x8xf32>
    %124 = arith.mulf %117, %70 : vector<32x8xf32>
    %125 = arith.mulf %112, %118 : vector<32x8xf32>
    %126 = arith.addf %124, %125 : vector<32x8xf32>
    %127 = math.tanh %126 : vector<32x8xf32>
    %128 = arith.mulf %123, %127 : vector<32x8xf32>
    %c2_i32 = arith.constant 2 : i32
    %129 = arith.index_cast %c2_i32 : i32 to index
    %c0_56 = arith.constant 0 : index
    %c0_57 = arith.constant 0 : index
    %130 = vector.load %arg2[%129, %c0_56, %c0_57] : memref<8x16x8xbf16, #tpu.memory_space<vmem>>, vector<1x16x8xbf16>
    %131 = vector.shape_cast %130 : vector<1x16x8xbf16> to vector<16x8xbf16>
    %132 = arith.extf %131 : vector<16x8xbf16> to vector<16x8xf32>
    %cst_58 = arith.constant dense<0.000000e+00> : vector<128x8xf32>
    %133 = tpu.matmul %3, %132, %cst_58 {dimension_numbers = #tpu.dot_dimension_numbers<[1], [0], [0], [1], [0, 0, 1, 1], [], []>} : vector<128x16xf32>, vector<16x8xf32>, vector<128x8xf32> -> vector<128x8xf32>
    %134 = arith.addf %9, %133 : vector<128x8xf32>
    %cst_59 = arith.constant dense<0.000000e+00> : vector<128x8xf32>
    %135 = tpu.matmul %4, %102, %cst_59 {dimension_numbers = #tpu.dot_dimension_numbers<[1], [0], [0], [1], [0, 0, 1, 1], [], []>} : vector<128x32xf32>, vector<32x8xf32>, vector<128x8xf32> -> vector<128x8xf32>
    %136 = arith.addf %134, %135 : vector<128x8xf32>
    %137 = math.tanh %136 : vector<128x8xf32>
    %138 = vector.extract_strided_slice %137 {offsets = [0, 0], sizes = [32, 8], strides = [1, 1]} : vector<128x8xf32> to vector<32x8xf32>
    %cst_60 = arith.constant 5.000000e-01 : f32
    %139 = vector.broadcast %cst_60 : f32 to vector<32x8xf32>
    %140 = arith.mulf %139, %138 : vector<32x8xf32>
    %cst_61 = arith.constant 5.000000e-01 : f32
    %141 = vector.broadcast %cst_61 : f32 to vector<32x8xf32>
    %142 = arith.addf %140, %141 : vector<32x8xf32>
    %143 = vector.extract_strided_slice %137 {offsets = [32, 0], sizes = [32, 8], strides = [1, 1]} : vector<128x8xf32> to vector<32x8xf32>
    %cst_62 = arith.constant 5.000000e-01 : f32
    %144 = vector.broadcast %cst_62 : f32 to vector<32x8xf32>
    %145 = arith.mulf %144, %143 : vector<32x8xf32>
    %cst_63 = arith.constant 5.000000e-01 : f32
    %146 = vector.broadcast %cst_63 : f32 to vector<32x8xf32>
    %147 = arith.addf %145, %146 : vector<32x8xf32>
    %148 = vector.extract_strided_slice %137 {offsets = [64, 0], sizes = [32, 8], strides = [1, 1]} : vector<128x8xf32> to vector<32x8xf32>
    %149 = vector.extract_strided_slice %137 {offsets = [96, 0], sizes = [32, 8], strides = [1, 1]} : vector<128x8xf32> to vector<32x8xf32>
    %cst_64 = arith.constant 5.000000e-01 : f32
    %150 = vector.broadcast %cst_64 : f32 to vector<32x8xf32>
    %151 = arith.mulf %150, %149 : vector<32x8xf32>
    %cst_65 = arith.constant 5.000000e-01 : f32
    %152 = vector.broadcast %cst_65 : f32 to vector<32x8xf32>
    %153 = arith.addf %151, %152 : vector<32x8xf32>
    %154 = arith.mulf %147, %100 : vector<32x8xf32>
    %155 = arith.mulf %142, %148 : vector<32x8xf32>
    %156 = arith.addf %154, %155 : vector<32x8xf32>
    %157 = math.tanh %156 : vector<32x8xf32>
    %158 = arith.mulf %153, %157 : vector<32x8xf32>
    %cst_66 = arith.constant dense<0.000000e+00> : vector<128x8xf32>
    %159 = tpu.matmul %5, %158, %cst_66 {dimension_numbers = #tpu.dot_dimension_numbers<[1], [0], [0], [1], [0, 0, 1, 1], [], []>} : vector<128x32xf32>, vector<32x8xf32>, vector<128x8xf32> -> vector<128x8xf32>
    %160 = arith.addf %12, %159 : vector<128x8xf32>
    %cst_67 = arith.constant dense<0.000000e+00> : vector<128x8xf32>
    %161 = tpu.matmul %6, %128, %cst_67 {dimension_numbers = #tpu.dot_dimension_numbers<[1], [0], [0], [1], [0, 0, 1, 1], [], []>} : vector<128x32xf32>, vector<32x8xf32>, vector<128x8xf32> -> vector<128x8xf32>
    %162 = arith.addf %160, %161 : vector<128x8xf32>
    %163 = math.tanh %162 : vector<128x8xf32>
    %164 = vector.extract_strided_slice %163 {offsets = [0, 0], sizes = [32, 8], strides = [1, 1]} : vector<128x8xf32> to vector<32x8xf32>
    %cst_68 = arith.constant 5.000000e-01 : f32
    %165 = vector.broadcast %cst_68 : f32 to vector<32x8xf32>
    %166 = arith.mulf %165, %164 : vector<32x8xf32>
    %cst_69 = arith.constant 5.000000e-01 : f32
    %167 = vector.broadcast %cst_69 : f32 to vector<32x8xf32>
    %168 = arith.addf %166, %167 : vector<32x8xf32>
    %169 = vector.extract_strided_slice %163 {offsets = [32, 0], sizes = [32, 8], strides = [1, 1]} : vector<128x8xf32> to vector<32x8xf32>
    %cst_70 = arith.constant 5.000000e-01 : f32
    %170 = vector.broadcast %cst_70 : f32 to vector<32x8xf32>
    %171 = arith.mulf %170, %169 : vector<32x8xf32>
    %cst_71 = arith.constant 5.000000e-01 : f32
    %172 = vector.broadcast %cst_71 : f32 to vector<32x8xf32>
    %173 = arith.addf %171, %172 : vector<32x8xf32>
    %174 = vector.extract_strided_slice %163 {offsets = [64, 0], sizes = [32, 8], strides = [1, 1]} : vector<128x8xf32> to vector<32x8xf32>
    %175 = vector.extract_strided_slice %163 {offsets = [96, 0], sizes = [32, 8], strides = [1, 1]} : vector<128x8xf32> to vector<32x8xf32>
    %cst_72 = arith.constant 5.000000e-01 : f32
    %176 = vector.broadcast %cst_72 : f32 to vector<32x8xf32>
    %177 = arith.mulf %176, %175 : vector<32x8xf32>
    %cst_73 = arith.constant 5.000000e-01 : f32
    %178 = vector.broadcast %cst_73 : f32 to vector<32x8xf32>
    %179 = arith.addf %177, %178 : vector<32x8xf32>
    %180 = arith.mulf %173, %126 : vector<32x8xf32>
    %181 = arith.mulf %168, %174 : vector<32x8xf32>
    %182 = arith.addf %180, %181 : vector<32x8xf32>
    %183 = math.tanh %182 : vector<32x8xf32>
    %184 = arith.mulf %179, %183 : vector<32x8xf32>
    %c3_i32 = arith.constant 3 : i32
    %185 = arith.index_cast %c3_i32 : i32 to index
    %c0_74 = arith.constant 0 : index
    %c0_75 = arith.constant 0 : index
    %186 = vector.load %arg2[%185, %c0_74, %c0_75] : memref<8x16x8xbf16, #tpu.memory_space<vmem>>, vector<1x16x8xbf16>
    %187 = vector.shape_cast %186 : vector<1x16x8xbf16> to vector<16x8xbf16>
    %188 = arith.extf %187 : vector<16x8xbf16> to vector<16x8xf32>
    %cst_76 = arith.constant dense<0.000000e+00> : vector<128x8xf32>
    %189 = tpu.matmul %3, %188, %cst_76 {dimension_numbers = #tpu.dot_dimension_numbers<[1], [0], [0], [1], [0, 0, 1, 1], [], []>} : vector<128x16xf32>, vector<16x8xf32>, vector<128x8xf32> -> vector<128x8xf32>
    %190 = arith.addf %9, %189 : vector<128x8xf32>
    %cst_77 = arith.constant dense<0.000000e+00> : vector<128x8xf32>
    %191 = tpu.matmul %4, %158, %cst_77 {dimension_numbers = #tpu.dot_dimension_numbers<[1], [0], [0], [1], [0, 0, 1, 1], [], []>} : vector<128x32xf32>, vector<32x8xf32>, vector<128x8xf32> -> vector<128x8xf32>
    %192 = arith.addf %190, %191 : vector<128x8xf32>
    %193 = math.tanh %192 : vector<128x8xf32>
    %194 = vector.extract_strided_slice %193 {offsets = [0, 0], sizes = [32, 8], strides = [1, 1]} : vector<128x8xf32> to vector<32x8xf32>
    %cst_78 = arith.constant 5.000000e-01 : f32
    %195 = vector.broadcast %cst_78 : f32 to vector<32x8xf32>
    %196 = arith.mulf %195, %194 : vector<32x8xf32>
    %cst_79 = arith.constant 5.000000e-01 : f32
    %197 = vector.broadcast %cst_79 : f32 to vector<32x8xf32>
    %198 = arith.addf %196, %197 : vector<32x8xf32>
    %199 = vector.extract_strided_slice %193 {offsets = [32, 0], sizes = [32, 8], strides = [1, 1]} : vector<128x8xf32> to vector<32x8xf32>
    %cst_80 = arith.constant 5.000000e-01 : f32
    %200 = vector.broadcast %cst_80 : f32 to vector<32x8xf32>
    %201 = arith.mulf %200, %199 : vector<32x8xf32>
    %cst_81 = arith.constant 5.000000e-01 : f32
    %202 = vector.broadcast %cst_81 : f32 to vector<32x8xf32>
    %203 = arith.addf %201, %202 : vector<32x8xf32>
    %204 = vector.extract_strided_slice %193 {offsets = [64, 0], sizes = [32, 8], strides = [1, 1]} : vector<128x8xf32> to vector<32x8xf32>
    %205 = vector.extract_strided_slice %193 {offsets = [96, 0], sizes = [32, 8], strides = [1, 1]} : vector<128x8xf32> to vector<32x8xf32>
    %cst_82 = arith.constant 5.000000e-01 : f32
    %206 = vector.broadcast %cst_82 : f32 to vector<32x8xf32>
    %207 = arith.mulf %206, %205 : vector<32x8xf32>
    %cst_83 = arith.constant 5.000000e-01 : f32
    %208 = vector.broadcast %cst_83 : f32 to vector<32x8xf32>
    %209 = arith.addf %207, %208 : vector<32x8xf32>
    %210 = arith.mulf %203, %156 : vector<32x8xf32>
    %211 = arith.mulf %198, %204 : vector<32x8xf32>
    %212 = arith.addf %210, %211 : vector<32x8xf32>
    %213 = math.tanh %212 : vector<32x8xf32>
    %214 = arith.mulf %209, %213 : vector<32x8xf32>
    %cst_84 = arith.constant dense<0.000000e+00> : vector<128x8xf32>
    %215 = tpu.matmul %5, %214, %cst_84 {dimension_numbers = #tpu.dot_dimension_numbers<[1], [0], [0], [1], [0, 0, 1, 1], [], []>} : vector<128x32xf32>, vector<32x8xf32>, vector<128x8xf32> -> vector<128x8xf32>
    %216 = arith.addf %12, %215 : vector<128x8xf32>
    %cst_85 = arith.constant dense<0.000000e+00> : vector<128x8xf32>
    %217 = tpu.matmul %6, %184, %cst_85 {dimension_numbers = #tpu.dot_dimension_numbers<[1], [0], [0], [1], [0, 0, 1, 1], [], []>} : vector<128x32xf32>, vector<32x8xf32>, vector<128x8xf32> -> vector<128x8xf32>
    %218 = arith.addf %216, %217 : vector<128x8xf32>
    %219 = math.tanh %218 : vector<128x8xf32>
    %220 = vector.extract_strided_slice %219 {offsets = [0, 0], sizes = [32, 8], strides = [1, 1]} : vector<128x8xf32> to vector<32x8xf32>
    %cst_86 = arith.constant 5.000000e-01 : f32
    %221 = vector.broadcast %cst_86 : f32 to vector<32x8xf32>
    %222 = arith.mulf %221, %220 : vector<32x8xf32>
    %cst_87 = arith.constant 5.000000e-01 : f32
    %223 = vector.broadcast %cst_87 : f32 to vector<32x8xf32>
    %224 = arith.addf %222, %223 : vector<32x8xf32>
    %225 = vector.extract_strided_slice %219 {offsets = [32, 0], sizes = [32, 8], strides = [1, 1]} : vector<128x8xf32> to vector<32x8xf32>
    %cst_88 = arith.constant 5.000000e-01 : f32
    %226 = vector.broadcast %cst_88 : f32 to vector<32x8xf32>
    %227 = arith.mulf %226, %225 : vector<32x8xf32>
    %cst_89 = arith.constant 5.000000e-01 : f32
    %228 = vector.broadcast %cst_89 : f32 to vector<32x8xf32>
    %229 = arith.addf %227, %228 : vector<32x8xf32>
    %230 = vector.extract_strided_slice %219 {offsets = [64, 0], sizes = [32, 8], strides = [1, 1]} : vector<128x8xf32> to vector<32x8xf32>
    %231 = vector.extract_strided_slice %219 {offsets = [96, 0], sizes = [32, 8], strides = [1, 1]} : vector<128x8xf32> to vector<32x8xf32>
    %cst_90 = arith.constant 5.000000e-01 : f32
    %232 = vector.broadcast %cst_90 : f32 to vector<32x8xf32>
    %233 = arith.mulf %232, %231 : vector<32x8xf32>
    %cst_91 = arith.constant 5.000000e-01 : f32
    %234 = vector.broadcast %cst_91 : f32 to vector<32x8xf32>
    %235 = arith.addf %233, %234 : vector<32x8xf32>
    %236 = arith.mulf %229, %182 : vector<32x8xf32>
    %237 = arith.mulf %224, %230 : vector<32x8xf32>
    %238 = arith.addf %236, %237 : vector<32x8xf32>
    %239 = math.tanh %238 : vector<32x8xf32>
    %240 = arith.mulf %235, %239 : vector<32x8xf32>
    %c4_i32 = arith.constant 4 : i32
    %241 = arith.index_cast %c4_i32 : i32 to index
    %c0_92 = arith.constant 0 : index
    %c0_93 = arith.constant 0 : index
    %242 = vector.load %arg2[%241, %c0_92, %c0_93] : memref<8x16x8xbf16, #tpu.memory_space<vmem>>, vector<1x16x8xbf16>
    %243 = vector.shape_cast %242 : vector<1x16x8xbf16> to vector<16x8xbf16>
    %244 = arith.extf %243 : vector<16x8xbf16> to vector<16x8xf32>
    %cst_94 = arith.constant dense<0.000000e+00> : vector<128x8xf32>
    %245 = tpu.matmul %3, %244, %cst_94 {dimension_numbers = #tpu.dot_dimension_numbers<[1], [0], [0], [1], [0, 0, 1, 1], [], []>} : vector<128x16xf32>, vector<16x8xf32>, vector<128x8xf32> -> vector<128x8xf32>
    %246 = arith.addf %9, %245 : vector<128x8xf32>
    %cst_95 = arith.constant dense<0.000000e+00> : vector<128x8xf32>
    %247 = tpu.matmul %4, %214, %cst_95 {dimension_numbers = #tpu.dot_dimension_numbers<[1], [0], [0], [1], [0, 0, 1, 1], [], []>} : vector<128x32xf32>, vector<32x8xf32>, vector<128x8xf32> -> vector<128x8xf32>
    %248 = arith.addf %246, %247 : vector<128x8xf32>
    %249 = math.tanh %248 : vector<128x8xf32>
    %250 = vector.extract_strided_slice %249 {offsets = [0, 0], sizes = [32, 8], strides = [1, 1]} : vector<128x8xf32> to vector<32x8xf32>
    %cst_96 = arith.constant 5.000000e-01 : f32
    %251 = vector.broadcast %cst_96 : f32 to vector<32x8xf32>
    %252 = arith.mulf %251, %250 : vector<32x8xf32>
    %cst_97 = arith.constant 5.000000e-01 : f32
    %253 = vector.broadcast %cst_97 : f32 to vector<32x8xf32>
    %254 = arith.addf %252, %253 : vector<32x8xf32>
    %255 = vector.extract_strided_slice %249 {offsets = [32, 0], sizes = [32, 8], strides = [1, 1]} : vector<128x8xf32> to vector<32x8xf32>
    %cst_98 = arith.constant 5.000000e-01 : f32
    %256 = vector.broadcast %cst_98 : f32 to vector<32x8xf32>
    %257 = arith.mulf %256, %255 : vector<32x8xf32>
    %cst_99 = arith.constant 5.000000e-01 : f32
    %258 = vector.broadcast %cst_99 : f32 to vector<32x8xf32>
    %259 = arith.addf %257, %258 : vector<32x8xf32>
    %260 = vector.extract_strided_slice %249 {offsets = [64, 0], sizes = [32, 8], strides = [1, 1]} : vector<128x8xf32> to vector<32x8xf32>
    %261 = vector.extract_strided_slice %249 {offsets = [96, 0], sizes = [32, 8], strides = [1, 1]} : vector<128x8xf32> to vector<32x8xf32>
    %cst_100 = arith.constant 5.000000e-01 : f32
    %262 = vector.broadcast %cst_100 : f32 to vector<32x8xf32>
    %263 = arith.mulf %262, %261 : vector<32x8xf32>
    %cst_101 = arith.constant 5.000000e-01 : f32
    %264 = vector.broadcast %cst_101 : f32 to vector<32x8xf32>
    %265 = arith.addf %263, %264 : vector<32x8xf32>
    %266 = arith.mulf %259, %212 : vector<32x8xf32>
    %267 = arith.mulf %254, %260 : vector<32x8xf32>
    %268 = arith.addf %266, %267 : vector<32x8xf32>
    %269 = math.tanh %268 : vector<32x8xf32>
    %270 = arith.mulf %265, %269 : vector<32x8xf32>
    %cst_102 = arith.constant dense<0.000000e+00> : vector<128x8xf32>
    %271 = tpu.matmul %5, %270, %cst_102 {dimension_numbers = #tpu.dot_dimension_numbers<[1], [0], [0], [1], [0, 0, 1, 1], [], []>} : vector<128x32xf32>, vector<32x8xf32>, vector<128x8xf32> -> vector<128x8xf32>
    %272 = arith.addf %12, %271 : vector<128x8xf32>
    %cst_103 = arith.constant dense<0.000000e+00> : vector<128x8xf32>
    %273 = tpu.matmul %6, %240, %cst_103 {dimension_numbers = #tpu.dot_dimension_numbers<[1], [0], [0], [1], [0, 0, 1, 1], [], []>} : vector<128x32xf32>, vector<32x8xf32>, vector<128x8xf32> -> vector<128x8xf32>
    %274 = arith.addf %272, %273 : vector<128x8xf32>
    %275 = math.tanh %274 : vector<128x8xf32>
    %276 = vector.extract_strided_slice %275 {offsets = [0, 0], sizes = [32, 8], strides = [1, 1]} : vector<128x8xf32> to vector<32x8xf32>
    %cst_104 = arith.constant 5.000000e-01 : f32
    %277 = vector.broadcast %cst_104 : f32 to vector<32x8xf32>
    %278 = arith.mulf %277, %276 : vector<32x8xf32>
    %cst_105 = arith.constant 5.000000e-01 : f32
    %279 = vector.broadcast %cst_105 : f32 to vector<32x8xf32>
    %280 = arith.addf %278, %279 : vector<32x8xf32>
    %281 = vector.extract_strided_slice %275 {offsets = [32, 0], sizes = [32, 8], strides = [1, 1]} : vector<128x8xf32> to vector<32x8xf32>
    %cst_106 = arith.constant 5.000000e-01 : f32
    %282 = vector.broadcast %cst_106 : f32 to vector<32x8xf32>
    %283 = arith.mulf %282, %281 : vector<32x8xf32>
    %cst_107 = arith.constant 5.000000e-01 : f32
    %284 = vector.broadcast %cst_107 : f32 to vector<32x8xf32>
    %285 = arith.addf %283, %284 : vector<32x8xf32>
    %286 = vector.extract_strided_slice %275 {offsets = [64, 0], sizes = [32, 8], strides = [1, 1]} : vector<128x8xf32> to vector<32x8xf32>
    %287 = vector.extract_strided_slice %275 {offsets = [96, 0], sizes = [32, 8], strides = [1, 1]} : vector<128x8xf32> to vector<32x8xf32>
    %cst_108 = arith.constant 5.000000e-01 : f32
    %288 = vector.broadcast %cst_108 : f32 to vector<32x8xf32>
    %289 = arith.mulf %288, %287 : vector<32x8xf32>
    %cst_109 = arith.constant 5.000000e-01 : f32
    %290 = vector.broadcast %cst_109 : f32 to vector<32x8xf32>
    %291 = arith.addf %289, %290 : vector<32x8xf32>
    %292 = arith.mulf %285, %238 : vector<32x8xf32>
    %293 = arith.mulf %280, %286 : vector<32x8xf32>
    %294 = arith.addf %292, %293 : vector<32x8xf32>
    %295 = math.tanh %294 : vector<32x8xf32>
    %296 = arith.mulf %291, %295 : vector<32x8xf32>
    %c5_i32 = arith.constant 5 : i32
    %297 = arith.index_cast %c5_i32 : i32 to index
    %c0_110 = arith.constant 0 : index
    %c0_111 = arith.constant 0 : index
    %298 = vector.load %arg2[%297, %c0_110, %c0_111] : memref<8x16x8xbf16, #tpu.memory_space<vmem>>, vector<1x16x8xbf16>
    %299 = vector.shape_cast %298 : vector<1x16x8xbf16> to vector<16x8xbf16>
    %300 = arith.extf %299 : vector<16x8xbf16> to vector<16x8xf32>
    %cst_112 = arith.constant dense<0.000000e+00> : vector<128x8xf32>
    %301 = tpu.matmul %3, %300, %cst_112 {dimension_numbers = #tpu.dot_dimension_numbers<[1], [0], [0], [1], [0, 0, 1, 1], [], []>} : vector<128x16xf32>, vector<16x8xf32>, vector<128x8xf32> -> vector<128x8xf32>
    %302 = arith.addf %9, %301 : vector<128x8xf32>
    %cst_113 = arith.constant dense<0.000000e+00> : vector<128x8xf32>
    %303 = tpu.matmul %4, %270, %cst_113 {dimension_numbers = #tpu.dot_dimension_numbers<[1], [0], [0], [1], [0, 0, 1, 1], [], []>} : vector<128x32xf32>, vector<32x8xf32>, vector<128x8xf32> -> vector<128x8xf32>
    %304 = arith.addf %302, %303 : vector<128x8xf32>
    %305 = math.tanh %304 : vector<128x8xf32>
    %306 = vector.extract_strided_slice %305 {offsets = [0, 0], sizes = [32, 8], strides = [1, 1]} : vector<128x8xf32> to vector<32x8xf32>
    %cst_114 = arith.constant 5.000000e-01 : f32
    %307 = vector.broadcast %cst_114 : f32 to vector<32x8xf32>
    %308 = arith.mulf %307, %306 : vector<32x8xf32>
    %cst_115 = arith.constant 5.000000e-01 : f32
    %309 = vector.broadcast %cst_115 : f32 to vector<32x8xf32>
    %310 = arith.addf %308, %309 : vector<32x8xf32>
    %311 = vector.extract_strided_slice %305 {offsets = [32, 0], sizes = [32, 8], strides = [1, 1]} : vector<128x8xf32> to vector<32x8xf32>
    %cst_116 = arith.constant 5.000000e-01 : f32
    %312 = vector.broadcast %cst_116 : f32 to vector<32x8xf32>
    %313 = arith.mulf %312, %311 : vector<32x8xf32>
    %cst_117 = arith.constant 5.000000e-01 : f32
    %314 = vector.broadcast %cst_117 : f32 to vector<32x8xf32>
    %315 = arith.addf %313, %314 : vector<32x8xf32>
    %316 = vector.extract_strided_slice %305 {offsets = [64, 0], sizes = [32, 8], strides = [1, 1]} : vector<128x8xf32> to vector<32x8xf32>
    %317 = vector.extract_strided_slice %305 {offsets = [96, 0], sizes = [32, 8], strides = [1, 1]} : vector<128x8xf32> to vector<32x8xf32>
    %cst_118 = arith.constant 5.000000e-01 : f32
    %318 = vector.broadcast %cst_118 : f32 to vector<32x8xf32>
    %319 = arith.mulf %318, %317 : vector<32x8xf32>
    %cst_119 = arith.constant 5.000000e-01 : f32
    %320 = vector.broadcast %cst_119 : f32 to vector<32x8xf32>
    %321 = arith.addf %319, %320 : vector<32x8xf32>
    %322 = arith.mulf %315, %268 : vector<32x8xf32>
    %323 = arith.mulf %310, %316 : vector<32x8xf32>
    %324 = arith.addf %322, %323 : vector<32x8xf32>
    %325 = math.tanh %324 : vector<32x8xf32>
    %326 = arith.mulf %321, %325 : vector<32x8xf32>
    %cst_120 = arith.constant dense<0.000000e+00> : vector<128x8xf32>
    %327 = tpu.matmul %5, %326, %cst_120 {dimension_numbers = #tpu.dot_dimension_numbers<[1], [0], [0], [1], [0, 0, 1, 1], [], []>} : vector<128x32xf32>, vector<32x8xf32>, vector<128x8xf32> -> vector<128x8xf32>
    %328 = arith.addf %12, %327 : vector<128x8xf32>
    %cst_121 = arith.constant dense<0.000000e+00> : vector<128x8xf32>
    %329 = tpu.matmul %6, %296, %cst_121 {dimension_numbers = #tpu.dot_dimension_numbers<[1], [0], [0], [1], [0, 0, 1, 1], [], []>} : vector<128x32xf32>, vector<32x8xf32>, vector<128x8xf32> -> vector<128x8xf32>
    %330 = arith.addf %328, %329 : vector<128x8xf32>
    %331 = math.tanh %330 : vector<128x8xf32>
    %332 = vector.extract_strided_slice %331 {offsets = [0, 0], sizes = [32, 8], strides = [1, 1]} : vector<128x8xf32> to vector<32x8xf32>
    %cst_122 = arith.constant 5.000000e-01 : f32
    %333 = vector.broadcast %cst_122 : f32 to vector<32x8xf32>
    %334 = arith.mulf %333, %332 : vector<32x8xf32>
    %cst_123 = arith.constant 5.000000e-01 : f32
    %335 = vector.broadcast %cst_123 : f32 to vector<32x8xf32>
    %336 = arith.addf %334, %335 : vector<32x8xf32>
    %337 = vector.extract_strided_slice %331 {offsets = [32, 0], sizes = [32, 8], strides = [1, 1]} : vector<128x8xf32> to vector<32x8xf32>
    %cst_124 = arith.constant 5.000000e-01 : f32
    %338 = vector.broadcast %cst_124 : f32 to vector<32x8xf32>
    %339 = arith.mulf %338, %337 : vector<32x8xf32>
    %cst_125 = arith.constant 5.000000e-01 : f32
    %340 = vector.broadcast %cst_125 : f32 to vector<32x8xf32>
    %341 = arith.addf %339, %340 : vector<32x8xf32>
    %342 = vector.extract_strided_slice %331 {offsets = [64, 0], sizes = [32, 8], strides = [1, 1]} : vector<128x8xf32> to vector<32x8xf32>
    %343 = vector.extract_strided_slice %331 {offsets = [96, 0], sizes = [32, 8], strides = [1, 1]} : vector<128x8xf32> to vector<32x8xf32>
    %cst_126 = arith.constant 5.000000e-01 : f32
    %344 = vector.broadcast %cst_126 : f32 to vector<32x8xf32>
    %345 = arith.mulf %344, %343 : vector<32x8xf32>
    %cst_127 = arith.constant 5.000000e-01 : f32
    %346 = vector.broadcast %cst_127 : f32 to vector<32x8xf32>
    %347 = arith.addf %345, %346 : vector<32x8xf32>
    %348 = arith.mulf %341, %294 : vector<32x8xf32>
    %349 = arith.mulf %336, %342 : vector<32x8xf32>
    %350 = arith.addf %348, %349 : vector<32x8xf32>
    %351 = math.tanh %350 : vector<32x8xf32>
    %352 = arith.mulf %347, %351 : vector<32x8xf32>
    %c6_i32 = arith.constant 6 : i32
    %353 = arith.index_cast %c6_i32 : i32 to index
    %c0_128 = arith.constant 0 : index
    %c0_129 = arith.constant 0 : index
    %354 = vector.load %arg2[%353, %c0_128, %c0_129] : memref<8x16x8xbf16, #tpu.memory_space<vmem>>, vector<1x16x8xbf16>
    %355 = vector.shape_cast %354 : vector<1x16x8xbf16> to vector<16x8xbf16>
    %356 = arith.extf %355 : vector<16x8xbf16> to vector<16x8xf32>
    %cst_130 = arith.constant dense<0.000000e+00> : vector<128x8xf32>
    %357 = tpu.matmul %3, %356, %cst_130 {dimension_numbers = #tpu.dot_dimension_numbers<[1], [0], [0], [1], [0, 0, 1, 1], [], []>} : vector<128x16xf32>, vector<16x8xf32>, vector<128x8xf32> -> vector<128x8xf32>
    %358 = arith.addf %9, %357 : vector<128x8xf32>
    %cst_131 = arith.constant dense<0.000000e+00> : vector<128x8xf32>
    %359 = tpu.matmul %4, %326, %cst_131 {dimension_numbers = #tpu.dot_dimension_numbers<[1], [0], [0], [1], [0, 0, 1, 1], [], []>} : vector<128x32xf32>, vector<32x8xf32>, vector<128x8xf32> -> vector<128x8xf32>
    %360 = arith.addf %358, %359 : vector<128x8xf32>
    %361 = math.tanh %360 : vector<128x8xf32>
    %362 = vector.extract_strided_slice %361 {offsets = [0, 0], sizes = [32, 8], strides = [1, 1]} : vector<128x8xf32> to vector<32x8xf32>
    %cst_132 = arith.constant 5.000000e-01 : f32
    %363 = vector.broadcast %cst_132 : f32 to vector<32x8xf32>
    %364 = arith.mulf %363, %362 : vector<32x8xf32>
    %cst_133 = arith.constant 5.000000e-01 : f32
    %365 = vector.broadcast %cst_133 : f32 to vector<32x8xf32>
    %366 = arith.addf %364, %365 : vector<32x8xf32>
    %367 = vector.extract_strided_slice %361 {offsets = [32, 0], sizes = [32, 8], strides = [1, 1]} : vector<128x8xf32> to vector<32x8xf32>
    %cst_134 = arith.constant 5.000000e-01 : f32
    %368 = vector.broadcast %cst_134 : f32 to vector<32x8xf32>
    %369 = arith.mulf %368, %367 : vector<32x8xf32>
    %cst_135 = arith.constant 5.000000e-01 : f32
    %370 = vector.broadcast %cst_135 : f32 to vector<32x8xf32>
    %371 = arith.addf %369, %370 : vector<32x8xf32>
    %372 = vector.extract_strided_slice %361 {offsets = [64, 0], sizes = [32, 8], strides = [1, 1]} : vector<128x8xf32> to vector<32x8xf32>
    %373 = vector.extract_strided_slice %361 {offsets = [96, 0], sizes = [32, 8], strides = [1, 1]} : vector<128x8xf32> to vector<32x8xf32>
    %cst_136 = arith.constant 5.000000e-01 : f32
    %374 = vector.broadcast %cst_136 : f32 to vector<32x8xf32>
    %375 = arith.mulf %374, %373 : vector<32x8xf32>
    %cst_137 = arith.constant 5.000000e-01 : f32
    %376 = vector.broadcast %cst_137 : f32 to vector<32x8xf32>
    %377 = arith.addf %375, %376 : vector<32x8xf32>
    %378 = arith.mulf %371, %324 : vector<32x8xf32>
    %379 = arith.mulf %366, %372 : vector<32x8xf32>
    %380 = arith.addf %378, %379 : vector<32x8xf32>
    %381 = math.tanh %380 : vector<32x8xf32>
    %382 = arith.mulf %377, %381 : vector<32x8xf32>
    %cst_138 = arith.constant dense<0.000000e+00> : vector<128x8xf32>
    %383 = tpu.matmul %5, %382, %cst_138 {dimension_numbers = #tpu.dot_dimension_numbers<[1], [0], [0], [1], [0, 0, 1, 1], [], []>} : vector<128x32xf32>, vector<32x8xf32>, vector<128x8xf32> -> vector<128x8xf32>
    %384 = arith.addf %12, %383 : vector<128x8xf32>
    %cst_139 = arith.constant dense<0.000000e+00> : vector<128x8xf32>
    %385 = tpu.matmul %6, %352, %cst_139 {dimension_numbers = #tpu.dot_dimension_numbers<[1], [0], [0], [1], [0, 0, 1, 1], [], []>} : vector<128x32xf32>, vector<32x8xf32>, vector<128x8xf32> -> vector<128x8xf32>
    %386 = arith.addf %384, %385 : vector<128x8xf32>
    %387 = math.tanh %386 : vector<128x8xf32>
    %388 = vector.extract_strided_slice %387 {offsets = [0, 0], sizes = [32, 8], strides = [1, 1]} : vector<128x8xf32> to vector<32x8xf32>
    %cst_140 = arith.constant 5.000000e-01 : f32
    %389 = vector.broadcast %cst_140 : f32 to vector<32x8xf32>
    %390 = arith.mulf %389, %388 : vector<32x8xf32>
    %cst_141 = arith.constant 5.000000e-01 : f32
    %391 = vector.broadcast %cst_141 : f32 to vector<32x8xf32>
    %392 = arith.addf %390, %391 : vector<32x8xf32>
    %393 = vector.extract_strided_slice %387 {offsets = [32, 0], sizes = [32, 8], strides = [1, 1]} : vector<128x8xf32> to vector<32x8xf32>
    %cst_142 = arith.constant 5.000000e-01 : f32
    %394 = vector.broadcast %cst_142 : f32 to vector<32x8xf32>
    %395 = arith.mulf %394, %393 : vector<32x8xf32>
    %cst_143 = arith.constant 5.000000e-01 : f32
    %396 = vector.broadcast %cst_143 : f32 to vector<32x8xf32>
    %397 = arith.addf %395, %396 : vector<32x8xf32>
    %398 = vector.extract_strided_slice %387 {offsets = [64, 0], sizes = [32, 8], strides = [1, 1]} : vector<128x8xf32> to vector<32x8xf32>
    %399 = vector.extract_strided_slice %387 {offsets = [96, 0], sizes = [32, 8], strides = [1, 1]} : vector<128x8xf32> to vector<32x8xf32>
    %cst_144 = arith.constant 5.000000e-01 : f32
    %400 = vector.broadcast %cst_144 : f32 to vector<32x8xf32>
    %401 = arith.mulf %400, %399 : vector<32x8xf32>
    %cst_145 = arith.constant 5.000000e-01 : f32
    %402 = vector.broadcast %cst_145 : f32 to vector<32x8xf32>
    %403 = arith.addf %401, %402 : vector<32x8xf32>
    %404 = arith.mulf %397, %350 : vector<32x8xf32>
    %405 = arith.mulf %392, %398 : vector<32x8xf32>
    %406 = arith.addf %404, %405 : vector<32x8xf32>
    %407 = math.tanh %406 : vector<32x8xf32>
    %408 = arith.mulf %403, %407 : vector<32x8xf32>
    %c7_i32 = arith.constant 7 : i32
    %409 = arith.index_cast %c7_i32 : i32 to index
    %c0_146 = arith.constant 0 : index
    %c0_147 = arith.constant 0 : index
    %410 = vector.load %arg2[%409, %c0_146, %c0_147] : memref<8x16x8xbf16, #tpu.memory_space<vmem>>, vector<1x16x8xbf16>
    %411 = vector.shape_cast %410 : vector<1x16x8xbf16> to vector<16x8xbf16>
    %412 = arith.extf %411 : vector<16x8xbf16> to vector<16x8xf32>
    %cst_148 = arith.constant dense<0.000000e+00> : vector<128x8xf32>
    %413 = tpu.matmul %3, %412, %cst_148 {dimension_numbers = #tpu.dot_dimension_numbers<[1], [0], [0], [1], [0, 0, 1, 1], [], []>} : vector<128x16xf32>, vector<16x8xf32>, vector<128x8xf32> -> vector<128x8xf32>
    %414 = arith.addf %9, %413 : vector<128x8xf32>
    %cst_149 = arith.constant dense<0.000000e+00> : vector<128x8xf32>
    %415 = tpu.matmul %4, %382, %cst_149 {dimension_numbers = #tpu.dot_dimension_numbers<[1], [0], [0], [1], [0, 0, 1, 1], [], []>} : vector<128x32xf32>, vector<32x8xf32>, vector<128x8xf32> -> vector<128x8xf32>
    %416 = arith.addf %414, %415 : vector<128x8xf32>
    %417 = math.tanh %416 : vector<128x8xf32>
    %418 = vector.extract_strided_slice %417 {offsets = [0, 0], sizes = [32, 8], strides = [1, 1]} : vector<128x8xf32> to vector<32x8xf32>
    %cst_150 = arith.constant 5.000000e-01 : f32
    %419 = vector.broadcast %cst_150 : f32 to vector<32x8xf32>
    %420 = arith.mulf %419, %418 : vector<32x8xf32>
    %cst_151 = arith.constant 5.000000e-01 : f32
    %421 = vector.broadcast %cst_151 : f32 to vector<32x8xf32>
    %422 = arith.addf %420, %421 : vector<32x8xf32>
    %423 = vector.extract_strided_slice %417 {offsets = [32, 0], sizes = [32, 8], strides = [1, 1]} : vector<128x8xf32> to vector<32x8xf32>
    %cst_152 = arith.constant 5.000000e-01 : f32
    %424 = vector.broadcast %cst_152 : f32 to vector<32x8xf32>
    %425 = arith.mulf %424, %423 : vector<32x8xf32>
    %cst_153 = arith.constant 5.000000e-01 : f32
    %426 = vector.broadcast %cst_153 : f32 to vector<32x8xf32>
    %427 = arith.addf %425, %426 : vector<32x8xf32>
    %428 = vector.extract_strided_slice %417 {offsets = [64, 0], sizes = [32, 8], strides = [1, 1]} : vector<128x8xf32> to vector<32x8xf32>
    %429 = vector.extract_strided_slice %417 {offsets = [96, 0], sizes = [32, 8], strides = [1, 1]} : vector<128x8xf32> to vector<32x8xf32>
    %cst_154 = arith.constant 5.000000e-01 : f32
    %430 = vector.broadcast %cst_154 : f32 to vector<32x8xf32>
    %431 = arith.mulf %430, %429 : vector<32x8xf32>
    %cst_155 = arith.constant 5.000000e-01 : f32
    %432 = vector.broadcast %cst_155 : f32 to vector<32x8xf32>
    %433 = arith.addf %431, %432 : vector<32x8xf32>
    %434 = arith.mulf %427, %380 : vector<32x8xf32>
    %435 = arith.mulf %422, %428 : vector<32x8xf32>
    %436 = arith.addf %434, %435 : vector<32x8xf32>
    %437 = math.tanh %436 : vector<32x8xf32>
    %438 = arith.mulf %433, %437 : vector<32x8xf32>
    %cst_156 = arith.constant dense<0.000000e+00> : vector<128x8xf32>
    %439 = tpu.matmul %5, %438, %cst_156 {dimension_numbers = #tpu.dot_dimension_numbers<[1], [0], [0], [1], [0, 0, 1, 1], [], []>} : vector<128x32xf32>, vector<32x8xf32>, vector<128x8xf32> -> vector<128x8xf32>
    %440 = arith.addf %12, %439 : vector<128x8xf32>
    %cst_157 = arith.constant dense<0.000000e+00> : vector<128x8xf32>
    %441 = tpu.matmul %6, %408, %cst_157 {dimension_numbers = #tpu.dot_dimension_numbers<[1], [0], [0], [1], [0, 0, 1, 1], [], []>} : vector<128x32xf32>, vector<32x8xf32>, vector<128x8xf32> -> vector<128x8xf32>
    %442 = arith.addf %440, %441 : vector<128x8xf32>
    %443 = math.tanh %442 : vector<128x8xf32>
    %444 = vector.extract_strided_slice %443 {offsets = [0, 0], sizes = [32, 8], strides = [1, 1]} : vector<128x8xf32> to vector<32x8xf32>
    %cst_158 = arith.constant 5.000000e-01 : f32
    %445 = vector.broadcast %cst_158 : f32 to vector<32x8xf32>
    %446 = arith.mulf %445, %444 : vector<32x8xf32>
    %cst_159 = arith.constant 5.000000e-01 : f32
    %447 = vector.broadcast %cst_159 : f32 to vector<32x8xf32>
    %448 = arith.addf %446, %447 : vector<32x8xf32>
    %449 = vector.extract_strided_slice %443 {offsets = [32, 0], sizes = [32, 8], strides = [1, 1]} : vector<128x8xf32> to vector<32x8xf32>
    %cst_160 = arith.constant 5.000000e-01 : f32
    %450 = vector.broadcast %cst_160 : f32 to vector<32x8xf32>
    %451 = arith.mulf %450, %449 : vector<32x8xf32>
    %cst_161 = arith.constant 5.000000e-01 : f32
    %452 = vector.broadcast %cst_161 : f32 to vector<32x8xf32>
    %453 = arith.addf %451, %452 : vector<32x8xf32>
    %454 = vector.extract_strided_slice %443 {offsets = [64, 0], sizes = [32, 8], strides = [1, 1]} : vector<128x8xf32> to vector<32x8xf32>
    %455 = vector.extract_strided_slice %443 {offsets = [96, 0], sizes = [32, 8], strides = [1, 1]} : vector<128x8xf32> to vector<32x8xf32>
    %cst_162 = arith.constant 5.000000e-01 : f32
    %456 = vector.broadcast %cst_162 : f32 to vector<32x8xf32>
    %457 = arith.mulf %456, %455 : vector<32x8xf32>
    %cst_163 = arith.constant 5.000000e-01 : f32
    %458 = vector.broadcast %cst_163 : f32 to vector<32x8xf32>
    %459 = arith.addf %457, %458 : vector<32x8xf32>
    %460 = arith.mulf %453, %406 : vector<32x8xf32>
    %461 = arith.mulf %448, %454 : vector<32x8xf32>
    %462 = arith.addf %460, %461 : vector<32x8xf32>
    %463 = math.tanh %462 : vector<32x8xf32>
    %464 = arith.mulf %459, %463 : vector<32x8xf32>
    %c8_i32 = arith.constant 8 : i32
    %c0_164 = arith.constant 0 : index
    %c0_165 = arith.constant 0 : index
    %465 = vector.load %arg14[%c0_164, %c0_165] : memref<32x8xf32, #tpu.memory_space<vmem>>, vector<32x8xf32>
    tpu.vector_store %arg14[%c0_164, %c0_165], %438 {strides = array<i32>} : memref<32x8xf32, #tpu.memory_space<vmem>>, vector<32x8xf32>,
    %c0_166 = arith.constant 0 : index
    %c0_167 = arith.constant 0 : index
    %466 = vector.load %arg15[%c0_166, %c0_167] : memref<32x8xf32, #tpu.memory_space<vmem>>, vector<32x8xf32>
    tpu.vector_store %arg15[%c0_166, %c0_167], %436 {strides = array<i32>} : memref<32x8xf32, #tpu.memory_space<vmem>>, vector<32x8xf32>,
    %c0_168 = arith.constant 0 : index
    %c0_169 = arith.constant 0 : index
    %467 = vector.load %arg16[%c0_168, %c0_169] : memref<32x8xf32, #tpu.memory_space<vmem>>, vector<32x8xf32>
    tpu.vector_store %arg16[%c0_168, %c0_169], %464 {strides = array<i32>} : memref<32x8xf32, #tpu.memory_space<vmem>>, vector<32x8xf32>,
    %c0_170 = arith.constant 0 : index
    %c0_171 = arith.constant 0 : index
    %468 = vector.load %arg17[%c0_170, %c0_171] : memref<32x8xf32, #tpu.memory_space<vmem>>, vector<32x8xf32>
    tpu.vector_store %arg17[%c0_170, %c0_171], %462 {strides = array<i32>} : memref<32x8xf32, #tpu.memory_space<vmem>>, vector<32x8xf32>,
    %c0_i32_172 = arith.constant 0 : i32
    %469 = arith.cmpi eq, %arg1, %c0_i32_172 : i32
    %470 = arith.extui %469 : i1 to i32
    %c0_i32_173 = arith.constant 0 : i32
    %471 = arith.cmpi ne, %470, %c0_i32_173 : i32
    scf.if %471 {
      %c0_174 = arith.constant 0 : index
      %c0_175 = arith.constant 0 : index
      %472 = vector.load %arg9[%c0_174, %c0_175] : memref<64x32xf32, #tpu.memory_space<vmem>>, vector<64x32xf32>
      %cst_176 = arith.constant dense<0.000000e+00> : vector<64x8xf32>
      %473 = tpu.matmul %472, %464, %cst_176 {dimension_numbers = #tpu.dot_dimension_numbers<[1], [0], [0], [1], [0, 0, 1, 1], [], []>} : vector<64x32xf32>, vector<32x8xf32>, vector<64x8xf32> -> vector<64x8xf32>
      %c0_177 = arith.constant 0 : index
      %c0_178 = arith.constant 0 : index
      %474 = vector.load %arg10[%c0_177, %c0_178] : memref<64x1xf32, #tpu.memory_space<vmem>>, vector<64x1xf32>
      %475 = vector.broadcast %474 : vector<64x1xf32> to vector<64x8xf32>
      %476 = arith.addf %473, %475 : vector<64x8xf32>
      %cst_179 = arith.constant 0.000000e+00 : f32
      %477 = vector.broadcast %cst_179 : f32 to vector<64x8xf32>
      %478 = arith.maximumf %476, %477 : vector<64x8xf32>
      %c0_180 = arith.constant 0 : index
      %c0_181 = arith.constant 0 : index
      %479 = vector.load %arg11[%c0_180, %c0_181] : memref<2x64xf32, #tpu.memory_space<vmem>>, vector<2x64xf32>
      %cst_182 = arith.constant dense<0.000000e+00> : vector<2x8xf32>
      %480 = tpu.matmul %479, %478, %cst_182 {dimension_numbers = #tpu.dot_dimension_numbers<[1], [0], [0], [1], [0, 0, 1, 1], [], []>} : vector<2x64xf32>, vector<64x8xf32>, vector<2x8xf32> -> vector<2x8xf32>
      %c0_183 = arith.constant 0 : index
      %c0_184 = arith.constant 0 : index
      %481 = vector.load %arg12[%c0_183, %c0_184] : memref<2x1xf32, #tpu.memory_space<vmem>>, vector<2x1xf32>
      %482 = vector.broadcast %481 : vector<2x1xf32> to vector<2x8xf32>
      %483 = arith.addf %480, %482 : vector<2x8xf32>
      %c0_185 = arith.constant 0 : index
      %c0_186 = arith.constant 0 : index
      %484 = vector.load %arg13[%c0_185, %c0_186] : memref<2x8xf32, #tpu.memory_space<vmem>>, vector<2x8xf32>
      tpu.vector_store %arg13[%c0_185, %c0_186], %483 {strides = array<i32>} : memref<2x8xf32, #tpu.memory_space<vmem>>, vector<2x8xf32>,
    } else {
    }
    return
  }
  func.func @transform_0(%arg0: i32, %arg1: i32) -> (i32, i32, i32) {
    %c0_i32 = arith.constant 0 : i32
    %c0_i32_0 = arith.constant 0 : i32
    return %arg1, %c0_i32, %arg0 : i32, i32, i32
  }
  func.func @transform_1(%arg0: i32, %arg1: i32) -> (i32, i32) {
    %c0_i32 = arith.constant 0 : i32
    %c0_i32_0 = arith.constant 0 : i32
    %c0_i32_1 = arith.constant 0 : i32
    return %c0_i32, %c0_i32_0 : i32, i32
  }
  func.func @transform_2(%arg0: i32, %arg1: i32) -> (i32, i32) {
    %c0_i32 = arith.constant 0 : i32
    %c0_i32_0 = arith.constant 0 : i32
    %c0_i32_1 = arith.constant 0 : i32
    return %c0_i32, %c0_i32_0 : i32, i32
  }
  func.func @transform_3(%arg0: i32, %arg1: i32) -> (i32, i32) {
    %c0_i32 = arith.constant 0 : i32
    %c0_i32_0 = arith.constant 0 : i32
    %c0_i32_1 = arith.constant 0 : i32
    return %c0_i32, %c0_i32_0 : i32, i32
  }
  func.func @transform_4(%arg0: i32, %arg1: i32) -> (i32, i32) {
    %c0_i32 = arith.constant 0 : i32
    %c0_i32_0 = arith.constant 0 : i32
    %c0_i32_1 = arith.constant 0 : i32
    return %c0_i32, %c0_i32_0 : i32, i32
  }
  func.func @transform_5(%arg0: i32, %arg1: i32) -> (i32, i32) {
    %c0_i32 = arith.constant 0 : i32
    %c0_i32_0 = arith.constant 0 : i32
    %c0_i32_1 = arith.constant 0 : i32
    return %c0_i32, %c0_i32_0 : i32, i32
  }
  func.func @transform_6(%arg0: i32, %arg1: i32) -> (i32, i32) {
    %c0_i32 = arith.constant 0 : i32
    %c0_i32_0 = arith.constant 0 : i32
    %c0_i32_1 = arith.constant 0 : i32
    return %c0_i32, %c0_i32_0 : i32, i32
  }
  func.func @transform_7(%arg0: i32, %arg1: i32) -> (i32, i32) {
    %c0_i32 = arith.constant 0 : i32
    %c0_i32_0 = arith.constant 0 : i32
    %c0_i32_1 = arith.constant 0 : i32
    return %c0_i32, %c0_i32_0 : i32, i32
  }
  func.func @transform_8(%arg0: i32, %arg1: i32) -> (i32, i32) {
    %c0_i32 = arith.constant 0 : i32
    %c0_i32_0 = arith.constant 0 : i32
    %c0_i32_1 = arith.constant 0 : i32
    return %c0_i32, %c0_i32_0 : i32, i32
  }
  func.func @transform_9(%arg0: i32, %arg1: i32) -> (i32, i32) {
    %c0_i32 = arith.constant 0 : i32
    %c0_i32_0 = arith.constant 0 : i32
    %c0_i32_1 = arith.constant 0 : i32
    return %c0_i32, %c0_i32_0 : i32, i32
  }
  func.func @transform_10(%arg0: i32, %arg1: i32) -> (i32, i32) {
    %c0_i32 = arith.constant 0 : i32
    %c0_i32_0 = arith.constant 0 : i32
    %c0_i32_1 = arith.constant 0 : i32
    return %c0_i32, %c0_i32_0 : i32, i32
  }
  func.func @transform_11(%arg0: i32, %arg1: i32) -> (i32, i32) {
    %c0_i32 = arith.constant 0 : i32
    %c0_i32_0 = arith.constant 0 : i32
    return %c0_i32, %arg0 : i32, i32
  }
}

</mosaic_0001>

<llo_original>
// kernel: tpu_custom_call.1
$region0: #{tpu_custom_call.1}
  #allocation0 [shape = 'u32[]', space=smem, size = 0x4, offset = 0x4, fixed_abs, tag = 'smem constant byte address 0x4 - core index']
  #allocation1 [shape = 'u32[144,128]{1,0:T(1,128)}', space=vmem, size = 0x12000, scoped, tag = 'internal scratch']
  #allocation2 [shape = 'f32[32,8]{1,0:T(8,128)}', space=vmem, size = 0x4000, scoped, tag = 'scratch operand']
  #allocation3 [shape = 'f32[32,8]{1,0:T(8,128)}', space=vmem, size = 0x4000, scoped, tag = 'scratch operand']
  #allocation4 [shape = 'f32[32,8]{1,0:T(8,128)}', space=vmem, size = 0x4000, scoped, tag = 'scratch operand']
  #allocation5 [shape = 'f32[32,8]{1,0:T(8,128)}', space=vmem, size = 0x4000, scoped, tag = 'scratch operand']
  %s0 = inlined_call_operand.vmem [shape: bf16[8,16,8], index: 0, kind: input, shape index: {}]
  %s1 = inlined_call_operand.vmem [shape: f32[128,16], index: 1, kind: input, shape index: {}]
  %s2 = inlined_call_operand.vmem [shape: f32[128,32], index: 2, kind: input, shape index: {}]
  %s3 = inlined_call_operand.vmem [shape: f32[128,32], index: 3, kind: input, shape index: {}]
  %s4 = inlined_call_operand.vmem [shape: f32[128,32], index: 4, kind: input, shape index: {}]
  %s5 = inlined_call_operand.vmem [shape: f32[128,1], index: 5, kind: input, shape index: {}]
  %s6 = inlined_call_operand.vmem [shape: f32[128,1], index: 6, kind: input, shape index: {}]
  %s7 = inlined_call_operand.vmem [shape: f32[64,32], index: 7, kind: input, shape index: {}]
  %s8 = inlined_call_operand.vmem [shape: f32[64,1], index: 8, kind: input, shape index: {}]
  %s9 = inlined_call_operand.vmem [shape: f32[2,64], index: 9, kind: input, shape index: {}]
  %s10 = inlined_call_operand.vmem [shape: f32[2,1], index: 10, kind: input, shape index: {}]
  %s11 = inlined_call_operand.hbm [shape: f32[2,8], index: 11, kind: output, shape index: {}]
  %s12 = sld [smem:[#allocation0]]
  $region62: #{tpu_custom_call.1} parent=0
    _
  %s14 = ssub.s32 1, %s12
  %s15 = scalar_select 0, %s14, %s12
  $region1: #{tpu_custom_call.1} parent=0
    #allocation6 [shape = 'u8[1024]{0}', space=vmem, size = 0x400, scoped, tag = 'output window, operand 0, single buffered']
    #allocation7 [shape = 's32[1]{0}', space=sflag, size = 0x4, scoped, tag = 'scoped memory for tpu_custom_call.1']
    %16 = vsyncpa [#allocation7], 0
    // Predicated region
    $region2: #{tpu_custom_call.1} parent=1 // pred_check
      _
    $region3: #{tpu_custom_call.1} parent=1 // pred_check_branch
      %18 = sbr.rel (0) target = $region5
    $region4: #{tpu_custom_call.1} parent=1 // pred_region
      _
    $region5: #{tpu_custom_call.1} parent=1 // pred_fallthru
      _
    // Predicated region
    $region6: #{tpu_custom_call.1} parent=1 // pred_check
      _
    $region7: #{tpu_custom_call.1} parent=1 // pred_check_branch
      %20 = sbr.rel (0) target = $region9
    $region8: #{tpu_custom_call.1} parent=1 // pred_region
      _
    $region9: #{tpu_custom_call.1} parent=1 // pred_fallthru
      _
    // Predicated region
    $region10: #{tpu_custom_call.1} parent=1 // pred_check
      _
    $region11: #{tpu_custom_call.1} parent=1 // pred_check_branch
      %22 = sbr.rel (0) target = $region13
    $region12: #{tpu_custom_call.1} parent=1 // pred_region
      _
    $region13: #{tpu_custom_call.1} parent=1 // pred_fallthru
      _
    // Predicated region
    $region14: #{tpu_custom_call.1} parent=1 // pred_check
      _
    $region15: #{tpu_custom_call.1} parent=1 // pred_check_branch
      %24 = sbr.rel (0) target = $region17
    $region16: #{tpu_custom_call.1} parent=1 // pred_region
      _
    $region17: #{tpu_custom_call.1} parent=1 // pred_fallthru
      _
    // Predicated region
    $region18: #{tpu_custom_call.1} parent=1 // pred_check
      _
    $region19: #{tpu_custom_call.1} parent=1 // pred_check_branch
      %26 = sbr.rel (0) target = $region21
    $region20: #{tpu_custom_call.1} parent=1 // pred_region
      _
    $region21: #{tpu_custom_call.1} parent=1 // pred_fallthru
      _
    // Predicated region
    $region22: #{tpu_custom_call.1} parent=1 // pred_check
      _
    $region23: #{tpu_custom_call.1} parent=1 // pred_check_branch
      %28 = sbr.rel (0) target = $region25
    $region24: #{tpu_custom_call.1} parent=1 // pred_region
      _
    $region25: #{tpu_custom_call.1} parent=1 // pred_fallthru
      _
    // Predicated region
    $region26: #{tpu_custom_call.1} parent=1 // pred_check
      _
    $region27: #{tpu_custom_call.1} parent=1 // pred_check_branch
      %30 = sbr.rel (0) target = $region29
    $region28: #{tpu_custom_call.1} parent=1 // pred_region
      _
    $region29: #{tpu_custom_call.1} parent=1 // pred_fallthru
      _
    // Predicated region
    $region30: #{tpu_custom_call.1} parent=1 // pred_check
      _
    $region31: #{tpu_custom_call.1} parent=1 // pred_check_branch
      %32 = sbr.rel (0) target = $region33
    $region32: #{tpu_custom_call.1} parent=1 // pred_region
      _
    $region33: #{tpu_custom_call.1} parent=1 // pred_fallthru
      _
    // Predicated region
    $region34: #{tpu_custom_call.1} parent=1 // pred_check
      _
    $region35: #{tpu_custom_call.1} parent=1 // pred_check_branch
      %34 = sbr.rel (0) target = $region37
    $region36: #{tpu_custom_call.1} parent=1 // pred_region
      _
    $region37: #{tpu_custom_call.1} parent=1 // pred_fallthru
      _
    // Predicated region
    $region38: #{tpu_custom_call.1} parent=1 // pred_check
      _
    $region39: #{tpu_custom_call.1} parent=1 // pred_check_branch
      %36 = sbr.rel (0) target = $region41
    $region40: #{tpu_custom_call.1} parent=1 // pred_region
      _
    $region41: #{tpu_custom_call.1} parent=1 // pred_fallthru
      _
    // Predicated region
    $region42: #{tpu_custom_call.1} parent=1 // pred_check
      _
    $region43: #{tpu_custom_call.1} parent=1 // pred_check_branch
      %38 = sbr.rel (0) target = $region45
    $region44: #{tpu_custom_call.1} parent=1 // pred_region
      _
    $region45: #{tpu_custom_call.1} parent=1 // pred_fallthru
      _
    %p39 = scmp.eq.s32.totalorder 0, 0
    // Predicated region
    $region46: #{tpu_custom_call.1} parent=1 // pred_check
      %p40 = pneg %p39
    $region47: #{tpu_custom_call.1} parent=1 // pred_check_branch
      %42 = sbr.rel (%p40) target = $region49
    $region48: #{tpu_custom_call.1} parent=1 // pred_region
      %vm43 = vcmask 64512
      %44 = vst.msk [vmem:[#allocation2] sm:$0xff] %vm43, 0.0
      %45 = vst.msk [vmem:[#allocation2 + $0x8] sm:$0xff] %vm43, 0.0
      %46 = vst.msk [vmem:[#allocation2 + $0x10] sm:$0xff] %vm43, 0.0
      %47 = vst.msk [vmem:[#allocation2 + $0x18] sm:$0xff] %vm43, 0.0
      %48 = vst.msk [vmem:[#allocation3] sm:$0xff] %vm43, 0.0
      %49 = vst.msk [vmem:[#allocation3 + $0x8] sm:$0xff] %vm43, 0.0
      %50 = vst.msk [vmem:[#allocation3 + $0x10] sm:$0xff] %vm43, 0.0
      %51 = vst.msk [vmem:[#allocation3 + $0x18] sm:$0xff] %vm43, 0.0
      %52 = vst.msk [vmem:[#allocation4] sm:$0xff] %vm43, 0.0
      %53 = vst.msk [vmem:[#allocation4 + $0x8] sm:$0xff] %vm43, 0.0
      %54 = vst.msk [vmem:[#allocation4 + $0x10] sm:$0xff] %vm43, 0.0
      %55 = vst.msk [vmem:[#allocation4 + $0x18] sm:$0xff] %vm43, 0.0
      %56 = vst.msk [vmem:[#allocation5] sm:$0xff] %vm43, 0.0
      %57 = vst.msk [vmem:[#allocation5 + $0x8] sm:$0xff] %vm43, 0.0
      %58 = vst.msk [vmem:[#allocation5 + $0x10] sm:$0xff] %vm43, 0.0
      %59 = vst.msk [vmem:[#allocation5 + $0x18] sm:$0xff] %vm43, 0.0
    $region49: #{tpu_custom_call.1} parent=1 // pred_fallthru
      _
    %v60 = vld [vmem:[%s1] sm:$0xff]
    %v61 = vld [vmem:[%s1 + $0x8] sm:$0xff]
    %v62 = vld [vmem:[%s1 + $0x10] sm:$0xff]
    %v63 = vld [vmem:[%s1 + $0x18] sm:$0xff]
    %v64 = vld [vmem:[%s1 + $0x20] sm:$0xff]
    %v65 = vld [vmem:[%s1 + $0x28] sm:$0xff]
    %v66 = vld [vmem:[%s1 + $0x30] sm:$0xff]
    %v67 = vld [vmem:[%s1 + $0x38] sm:$0xff]
    %v68 = vld [vmem:[%s1 + $0x40] sm:$0xff]
    %v69 = vld [vmem:[%s1 + $0x48] sm:$0xff]
    %v70 = vld [vmem:[%s1 + $0x50] sm:$0xff]
    %v71 = vld [vmem:[%s1 + $0x58] sm:$0xff]
    %v72 = vld [vmem:[%s1 + $0x60] sm:$0xff]
    %v73 = vld [vmem:[%s1 + $0x68] sm:$0xff]
    %v74 = vld [vmem:[%s1 + $0x70] sm:$0xff]
    %v75 = vld [vmem:[%s1 + $0x78] sm:$0xff]
    %v76 = vld [vmem:[%s2] sm:$0xff]
    %v77 = vld [vmem:[%s2 + $0x8] sm:$0xff]
    %v78 = vld [vmem:[%s2 + $0x10] sm:$0xff]
    %v79 = vld [vmem:[%s2 + $0x18] sm:$0xff]
    %v80 = vld [vmem:[%s2 + $0x20] sm:$0xff]
    %v81 = vld [vmem:[%s2 + $0x28] sm:$0xff]
    %v82 = vld [vmem:[%s2 + $0x30] sm:$0xff]
    %v83 = vld [vmem:[%s2 + $0x38] sm:$0xff]
    %v84 = vld [vmem:[%s2 + $0x40] sm:$0xff]
    %v85 = vld [vmem:[%s2 + $0x48] sm:$0xff]
    %v86 = vld [vmem:[%s2 + $0x50] sm:$0xff]
    %v87 = vld [vmem:[%s2 + $0x58] sm:$0xff]
    %v88 = vld [vmem:[%s2 + $0x60] sm:$0xff]
    %v89 = vld [vmem:[%s2 + $0x68] sm:$0xff]
    %v90 = vld [vmem:[%s2 + $0x70] sm:$0xff]
    %v91 = vld [vmem:[%s2 + $0x78] sm:$0xff]
    %v92 = vld [vmem:[%s3] sm:$0xff]
    %v93 = vld [vmem:[%s3 + $0x8] sm:$0xff]
    %v94 = vld [vmem:[%s3 + $0x10] sm:$0xff]
    %v95 = vld [vmem:[%s3 + $0x18] sm:$0xff]
    %v96 = vld [vmem:[%s3 + $0x20] sm:$0xff]
    %v97 = vld [vmem:[%s3 + $0x28] sm:$0xff]
    %v98 = vld [vmem:[%s3 + $0x30] sm:$0xff]
    %v99 = vld [vmem:[%s3 + $0x38] sm:$0xff]
    %v100 = vld [vmem:[%s3 + $0x40] sm:$0xff]
    %v101 = vld [vmem:[%s3 + $0x48] sm:$0xff]
    %v102 = vld [vmem:[%s3 + $0x50] sm:$0xff]
    %v103 = vld [vmem:[%s3 + $0x58] sm:$0xff]
    %v104 = vld [vmem:[%s3 + $0x60] sm:$0xff]
    %v105 = vld [vmem:[%s3 + $0x68] sm:$0xff]
    %v106 = vld [vmem:[%s3 + $0x70] sm:$0xff]
    %v107 = vld [vmem:[%s3 + $0x78] sm:$0xff]
    %v108 = vld [vmem:[%s4] sm:$0xff]
    %v109 = vld [vmem:[%s4 + $0x8] sm:$0xff]
    %v110 = vld [vmem:[%s4 + $0x10] sm:$0xff]
    %v111 = vld [vmem:[%s4 + $0x18] sm:$0xff]
    %v112 = vld [vmem:[%s4 + $0x20] sm:$0xff]
    %v113 = vld [vmem:[%s4 + $0x28] sm:$0xff]
    %v114 = vld [vmem:[%s4 + $0x30] sm:$0xff]
    %v115 = vld [vmem:[%s4 + $0x38] sm:$0xff]
    %v116 = vld [vmem:[%s4 + $0x40] sm:$0xff]
    %v117 = vld [vmem:[%s4 + $0x48] sm:$0xff]
    %v118 = vld [vmem:[%s4 + $0x50] sm:$0xff]
    %v119 = vld [vmem:[%s4 + $0x58] sm:$0xff]
    %v120 = vld [vmem:[%s4 + $0x60] sm:$0xff]
    %v121 = vld [vmem:[%s4 + $0x68] sm:$0xff]
    %v122 = vld [vmem:[%s4 + $0x70] sm:$0xff]
    %v123 = vld [vmem:[%s4 + $0x78] sm:$0xff]
    %v124 = vld [vmem:[%s5] sm:$0xff]
    %v125 = vld [vmem:[%s5 + $0x8] sm:$0xff]
    %v126 = vld [vmem:[%s5 + $0x10] sm:$0xff]
    %v127 = vld [vmem:[%s5 + $0x18] sm:$0xff]
    %v128 = vld [vmem:[%s5 + $0x20] sm:$0xff]
    %v129 = vld [vmem:[%s5 + $0x28] sm:$0xff]
    %v130 = vld [vmem:[%s5 + $0x30] sm:$0xff]
    %v131 = vld [vmem:[%s5 + $0x38] sm:$0xff]
    %v132 = vld [vmem:[%s5 + $0x40] sm:$0xff]
    %v133 = vld [vmem:[%s5 + $0x48] sm:$0xff]
    %v134 = vld [vmem:[%s5 + $0x50] sm:$0xff]
    %v135 = vld [vmem:[%s5 + $0x58] sm:$0xff]
    %v136 = vld [vmem:[%s5 + $0x60] sm:$0xff]
    %v137 = vld [vmem:[%s5 + $0x68] sm:$0xff]
    %v138 = vld [vmem:[%s5 + $0x70] sm:$0xff]
    %v139 = vld [vmem:[%s5 + $0x78] sm:$0xff]
    %141 = vset.pattern.permute.xlu0 0
    %142 = vperm.xlu0 %141, %v124
    %v143 = vpop.permute.xlu0 %142
    %146 = vset.pattern.permute.xlu0 0
    %147 = vperm.xlu0 %146, %v125
    %v148 = vpop.permute.xlu0 %147
    %151 = vset.pattern.permute.xlu0 0
    %152 = vperm.xlu0 %151, %v126
    %v153 = vpop.permute.xlu0 %152
    %156 = vset.pattern.permute.xlu0 0
    %157 = vperm.xlu0 %156, %v127
    %v158 = vpop.permute.xlu0 %157
    %161 = vset.pattern.permute.xlu0 0
    %162 = vperm.xlu0 %161, %v128
    %v163 = vpop.permute.xlu0 %162
    %166 = vset.pattern.permute.xlu0 0
    %167 = vperm.xlu0 %166, %v129
    %v168 = vpop.permute.xlu0 %167
    %171 = vset.pattern.permute.xlu0 0
    %172 = vperm.xlu0 %171, %v130
    %v173 = vpop.permute.xlu0 %172
    %176 = vset.pattern.permute.xlu0 0
    %177 = vperm.xlu0 %176, %v131
    %v178 = vpop.permute.xlu0 %177
    %181 = vset.pattern.permute.xlu0 0
    %182 = vperm.xlu0 %181, %v132
    %v183 = vpop.permute.xlu0 %182
    %186 = vset.pattern.permute.xlu0 0
    %187 = vperm.xlu0 %186, %v133
    %v188 = vpop.permute.xlu0 %187
    %191 = vset.pattern.permute.xlu0 0
    %192 = vperm.xlu0 %191, %v134
    %v193 = vpop.permute.xlu0 %192
    %196 = vset.pattern.permute.xlu0 0
    %197 = vperm.xlu0 %196, %v135
    %v198 = vpop.permute.xlu0 %197
    %201 = vset.pattern.permute.xlu0 0
    %202 = vperm.xlu0 %201, %v136
    %v203 = vpop.permute.xlu0 %202
    %206 = vset.pattern.permute.xlu0 0
    %207 = vperm.xlu0 %206, %v137
    %v208 = vpop.permute.xlu0 %207
    %211 = vset.pattern.permute.xlu0 0
    %212 = vperm.xlu0 %211, %v138
    %v213 = vpop.permute.xlu0 %212
    %216 = vset.pattern.permute.xlu0 0
    %217 = vperm.xlu0 %216, %v139
    %v218 = vpop.permute.xlu0 %217
    %v220 = vld [vmem:[%s6] sm:$0xff]
    %v221 = vld [vmem:[%s6 + $0x8] sm:$0xff]
    %v222 = vld [vmem:[%s6 + $0x10] sm:$0xff]
    %v223 = vld [vmem:[%s6 + $0x18] sm:$0xff]
    %v224 = vld [vmem:[%s6 + $0x20] sm:$0xff]
    %v225 = vld [vmem:[%s6 + $0x28] sm:$0xff]
    %v226 = vld [vmem:[%s6 + $0x30] sm:$0xff]
    %v227 = vld [vmem:[%s6 + $0x38] sm:$0xff]
    %v228 = vld [vmem:[%s6 + $0x40] sm:$0xff]
    %v229 = vld [vmem:[%s6 + $0x48] sm:$0xff]
    %v230 = vld [vmem:[%s6 + $0x50] sm:$0xff]
    %v231 = vld [vmem:[%s6 + $0x58] sm:$0xff]
    %v232 = vld [vmem:[%s6 + $0x60] sm:$0xff]
    %v233 = vld [vmem:[%s6 + $0x68] sm:$0xff]
    %v234 = vld [vmem:[%s6 + $0x70] sm:$0xff]
    %v235 = vld [vmem:[%s6 + $0x78] sm:$0xff]
    %237 = vset.pattern.permute.xlu0 0
    %238 = vperm.xlu0 %237, %v220
    %v239 = vpop.permute.xlu0 %238
    %242 = vset.pattern.permute.xlu0 0
    %243 = vperm.xlu0 %242, %v221
    %v244 = vpop.permute.xlu0 %243
    %247 = vset.pattern.permute.xlu0 0
    %248 = vperm.xlu0 %247, %v222
    %v249 = vpop.permute.xlu0 %248
    %252 = vset.pattern.permute.xlu0 0
    %253 = vperm.xlu0 %252, %v223
    %v254 = vpop.permute.xlu0 %253
    %257 = vset.pattern.permute.xlu0 0
    %258 = vperm.xlu0 %257, %v224
    %v259 = vpop.permute.xlu0 %258
    %262 = vset.pattern.permute.xlu0 0
    %263 = vperm.xlu0 %262, %v225
    %v264 = vpop.permute.xlu0 %263
    %267 = vset.pattern.permute.xlu0 0
    %268 = vperm.xlu0 %267, %v226
    %v269 = vpop.permute.xlu0 %268
    %272 = vset.pattern.permute.xlu0 0
    %273 = vperm.xlu0 %272, %v227
    %v274 = vpop.permute.xlu0 %273
    %277 = vset.pattern.permute.xlu0 0
    %278 = vperm.xlu0 %277, %v228
    %v279 = vpop.permute.xlu0 %278
    %282 = vset.pattern.permute.xlu0 0
    %283 = vperm.xlu0 %282, %v229
    %v284 = vpop.permute.xlu0 %283
    %287 = vset.pattern.permute.xlu0 0
    %288 = vperm.xlu0 %287, %v230
    %v289 = vpop.permute.xlu0 %288
    %292 = vset.pattern.permute.xlu0 0
    %293 = vperm.xlu0 %292, %v231
    %v294 = vpop.permute.xlu0 %293
    %297 = vset.pattern.permute.xlu0 0
    %298 = vperm.xlu0 %297, %v232
    %v299 = vpop.permute.xlu0 %298
    %302 = vset.pattern.permute.xlu0 0
    %303 = vperm.xlu0 %302, %v233
    %v304 = vpop.permute.xlu0 %303
    %307 = vset.pattern.permute.xlu0 0
    %308 = vperm.xlu0 %307, %v234
    %v309 = vpop.permute.xlu0 %308
    %312 = vset.pattern.permute.xlu0 0
    %313 = vperm.xlu0 %312, %v235
    %v314 = vpop.permute.xlu0 %313
    %v316 = vld [vmem:[#allocation2] sm:$0xff]
    %v317 = vld [vmem:[#allocation2 + $0x8] sm:$0xff]
    %v318 = vld [vmem:[#allocation2 + $0x10] sm:$0xff]
    %v319 = vld [vmem:[#allocation2 + $0x18] sm:$0xff]
    %v320 = vld [vmem:[#allocation3] sm:$0xff]
    %v321 = vld [vmem:[#allocation3 + $0x8] sm:$0xff]
    %v322 = vld [vmem:[#allocation3 + $0x10] sm:$0xff]
    %v323 = vld [vmem:[#allocation3 + $0x18] sm:$0xff]
    %v324 = vld [vmem:[#allocation4] sm:$0xff]
    %v325 = vld [vmem:[#allocation4 + $0x8] sm:$0xff]
    %v326 = vld [vmem:[#allocation4 + $0x10] sm:$0xff]
    %v327 = vld [vmem:[#allocation4 + $0x18] sm:$0xff]
    %v328 = vld [vmem:[#allocation5] sm:$0xff]
    %v329 = vld [vmem:[#allocation5 + $0x8] sm:$0xff]
    %v330 = vld [vmem:[#allocation5 + $0x10] sm:$0xff]
    %v331 = vld [vmem:[#allocation5 + $0x18] sm:$0xff]
    %v332 = vld [vmem:[%s0] sm:$0xf]
    %v333 = vld [vmem:[%s0 + $0x4] sm:$0xf]
    %v334 = vunpack.c.l.bf16 %v332
    %v335 = vunpack.c.l.bf16 %v333
    %vm336 = vcmask 130048
    %v338 = vsel %vm336, %v60, 0
    %v341 = vsel %vm336, %v61, 0
    %v344 = vsel %vm336, %v62, 0
    %v347 = vsel %vm336, %v63, 0
    %v350 = vsel %vm336, %v64, 0
    %v353 = vsel %vm336, %v65, 0
    %v356 = vsel %vm336, %v66, 0
    %v359 = vsel %vm336, %v67, 0
    %v362 = vsel %vm336, %v68, 0
    %v365 = vsel %vm336, %v69, 0
    %v368 = vsel %vm336, %v70, 0
    %v371 = vsel %vm336, %v71, 0
    %v374 = vsel %vm336, %v72, 0
    %v377 = vsel %vm336, %v73, 0
    %v380 = vsel %vm336, %v74, 0
    %v383 = vsel %vm336, %v75, 0
    %385 = vmatprep.subr.mxu0 0.0
    %386 = vmatpush1.msra.mxu0 0.0
    %387 = vmatprep.subr.mxu0 0.0
    %388 = vmatpush1.msra.mxu0 0.0
    %389 = vmatprep.subr.mxu0 0.0
    %390 = vmatpush1.msra.mxu0 0.0
    %391 = vmatprep.subr.mxu0 0.0
    %392 = vmatpush1.msra.mxu0 0.0
    %393 = vmatprep.subr.mxu0 0.0
    %394 = vmatpush1.msra.mxu0 0.0
    %395 = vmatprep.subr.mxu0 0.0
    %396 = vmatpush1.msra.mxu0 0.0
    %397 = vmatprep.subr.mxu0 0.0
    %398 = vmatpush1.msra.mxu0 0.0
    %399 = vmatprep.subr.mxu0 0.0
    %400 = vmatpush1.msra.mxu0 0.0
    %401 = vmatprep.subr.mxu0 0.0
    %402 = vmatpush1.msra.mxu0 0.0
    %403 = vmatprep.subr.mxu0 0.0
    %404 = vmatpush1.msra.mxu0 0.0
    %405 = vmatprep.subr.mxu0 0.0
    %406 = vmatpush1.msra.mxu0 0.0
    %407 = vmatprep.subr.mxu0 0.0
    %408 = vmatpush1.msra.mxu0 0.0
    %409 = vmatprep.subr.mxu0 0.0
    %410 = vmatpush1.msra.mxu0 0.0
    %411 = vmatprep.subr.mxu0 0.0
    %412 = vmatpush1.msra.mxu0 0.0
    %413 = vmatprep.subr.mxu0 0.0
    %414 = vmatpush1.msra.mxu0 %v335
    %415 = vmatprep.subr.mxu0 0.0
    %416 = vmatpush1.msra.mxu0 %v334
    %417 = vmatprep.subr.mxu0 0.0
    %418 = vmatpush2.msra.mxu0 0.0
    %419 = vmatprep.subr.mxu0 0.0
    %420 = vmatpush2.msra.mxu0 0.0
    %421 = vmatprep.subr.mxu0 0.0
    %422 = vmatpush2.msra.mxu0 0.0
    %423 = vmatprep.subr.mxu0 0.0
    %424 = vmatpush2.msra.mxu0 0.0
    %425 = vmatprep.subr.mxu0 0.0
    %426 = vmatpush2.msra.mxu0 0.0
    %427 = vmatprep.subr.mxu0 0.0
    %428 = vmatpush2.msra.mxu0 0.0
    %429 = vmatprep.subr.mxu0 0.0
    %430 = vmatpush2.msra.mxu0 0.0
    %431 = vmatprep.subr.mxu0 0.0
    %432 = vmatpush2.msra.mxu0 0.0
    %433 = vmatprep.subr.mxu0 0.0
    %434 = vmatpush2.msra.mxu0 0.0
    %435 = vmatprep.subr.mxu0 0.0
    %436 = vmatpush2.msra.mxu0 0.0
    %437 = vmatprep.subr.mxu0 0.0
    %438 = vmatpush2.msra.mxu0 0.0
    %439 = vmatprep.subr.mxu0 0.0
    %440 = vmatpush2.msra.mxu0 0.0
    %441 = vmatprep.subr.mxu0 0.0
    %442 = vmatpush2.msra.mxu0 0.0
    %443 = vmatprep.subr.mxu0 0.0
    %444 = vmatpush2.msra.mxu0 0.0
    %445 = vmatprep.subr.mxu0 0.0
    %446 = vmatpush2.msra.mxu0 0.0
    %447 = vmatprep.subr.mxu0 0.0
    %448 = vmatpush2.msra.mxu0 0.0
    %449 = vmatprep.mubr.f32.mxu0 0.0
    %450 = vmatmul.mubr.f32.gmra.mxu0 %v338
    %v451 = vpop.f32.mrf.mxu0
    %v452 = vadd.f32 0.0, %v451
    %v453 = vpop.f32.mrf.mxu0
    %454 = vmatprep.mubr.f32.mxu0 0.0
    %455 = vmatmul.mubr.f32.gmra.mxu0 %v341
    %v456 = vpop.f32.mrf.mxu0
    %v457 = vadd.f32 0.0, %v456
    %v458 = vpop.f32.mrf.mxu0
    %459 = vmatprep.mubr.f32.mxu0 0.0
    %460 = vmatmul.mubr.f32.gmra.mxu0 %v344
    %v461 = vpop.f32.mrf.mxu0
    %v462 = vadd.f32 0.0, %v461
    %v463 = vpop.f32.mrf.mxu0
    %464 = vmatprep.mubr.f32.mxu0 0.0
    %465 = vmatmul.mubr.f32.gmra.mxu0 %v347
    %v466 = vpop.f32.mrf.mxu0
    %v467 = vadd.f32 0.0, %v466
    %v468 = vpop.f32.mrf.mxu0
    %469 = vmatprep.mubr.f32.mxu0 0.0
    %470 = vmatmul.mubr.f32.gmra.mxu0 %v350
    %v471 = vpop.f32.mrf.mxu0
    %v472 = vadd.f32 0.0, %v471
    %v473 = vpop.f32.mrf.mxu0
    %474 = vmatprep.mubr.f32.mxu0 0.0
    %475 = vmatmul.mubr.f32.gmra.mxu0 %v353
    %v476 = vpop.f32.mrf.mxu0
    %v477 = vadd.f32 0.0, %v476
    %v478 = vpop.f32.mrf.mxu0
    %479 = vmatprep.mubr.f32.mxu0 0.0
    %480 = vmatmul.mubr.f32.gmra.mxu0 %v356
    %v481 = vpop.f32.mrf.mxu0
    %v482 = vadd.f32 0.0, %v481
    %v483 = vpop.f32.mrf.mxu0
    %484 = vmatprep.mubr.f32.mxu0 0.0
    %485 = vmatmul.mubr.f32.gmra.mxu0 %v359
    %v486 = vpop.f32.mrf.mxu0
    %v487 = vadd.f32 0.0, %v486
    %v488 = vpop.f32.mrf.mxu0
    %489 = vmatprep.mubr.f32.mxu0 0.0
    %490 = vmatmul.mubr.f32.gmra.mxu0 %v362
    %v491 = vpop.f32.mrf.mxu0
    %v492 = vadd.f32 0.0, %v491
    %v493 = vpop.f32.mrf.mxu0
    %494 = vmatprep.mubr.f32.mxu0 0.0
    %495 = vmatmul.mubr.f32.gmra.mxu0 %v365
    %v496 = vpop.f32.mrf.mxu0
    %v497 = vadd.f32 0.0, %v496
    %v498 = vpop.f32.mrf.mxu0
    %499 = vmatprep.mubr.f32.mxu0 0.0
    %500 = vmatmul.mubr.f32.gmra.mxu0 %v368
    %v501 = vpop.f32.mrf.mxu0
    %v502 = vadd.f32 0.0, %v501
    %v503 = vpop.f32.mrf.mxu0
    %504 = vmatprep.mubr.f32.mxu0 0.0
    %505 = vmatmul.mubr.f32.gmra.mxu0 %v371
    %v506 = vpop.f32.mrf.mxu0
    %v507 = vadd.f32 0.0, %v506
    %v508 = vpop.f32.mrf.mxu0
    %509 = vmatprep.mubr.f32.mxu0 0.0
    %510 = vmatmul.mubr.f32.gmra.mxu0 %v374
    %v511 = vpop.f32.mrf.mxu0
    %v512 = vadd.f32 0.0, %v511
    %v513 = vpop.f32.mrf.mxu0
    %514 = vmatprep.mubr.f32.mxu0 0.0
    %515 = vmatmul.mubr.f32.gmra.mxu0 %v377
    %v516 = vpop.f32.mrf.mxu0
    %v517 = vadd.f32 0.0, %v516
    %v518 = vpop.f32.mrf.mxu0
    %519 = vmatprep.mubr.f32.mxu0 0.0
    %520 = vmatmul.mubr.f32.gmra.mxu0 %v380
    %v521 = vpop.f32.mrf.mxu0
    %v522 = vadd.f32 0.0, %v521
    %v523 = vpop.f32.mrf.mxu0
    %524 = vmatprep.mubr.f32.mxu0 0.0
    %525 = vmatmul.mubr.f32.gmra.mxu0 %v383
    %v526 = vpop.f32.mrf.mxu0
    %v527 = vadd.f32 0.0, %v526
    %v528 = vpop.f32.mrf.mxu0
    %529 = vdwg.mxu0
    %v530 = vadd.f32 %v143, %v452
    %v531 = vadd.f32 %v148, %v457
    %v532 = vadd.f32 %v153, %v462
    %v533 = vadd.f32 %v158, %v467
    %v534 = vadd.f32 %v163, %v472
    %v535 = vadd.f32 %v168, %v477
    %v536 = vadd.f32 %v173, %v482
    %v537 = vadd.f32 %v178, %v487
    %v538 = vadd.f32 %v183, %v492
    %v539 = vadd.f32 %v188, %v497
    %v540 = vadd.f32 %v193, %v502
    %v541 = vadd.f32 %v198, %v507
    %v542 = vadd.f32 %v203, %v512
    %v543 = vadd.f32 %v208, %v517
    %v544 = vadd.f32 %v213, %v522
    %v545 = vadd.f32 %v218, %v527
    %vm546 = vcmask 261120
    %v548 = vsel %vm546, %v76, 0
    %v551 = vsel %vm546, %v77, 0
    %v554 = vsel %vm546, %v78, 0
    %v557 = vsel %vm546, %v79, 0
    %v560 = vsel %vm546, %v80, 0
    %v563 = vsel %vm546, %v81, 0
    %v566 = vsel %vm546, %v82, 0
    %v569 = vsel %vm546, %v83, 0
    %v572 = vsel %vm546, %v84, 0
    %v575 = vsel %vm546, %v85, 0
    %v578 = vsel %vm546, %v86, 0
    %v581 = vsel %vm546, %v87, 0
    %v584 = vsel %vm546, %v88, 0
    %v587 = vsel %vm546, %v89, 0
    %v590 = vsel %vm546, %v90, 0
    %v593 = vsel %vm546, %v91, 0
    %595 = vmatprep.subr.mxu0 0.0
    %596 = vmatpush1.msra.mxu0 0.0
    %597 = vmatprep.subr.mxu0 0.0
    %598 = vmatpush1.msra.mxu0 0.0
    %599 = vmatprep.subr.mxu0 0.0
    %600 = vmatpush1.msra.mxu0 0.0
    %601 = vmatprep.subr.mxu0 0.0
    %602 = vmatpush1.msra.mxu0 0.0
    %603 = vmatprep.subr.mxu0 0.0
    %604 = vmatpush1.msra.mxu0 0.0
    %605 = vmatprep.subr.mxu0 0.0
    %606 = vmatpush1.msra.mxu0 0.0
    %607 = vmatprep.subr.mxu0 0.0
    %608 = vmatpush1.msra.mxu0 0.0
    %609 = vmatprep.subr.mxu0 0.0
    %610 = vmatpush1.msra.mxu0 0.0
    %611 = vmatprep.subr.mxu0 0.0
    %612 = vmatpush1.msra.mxu0 0.0
    %613 = vmatprep.subr.mxu0 0.0
    %614 = vmatpush1.msra.mxu0 0.0
    %615 = vmatprep.subr.mxu0 0.0
    %616 = vmatpush1.msra.mxu0 0.0
    %617 = vmatprep.subr.mxu0 0.0
    %618 = vmatpush1.msra.mxu0 0.0
    %619 = vmatprep.subr.mxu0 0.0
    %620 = vmatpush1.msra.mxu0 %v319
    %621 = vmatprep.subr.mxu0 0.0
    %622 = vmatpush1.msra.mxu0 %v318
    %623 = vmatprep.subr.mxu0 0.0
    %624 = vmatpush1.msra.mxu0 %v317
    %625 = vmatprep.subr.mxu0 0.0
    %626 = vmatpush1.msra.mxu0 %v316
    %627 = vmatprep.subr.mxu0 0.0
    %628 = vmatpush2.msra.mxu0 0.0
    %629 = vmatprep.subr.mxu0 0.0
    %630 = vmatpush2.msra.mxu0 0.0
    %631 = vmatprep.subr.mxu0 0.0
    %632 = vmatpush2.msra.mxu0 0.0
    %633 = vmatprep.subr.mxu0 0.0
    %634 = vmatpush2.msra.mxu0 0.0
    %635 = vmatprep.subr.mxu0 0.0
    %636 = vmatpush2.msra.mxu0 0.0
    %637 = vmatprep.subr.mxu0 0.0
    %638 = vmatpush2.msra.mxu0 0.0
    %639 = vmatprep.subr.mxu0 0.0
    %640 = vmatpush2.msra.mxu0 0.0
    %641 = vmatprep.subr.mxu0 0.0
    %642 = vmatpush2.msra.mxu0 0.0
    %643 = vmatprep.subr.mxu0 0.0
    %644 = vmatpush2.msra.mxu0 0.0
    %645 = vmatprep.subr.mxu0 0.0
    %646 = vmatpush2.msra.mxu0 0.0
    %647 = vmatprep.subr.mxu0 0.0
    %648 = vmatpush2.msra.mxu0 0.0
    %649 = vmatprep.subr.mxu0 0.0
    %650 = vmatpush2.msra.mxu0 0.0
    %651 = vmatprep.subr.mxu0 0.0
    %652 = vmatpush2.msra.mxu0 0.0
    %653 = vmatprep.subr.mxu0 0.0
    %654 = vmatpush2.msra.mxu0 0.0
    %655 = vmatprep.subr.mxu0 0.0
    %656 = vmatpush2.msra.mxu0 0.0
    %657 = vmatprep.subr.mxu0 0.0
    %658 = vmatpush2.msra.mxu0 0.0
    %659 = vmatprep.mubr.f32.mxu0 0.0
    %660 = vmatmul.mubr.f32.gmra.mxu0 %v548
    %v661 = vpop.f32.mrf.mxu0
    %v662 = vadd.f32 0.0, %v661
    %v663 = vpop.f32.mrf.mxu0
    %664 = vmatprep.mubr.f32.mxu0 0.0
    %665 = vmatmul.mubr.f32.gmra.mxu0 %v551
    %v666 = vpop.f32.mrf.mxu0
    %v667 = vadd.f32 0.0, %v666
    %v668 = vpop.f32.mrf.mxu0
    %669 = vmatprep.mubr.f32.mxu0 0.0
    %670 = vmatmul.mubr.f32.gmra.mxu0 %v554
    %v671 = vpop.f32.mrf.mxu0
    %v672 = vadd.f32 0.0, %v671
    %v673 = vpop.f32.mrf.mxu0
    %674 = vmatprep.mubr.f32.mxu0 0.0
    %675 = vmatmul.mubr.f32.gmra.mxu0 %v557
    %v676 = vpop.f32.mrf.mxu0
    %v677 = vadd.f32 0.0, %v676
    %v678 = vpop.f32.mrf.mxu0
    %679 = vmatprep.mubr.f32.mxu0 0.0
    %680 = vmatmul.mubr.f32.gmra.mxu0 %v560
    %v681 = vpop.f32.mrf.mxu0
    %v682 = vadd.f32 0.0, %v681
    %v683 = vpop.f32.mrf.mxu0
    %684 = vmatprep.mubr.f32.mxu0 0.0
    %685 = vmatmul.mubr.f32.gmra.mxu0 %v563
    %v686 = vpop.f32.mrf.mxu0
    %v687 = vadd.f32 0.0, %v686
    %v688 = vpop.f32.mrf.mxu0
    %689 = vmatprep.mubr.f32.mxu0 0.0
    %690 = vmatmul.mubr.f32.gmra.mxu0 %v566
    %v691 = vpop.f32.mrf.mxu0
    %v692 = vadd.f32 0.0, %v691
    %v693 = vpop.f32.mrf.mxu0
    %694 = vmatprep.mubr.f32.mxu0 0.0
    %695 = vmatmul.mubr.f32.gmra.mxu0 %v569
    %v696 = vpop.f32.mrf.mxu0
    %v697 = vadd.f32 0.0, %v696
    %v698 = vpop.f32.mrf.mxu0
    %699 = vmatprep.mubr.f32.mxu0 0.0
    %700 = vmatmul.mubr.f32.gmra.mxu0 %v572
    %v701 = vpop.f32.mrf.mxu0
    %v702 = vadd.f32 0.0, %v701
    %v703 = vpop.f32.mrf.mxu0
    %704 = vmatprep.mubr.f32.mxu0 0.0
    %705 = vmatmul.mubr.f32.gmra.mxu0 %v575
    %v706 = vpop.f32.mrf.mxu0
    %v707 = vadd.f32 0.0, %v706
    %v708 = vpop.f32.mrf.mxu0
    %709 = vmatprep.mubr.f32.mxu0 0.0
    %710 = vmatmul.mubr.f32.gmra.mxu0 %v578
    %v711 = vpop.f32.mrf.mxu0
    %v712 = vadd.f32 0.0, %v711
    %v713 = vpop.f32.mrf.mxu0
    %714 = vmatprep.mubr.f32.mxu0 0.0
    %715 = vmatmul.mubr.f32.gmra.mxu0 %v581
    %v716 = vpop.f32.mrf.mxu0
    %v717 = vadd.f32 0.0, %v716
    %v718 = vpop.f32.mrf.mxu0
    %719 = vmatprep.mubr.f32.mxu0 0.0
    %720 = vmatmul.mubr.f32.gmra.mxu0 %v584
    %v721 = vpop.f32.mrf.mxu0
    %v722 = vadd.f32 0.0, %v721
    %v723 = vpop.f32.mrf.mxu0
    %724 = vmatprep.mubr.f32.mxu0 0.0
    %725 = vmatmul.mubr.f32.gmra.mxu0 %v587
    %v726 = vpop.f32.mrf.mxu0
    %v727 = vadd.f32 0.0, %v726
    %v728 = vpop.f32.mrf.mxu0
    %729 = vmatprep.mubr.f32.mxu0 0.0
    %730 = vmatmul.mubr.f32.gmra.mxu0 %v590
    %v731 = vpop.f32.mrf.mxu0
    %v732 = vadd.f32 0.0, %v731
    %v733 = vpop.f32.mrf.mxu0
    %734 = vmatprep.mubr.f32.mxu0 0.0
    %735 = vmatmul.mubr.f32.gmra.mxu0 %v593
    %v736 = vpop.f32.mrf.mxu0
    %v737 = vadd.f32 0.0, %v736
    %v738 = vpop.f32.mrf.mxu0
    %739 = vdwg.mxu0
    %v740 = vadd.f32 %v530, %v662
    %v741 = vadd.f32 %v531, %v667
    %v742 = vadd.f32 %v532, %v672
    %v743 = vadd.f32 %v533, %v677
    %v744 = vadd.f32 %v534, %v682
    %v745 = vadd.f32 %v535, %v687
    %v746 = vadd.f32 %v536, %v692
    %v747 = vadd.f32 %v537, %v697
    %v748 = vadd.f32 %v538, %v702
    %v749 = vadd.f32 %v539, %v707
    %v750 = vadd.f32 %v540, %v712
    %v751 = vadd.f32 %v541, %v717
    %v752 = vadd.f32 %v542, %v722
    %v753 = vadd.f32 %v543, %v727
    %v754 = vadd.f32 %v544, %v732
    %v755 = vadd.f32 %v545, %v737
    %v756 = vtanh.pop %v740
    %v757 = vtanh.pop %v741
    %v758 = vtanh.pop %v742
    %v759 = vtanh.pop %v743
    %v760 = vtanh.pop %v744
    %v761 = vtanh.pop %v745
    %v762 = vtanh.pop %v746
    %v763 = vtanh.pop %v747
    %v764 = vtanh.pop %v748
    %v765 = vtanh.pop %v749
    %v766 = vtanh.pop %v750
    %v767 = vtanh.pop %v751
    %v768 = vtanh.pop %v752
    %v769 = vtanh.pop %v753
    %v770 = vtanh.pop %v754
    %v771 = vtanh.pop %v755
    %v772 = vmul.f32 %v756, 0.5
    %v773 = vmul.f32 %v757, 0.5
    %v774 = vmul.f32 %v758, 0.5
    %v775 = vmul.f32 %v759, 0.5
    %v776 = vadd.f32 %v772, 0.5
    %v777 = vadd.f32 %v773, 0.5
    %v778 = vadd.f32 %v774, 0.5
    %v779 = vadd.f32 %v775, 0.5
    %v780 = vmul.f32 %v760, 0.5
    %v781 = vmul.f32 %v761, 0.5
    %v782 = vmul.f32 %v762, 0.5
    %v783 = vmul.f32 %v763, 0.5
    %v784 = vadd.f32 %v780, 0.5
    %v785 = vadd.f32 %v781, 0.5
    %v786 = vadd.f32 %v782, 0.5
    %v787 = vadd.f32 %v783, 0.5
    %v788 = vmul.f32 %v768, 0.5
    %v789 = vmul.f32 %v769, 0.5
    %v790 = vmul.f32 %v770, 0.5
    %v791 = vmul.f32 %v771, 0.5
    %v792 = vadd.f32 %v788, 0.5
    %v793 = vadd.f32 %v789, 0.5
    %v794 = vadd.f32 %v790, 0.5
    %v795 = vadd.f32 %v791, 0.5
    %v796 = vmul.f32 %v784, %v320
    %v797 = vmul.f32 %v785, %v321
    %v798 = vmul.f32 %v786, %v322
    %v799 = vmul.f32 %v787, %v323
    %v800 = vmul.f32 %v776, %v764
    %v801 = vmul.f32 %v777, %v765
    %v802 = vmul.f32 %v778, %v766
    %v803 = vmul.f32 %v779, %v767
    %v804 = vadd.f32 %v796, %v800
    %v805 = vadd.f32 %v797, %v801
    %v806 = vadd.f32 %v798, %v802
    %v807 = vadd.f32 %v799, %v803
    %v808 = vtanh.pop %v804
    %v809 = vtanh.pop %v805
    %v810 = vtanh.pop %v806
    %v811 = vtanh.pop %v807
    %v812 = vmul.f32 %v792, %v808
    %v813 = vmul.f32 %v793, %v809
    %v814 = vmul.f32 %v794, %v810
    %v815 = vmul.f32 %v795, %v811
    %v817 = vsel %vm546, %v92, 0
    %v820 = vsel %vm546, %v93, 0
    %v823 = vsel %vm546, %v94, 0
    %v826 = vsel %vm546, %v95, 0
    %v829 = vsel %vm546, %v96, 0
    %v832 = vsel %vm546, %v97, 0
    %v835 = vsel %vm546, %v98, 0
    %v838 = vsel %vm546, %v99, 0
    %v841 = vsel %vm546, %v100, 0
    %v844 = vsel %vm546, %v101, 0
    %v847 = vsel %vm546, %v102, 0
    %v850 = vsel %vm546, %v103, 0
    %v853 = vsel %vm546, %v104, 0
    %v856 = vsel %vm546, %v105, 0
    %v859 = vsel %vm546, %v106, 0
    %v862 = vsel %vm546, %v107, 0
    %864 = vmatprep.subr.mxu0 0.0
    %865 = vmatpush1.msra.mxu0 0.0
    %866 = vmatprep.subr.mxu0 0.0
    %867 = vmatpush1.msra.mxu0 0.0
    %868 = vmatprep.subr.mxu0 0.0
    %869 = vmatpush1.msra.mxu0 0.0
    %870 = vmatprep.subr.mxu0 0.0
    %871 = vmatpush1.msra.mxu0 0.0
    %872 = vmatprep.subr.mxu0 0.0
    %873 = vmatpush1.msra.mxu0 0.0
    %874 = vmatprep.subr.mxu0 0.0
    %875 = vmatpush1.msra.mxu0 0.0
    %876 = vmatprep.subr.mxu0 0.0
    %877 = vmatpush1.msra.mxu0 0.0
    %878 = vmatprep.subr.mxu0 0.0
    %879 = vmatpush1.msra.mxu0 0.0
    %880 = vmatprep.subr.mxu0 0.0
    %881 = vmatpush1.msra.mxu0 0.0
    %882 = vmatprep.subr.mxu0 0.0
    %883 = vmatpush1.msra.mxu0 0.0
    %884 = vmatprep.subr.mxu0 0.0
    %885 = vmatpush1.msra.mxu0 0.0
    %886 = vmatprep.subr.mxu0 0.0
    %887 = vmatpush1.msra.mxu0 0.0
    %888 = vmatprep.subr.mxu0 0.0
    %889 = vmatpush1.msra.mxu0 %v815
    %890 = vmatprep.subr.mxu0 0.0
    %891 = vmatpush1.msra.mxu0 %v814
    %892 = vmatprep.subr.mxu0 0.0
    %893 = vmatpush1.msra.mxu0 %v813
    %894 = vmatprep.subr.mxu0 0.0
    %895 = vmatpush1.msra.mxu0 %v812
    %896 = vmatprep.subr.mxu0 0.0
    %897 = vmatpush2.msra.mxu0 0.0
    %898 = vmatprep.subr.mxu0 0.0
    %899 = vmatpush2.msra.mxu0 0.0
    %900 = vmatprep.subr.mxu0 0.0
    %901 = vmatpush2.msra.mxu0 0.0
    %902 = vmatprep.subr.mxu0 0.0
    %903 = vmatpush2.msra.mxu0 0.0
    %904 = vmatprep.subr.mxu0 0.0
    %905 = vmatpush2.msra.mxu0 0.0
    %906 = vmatprep.subr.mxu0 0.0
    %907 = vmatpush2.msra.mxu0 0.0
    %908 = vmatprep.subr.mxu0 0.0
    %909 = vmatpush2.msra.mxu0 0.0
    %910 = vmatprep.subr.mxu0 0.0
    %911 = vmatpush2.msra.mxu0 0.0
    %912 = vmatprep.subr.mxu0 0.0
    %913 = vmatpush2.msra.mxu0 0.0
    %914 = vmatprep.subr.mxu0 0.0
    %915 = vmatpush2.msra.mxu0 0.0
    %916 = vmatprep.subr.mxu0 0.0
    %917 = vmatpush2.msra.mxu0 0.0
    %918 = vmatprep.subr.mxu0 0.0
    %919 = vmatpush2.msra.mxu0 0.0
    %920 = vmatprep.subr.mxu0 0.0
    %921 = vmatpush2.msra.mxu0 0.0
    %922 = vmatprep.subr.mxu0 0.0
    %923 = vmatpush2.msra.mxu0 0.0
    %924 = vmatprep.subr.mxu0 0.0
    %925 = vmatpush2.msra.mxu0 0.0
    %926 = vmatprep.subr.mxu0 0.0
    %927 = vmatpush2.msra.mxu0 0.0
    %928 = vmatprep.mubr.f32.mxu0 0.0
    %929 = vmatmul.mubr.f32.gmra.mxu0 %v817
    %v930 = vpop.f32.mrf.mxu0
    %v931 = vadd.f32 0.0, %v930
    %v932 = vpop.f32.mrf.mxu0
    %933 = vmatprep.mubr.f32.mxu0 0.0
    %934 = vmatmul.mubr.f32.gmra.mxu0 %v820
    %v935 = vpop.f32.mrf.mxu0
    %v936 = vadd.f32 0.0, %v935
    %v937 = vpop.f32.mrf.mxu0
    %938 = vmatprep.mubr.f32.mxu0 0.0
    %939 = vmatmul.mubr.f32.gmra.mxu0 %v823
    %v940 = vpop.f32.mrf.mxu0
    %v941 = vadd.f32 0.0, %v940
    %v942 = vpop.f32.mrf.mxu0
    %943 = vmatprep.mubr.f32.mxu0 0.0
    %944 = vmatmul.mubr.f32.gmra.mxu0 %v826
    %v945 = vpop.f32.mrf.mxu0
    %v946 = vadd.f32 0.0, %v945
    %v947 = vpop.f32.mrf.mxu0
    %948 = vmatprep.mubr.f32.mxu0 0.0
    %949 = vmatmul.mubr.f32.gmra.mxu0 %v829
    %v950 = vpop.f32.mrf.mxu0
    %v951 = vadd.f32 0.0, %v950
    %v952 = vpop.f32.mrf.mxu0
    %953 = vmatprep.mubr.f32.mxu0 0.0
    %954 = vmatmul.mubr.f32.gmra.mxu0 %v832
    %v955 = vpop.f32.mrf.mxu0
    %v956 = vadd.f32 0.0, %v955
    %v957 = vpop.f32.mrf.mxu0
    %958 = vmatprep.mubr.f32.mxu0 0.0
    %959 = vmatmul.mubr.f32.gmra.mxu0 %v835
    %v960 = vpop.f32.mrf.mxu0
    %v961 = vadd.f32 0.0, %v960
    %v962 = vpop.f32.mrf.mxu0
    %963 = vmatprep.mubr.f32.mxu0 0.0
    %964 = vmatmul.mubr.f32.gmra.mxu0 %v838
    %v965 = vpop.f32.mrf.mxu0
    %v966 = vadd.f32 0.0, %v965
    %v967 = vpop.f32.mrf.mxu0
    %968 = vmatprep.mubr.f32.mxu0 0.0
    %969 = vmatmul.mubr.f32.gmra.mxu0 %v841
    %v970 = vpop.f32.mrf.mxu0
    %v971 = vadd.f32 0.0, %v970
    %v972 = vpop.f32.mrf.mxu0
    %973 = vmatprep.mubr.f32.mxu0 0.0
    %974 = vmatmul.mubr.f32.gmra.mxu0 %v844
    %v975 = vpop.f32.mrf.mxu0
    %v976 = vadd.f32 0.0, %v975
    %v977 = vpop.f32.mrf.mxu0
    %978 = vmatprep.mubr.f32.mxu0 0.0
    %979 = vmatmul.mubr.f32.gmra.mxu0 %v847
    %v980 = vpop.f32.mrf.mxu0
    %v981 = vadd.f32 0.0, %v980
    %v982 = vpop.f32.mrf.mxu0
    %983 = vmatprep.mubr.f32.mxu0 0.0
    %984 = vmatmul.mubr.f32.gmra.mxu0 %v850
    %v985 = vpop.f32.mrf.mxu0
    %v986 = vadd.f32 0.0, %v985
    %v987 = vpop.f32.mrf.mxu0
    %988 = vmatprep.mubr.f32.mxu0 0.0
    %989 = vmatmul.mubr.f32.gmra.mxu0 %v853
    %v990 = vpop.f32.mrf.mxu0
    %v991 = vadd.f32 0.0, %v990
    %v992 = vpop.f32.mrf.mxu0
    %993 = vmatprep.mubr.f32.mxu0 0.0
    %994 = vmatmul.mubr.f32.gmra.mxu0 %v856
    %v995 = vpop.f32.mrf.mxu0
    %v996 = vadd.f32 0.0, %v995
    %v997 = vpop.f32.mrf.mxu0
    %998 = vmatprep.mubr.f32.mxu0 0.0
    %999 = vmatmul.mubr.f32.gmra.mxu0 %v859
    %v1000 = vpop.f32.mrf.mxu0
    %v1001 = vadd.f32 0.0, %v1000
    %v1002 = vpop.f32.mrf.mxu0
    %1003 = vmatprep.mubr.f32.mxu0 0.0
    %1004 = vmatmul.mubr.f32.gmra.mxu0 %v862
    %v1005 = vpop.f32.mrf.mxu0
    %v1006 = vadd.f32 0.0, %v1005
    %v1007 = vpop.f32.mrf.mxu0
    %1008 = vdwg.mxu0
    %v1009 = vadd.f32 %v239, %v931
    %v1010 = vadd.f32 %v244, %v936
    %v1011 = vadd.f32 %v249, %v941
    %v1012 = vadd.f32 %v254, %v946
    %v1013 = vadd.f32 %v259, %v951
    %v1014 = vadd.f32 %v264, %v956
    %v1015 = vadd.f32 %v269, %v961
    %v1016 = vadd.f32 %v274, %v966
    %v1017 = vadd.f32 %v279, %v971
    %v1018 = vadd.f32 %v284, %v976
    %v1019 = vadd.f32 %v289, %v981
    %v1020 = vadd.f32 %v294, %v986
    %v1021 = vadd.f32 %v299, %v991
    %v1022 = vadd.f32 %v304, %v996
    %v1023 = vadd.f32 %v309, %v1001
    %v1024 = vadd.f32 %v314, %v1006
    %v1026 = vsel %vm546, %v108, 0
    %v1029 = vsel %vm546, %v109, 0
    %v1032 = vsel %vm546, %v110, 0
    %v1035 = vsel %vm546, %v111, 0
    %v1038 = vsel %vm546, %v112, 0
    %v1041 = vsel %vm546, %v113, 0
    %v1044 = vsel %vm546, %v114, 0
    %v1047 = vsel %vm546, %v115, 0
    %v1050 = vsel %vm546, %v116, 0
    %v1053 = vsel %vm546, %v117, 0
    %v1056 = vsel %vm546, %v118, 0
    %v1059 = vsel %vm546, %v119, 0
    %v1062 = vsel %vm546, %v120, 0
    %v1065 = vsel %vm546, %v121, 0
    %v1068 = vsel %vm546, %v122, 0
    %v1071 = vsel %vm546, %v123, 0
    %1073 = vmatprep.subr.mxu0 0.0
    %1074 = vmatpush1.msra.mxu0 0.0
    %1075 = vmatprep.subr.mxu0 0.0
    %1076 = vmatpush1.msra.mxu0 0.0
    %1077 = vmatprep.subr.mxu0 0.0
    %1078 = vmatpush1.msra.mxu0 0.0
    %1079 = vmatprep.subr.mxu0 0.0
    %1080 = vmatpush1.msra.mxu0 0.0
    %1081 = vmatprep.subr.mxu0 0.0
    %1082 = vmatpush1.msra.mxu0 0.0
    %1083 = vmatprep.subr.mxu0 0.0
    %1084 = vmatpush1.msra.mxu0 0.0
    %1085 = vmatprep.subr.mxu0 0.0
    %1086 = vmatpush1.msra.mxu0 0.0
    %1087 = vmatprep.subr.mxu0 0.0
    %1088 = vmatpush1.msra.mxu0 0.0
    %1089 = vmatprep.subr.mxu0 0.0
    %1090 = vmatpush1.msra.mxu0 0.0
    %1091 = vmatprep.subr.mxu0 0.0
    %1092 = vmatpush1.msra.mxu0 0.0
    %1093 = vmatprep.subr.mxu0 0.0
    %1094 = vmatpush1.msra.mxu0 0.0
    %1095 = vmatprep.subr.mxu0 0.0
    %1096 = vmatpush1.msra.mxu0 0.0
    %1097 = vmatprep.subr.mxu0 0.0
    %1098 = vmatpush1.msra.mxu0 %v327
    %1099 = vmatprep.subr.mxu0 0.0
    %1100 = vmatpush1.msra.mxu0 %v326
    %1101 = vmatprep.subr.mxu0 0.0
    %1102 = vmatpush1.msra.mxu0 %v325
    %1103 = vmatprep.subr.mxu0 0.0
    %1104 = vmatpush1.msra.mxu0 %v324
    %1105 = vmatprep.subr.mxu0 0.0
    %1106 = vmatpush2.msra.mxu0 0.0
    %1107 = vmatprep.subr.mxu0 0.0
    %1108 = vmatpush2.msra.mxu0 0.0
    %1109 = vmatprep.subr.mxu0 0.0
    %1110 = vmatpush2.msra.mxu0 0.0
    %1111 = vmatprep.subr.mxu0 0.0
    %1112 = vmatpush2.msra.mxu0 0.0
    %1113 = vmatprep.subr.mxu0 0.0
    %1114 = vmatpush2.msra.mxu0 0.0
    %1115 = vmatprep.subr.mxu0 0.0
    %1116 = vmatpush2.msra.mxu0 0.0
    %1117 = vmatprep.subr.mxu0 0.0
    %1118 = vmatpush2.msra.mxu0 0.0
    %1119 = vmatprep.subr.mxu0 0.0
    %1120 = vmatpush2.msra.mxu0 0.0
    %1121 = vmatprep.subr.mxu0 0.0
    %1122 = vmatpush2.msra.mxu0 0.0
    %1123 = vmatprep.subr.mxu0 0.0
    %1124 = vmatpush2.msra.mxu0 0.0
    %1125 = vmatprep.subr.mxu0 0.0
    %1126 = vmatpush2.msra.mxu0 0.0
    %1127 = vmatprep.subr.mxu0 0.0
    %1128 = vmatpush2.msra.mxu0 0.0
    %1129 = vmatprep.subr.mxu0 0.0
    %1130 = vmatpush2.msra.mxu0 0.0
    %1131 = vmatprep.subr.mxu0 0.0
    %1132 = vmatpush2.msra.mxu0 0.0
    %1133 = vmatprep.subr.mxu0 0.0
    %1134 = vmatpush2.msra.mxu0 0.0
    %1135 = vmatprep.subr.mxu0 0.0
    %1136 = vmatpush2.msra.mxu0 0.0
    %1137 = vmatprep.mubr.f32.mxu0 0.0
    %1138 = vmatmul.mubr.f32.gmra.mxu0 %v1026
    %v1139 = vpop.f32.mrf.mxu0
    %v1140 = vadd.f32 0.0, %v1139
    %v1141 = vpop.f32.mrf.mxu0
    %1142 = vmatprep.mubr.f32.mxu0 0.0
    %1143 = vmatmul.mubr.f32.gmra.mxu0 %v1029
    %v1144 = vpop.f32.mrf.mxu0
    %v1145 = vadd.f32 0.0, %v1144
    %v1146 = vpop.f32.mrf.mxu0
    %1147 = vmatprep.mubr.f32.mxu0 0.0
    %1148 = vmatmul.mubr.f32.gmra.mxu0 %v1032
    %v1149 = vpop.f32.mrf.mxu0
    %v1150 = vadd.f32 0.0, %v1149
    %v1151 = vpop.f32.mrf.mxu0
    %1152 = vmatprep.mubr.f32.mxu0 0.0
    %1153 = vmatmul.mubr.f32.gmra.mxu0 %v1035
    %v1154 = vpop.f32.mrf.mxu0
    %v1155 = vadd.f32 0.0, %v1154
    %v1156 = vpop.f32.mrf.mxu0
    %1157 = vmatprep.mubr.f32.mxu0 0.0
    %1158 = vmatmul.mubr.f32.gmra.mxu0 %v1038
    %v1159 = vpop.f32.mrf.mxu0
    %v1160 = vadd.f32 0.0, %v1159
    %v1161 = vpop.f32.mrf.mxu0
    %1162 = vmatprep.mubr.f32.mxu0 0.0
    %1163 = vmatmul.mubr.f32.gmra.mxu0 %v1041
    %v1164 = vpop.f32.mrf.mxu0
    %v1165 = vadd.f32 0.0, %v1164
    %v1166 = vpop.f32.mrf.mxu0
    %1167 = vmatprep.mubr.f32.mxu0 0.0
    %1168 = vmatmul.mubr.f32.gmra.mxu0 %v1044
    %v1169 = vpop.f32.mrf.mxu0
    %v1170 = vadd.f32 0.0, %v1169
    %v1171 = vpop.f32.mrf.mxu0
    %1172 = vmatprep.mubr.f32.mxu0 0.0
    %1173 = vmatmul.mubr.f32.gmra.mxu0 %v1047
    %v1174 = vpop.f32.mrf.mxu0
    %v1175 = vadd.f32 0.0, %v1174
    %v1176 = vpop.f32.mrf.mxu0
    %1177 = vmatprep.mubr.f32.mxu0 0.0
    %1178 = vmatmul.mubr.f32.gmra.mxu0 %v1050
    %v1179 = vpop.f32.mrf.mxu0
    %v1180 = vadd.f32 0.0, %v1179
    %v1181 = vpop.f32.mrf.mxu0
    %1182 = vmatprep.mubr.f32.mxu0 0.0
    %1183 = vmatmul.mubr.f32.gmra.mxu0 %v1053
    %v1184 = vpop.f32.mrf.mxu0
    %v1185 = vadd.f32 0.0, %v1184
    %v1186 = vpop.f32.mrf.mxu0
    %1187 = vmatprep.mubr.f32.mxu0 0.0
    %1188 = vmatmul.mubr.f32.gmra.mxu0 %v1056
    %v1189 = vpop.f32.mrf.mxu0
    %v1190 = vadd.f32 0.0, %v1189
    %v1191 = vpop.f32.mrf.mxu0
    %1192 = vmatprep.mubr.f32.mxu0 0.0
    %1193 = vmatmul.mubr.f32.gmra.mxu0 %v1059
    %v1194 = vpop.f32.mrf.mxu0
    %v1195 = vadd.f32 0.0, %v1194
    %v1196 = vpop.f32.mrf.mxu0
    %1197 = vmatprep.mubr.f32.mxu0 0.0
    %1198 = vmatmul.mubr.f32.gmra.mxu0 %v1062
    %v1199 = vpop.f32.mrf.mxu0
    %v1200 = vadd.f32 0.0, %v1199
    %v1201 = vpop.f32.mrf.mxu0
    %1202 = vmatprep.mubr.f32.mxu0 0.0
    %1203 = vmatmul.mubr.f32.gmra.mxu0 %v1065
    %v1204 = vpop.f32.mrf.mxu0
    %v1205 = vadd.f32 0.0, %v1204
    %v1206 = vpop.f32.mrf.mxu0
    %1207 = vmatprep.mubr.f32.mxu0 0.0
    %1208 = vmatmul.mubr.f32.gmra.mxu0 %v1068
    %v1209 = vpop.f32.mrf.mxu0
    %v1210 = vadd.f32 0.0, %v1209
    %v1211 = vpop.f32.mrf.mxu0
    %1212 = vmatprep.mubr.f32.mxu0 0.0
    %1213 = vmatmul.mubr.f32.gmra.mxu0 %v1071
    %v1214 = vpop.f32.mrf.mxu0
    %v1215 = vadd.f32 0.0, %v1214
    %v1216 = vpop.f32.mrf.mxu0
    %1217 = vdwg.mxu0
    %v1218 = vadd.f32 %v1009, %v1140
    %v1219 = vadd.f32 %v1010, %v1145
    %v1220 = vadd.f32 %v1011, %v1150
    %v1221 = vadd.f32 %v1012, %v1155
    %v1222 = vadd.f32 %v1013, %v1160
    %v1223 = vadd.f32 %v1014, %v1165
    %v1224 = vadd.f32 %v1015, %v1170
    %v1225 = vadd.f32 %v1016, %v1175
    %v1226 = vadd.f32 %v1017, %v1180
    %v1227 = vadd.f32 %v1018, %v1185
    %v1228 = vadd.f32 %v1019, %v1190
    %v1229 = vadd.f32 %v1020, %v1195
    %v1230 = vadd.f32 %v1021, %v1200
    %v1231 = vadd.f32 %v1022, %v1205
    %v1232 = vadd.f32 %v1023, %v1210
    %v1233 = vadd.f32 %v1024, %v1215
    %v1234 = vtanh.pop %v1218
    %v1235 = vtanh.pop %v1219
    %v1236 = vtanh.pop %v1220
    %v1237 = vtanh.pop %v1221
    %v1238 = vtanh.pop %v1222
    %v1239 = vtanh.pop %v1223
    %v1240 = vtanh.pop %v1224
    %v1241 = vtanh.pop %v1225
    %v1242 = vtanh.pop %v1226
    %v1243 = vtanh.pop %v1227
    %v1244 = vtanh.pop %v1228
    %v1245 = vtanh.pop %v1229
    %v1246 = vtanh.pop %v1230
    %v1247 = vtanh.pop %v1231
    %v1248 = vtanh.pop %v1232
    %v1249 = vtanh.pop %v1233
    %v1250 = vmul.f32 %v1234, 0.5
    %v1251 = vmul.f32 %v1235, 0.5
    %v1252 = vmul.f32 %v1236, 0.5
    %v1253 = vmul.f32 %v1237, 0.5
    %v1254 = vadd.f32 %v1250, 0.5
    %v1255 = vadd.f32 %v1251, 0.5
    %v1256 = vadd.f32 %v1252, 0.5
    %v1257 = vadd.f32 %v1253, 0.5
    %v1258 = vmul.f32 %v1238, 0.5
    %v1259 = vmul.f32 %v1239, 0.5
    %v1260 = vmul.f32 %v1240, 0.5
    %v1261 = vmul.f32 %v1241, 0.5
    %v1262 = vadd.f32 %v1258, 0.5
    %v1263 = vadd.f32 %v1259, 0.5
    %v1264 = vadd.f32 %v1260, 0.5
    %v1265 = vadd.f32 %v1261, 0.5
    %v1266 = vmul.f32 %v1246, 0.5
    %v1267 = vmul.f32 %v1247, 0.5
    %v1268 = vmul.f32 %v1248, 0.5
    %v1269 = vmul.f32 %v1249, 0.5
    %v1270 = vadd.f32 %v1266, 0.5
    %v1271 = vadd.f32 %v1267, 0.5
    %v1272 = vadd.f32 %v1268, 0.5
    %v1273 = vadd.f32 %v1269, 0.5
    %v1274 = vmul.f32 %v1262, %v328
    %v1275 = vmul.f32 %v1263, %v329
    %v1276 = vmul.f32 %v1264, %v330
    %v1277 = vmul.f32 %v1265, %v331
    %v1278 = vmul.f32 %v1254, %v1242
    %v1279 = vmul.f32 %v1255, %v1243
    %v1280 = vmul.f32 %v1256, %v1244
    %v1281 = vmul.f32 %v1257, %v1245
    %v1282 = vadd.f32 %v1274, %v1278
    %v1283 = vadd.f32 %v1275, %v1279
    %v1284 = vadd.f32 %v1276, %v1280
    %v1285 = vadd.f32 %v1277, %v1281
    %v1286 = vtanh.pop %v1282
    %v1287 = vtanh.pop %v1283
    %v1288 = vtanh.pop %v1284
    %v1289 = vtanh.pop %v1285
    %v1290 = vmul.f32 %v1270, %v1286
    %v1291 = vmul.f32 %v1271, %v1287
    %v1292 = vmul.f32 %v1272, %v1288
    %v1293 = vmul.f32 %v1273, %v1289
    %s1294 = scalar_lea.vmem %s0, 8
    %v1295 = vld [vmem:[%s1294] sm:$0xf]
    %v1296 = vld [vmem:[%s1294 + $0x4] sm:$0xf]
    %v1297 = vunpack.c.l.bf16 %v1295
    %v1298 = vunpack.c.l.bf16 %v1296
    %1299 = vmatprep.subr.mxu0 0.0
    %1300 = vmatpush1.msra.mxu0 0.0
    %1301 = vmatprep.subr.mxu0 0.0
    %1302 = vmatpush1.msra.mxu0 0.0
    %1303 = vmatprep.subr.mxu0 0.0
    %1304 = vmatpush1.msra.mxu0 0.0
    %1305 = vmatprep.subr.mxu0 0.0
    %1306 = vmatpush1.msra.mxu0 0.0
    %1307 = vmatprep.subr.mxu0 0.0
    %1308 = vmatpush1.msra.mxu0 0.0
    %1309 = vmatprep.subr.mxu0 0.0
    %1310 = vmatpush1.msra.mxu0 0.0
    %1311 = vmatprep.subr.mxu0 0.0
    %1312 = vmatpush1.msra.mxu0 0.0
    %1313 = vmatprep.subr.mxu0 0.0
    %1314 = vmatpush1.msra.mxu0 0.0
    %1315 = vmatprep.subr.mxu0 0.0
    %1316 = vmatpush1.msra.mxu0 0.0
    %1317 = vmatprep.subr.mxu0 0.0
    %1318 = vmatpush1.msra.mxu0 0.0
    %1319 = vmatprep.subr.mxu0 0.0
    %1320 = vmatpush1.msra.mxu0 0.0
    %1321 = vmatprep.subr.mxu0 0.0
    %1322 = vmatpush1.msra.mxu0 0.0
    %1323 = vmatprep.subr.mxu0 0.0
    %1324 = vmatpush1.msra.mxu0 0.0
    %1325 = vmatprep.subr.mxu0 0.0
    %1326 = vmatpush1.msra.mxu0 0.0
    %1327 = vmatprep.subr.mxu0 0.0
    %1328 = vmatpush1.msra.mxu0 %v1298
    %1329 = vmatprep.subr.mxu0 0.0
    %1330 = vmatpush1.msra.mxu0 %v1297
    %1331 = vmatprep.subr.mxu0 0.0
    %1332 = vmatpush2.msra.mxu0 0.0
    %1333 = vmatprep.subr.mxu0 0.0
    %1334 = vmatpush2.msra.mxu0 0.0
    %1335 = vmatprep.subr.mxu0 0.0
    %1336 = vmatpush2.msra.mxu0 0.0
    %1337 = vmatprep.subr.mxu0 0.0
    %1338 = vmatpush2.msra.mxu0 0.0
    %1339 = vmatprep.subr.mxu0 0.0
    %1340 = vmatpush2.msra.mxu0 0.0
    %1341 = vmatprep.subr.mxu0 0.0
    %1342 = vmatpush2.msra.mxu0 0.0
    %1343 = vmatprep.subr.mxu0 0.0
    %1344 = vmatpush2.msra.mxu0 0.0
    %1345 = vmatprep.subr.mxu0 0.0
    %1346 = vmatpush2.msra.mxu0 0.0
    %1347 = vmatprep.subr.mxu0 0.0
    %1348 = vmatpush2.msra.mxu0 0.0
    %1349 = vmatprep.subr.mxu0 0.0
    %1350 = vmatpush2.msra.mxu0 0.0
    %1351 = vmatprep.subr.mxu0 0.0
    %1352 = vmatpush2.msra.mxu0 0.0
    %1353 = vmatprep.subr.mxu0 0.0
    %1354 = vmatpush2.msra.mxu0 0.0
    %1355 = vmatprep.subr.mxu0 0.0
    %1356 = vmatpush2.msra.mxu0 0.0
    %1357 = vmatprep.subr.mxu0 0.0
    %1358 = vmatpush2.msra.mxu0 0.0
    %1359 = vmatprep.subr.mxu0 0.0
    %1360 = vmatpush2.msra.mxu0 0.0
    %1361 = vmatprep.subr.mxu0 0.0
    %1362 = vmatpush2.msra.mxu0 0.0
    %1363 = vmatprep.mubr.f32.mxu0 0.0
    %1364 = vmatmul.mubr.f32.gmra.mxu0 %v338
    %v1365 = vpop.f32.mrf.mxu0
    %v1366 = vadd.f32 0.0, %v1365
    %v1367 = vpop.f32.mrf.mxu0
    %1368 = vmatprep.mubr.f32.mxu0 0.0
    %1369 = vmatmul.mubr.f32.gmra.mxu0 %v341
    %v1370 = vpop.f32.mrf.mxu0
    %v1371 = vadd.f32 0.0, %v1370
    %v1372 = vpop.f32.mrf.mxu0
    %1373 = vmatprep.mubr.f32.mxu0 0.0
    %1374 = vmatmul.mubr.f32.gmra.mxu0 %v344
    %v1375 = vpop.f32.mrf.mxu0
    %v1376 = vadd.f32 0.0, %v1375
    %v1377 = vpop.f32.mrf.mxu0
    %1378 = vmatprep.mubr.f32.mxu0 0.0
    %1379 = vmatmul.mubr.f32.gmra.mxu0 %v347
    %v1380 = vpop.f32.mrf.mxu0
    %v1381 = vadd.f32 0.0, %v1380
    %v1382 = vpop.f32.mrf.mxu0
    %1383 = vmatprep.mubr.f32.mxu0 0.0
    %1384 = vmatmul.mubr.f32.gmra.mxu0 %v350
    %v1385 = vpop.f32.mrf.mxu0
    %v1386 = vadd.f32 0.0, %v1385
    %v1387 = vpop.f32.mrf.mxu0
    %1388 = vmatprep.mubr.f32.mxu0 0.0
    %1389 = vmatmul.mubr.f32.gmra.mxu0 %v353
    %v1390 = vpop.f32.mrf.mxu0
    %v1391 = vadd.f32 0.0, %v1390
    %v1392 = vpop.f32.mrf.mxu0
    %1393 = vmatprep.mubr.f32.mxu0 0.0
    %1394 = vmatmul.mubr.f32.gmra.mxu0 %v356
    %v1395 = vpop.f32.mrf.mxu0
    %v1396 = vadd.f32 0.0, %v1395
    %v1397 = vpop.f32.mrf.mxu0
    %1398 = vmatprep.mubr.f32.mxu0 0.0
    %1399 = vmatmul.mubr.f32.gmra.mxu0 %v359
    %v1400 = vpop.f32.mrf.mxu0
    %v1401 = vadd.f32 0.0, %v1400
    %v1402 = vpop.f32.mrf.mxu0
    %1403 = vmatprep.mubr.f32.mxu0 0.0
    %1404 = vmatmul.mubr.f32.gmra.mxu0 %v362
    %v1405 = vpop.f32.mrf.mxu0
    %v1406 = vadd.f32 0.0, %v1405
    %v1407 = vpop.f32.mrf.mxu0
    %1408 = vmatprep.mubr.f32.mxu0 0.0
    %1409 = vmatmul.mubr.f32.gmra.mxu0 %v365
    %v1410 = vpop.f32.mrf.mxu0
    %v1411 = vadd.f32 0.0, %v1410
    %v1412 = vpop.f32.mrf.mxu0
    %1413 = vmatprep.mubr.f32.mxu0 0.0
    %1414 = vmatmul.mubr.f32.gmra.mxu0 %v368
    %v1415 = vpop.f32.mrf.mxu0
    %v1416 = vadd.f32 0.0, %v1415
    %v1417 = vpop.f32.mrf.mxu0
    %1418 = vmatprep.mubr.f32.mxu0 0.0
    %1419 = vmatmul.mubr.f32.gmra.mxu0 %v371
    %v1420 = vpop.f32.mrf.mxu0
    %v1421 = vadd.f32 0.0, %v1420
    %v1422 = vpop.f32.mrf.mxu0
    %1423 = vmatprep.mubr.f32.mxu0 0.0
    %1424 = vmatmul.mubr.f32.gmra.mxu0 %v374
    %v1425 = vpop.f32.mrf.mxu0
    %v1426 = vadd.f32 0.0, %v1425
    %v1427 = vpop.f32.mrf.mxu0
    %1428 = vmatprep.mubr.f32.mxu0 0.0
    %1429 = vmatmul.mubr.f32.gmra.mxu0 %v377
    %v1430 = vpop.f32.mrf.mxu0
    %v1431 = vadd.f32 0.0, %v1430
    %v1432 = vpop.f32.mrf.mxu0
    %1433 = vmatprep.mubr.f32.mxu0 0.0
    %1434 = vmatmul.mubr.f32.gmra.mxu0 %v380
    %v1435 = vpop.f32.mrf.mxu0
    %v1436 = vadd.f32 0.0, %v1435
    %v1437 = vpop.f32.mrf.mxu0
    %1438 = vmatprep.mubr.f32.mxu0 0.0
    %1439 = vmatmul.mubr.f32.gmra.mxu0 %v383
    %v1440 = vpop.f32.mrf.mxu0
    %v1441 = vadd.f32 0.0, %v1440
    %v1442 = vpop.f32.mrf.mxu0
    %1443 = vdwg.mxu0
    %v1444 = vadd.f32 %v143, %v1366
    %v1445 = vadd.f32 %v148, %v1371
    %v1446 = vadd.f32 %v153, %v1376
    %v1447 = vadd.f32 %v158, %v1381
    %v1448 = vadd.f32 %v163, %v1386
    %v1449 = vadd.f32 %v168, %v1391
    %v1450 = vadd.f32 %v173, %v1396
    %v1451 = vadd.f32 %v178, %v1401
    %v1452 = vadd.f32 %v183, %v1406
    %v1453 = vadd.f32 %v188, %v1411
    %v1454 = vadd.f32 %v193, %v1416
    %v1455 = vadd.f32 %v198, %v1421
    %v1456 = vadd.f32 %v203, %v1426
    %v1457 = vadd.f32 %v208, %v1431
    %v1458 = vadd.f32 %v213, %v1436
    %v1459 = vadd.f32 %v218, %v1441
    %1460 = vmatprep.subr.mxu0 0.0
    %1461 = vmatpush1.msra.mxu0 0.0
    %1462 = vmatprep.subr.mxu0 0.0
    %1463 = vmatpush1.msra.mxu0 0.0
    %1464 = vmatprep.subr.mxu0 0.0
    %1465 = vmatpush1.msra.mxu0 0.0
    %1466 = vmatprep.subr.mxu0 0.0
    %1467 = vmatpush1.msra.mxu0 0.0
    %1468 = vmatprep.subr.mxu0 0.0
    %1469 = vmatpush1.msra.mxu0 0.0
    %1470 = vmatprep.subr.mxu0 0.0
    %1471 = vmatpush1.msra.mxu0 0.0
    %1472 = vmatprep.subr.mxu0 0.0
    %1473 = vmatpush1.msra.mxu0 0.0
    %1474 = vmatprep.subr.mxu0 0.0
    %1475 = vmatpush1.msra.mxu0 0.0
    %1476 = vmatprep.subr.mxu0 0.0
    %1477 = vmatpush1.msra.mxu0 0.0
    %1478 = vmatprep.subr.mxu0 0.0
    %1479 = vmatpush1.msra.mxu0 0.0
    %1480 = vmatprep.subr.mxu0 0.0
    %1481 = vmatpush1.msra.mxu0 0.0
    %1482 = vmatprep.subr.mxu0 0.0
    %1483 = vmatpush1.msra.mxu0 0.0
    %1484 = vmatprep.subr.mxu0 0.0
    %1485 = vmatpush1.msra.mxu0 %v815
    %1486 = vmatprep.subr.mxu0 0.0
    %1487 = vmatpush1.msra.mxu0 %v814
    %1488 = vmatprep.subr.mxu0 0.0
    %1489 = vmatpush1.msra.mxu0 %v813
    %1490 = vmatprep.subr.mxu0 0.0
    %1491 = vmatpush1.msra.mxu0 %v812
    %1492 = vmatprep.subr.mxu0 0.0
    %1493 = vmatpush2.msra.mxu0 0.0
    %1494 = vmatprep.subr.mxu0 0.0
    %1495 = vmatpush2.msra.mxu0 0.0
    %1496 = vmatprep.subr.mxu0 0.0
    %1497 = vmatpush2.msra.mxu0 0.0
    %1498 = vmatprep.subr.mxu0 0.0
    %1499 = vmatpush2.msra.mxu0 0.0
    %1500 = vmatprep.subr.mxu0 0.0
    %1501 = vmatpush2.msra.mxu0 0.0
    %1502 = vmatprep.subr.mxu0 0.0
    %1503 = vmatpush2.msra.mxu0 0.0
    %1504 = vmatprep.subr.mxu0 0.0
    %1505 = vmatpush2.msra.mxu0 0.0
    %1506 = vmatprep.subr.mxu0 0.0
    %1507 = vmatpush2.msra.mxu0 0.0
    %1508 = vmatprep.subr.mxu0 0.0
    %1509 = vmatpush2.msra.mxu0 0.0
    %1510 = vmatprep.subr.mxu0 0.0
    %1511 = vmatpush2.msra.mxu0 0.0
    %1512 = vmatprep.subr.mxu0 0.0
    %1513 = vmatpush2.msra.mxu0 0.0
    %1514 = vmatprep.subr.mxu0 0.0
    %1515 = vmatpush2.msra.mxu0 0.0
    %1516 = vmatprep.subr.mxu0 0.0
    %1517 = vmatpush2.msra.mxu0 0.0
    %1518 = vmatprep.subr.mxu0 0.0
    %1519 = vmatpush2.msra.mxu0 0.0
    %1520 = vmatprep.subr.mxu0 0.0
    %1521 = vmatpush2.msra.mxu0 0.0
    %1522 = vmatprep.subr.mxu0 0.0
    %1523 = vmatpush2.msra.mxu0 0.0
    %1524 = vmatprep.mubr.f32.mxu0 0.0
    %1525 = vmatmul.mubr.f32.gmra.mxu0 %v548
    %v1526 = vpop.f32.mrf.mxu0
    %v1527 = vadd.f32 0.0, %v1526
    %v1528 = vpop.f32.mrf.mxu0
    %1529 = vmatprep.mubr.f32.mxu0 0.0
    %1530 = vmatmul.mubr.f32.gmra.mxu0 %v551
    %v1531 = vpop.f32.mrf.mxu0
    %v1532 = vadd.f32 0.0, %v1531
    %v1533 = vpop.f32.mrf.mxu0
    %1534 = vmatprep.mubr.f32.mxu0 0.0
    %1535 = vmatmul.mubr.f32.gmra.mxu0 %v554
    %v1536 = vpop.f32.mrf.mxu0
    %v1537 = vadd.f32 0.0, %v1536
    %v1538 = vpop.f32.mrf.mxu0
    %1539 = vmatprep.mubr.f32.mxu0 0.0
    %1540 = vmatmul.mubr.f32.gmra.mxu0 %v557
    %v1541 = vpop.f32.mrf.mxu0
    %v1542 = vadd.f32 0.0, %v1541
    %v1543 = vpop.f32.mrf.mxu0
    %1544 = vmatprep.mubr.f32.mxu0 0.0
    %1545 = vmatmul.mubr.f32.gmra.mxu0 %v560
    %v1546 = vpop.f32.mrf.mxu0
    %v1547 = vadd.f32 0.0, %v1546
    %v1548 = vpop.f32.mrf.mxu0
    %1549 = vmatprep.mubr.f32.mxu0 0.0
    %1550 = vmatmul.mubr.f32.gmra.mxu0 %v563
    %v1551 = vpop.f32.mrf.mxu0
    %v1552 = vadd.f32 0.0, %v1551
    %v1553 = vpop.f32.mrf.mxu0
    %1554 = vmatprep.mubr.f32.mxu0 0.0
    %1555 = vmatmul.mubr.f32.gmra.mxu0 %v566
    %v1556 = vpop.f32.mrf.mxu0
    %v1557 = vadd.f32 0.0, %v1556
    %v1558 = vpop.f32.mrf.mxu0
    %1559 = vmatprep.mubr.f32.mxu0 0.0
    %1560 = vmatmul.mubr.f32.gmra.mxu0 %v569
    %v1561 = vpop.f32.mrf.mxu0
    %v1562 = vadd.f32 0.0, %v1561
    %v1563 = vpop.f32.mrf.mxu0
    %1564 = vmatprep.mubr.f32.mxu0 0.0
    %1565 = vmatmul.mubr.f32.gmra.mxu0 %v572
    %v1566 = vpop.f32.mrf.mxu0
    %v1567 = vadd.f32 0.0, %v1566
    %v1568 = vpop.f32.mrf.mxu0
    %1569 = vmatprep.mubr.f32.mxu0 0.0
    %1570 = vmatmul.mubr.f32.gmra.mxu0 %v575
    %v1571 = vpop.f32.mrf.mxu0
    %v1572 = vadd.f32 0.0, %v1571
    %v1573 = vpop.f32.mrf.mxu0
    %1574 = vmatprep.mubr.f32.mxu0 0.0
    %1575 = vmatmul.mubr.f32.gmra.mxu0 %v578
    %v1576 = vpop.f32.mrf.mxu0
    %v1577 = vadd.f32 0.0, %v1576
    %v1578 = vpop.f32.mrf.mxu0
    %1579 = vmatprep.mubr.f32.mxu0 0.0
    %1580 = vmatmul.mubr.f32.gmra.mxu0 %v581
    %v1581 = vpop.f32.mrf.mxu0
    %v1582 = vadd.f32 0.0, %v1581
    %v1583 = vpop.f32.mrf.mxu0
    %1584 = vmatprep.mubr.f32.mxu0 0.0
    %1585 = vmatmul.mubr.f32.gmra.mxu0 %v584
    %v1586 = vpop.f32.mrf.mxu0
    %v1587 = vadd.f32 0.0, %v1586
    %v1588 = vpop.f32.mrf.mxu0
    %1589 = vmatprep.mubr.f32.mxu0 0.0
    %1590 = vmatmul.mubr.f32.gmra.mxu0 %v587
    %v1591 = vpop.f32.mrf.mxu0
    %v1592 = vadd.f32 0.0, %v1591
    %v1593 = vpop.f32.mrf.mxu0
    %1594 = vmatprep.mubr.f32.mxu0 0.0
    %1595 = vmatmul.mubr.f32.gmra.mxu0 %v590
    %v1596 = vpop.f32.mrf.mxu0
    %v1597 = vadd.f32 0.0, %v1596
    %v1598 = vpop.f32.mrf.mxu0
    %1599 = vmatprep.mubr.f32.mxu0 0.0
    %1600 = vmatmul.mubr.f32.gmra.mxu0 %v593
    %v1601 = vpop.f32.mrf.mxu0
    %v1602 = vadd.f32 0.0, %v1601
    %v1603 = vpop.f32.mrf.mxu0
    %1604 = vdwg.mxu0
    %v1605 = vadd.f32 %v1444, %v1527
    %v1606 = vadd.f32 %v1445, %v1532
    %v1607 = vadd.f32 %v1446, %v1537
    %v1608 = vadd.f32 %v1447, %v1542
    %v1609 = vadd.f32 %v1448, %v1547
    %v1610 = vadd.f32 %v1449, %v1552
    %v1611 = vadd.f32 %v1450, %v1557
    %v1612 = vadd.f32 %v1451, %v1562
    %v1613 = vadd.f32 %v1452, %v1567
    %v1614 = vadd.f32 %v1453, %v1572
    %v1615 = vadd.f32 %v1454, %v1577
    %v1616 = vadd.f32 %v1455, %v1582
    %v1617 = vadd.f32 %v1456, %v1587
    %v1618 = vadd.f32 %v1457, %v1592
    %v1619 = vadd.f32 %v1458, %v1597
    %v1620 = vadd.f32 %v1459, %v1602
    %v1621 = vtanh.pop %v1605
    %v1622 = vtanh.pop %v1606
    %v1623 = vtanh.pop %v1607
    %v1624 = vtanh.pop %v1608
    %v1625 = vtanh.pop %v1609
    %v1626 = vtanh.pop %v1610
    %v1627 = vtanh.pop %v1611
    %v1628 = vtanh.pop %v1612
    %v1629 = vtanh.pop %v1613
    %v1630 = vtanh.pop %v1614
    %v1631 = vtanh.pop %v1615
    %v1632 = vtanh.pop %v1616
    %v1633 = vtanh.pop %v1617
    %v1634 = vtanh.pop %v1618
    %v1635 = vtanh.pop %v1619
    %v1636 = vtanh.pop %v1620
    %v1637 = vmul.f32 %v1621, 0.5
    %v1638 = vmul.f32 %v1622, 0.5
    %v1639 = vmul.f32 %v1623, 0.5
    %v1640 = vmul.f32 %v1624, 0.5
    %v1641 = vadd.f32 %v1637, 0.5
    %v1642 = vadd.f32 %v1638, 0.5
    %v1643 = vadd.f32 %v1639, 0.5
    %v1644 = vadd.f32 %v1640, 0.5
    %v1645 = vmul.f32 %v1625, 0.5
    %v1646 = vmul.f32 %v1626, 0.5
    %v1647 = vmul.f32 %v1627, 0.5
    %v1648 = vmul.f32 %v1628, 0.5
    %v1649 = vadd.f32 %v1645, 0.5
    %v1650 = vadd.f32 %v1646, 0.5
    %v1651 = vadd.f32 %v1647, 0.5
    %v1652 = vadd.f32 %v1648, 0.5
    %v1653 = vmul.f32 %v1633, 0.5
    %v1654 = vmul.f32 %v1634, 0.5
    %v1655 = vmul.f32 %v1635, 0.5
    %v1656 = vmul.f32 %v1636, 0.5
    %v1657 = vadd.f32 %v1653, 0.5
    %v1658 = vadd.f32 %v1654, 0.5
    %v1659 = vadd.f32 %v1655, 0.5
    %v1660 = vadd.f32 %v1656, 0.5
    %v1661 = vmul.f32 %v1649, %v804
    %v1662 = vmul.f32 %v1650, %v805
    %v1663 = vmul.f32 %v1651, %v806
    %v1664 = vmul.f32 %v1652, %v807
    %v1665 = vmul.f32 %v1641, %v1629
    %v1666 = vmul.f32 %v1642, %v1630
    %v1667 = vmul.f32 %v1643, %v1631
    %v1668 = vmul.f32 %v1644, %v1632
    %v1669 = vadd.f32 %v1661, %v1665
    %v1670 = vadd.f32 %v1662, %v1666
    %v1671 = vadd.f32 %v1663, %v1667
    %v1672 = vadd.f32 %v1664, %v1668
    %v1673 = vtanh.pop %v1669
    %v1674 = vtanh.pop %v1670
    %v1675 = vtanh.pop %v1671
    %v1676 = vtanh.pop %v1672
    %v1677 = vmul.f32 %v1657, %v1673
    %v1678 = vmul.f32 %v1658, %v1674
    %v1679 = vmul.f32 %v1659, %v1675
    %v1680 = vmul.f32 %v1660, %v1676
    %1681 = vmatprep.subr.mxu0 0.0
    %1682 = vmatpush1.msra.mxu0 0.0
    %1683 = vmatprep.subr.mxu0 0.0
    %1684 = vmatpush1.msra.mxu0 0.0
    %1685 = vmatprep.subr.mxu0 0.0
    %1686 = vmatpush1.msra.mxu0 0.0
    %1687 = vmatprep.subr.mxu0 0.0
    %1688 = vmatpush1.msra.mxu0 0.0
    %1689 = vmatprep.subr.mxu0 0.0
    %1690 = vmatpush1.msra.mxu0 0.0
    %1691 = vmatprep.subr.mxu0 0.0
    %1692 = vmatpush1.msra.mxu0 0.0
    %1693 = vmatprep.subr.mxu0 0.0
    %1694 = vmatpush1.msra.mxu0 0.0
    %1695 = vmatprep.subr.mxu0 0.0
    %1696 = vmatpush1.msra.mxu0 0.0
    %1697 = vmatprep.subr.mxu0 0.0
    %1698 = vmatpush1.msra.mxu0 0.0
    %1699 = vmatprep.subr.mxu0 0.0
    %1700 = vmatpush1.msra.mxu0 0.0
    %1701 = vmatprep.subr.mxu0 0.0
    %1702 = vmatpush1.msra.mxu0 0.0
    %1703 = vmatprep.subr.mxu0 0.0
    %1704 = vmatpush1.msra.mxu0 0.0
    %1705 = vmatprep.subr.mxu0 0.0
    %1706 = vmatpush1.msra.mxu0 %v1680
    %1707 = vmatprep.subr.mxu0 0.0
    %1708 = vmatpush1.msra.mxu0 %v1679
    %1709 = vmatprep.subr.mxu0 0.0
    %1710 = vmatpush1.msra.mxu0 %v1678
    %1711 = vmatprep.subr.mxu0 0.0
    %1712 = vmatpush1.msra.mxu0 %v1677
    %1713 = vmatprep.subr.mxu0 0.0
    %1714 = vmatpush2.msra.mxu0 0.0
    %1715 = vmatprep.subr.mxu0 0.0
    %1716 = vmatpush2.msra.mxu0 0.0
    %1717 = vmatprep.subr.mxu0 0.0
    %1718 = vmatpush2.msra.mxu0 0.0
    %1719 = vmatprep.subr.mxu0 0.0
    %1720 = vmatpush2.msra.mxu0 0.0
    %1721 = vmatprep.subr.mxu0 0.0
    %1722 = vmatpush2.msra.mxu0 0.0
    %1723 = vmatprep.subr.mxu0 0.0
    %1724 = vmatpush2.msra.mxu0 0.0
    %1725 = vmatprep.subr.mxu0 0.0
    %1726 = vmatpush2.msra.mxu0 0.0
    %1727 = vmatprep.subr.mxu0 0.0
    %1728 = vmatpush2.msra.mxu0 0.0
    %1729 = vmatprep.subr.mxu0 0.0
    %1730 = vmatpush2.msra.mxu0 0.0
    %1731 = vmatprep.subr.mxu0 0.0
    %1732 = vmatpush2.msra.mxu0 0.0
    %1733 = vmatprep.subr.mxu0 0.0
    %1734 = vmatpush2.msra.mxu0 0.0
    %1735 = vmatprep.subr.mxu0 0.0
    %1736 = vmatpush2.msra.mxu0 0.0
    %1737 = vmatprep.subr.mxu0 0.0
    %1738 = vmatpush2.msra.mxu0 0.0
    %1739 = vmatprep.subr.mxu0 0.0
    %1740 = vmatpush2.msra.mxu0 0.0
    %1741 = vmatprep.subr.mxu0 0.0
    %1742 = vmatpush2.msra.mxu0 0.0
    %1743 = vmatprep.subr.mxu0 0.0
    %1744 = vmatpush2.msra.mxu0 0.0
    %1745 = vmatprep.mubr.f32.mxu0 0.0
    %1746 = vmatmul.mubr.f32.gmra.mxu0 %v817
    %v1747 = vpop.f32.mrf.mxu0
    %v1748 = vadd.f32 0.0, %v1747
    %v1749 = vpop.f32.mrf.mxu0
    %1750 = vmatprep.mubr.f32.mxu0 0.0
    %1751 = vmatmul.mubr.f32.gmra.mxu0 %v820
    %v1752 = vpop.f32.mrf.mxu0
    %v1753 = vadd.f32 0.0, %v1752
    %v1754 = vpop.f32.mrf.mxu0
    %1755 = vmatprep.mubr.f32.mxu0 0.0
    %1756 = vmatmul.mubr.f32.gmra.mxu0 %v823
    %v1757 = vpop.f32.mrf.mxu0
    %v1758 = vadd.f32 0.0, %v1757
    %v1759 = vpop.f32.mrf.mxu0
    %1760 = vmatprep.mubr.f32.mxu0 0.0
    %1761 = vmatmul.mubr.f32.gmra.mxu0 %v826
    %v1762 = vpop.f32.mrf.mxu0
    %v1763 = vadd.f32 0.0, %v1762
    %v1764 = vpop.f32.mrf.mxu0
    %1765 = vmatprep.mubr.f32.mxu0 0.0
    %1766 = vmatmul.mubr.f32.gmra.mxu0 %v829
    %v1767 = vpop.f32.mrf.mxu0
    %v1768 = vadd.f32 0.0, %v1767
    %v1769 = vpop.f32.mrf.mxu0
    %1770 = vmatprep.mubr.f32.mxu0 0.0
    %1771 = vmatmul.mubr.f32.gmra.mxu0 %v832
    %v1772 = vpop.f32.mrf.mxu0
    %v1773 = vadd.f32 0.0, %v1772
    %v1774 = vpop.f32.mrf.mxu0
    %1775 = vmatprep.mubr.f32.mxu0 0.0
    %1776 = vmatmul.mubr.f32.gmra.mxu0 %v835
    %v1777 = vpop.f32.mrf.mxu0
    %v1778 = vadd.f32 0.0, %v1777
    %v1779 = vpop.f32.mrf.mxu0
    %1780 = vmatprep.mubr.f32.mxu0 0.0
    %1781 = vmatmul.mubr.f32.gmra.mxu0 %v838
    %v1782 = vpop.f32.mrf.mxu0
    %v1783 = vadd.f32 0.0, %v1782
    %v1784 = vpop.f32.mrf.mxu0
    %1785 = vmatprep.mubr.f32.mxu0 0.0
    %1786 = vmatmul.mubr.f32.gmra.mxu0 %v841
    %v1787 = vpop.f32.mrf.mxu0
    %v1788 = vadd.f32 0.0, %v1787
    %v1789 = vpop.f32.mrf.mxu0
    %1790 = vmatprep.mubr.f32.mxu0 0.0
    %1791 = vmatmul.mubr.f32.gmra.mxu0 %v844
    %v1792 = vpop.f32.mrf.mxu0
    %v1793 = vadd.f32 0.0, %v1792
    %v1794 = vpop.f32.mrf.mxu0
    %1795 = vmatprep.mubr.f32.mxu0 0.0
    %1796 = vmatmul.mubr.f32.gmra.mxu0 %v847
    %v1797 = vpop.f32.mrf.mxu0
    %v1798 = vadd.f32 0.0, %v1797
    %v1799 = vpop.f32.mrf.mxu0
    %1800 = vmatprep.mubr.f32.mxu0 0.0
    %1801 = vmatmul.mubr.f32.gmra.mxu0 %v850
    %v1802 = vpop.f32.mrf.mxu0
    %v1803 = vadd.f32 0.0, %v1802
    %v1804 = vpop.f32.mrf.mxu0
    %1805 = vmatprep.mubr.f32.mxu0 0.0
    %1806 = vmatmul.mubr.f32.gmra.mxu0 %v853
    %v1807 = vpop.f32.mrf.mxu0
    %v1808 = vadd.f32 0.0, %v1807
    %v1809 = vpop.f32.mrf.mxu0
    %1810 = vmatprep.mubr.f32.mxu0 0.0
    %1811 = vmatmul.mubr.f32.gmra.mxu0 %v856
    %v1812 = vpop.f32.mrf.mxu0
    %v1813 = vadd.f32 0.0, %v1812
    %v1814 = vpop.f32.mrf.mxu0
    %1815 = vmatprep.mubr.f32.mxu0 0.0
    %1816 = vmatmul.mubr.f32.gmra.mxu0 %v859
    %v1817 = vpop.f32.mrf.mxu0
    %v1818 = vadd.f32 0.0, %v1817
    %v1819 = vpop.f32.mrf.mxu0
    %1820 = vmatprep.mubr.f32.mxu0 0.0
    %1821 = vmatmul.mubr.f32.gmra.mxu0 %v862
    %v1822 = vpop.f32.mrf.mxu0
    %v1823 = vadd.f32 0.0, %v1822
    %v1824 = vpop.f32.mrf.mxu0
    %1825 = vdwg.mxu0
    %v1826 = vadd.f32 %v239, %v1748
    %v1827 = vadd.f32 %v244, %v1753
    %v1828 = vadd.f32 %v249, %v1758
    %v1829 = vadd.f32 %v254, %v1763
    %v1830 = vadd.f32 %v259, %v1768
    %v1831 = vadd.f32 %v264, %v1773
    %v1832 = vadd.f32 %v269, %v1778
    %v1833 = vadd.f32 %v274, %v1783
    %v1834 = vadd.f32 %v279, %v1788
    %v1835 = vadd.f32 %v284, %v1793
    %v1836 = vadd.f32 %v289, %v1798
    %v1837 = vadd.f32 %v294, %v1803
    %v1838 = vadd.f32 %v299, %v1808
    %v1839 = vadd.f32 %v304, %v1813
    %v1840 = vadd.f32 %v309, %v1818
    %v1841 = vadd.f32 %v314, %v1823
    %1842 = vmatprep.subr.mxu0 0.0
    %1843 = vmatpush1.msra.mxu0 0.0
    %1844 = vmatprep.subr.mxu0 0.0
    %1845 = vmatpush1.msra.mxu0 0.0
    %1846 = vmatprep.subr.mxu0 0.0
    %1847 = vmatpush1.msra.mxu0 0.0
    %1848 = vmatprep.subr.mxu0 0.0
    %1849 = vmatpush1.msra.mxu0 0.0
    %1850 = vmatprep.subr.mxu0 0.0
    %1851 = vmatpush1.msra.mxu0 0.0
    %1852 = vmatprep.subr.mxu0 0.0
    %1853 = vmatpush1.msra.mxu0 0.0
    %1854 = vmatprep.subr.mxu0 0.0
    %1855 = vmatpush1.msra.mxu0 0.0
    %1856 = vmatprep.subr.mxu0 0.0
    %1857 = vmatpush1.msra.mxu0 0.0
    %1858 = vmatprep.subr.mxu0 0.0
    %1859 = vmatpush1.msra.mxu0 0.0
    %1860 = vmatprep.subr.mxu0 0.0
    %1861 = vmatpush1.msra.mxu0 0.0
    %1862 = vmatprep.subr.mxu0 0.0
    %1863 = vmatpush1.msra.mxu0 0.0
    %1864 = vmatprep.subr.mxu0 0.0
    %1865 = vmatpush1.msra.mxu0 0.0
    %1866 = vmatprep.subr.mxu0 0.0
    %1867 = vmatpush1.msra.mxu0 %v1293
    %1868 = vmatprep.subr.mxu0 0.0
    %1869 = vmatpush1.msra.mxu0 %v1292
    %1870 = vmatprep.subr.mxu0 0.0
    %1871 = vmatpush1.msra.mxu0 %v1291
    %1872 = vmatprep.subr.mxu0 0.0
    %1873 = vmatpush1.msra.mxu0 %v1290
    %1874 = vmatprep.subr.mxu0 0.0
    %1875 = vmatpush2.msra.mxu0 0.0
    %1876 = vmatprep.subr.mxu0 0.0
    %1877 = vmatpush2.msra.mxu0 0.0
    %1878 = vmatprep.subr.mxu0 0.0
    %1879 = vmatpush2.msra.mxu0 0.0
    %1880 = vmatprep.subr.mxu0 0.0
    %1881 = vmatpush2.msra.mxu0 0.0
    %1882 = vmatprep.subr.mxu0 0.0
    %1883 = vmatpush2.msra.mxu0 0.0
    %1884 = vmatprep.subr.mxu0 0.0
    %1885 = vmatpush2.msra.mxu0 0.0
    %1886 = vmatprep.subr.mxu0 0.0
    %1887 = vmatpush2.msra.mxu0 0.0
    %1888 = vmatprep.subr.mxu0 0.0
    %1889 = vmatpush2.msra.mxu0 0.0
    %1890 = vmatprep.subr.mxu0 0.0
    %1891 = vmatpush2.msra.mxu0 0.0
    %1892 = vmatprep.subr.mxu0 0.0
    %1893 = vmatpush2.msra.mxu0 0.0
    %1894 = vmatprep.subr.mxu0 0.0
    %1895 = vmatpush2.msra.mxu0 0.0
    %1896 = vmatprep.subr.mxu0 0.0
    %1897 = vmatpush2.msra.mxu0 0.0
    %1898 = vmatprep.subr.mxu0 0.0
    %1899 = vmatpush2.msra.mxu0 0.0
    %1900 = vmatprep.subr.mxu0 0.0
    %1901 = vmatpush2.msra.mxu0 0.0
    %1902 = vmatprep.subr.mxu0 0.0
    %1903 = vmatpush2.msra.mxu0 0.0
    %1904 = vmatprep.subr.mxu0 0.0
    %1905 = vmatpush2.msra.mxu0 0.0
    %1906 = vmatprep.mubr.f32.mxu0 0.0
    %1907 = vmatmul.mubr.f32.gmra.mxu0 %v1026
    %v1908 = vpop.f32.mrf.mxu0
    %v1909 = vadd.f32 0.0, %v1908
    %v1910 = vpop.f32.mrf.mxu0
    %1911 = vmatprep.mubr.f32.mxu0 0.0
    %1912 = vmatmul.mubr.f32.gmra.mxu0 %v1029
    %v1913 = vpop.f32.mrf.mxu0
    %v1914 = vadd.f32 0.0, %v1913
    %v1915 = vpop.f32.mrf.mxu0
    %1916 = vmatprep.mubr.f32.mxu0 0.0
    %1917 = vmatmul.mubr.f32.gmra.mxu0 %v1032
    %v1918 = vpop.f32.mrf.mxu0
    %v1919 = vadd.f32 0.0, %v1918
    %v1920 = vpop.f32.mrf.mxu0
    %1921 = vmatprep.mubr.f32.mxu0 0.0
    %1922 = vmatmul.mubr.f32.gmra.mxu0 %v1035
    %v1923 = vpop.f32.mrf.mxu0
    %v1924 = vadd.f32 0.0, %v1923
    %v1925 = vpop.f32.mrf.mxu0
    %1926 = vmatprep.mubr.f32.mxu0 0.0
    %1927 = vmatmul.mubr.f32.gmra.mxu0 %v1038
    %v1928 = vpop.f32.mrf.mxu0
    %v1929 = vadd.f32 0.0, %v1928
    %v1930 = vpop.f32.mrf.mxu0
    %1931 = vmatprep.mubr.f32.mxu0 0.0
    %1932 = vmatmul.mubr.f32.gmra.mxu0 %v1041
    %v1933 = vpop.f32.mrf.mxu0
    %v1934 = vadd.f32 0.0, %v1933
    %v1935 = vpop.f32.mrf.mxu0
    %1936 = vmatprep.mubr.f32.mxu0 0.0
    %1937 = vmatmul.mubr.f32.gmra.mxu0 %v1044
    %v1938 = vpop.f32.mrf.mxu0
    %v1939 = vadd.f32 0.0, %v1938
    %v1940 = vpop.f32.mrf.mxu0
    %1941 = vmatprep.mubr.f32.mxu0 0.0
    %1942 = vmatmul.mubr.f32.gmra.mxu0 %v1047
    %v1943 = vpop.f32.mrf.mxu0
    %v1944 = vadd.f32 0.0, %v1943
    %v1945 = vpop.f32.mrf.mxu0
    %1946 = vmatprep.mubr.f32.mxu0 0.0
    %1947 = vmatmul.mubr.f32.gmra.mxu0 %v1050
    %v1948 = vpop.f32.mrf.mxu0
    %v1949 = vadd.f32 0.0, %v1948
    %v1950 = vpop.f32.mrf.mxu0
    %1951 = vmatprep.mubr.f32.mxu0 0.0
    %1952 = vmatmul.mubr.f32.gmra.mxu0 %v1053
    %v1953 = vpop.f32.mrf.mxu0
    %v1954 = vadd.f32 0.0, %v1953
    %v1955 = vpop.f32.mrf.mxu0
    %1956 = vmatprep.mubr.f32.mxu0 0.0
    %1957 = vmatmul.mubr.f32.gmra.mxu0 %v1056
    %v1958 = vpop.f32.mrf.mxu0
    %v1959 = vadd.f32 0.0, %v1958
    %v1960 = vpop.f32.mrf.mxu0
    %1961 = vmatprep.mubr.f32.mxu0 0.0
    %1962 = vmatmul.mubr.f32.gmra.mxu0 %v1059
    %v1963 = vpop.f32.mrf.mxu0
    %v1964 = vadd.f32 0.0, %v1963
    %v1965 = vpop.f32.mrf.mxu0
    %1966 = vmatprep.mubr.f32.mxu0 0.0
    %1967 = vmatmul.mubr.f32.gmra.mxu0 %v1062
    %v1968 = vpop.f32.mrf.mxu0
    %v1969 = vadd.f32 0.0, %v1968
    %v1970 = vpop.f32.mrf.mxu0
    %1971 = vmatprep.mubr.f32.mxu0 0.0
    %1972 = vmatmul.mubr.f32.gmra.mxu0 %v1065
    %v1973 = vpop.f32.mrf.mxu0
    %v1974 = vadd.f32 0.0, %v1973
    %v1975 = vpop.f32.mrf.mxu0
    %1976 = vmatprep.mubr.f32.mxu0 0.0
    %1977 = vmatmul.mubr.f32.gmra.mxu0 %v1068
    %v1978 = vpop.f32.mrf.mxu0
    %v1979 = vadd.f32 0.0, %v1978
    %v1980 = vpop.f32.mrf.mxu0
    %1981 = vmatprep.mubr.f32.mxu0 0.0
    %1982 = vmatmul.mubr.f32.gmra.mxu0 %v1071
    %v1983 = vpop.f32.mrf.mxu0
    %v1984 = vadd.f32 0.0, %v1983
    %v1985 = vpop.f32.mrf.mxu0
    %1986 = vdwg.mxu0
    %v1987 = vadd.f32 %v1826, %v1909
    %v1988 = vadd.f32 %v1827, %v1914
    %v1989 = vadd.f32 %v1828, %v1919
    %v1990 = vadd.f32 %v1829, %v1924
    %v1991 = vadd.f32 %v1830, %v1929
    %v1992 = vadd.f32 %v1831, %v1934
    %v1993 = vadd.f32 %v1832, %v1939
    %v1994 = vadd.f32 %v1833, %v1944
    %v1995 = vadd.f32 %v1834, %v1949
    %v1996 = vadd.f32 %v1835, %v1954
    %v1997 = vadd.f32 %v1836, %v1959
    %v1998 = vadd.f32 %v1837, %v1964
    %v1999 = vadd.f32 %v1838, %v1969
    %v2000 = vadd.f32 %v1839, %v1974
    %v2001 = vadd.f32 %v1840, %v1979
    %v2002 = vadd.f32 %v1841, %v1984
    %v2003 = vtanh.pop %v1987
    %v2004 = vtanh.pop %v1988
    %v2005 = vtanh.pop %v1989
    %v2006 = vtanh.pop %v1990
    %v2007 = vtanh.pop %v1991
    %v2008 = vtanh.pop %v1992
    %v2009 = vtanh.pop %v1993
    %v2010 = vtanh.pop %v1994
    %v2011 = vtanh.pop %v1995
    %v2012 = vtanh.pop %v1996
    %v2013 = vtanh.pop %v1997
    %v2014 = vtanh.pop %v1998
    %v2015 = vtanh.pop %v1999
    %v2016 = vtanh.pop %v2000
    %v2017 = vtanh.pop %v2001
    %v2018 = vtanh.pop %v2002
    %v2019 = vmul.f32 %v2003, 0.5
    %v2020 = vmul.f32 %v2004, 0.5
    %v2021 = vmul.f32 %v2005, 0.5
    %v2022 = vmul.f32 %v2006, 0.5
    %v2023 = vadd.f32 %v2019, 0.5
    %v2024 = vadd.f32 %v2020, 0.5
    %v2025 = vadd.f32 %v2021, 0.5
    %v2026 = vadd.f32 %v2022, 0.5
    %v2027 = vmul.f32 %v2007, 0.5
    %v2028 = vmul.f32 %v2008, 0.5
    %v2029 = vmul.f32 %v2009, 0.5
    %v2030 = vmul.f32 %v2010, 0.5
    %v2031 = vadd.f32 %v2027, 0.5
    %v2032 = vadd.f32 %v2028, 0.5
    %v2033 = vadd.f32 %v2029, 0.5
    %v2034 = vadd.f32 %v2030, 0.5
    %v2035 = vmul.f32 %v2015, 0.5
    %v2036 = vmul.f32 %v2016, 0.5
    %v2037 = vmul.f32 %v2017, 0.5
    %v2038 = vmul.f32 %v2018, 0.5
    %v2039 = vadd.f32 %v2035, 0.5
    %v2040 = vadd.f32 %v2036, 0.5
    %v2041 = vadd.f32 %v2037, 0.5
    %v2042 = vadd.f32 %v2038, 0.5
    %v2043 = vmul.f32 %v2031, %v1282
    %v2044 = vmul.f32 %v2032, %v1283
    %v2045 = vmul.f32 %v2033, %v1284
    %v2046 = vmul.f32 %v2034, %v1285
    %v2047 = vmul.f32 %v2023, %v2011
    %v2048 = vmul.f32 %v2024, %v2012
    %v2049 = vmul.f32 %v2025, %v2013
    %v2050 = vmul.f32 %v2026, %v2014
    %v2051 = vadd.f32 %v2043, %v2047
    %v2052 = vadd.f32 %v2044, %v2048
    %v2053 = vadd.f32 %v2045, %v2049
    %v2054 = vadd.f32 %v2046, %v2050
    %v2055 = vtanh.pop %v2051
    %v2056 = vtanh.pop %v2052
    %v2057 = vtanh.pop %v2053
    %v2058 = vtanh.pop %v2054
    %v2059 = vmul.f32 %v2039, %v2055
    %v2060 = vmul.f32 %v2040, %v2056
    %v2061 = vmul.f32 %v2041, %v2057
    %v2062 = vmul.f32 %v2042, %v2058
    %s2063 = scalar_lea.vmem %s0, 16
    %v2064 = vld [vmem:[%s2063] sm:$0xf]
    %v2065 = vld [vmem:[%s2063 + $0x4] sm:$0xf]
    %v2066 = vunpack.c.l.bf16 %v2064
    %v2067 = vunpack.c.l.bf16 %v2065
    %2068 = vmatprep.subr.mxu0 0.0
    %2069 = vmatpush1.msra.mxu0 0.0
    %2070 = vmatprep.subr.mxu0 0.0
    %2071 = vmatpush1.msra.mxu0 0.0
    %2072 = vmatprep.subr.mxu0 0.0
    %2073 = vmatpush1.msra.mxu0 0.0
    %2074 = vmatprep.subr.mxu0 0.0
    %2075 = vmatpush1.msra.mxu0 0.0
    %2076 = vmatprep.subr.mxu0 0.0
    %2077 = vmatpush1.msra.mxu0 0.0
    %2078 = vmatprep.subr.mxu0 0.0
    %2079 = vmatpush1.msra.mxu0 0.0
    %2080 = vmatprep.subr.mxu0 0.0
    %2081 = vmatpush1.msra.mxu0 0.0
    %2082 = vmatprep.subr.mxu0 0.0
    %2083 = vmatpush1.msra.mxu0 0.0
    %2084 = vmatprep.subr.mxu0 0.0
    %2085 = vmatpush1.msra.mxu0 0.0
    %2086 = vmatprep.subr.mxu0 0.0
    %2087 = vmatpush1.msra.mxu0 0.0
    %2088 = vmatprep.subr.mxu0 0.0
    %2089 = vmatpush1.msra.mxu0 0.0
    %2090 = vmatprep.subr.mxu0 0.0
    %2091 = vmatpush1.msra.mxu0 0.0
    %2092 = vmatprep.subr.mxu0 0.0
    %2093 = vmatpush1.msra.mxu0 0.0
    %2094 = vmatprep.subr.mxu0 0.0
    %2095 = vmatpush1.msra.mxu0 0.0
    %2096 = vmatprep.subr.mxu0 0.0
    %2097 = vmatpush1.msra.mxu0 %v2067
    %2098 = vmatprep.subr.mxu0 0.0
    %2099 = vmatpush1.msra.mxu0 %v2066
    %2100 = vmatprep.subr.mxu0 0.0
    %2101 = vmatpush2.msra.mxu0 0.0
    %2102 = vmatprep.subr.mxu0 0.0
    %2103 = vmatpush2.msra.mxu0 0.0
    %2104 = vmatprep.subr.mxu0 0.0
    %2105 = vmatpush2.msra.mxu0 0.0
    %2106 = vmatprep.subr.mxu0 0.0
    %2107 = vmatpush2.msra.mxu0 0.0
    %2108 = vmatprep.subr.mxu0 0.0
    %2109 = vmatpush2.msra.mxu0 0.0
    %2110 = vmatprep.subr.mxu0 0.0
    %2111 = vmatpush2.msra.mxu0 0.0
    %2112 = vmatprep.subr.mxu0 0.0
    %2113 = vmatpush2.msra.mxu0 0.0
    %2114 = vmatprep.subr.mxu0 0.0
    %2115 = vmatpush2.msra.mxu0 0.0
    %2116 = vmatprep.subr.mxu0 0.0
    %2117 = vmatpush2.msra.mxu0 0.0
    %2118 = vmatprep.subr.mxu0 0.0
    %2119 = vmatpush2.msra.mxu0 0.0
    %2120 = vmatprep.subr.mxu0 0.0
    %2121 = vmatpush2.msra.mxu0 0.0
    %2122 = vmatprep.subr.mxu0 0.0
    %2123 = vmatpush2.msra.mxu0 0.0
    %2124 = vmatprep.subr.mxu0 0.0
    %2125 = vmatpush2.msra.mxu0 0.0
    %2126 = vmatprep.subr.mxu0 0.0
    %2127 = vmatpush2.msra.mxu0 0.0
    %2128 = vmatprep.subr.mxu0 0.0
    %2129 = vmatpush2.msra.mxu0 0.0
    %2130 = vmatprep.subr.mxu0 0.0
    %2131 = vmatpush2.msra.mxu0 0.0
    %2132 = vmatprep.mubr.f32.mxu0 0.0
    %2133 = vmatmul.mubr.f32.gmra.mxu0 %v338
    %v2134 = vpop.f32.mrf.mxu0
    %v2135 = vadd.f32 0.0, %v2134
    %v2136 = vpop.f32.mrf.mxu0
    %2137 = vmatprep.mubr.f32.mxu0 0.0
    %2138 = vmatmul.mubr.f32.gmra.mxu0 %v341
    %v2139 = vpop.f32.mrf.mxu0
    %v2140 = vadd.f32 0.0, %v2139
    %v2141 = vpop.f32.mrf.mxu0
    %2142 = vmatprep.mubr.f32.mxu0 0.0
    %2143 = vmatmul.mubr.f32.gmra.mxu0 %v344
    %v2144 = vpop.f32.mrf.mxu0
    %v2145 = vadd.f32 0.0, %v2144
    %v2146 = vpop.f32.mrf.mxu0
    %2147 = vmatprep.mubr.f32.mxu0 0.0
    %2148 = vmatmul.mubr.f32.gmra.mxu0 %v347
    %v2149 = vpop.f32.mrf.mxu0
    %v2150 = vadd.f32 0.0, %v2149
    %v2151 = vpop.f32.mrf.mxu0
    %2152 = vmatprep.mubr.f32.mxu0 0.0
    %2153 = vmatmul.mubr.f32.gmra.mxu0 %v350
    %v2154 = vpop.f32.mrf.mxu0
    %v2155 = vadd.f32 0.0, %v2154
    %v2156 = vpop.f32.mrf.mxu0
    %2157 = vmatprep.mubr.f32.mxu0 0.0
    %2158 = vmatmul.mubr.f32.gmra.mxu0 %v353
    %v2159 = vpop.f32.mrf.mxu0
    %v2160 = vadd.f32 0.0, %v2159
    %v2161 = vpop.f32.mrf.mxu0
    %2162 = vmatprep.mubr.f32.mxu0 0.0
    %2163 = vmatmul.mubr.f32.gmra.mxu0 %v356
    %v2164 = vpop.f32.mrf.mxu0
    %v2165 = vadd.f32 0.0, %v2164
    %v2166 = vpop.f32.mrf.mxu0
    %2167 = vmatprep.mubr.f32.mxu0 0.0
    %2168 = vmatmul.mubr.f32.gmra.mxu0 %v359
    %v2169 = vpop.f32.mrf.mxu0
    %v2170 = vadd.f32 0.0, %v2169
    %v2171 = vpop.f32.mrf.mxu0
    %2172 = vmatprep.mubr.f32.mxu0 0.0
    %2173 = vmatmul.mubr.f32.gmra.mxu0 %v362
    %v2174 = vpop.f32.mrf.mxu0
    %v2175 = vadd.f32 0.0, %v2174
    %v2176 = vpop.f32.mrf.mxu0
    %2177 = vmatprep.mubr.f32.mxu0 0.0
    %2178 = vmatmul.mubr.f32.gmra.mxu0 %v365
    %v2179 = vpop.f32.mrf.mxu0
    %v2180 = vadd.f32 0.0, %v2179
    %v2181 = vpop.f32.mrf.mxu0
    %2182 = vmatprep.mubr.f32.mxu0 0.0
    %2183 = vmatmul.mubr.f32.gmra.mxu0 %v368
    %v2184 = vpop.f32.mrf.mxu0
    %v2185 = vadd.f32 0.0, %v2184
    %v2186 = vpop.f32.mrf.mxu0
    %2187 = vmatprep.mubr.f32.mxu0 0.0
    %2188 = vmatmul.mubr.f32.gmra.mxu0 %v371
    %v2189 = vpop.f32.mrf.mxu0
    %v2190 = vadd.f32 0.0, %v2189
    %v2191 = vpop.f32.mrf.mxu0
    %2192 = vmatprep.mubr.f32.mxu0 0.0
    %2193 = vmatmul.mubr.f32.gmra.mxu0 %v374
    %v2194 = vpop.f32.mrf.mxu0
    %v2195 = vadd.f32 0.0, %v2194
    %v2196 = vpop.f32.mrf.mxu0
    %2197 = vmatprep.mubr.f32.mxu0 0.0
    %2198 = vmatmul.mubr.f32.gmra.mxu0 %v377
    %v2199 = vpop.f32.mrf.mxu0
    %v2200 = vadd.f32 0.0, %v2199
    %v2201 = vpop.f32.mrf.mxu0
    %2202 = vmatprep.mubr.f32.mxu0 0.0
    %2203 = vmatmul.mubr.f32.gmra.mxu0 %v380
    %v2204 = vpop.f32.mrf.mxu0
    %v2205 = vadd.f32 0.0, %v2204
    %v2206 = vpop.f32.mrf.mxu0
    %2207 = vmatprep.mubr.f32.mxu0 0.0
    %2208 = vmatmul.mubr.f32.gmra.mxu0 %v383
    %v2209 = vpop.f32.mrf.mxu0
    %v2210 = vadd.f32 0.0, %v2209
    %v2211 = vpop.f32.mrf.mxu0
    %2212 = vdwg.mxu0
    %v2213 = vadd.f32 %v143, %v2135
    %v2214 = vadd.f32 %v148, %v2140
    %v2215 = vadd.f32 %v153, %v2145
    %v2216 = vadd.f32 %v158, %v2150
    %v2217 = vadd.f32 %v163, %v2155
    %v2218 = vadd.f32 %v168, %v2160
    %v2219 = vadd.f32 %v173, %v2165
    %v2220 = vadd.f32 %v178, %v2170
    %v2221 = vadd.f32 %v183, %v2175
    %v2222 = vadd.f32 %v188, %v2180
    %v2223 = vadd.f32 %v193, %v2185
    %v2224 = vadd.f32 %v198, %v2190
    %v2225 = vadd.f32 %v203, %v2195
    %v2226 = vadd.f32 %v208, %v2200
    %v2227 = vadd.f32 %v213, %v2205
    %v2228 = vadd.f32 %v218, %v2210
    %2229 = vmatprep.subr.mxu0 0.0
    %2230 = vmatpush1.msra.mxu0 0.0
    %2231 = vmatprep.subr.mxu0 0.0
    %2232 = vmatpush1.msra.mxu0 0.0
    %2233 = vmatprep.subr.mxu0 0.0
    %2234 = vmatpush1.msra.mxu0 0.0
    %2235 = vmatprep.subr.mxu0 0.0
    %2236 = vmatpush1.msra.mxu0 0.0
    %2237 = vmatprep.subr.mxu0 0.0
    %2238 = vmatpush1.msra.mxu0 0.0
    %2239 = vmatprep.subr.mxu0 0.0
    %2240 = vmatpush1.msra.mxu0 0.0
    %2241 = vmatprep.subr.mxu0 0.0
    %2242 = vmatpush1.msra.mxu0 0.0
    %2243 = vmatprep.subr.mxu0 0.0
    %2244 = vmatpush1.msra.mxu0 0.0
    %2245 = vmatprep.subr.mxu0 0.0
    %2246 = vmatpush1.msra.mxu0 0.0
    %2247 = vmatprep.subr.mxu0 0.0
    %2248 = vmatpush1.msra.mxu0 0.0
    %2249 = vmatprep.subr.mxu0 0.0
    %2250 = vmatpush1.msra.mxu0 0.0
    %2251 = vmatprep.subr.mxu0 0.0
    %2252 = vmatpush1.msra.mxu0 0.0
    %2253 = vmatprep.subr.mxu0 0.0
    %2254 = vmatpush1.msra.mxu0 %v1680
    %2255 = vmatprep.subr.mxu0 0.0
    %2256 = vmatpush1.msra.mxu0 %v1679
    %2257 = vmatprep.subr.mxu0 0.0
    %2258 = vmatpush1.msra.mxu0 %v1678
    %2259 = vmatprep.subr.mxu0 0.0
    %2260 = vmatpush1.msra.mxu0 %v1677
    %2261 = vmatprep.subr.mxu0 0.0
    %2262 = vmatpush2.msra.mxu0 0.0
    %2263 = vmatprep.subr.mxu0 0.0
    %2264 = vmatpush2.msra.mxu0 0.0
    %2265 = vmatprep.subr.mxu0 0.0
    %2266 = vmatpush2.msra.mxu0 0.0
    %2267 = vmatprep.subr.mxu0 0.0
    %2268 = vmatpush2.msra.mxu0 0.0
    %2269 = vmatprep.subr.mxu0 0.0
    %2270 = vmatpush2.msra.mxu0 0.0
    %2271 = vmatprep.subr.mxu0 0.0
    %2272 = vmatpush2.msra.mxu0 0.0
    %2273 = vmatprep.subr.mxu0 0.0
    %2274 = vmatpush2.msra.mxu0 0.0
    %2275 = vmatprep.subr.mxu0 0.0
    %2276 = vmatpush2.msra.mxu0 0.0
    %2277 = vmatprep.subr.mxu0 0.0
    %2278 = vmatpush2.msra.mxu0 0.0
    %2279 = vmatprep.subr.mxu0 0.0
    %2280 = vmatpush2.msra.mxu0 0.0
    %2281 = vmatprep.subr.mxu0 0.0
    %2282 = vmatpush2.msra.mxu0 0.0
    %2283 = vmatprep.subr.mxu0 0.0
    %2284 = vmatpush2.msra.mxu0 0.0
    %2285 = vmatprep.subr.mxu0 0.0
    %2286 = vmatpush2.msra.mxu0 0.0
    %2287 = vmatprep.subr.mxu0 0.0
    %2288 = vmatpush2.msra.mxu0 0.0
    %2289 = vmatprep.subr.mxu0 0.0
    %2290 = vmatpush2.msra.mxu0 0.0
    %2291 = vmatprep.subr.mxu0 0.0
    %2292 = vmatpush2.msra.mxu0 0.0
    %2293 = vmatprep.mubr.f32.mxu0 0.0
    %2294 = vmatmul.mubr.f32.gmra.mxu0 %v548
    %v2295 = vpop.f32.mrf.mxu0
    %v2296 = vadd.f32 0.0, %v2295
    %v2297 = vpop.f32.mrf.mxu0
    %2298 = vmatprep.mubr.f32.mxu0 0.0
    %2299 = vmatmul.mubr.f32.gmra.mxu0 %v551
    %v2300 = vpop.f32.mrf.mxu0
    %v2301 = vadd.f32 0.0, %v2300
    %v2302 = vpop.f32.mrf.mxu0
    %2303 = vmatprep.mubr.f32.mxu0 0.0
    %2304 = vmatmul.mubr.f32.gmra.mxu0 %v554
    %v2305 = vpop.f32.mrf.mxu0
    %v2306 = vadd.f32 0.0, %v2305
    %v2307 = vpop.f32.mrf.mxu0
    %2308 = vmatprep.mubr.f32.mxu0 0.0
    %2309 = vmatmul.mubr.f32.gmra.mxu0 %v557
    %v2310 = vpop.f32.mrf.mxu0
    %v2311 = vadd.f32 0.0, %v2310
    %v2312 = vpop.f32.mrf.mxu0
    %2313 = vmatprep.mubr.f32.mxu0 0.0
    %2314 = vmatmul.mubr.f32.gmra.mxu0 %v560
    %v2315 = vpop.f32.mrf.mxu0
    %v2316 = vadd.f32 0.0, %v2315
    %v2317 = vpop.f32.mrf.mxu0
    %2318 = vmatprep.mubr.f32.mxu0 0.0
    %2319 = vmatmul.mubr.f32.gmra.mxu0 %v563
    %v2320 = vpop.f32.mrf.mxu0
    %v2321 = vadd.f32 0.0, %v2320
    %v2322 = vpop.f32.mrf.mxu0
    %2323 = vmatprep.mubr.f32.mxu0 0.0
    %2324 = vmatmul.mubr.f32.gmra.mxu0 %v566
    %v2325 = vpop.f32.mrf.mxu0
    %v2326 = vadd.f32 0.0, %v2325
    %v2327 = vpop.f32.mrf.mxu0
    %2328 = vmatprep.mubr.f32.mxu0 0.0
    %2329 = vmatmul.mubr.f32.gmra.mxu0 %v569
    %v2330 = vpop.f32.mrf.mxu0
    %v2331 = vadd.f32 0.0, %v2330
    %v2332 = vpop.f32.mrf.mxu0
    %2333 = vmatprep.mubr.f32.mxu0 0.0
    %2334 = vmatmul.mubr.f32.gmra.mxu0 %v572
    %v2335 = vpop.f32.mrf.mxu0
    %v2336 = vadd.f32 0.0, %v2335
    %v2337 = vpop.f32.mrf.mxu0
    %2338 = vmatprep.mubr.f32.mxu0 0.0
    %2339 = vmatmul.mubr.f32.gmra.mxu0 %v575
    %v2340 = vpop.f32.mrf.mxu0
    %v2341 = vadd.f32 0.0, %v2340
    %v2342 = vpop.f32.mrf.mxu0
    %2343 = vmatprep.mubr.f32.mxu0 0.0
    %2344 = vmatmul.mubr.f32.gmra.mxu0 %v578
    %v2345 = vpop.f32.mrf.mxu0
    %v2346 = vadd.f32 0.0, %v2345
    %v2347 = vpop.f32.mrf.mxu0
    %2348 = vmatprep.mubr.f32.mxu0 0.0
    %2349 = vmatmul.mubr.f32.gmra.mxu0 %v581
    %v2350 = vpop.f32.mrf.mxu0
    %v2351 = vadd.f32 0.0, %v2350
    %v2352 = vpop.f32.mrf.mxu0
    %2353 = vmatprep.mubr.f32.mxu0 0.0
    %2354 = vmatmul.mubr.f32.gmra.mxu0 %v584
    %v2355 = vpop.f32.mrf.mxu0
    %v2356 = vadd.f32 0.0, %v2355
    %v2357 = vpop.f32.mrf.mxu0
    %2358 = vmatprep.mubr.f32.mxu0 0.0
    %2359 = vmatmul.mubr.f32.gmra.mxu0 %v587
    %v2360 = vpop.f32.mrf.mxu0
    %v2361 = vadd.f32 0.0, %v2360
    %v2362 = vpop.f32.mrf.mxu0
    %2363 = vmatprep.mubr.f32.mxu0 0.0
    %2364 = vmatmul.mubr.f32.gmra.mxu0 %v590
    %v2365 = vpop.f32.mrf.mxu0
    %v2366 = vadd.f32 0.0, %v2365
    %v2367 = vpop.f32.mrf.mxu0
    %2368 = vmatprep.mubr.f32.mxu0 0.0
    %2369 = vmatmul.mubr.f32.gmra.mxu0 %v593
    %v2370 = vpop.f32.mrf.mxu0
    %v2371 = vadd.f32 0.0, %v2370
    %v2372 = vpop.f32.mrf.mxu0
    %2373 = vdwg.mxu0
    %v2374 = vadd.f32 %v2213, %v2296
    %v2375 = vadd.f32 %v2214, %v2301
    %v2376 = vadd.f32 %v2215, %v2306
    %v2377 = vadd.f32 %v2216, %v2311
    %v2378 = vadd.f32 %v2217, %v2316
    %v2379 = vadd.f32 %v2218, %v2321
    %v2380 = vadd.f32 %v2219, %v2326
    %v2381 = vadd.f32 %v2220, %v2331
    %v2382 = vadd.f32 %v2221, %v2336
    %v2383 = vadd.f32 %v2222, %v2341
    %v2384 = vadd.f32 %v2223, %v2346
    %v2385 = vadd.f32 %v2224, %v2351
    %v2386 = vadd.f32 %v2225, %v2356
    %v2387 = vadd.f32 %v2226, %v2361
    %v2388 = vadd.f32 %v2227, %v2366
    %v2389 = vadd.f32 %v2228, %v2371
    %v2390 = vtanh.pop %v2374
    %v2391 = vtanh.pop %v2375
    %v2392 = vtanh.pop %v2376
    %v2393 = vtanh.pop %v2377
    %v2394 = vtanh.pop %v2378
    %v2395 = vtanh.pop %v2379
    %v2396 = vtanh.pop %v2380
    %v2397 = vtanh.pop %v2381
    %v2398 = vtanh.pop %v2382
    %v2399 = vtanh.pop %v2383
    %v2400 = vtanh.pop %v2384
    %v2401 = vtanh.pop %v2385
    %v2402 = vtanh.pop %v2386
    %v2403 = vtanh.pop %v2387
    %v2404 = vtanh.pop %v2388
    %v2405 = vtanh.pop %v2389
    %v2406 = vmul.f32 %v2390, 0.5
    %v2407 = vmul.f32 %v2391, 0.5
    %v2408 = vmul.f32 %v2392, 0.5
    %v2409 = vmul.f32 %v2393, 0.5
    %v2410 = vadd.f32 %v2406, 0.5
    %v2411 = vadd.f32 %v2407, 0.5
    %v2412 = vadd.f32 %v2408, 0.5
    %v2413 = vadd.f32 %v2409, 0.5
    %v2414 = vmul.f32 %v2394, 0.5
    %v2415 = vmul.f32 %v2395, 0.5
    %v2416 = vmul.f32 %v2396, 0.5
    %v2417 = vmul.f32 %v2397, 0.5
    %v2418 = vadd.f32 %v2414, 0.5
    %v2419 = vadd.f32 %v2415, 0.5
    %v2420 = vadd.f32 %v2416, 0.5
    %v2421 = vadd.f32 %v2417, 0.5
    %v2422 = vmul.f32 %v2402, 0.5
    %v2423 = vmul.f32 %v2403, 0.5
    %v2424 = vmul.f32 %v2404, 0.5
    %v2425 = vmul.f32 %v2405, 0.5
    %v2426 = vadd.f32 %v2422, 0.5
    %v2427 = vadd.f32 %v2423, 0.5
    %v2428 = vadd.f32 %v2424, 0.5
    %v2429 = vadd.f32 %v2425, 0.5
    %v2430 = vmul.f32 %v2418, %v1669
    %v2431 = vmul.f32 %v2419, %v1670
    %v2432 = vmul.f32 %v2420, %v1671
    %v2433 = vmul.f32 %v2421, %v1672
    %v2434 = vmul.f32 %v2410, %v2398
    %v2435 = vmul.f32 %v2411, %v2399
    %v2436 = vmul.f32 %v2412, %v2400
    %v2437 = vmul.f32 %v2413, %v2401
    %v2438 = vadd.f32 %v2430, %v2434
    %v2439 = vadd.f32 %v2431, %v2435
    %v2440 = vadd.f32 %v2432, %v2436
    %v2441 = vadd.f32 %v2433, %v2437
    %v2442 = vtanh.pop %v2438
    %v2443 = vtanh.pop %v2439
    %v2444 = vtanh.pop %v2440
    %v2445 = vtanh.pop %v2441
    %v2446 = vmul.f32 %v2426, %v2442
    %v2447 = vmul.f32 %v2427, %v2443
    %v2448 = vmul.f32 %v2428, %v2444
    %v2449 = vmul.f32 %v2429, %v2445
    %2450 = vmatprep.subr.mxu0 0.0
    %2451 = vmatpush1.msra.mxu0 0.0
    %2452 = vmatprep.subr.mxu0 0.0
    %2453 = vmatpush1.msra.mxu0 0.0
    %2454 = vmatprep.subr.mxu0 0.0
    %2455 = vmatpush1.msra.mxu0 0.0
    %2456 = vmatprep.subr.mxu0 0.0
    %2457 = vmatpush1.msra.mxu0 0.0
    %2458 = vmatprep.subr.mxu0 0.0
    %2459 = vmatpush1.msra.mxu0 0.0
    %2460 = vmatprep.subr.mxu0 0.0
    %2461 = vmatpush1.msra.mxu0 0.0
    %2462 = vmatprep.subr.mxu0 0.0
    %2463 = vmatpush1.msra.mxu0 0.0
    %2464 = vmatprep.subr.mxu0 0.0
    %2465 = vmatpush1.msra.mxu0 0.0
    %2466 = vmatprep.subr.mxu0 0.0
    %2467 = vmatpush1.msra.mxu0 0.0
    %2468 = vmatprep.subr.mxu0 0.0
    %2469 = vmatpush1.msra.mxu0 0.0
    %2470 = vmatprep.subr.mxu0 0.0
    %2471 = vmatpush1.msra.mxu0 0.0
    %2472 = vmatprep.subr.mxu0 0.0
    %2473 = vmatpush1.msra.mxu0 0.0
    %2474 = vmatprep.subr.mxu0 0.0
    %2475 = vmatpush1.msra.mxu0 %v2449
    %2476 = vmatprep.subr.mxu0 0.0
    %2477 = vmatpush1.msra.mxu0 %v2448
    %2478 = vmatprep.subr.mxu0 0.0
    %2479 = vmatpush1.msra.mxu0 %v2447
    %2480 = vmatprep.subr.mxu0 0.0
    %2481 = vmatpush1.msra.mxu0 %v2446
    %2482 = vmatprep.subr.mxu0 0.0
    %2483 = vmatpush2.msra.mxu0 0.0
    %2484 = vmatprep.subr.mxu0 0.0
    %2485 = vmatpush2.msra.mxu0 0.0
    %2486 = vmatprep.subr.mxu0 0.0
    %2487 = vmatpush2.msra.mxu0 0.0
    %2488 = vmatprep.subr.mxu0 0.0
    %2489 = vmatpush2.msra.mxu0 0.0
    %2490 = vmatprep.subr.mxu0 0.0
    %2491 = vmatpush2.msra.mxu0 0.0
    %2492 = vmatprep.subr.mxu0 0.0
    %2493 = vmatpush2.msra.mxu0 0.0
    %2494 = vmatprep.subr.mxu0 0.0
    %2495 = vmatpush2.msra.mxu0 0.0
    %2496 = vmatprep.subr.mxu0 0.0
    %2497 = vmatpush2.msra.mxu0 0.0
    %2498 = vmatprep.subr.mxu0 0.0
    %2499 = vmatpush2.msra.mxu0 0.0
    %2500 = vmatprep.subr.mxu0 0.0
    %2501 = vmatpush2.msra.mxu0 0.0
    %2502 = vmatprep.subr.mxu0 0.0
    %2503 = vmatpush2.msra.mxu0 0.0
    %2504 = vmatprep.subr.mxu0 0.0
    %2505 = vmatpush2.msra.mxu0 0.0
    %2506 = vmatprep.subr.mxu0 0.0
    %2507 = vmatpush2.msra.mxu0 0.0
    %2508 = vmatprep.subr.mxu0 0.0
    %2509 = vmatpush2.msra.mxu0 0.0
    %2510 = vmatprep.subr.mxu0 0.0
    %2511 = vmatpush2.msra.mxu0 0.0
    %2512 = vmatprep.subr.mxu0 0.0
    %2513 = vmatpush2.msra.mxu0 0.0
    %2514 = vmatprep.mubr.f32.mxu0 0.0
    %2515 = vmatmul.mubr.f32.gmra.mxu0 %v817
    %v2516 = vpop.f32.mrf.mxu0
    %v2517 = vadd.f32 0.0, %v2516
    %v2518 = vpop.f32.mrf.mxu0
    %2519 = vmatprep.mubr.f32.mxu0 0.0
    %2520 = vmatmul.mubr.f32.gmra.mxu0 %v820
    %v2521 = vpop.f32.mrf.mxu0
    %v2522 = vadd.f32 0.0, %v2521
    %v2523 = vpop.f32.mrf.mxu0
    %2524 = vmatprep.mubr.f32.mxu0 0.0
    %2525 = vmatmul.mubr.f32.gmra.mxu0 %v823
    %v2526 = vpop.f32.mrf.mxu0
    %v2527 = vadd.f32 0.0, %v2526
    %v2528 = vpop.f32.mrf.mxu0
    %2529 = vmatprep.mubr.f32.mxu0 0.0
    %2530 = vmatmul.mubr.f32.gmra.mxu0 %v826
    %v2531 = vpop.f32.mrf.mxu0
    %v2532 = vadd.f32 0.0, %v2531
    %v2533 = vpop.f32.mrf.mxu0
    %2534 = vmatprep.mubr.f32.mxu0 0.0
    %2535 = vmatmul.mubr.f32.gmra.mxu0 %v829
    %v2536 = vpop.f32.mrf.mxu0
    %v2537 = vadd.f32 0.0, %v2536
    %v2538 = vpop.f32.mrf.mxu0
    %2539 = vmatprep.mubr.f32.mxu0 0.0
    %2540 = vmatmul.mubr.f32.gmra.mxu0 %v832
    %v2541 = vpop.f32.mrf.mxu0
    %v2542 = vadd.f32 0.0, %v2541
    %v2543 = vpop.f32.mrf.mxu0
    %2544 = vmatprep.mubr.f32.mxu0 0.0
    %2545 = vmatmul.mubr.f32.gmra.mxu0 %v835
    %v2546 = vpop.f32.mrf.mxu0
    %v2547 = vadd.f32 0.0, %v2546
    %v2548 = vpop.f32.mrf.mxu0
    %2549 = vmatprep.mubr.f32.mxu0 0.0
    %2550 = vmatmul.mubr.f32.gmra.mxu0 %v838
    %v2551 = vpop.f32.mrf.mxu0
    %v2552 = vadd.f32 0.0, %v2551
    %v2553 = vpop.f32.mrf.mxu0
    %2554 = vmatprep.mubr.f32.mxu0 0.0
    %2555 = vmatmul.mubr.f32.gmra.mxu0 %v841
    %v2556 = vpop.f32.mrf.mxu0
    %v2557 = vadd.f32 0.0, %v2556
    %v2558 = vpop.f32.mrf.mxu0
    %2559 = vmatprep.mubr.f32.mxu0 0.0
    %2560 = vmatmul.mubr.f32.gmra.mxu0 %v844
    %v2561 = vpop.f32.mrf.mxu0
    %v2562 = vadd.f32 0.0, %v2561
    %v2563 = vpop.f32.mrf.mxu0
    %2564 = vmatprep.mubr.f32.mxu0 0.0
    %2565 = vmatmul.mubr.f32.gmra.mxu0 %v847
    %v2566 = vpop.f32.mrf.mxu0
    %v2567 = vadd.f32 0.0, %v2566
    %v2568 = vpop.f32.mrf.mxu0
    %2569 = vmatprep.mubr.f32.mxu0 0.0
    %2570 = vmatmul.mubr.f32.gmra.mxu0 %v850
    %v2571 = vpop.f32.mrf.mxu0
    %v2572 = vadd.f32 0.0, %v2571
    %v2573 = vpop.f32.mrf.mxu0
    %2574 = vmatprep.mubr.f32.mxu0 0.0
    %2575 = vmatmul.mubr.f32.gmra.mxu0 %v853
    %v2576 = vpop.f32.mrf.mxu0
    %v2577 = vadd.f32 0.0, %v2576
    %v2578 = vpop.f32.mrf.mxu0
    %2579 = vmatprep.mubr.f32.mxu0 0.0
    %2580 = vmatmul.mubr.f32.gmra.mxu0 %v856
    %v2581 = vpop.f32.mrf.mxu0
    %v2582 = vadd.f32 0.0, %v2581
    %v2583 = vpop.f32.mrf.mxu0
    %2584 = vmatprep.mubr.f32.mxu0 0.0
    %2585 = vmatmul.mubr.f32.gmra.mxu0 %v859
    %v2586 = vpop.f32.mrf.mxu0
    %v2587 = vadd.f32 0.0, %v2586
    %v2588 = vpop.f32.mrf.mxu0
    %2589 = vmatprep.mubr.f32.mxu0 0.0
    %2590 = vmatmul.mubr.f32.gmra.mxu0 %v862
    %v2591 = vpop.f32.mrf.mxu0
    %v2592 = vadd.f32 0.0, %v2591
    %v2593 = vpop.f32.mrf.mxu0
    %2594 = vdwg.mxu0
    %v2595 = vadd.f32 %v239, %v2517
    %v2596 = vadd.f32 %v244, %v2522
    %v2597 = vadd.f32 %v249, %v2527
    %v2598 = vadd.f32 %v254, %v2532
    %v2599 = vadd.f32 %v259, %v2537
    %v2600 = vadd.f32 %v264, %v2542
    %v2601 = vadd.f32 %v269, %v2547
    %v2602 = vadd.f32 %v274, %v2552
    %v2603 = vadd.f32 %v279, %v2557
    %v2604 = vadd.f32 %v284, %v2562
    %v2605 = vadd.f32 %v289, %v2567
    %v2606 = vadd.f32 %v294, %v2572
    %v2607 = vadd.f32 %v299, %v2577
    %v2608 = vadd.f32 %v304, %v2582
    %v2609 = vadd.f32 %v309, %v2587
    %v2610 = vadd.f32 %v314, %v2592
    %2611 = vmatprep.subr.mxu0 0.0
    %2612 = vmatpush1.msra.mxu0 0.0
    %2613 = vmatprep.subr.mxu0 0.0
    %2614 = vmatpush1.msra.mxu0 0.0
    %2615 = vmatprep.subr.mxu0 0.0
    %2616 = vmatpush1.msra.mxu0 0.0
    %2617 = vmatprep.subr.mxu0 0.0
    %2618 = vmatpush1.msra.mxu0 0.0
    %2619 = vmatprep.subr.mxu0 0.0
    %2620 = vmatpush1.msra.mxu0 0.0
    %2621 = vmatprep.subr.mxu0 0.0
    %2622 = vmatpush1.msra.mxu0 0.0
    %2623 = vmatprep.subr.mxu0 0.0
    %2624 = vmatpush1.msra.mxu0 0.0
    %2625 = vmatprep.subr.mxu0 0.0
    %2626 = vmatpush1.msra.mxu0 0.0
    %2627 = vmatprep.subr.mxu0 0.0
    %2628 = vmatpush1.msra.mxu0 0.0
    %2629 = vmatprep.subr.mxu0 0.0
    %2630 = vmatpush1.msra.mxu0 0.0
    %2631 = vmatprep.subr.mxu0 0.0
    %2632 = vmatpush1.msra.mxu0 0.0
    %2633 = vmatprep.subr.mxu0 0.0
    %2634 = vmatpush1.msra.mxu0 0.0
    %2635 = vmatprep.subr.mxu0 0.0
    %2636 = vmatpush1.msra.mxu0 %v2062
    %2637 = vmatprep.subr.mxu0 0.0
    %2638 = vmatpush1.msra.mxu0 %v2061
    %2639 = vmatprep.subr.mxu0 0.0
    %2640 = vmatpush1.msra.mxu0 %v2060
    %2641 = vmatprep.subr.mxu0 0.0
    %2642 = vmatpush1.msra.mxu0 %v2059
    %2643 = vmatprep.subr.mxu0 0.0
    %2644 = vmatpush2.msra.mxu0 0.0
    %2645 = vmatprep.subr.mxu0 0.0
    %2646 = vmatpush2.msra.mxu0 0.0
    %2647 = vmatprep.subr.mxu0 0.0
    %2648 = vmatpush2.msra.mxu0 0.0
    %2649 = vmatprep.subr.mxu0 0.0
    %2650 = vmatpush2.msra.mxu0 0.0
    %2651 = vmatprep.subr.mxu0 0.0
    %2652 = vmatpush2.msra.mxu0 0.0
    %2653 = vmatprep.subr.mxu0 0.0
    %2654 = vmatpush2.msra.mxu0 0.0
    %2655 = vmatprep.subr.mxu0 0.0
    %2656 = vmatpush2.msra.mxu0 0.0
    %2657 = vmatprep.subr.mxu0 0.0
    %2658 = vmatpush2.msra.mxu0 0.0
    %2659 = vmatprep.subr.mxu0 0.0
    %2660 = vmatpush2.msra.mxu0 0.0
    %2661 = vmatprep.subr.mxu0 0.0
    %2662 = vmatpush2.msra.mxu0 0.0
    %2663 = vmatprep.subr.mxu0 0.0
    %2664 = vmatpush2.msra.mxu0 0.0
    %2665 = vmatprep.subr.mxu0 0.0
    %2666 = vmatpush2.msra.mxu0 0.0
    %2667 = vmatprep.subr.mxu0 0.0
    %2668 = vmatpush2.msra.mxu0 0.0
    %2669 = vmatprep.subr.mxu0 0.0
    %2670 = vmatpush2.msra.mxu0 0.0
    %2671 = vmatprep.subr.mxu0 0.0
    %2672 = vmatpush2.msra.mxu0 0.0
    %2673 = vmatprep.subr.mxu0 0.0
    %2674 = vmatpush2.msra.mxu0 0.0
    %2675 = vmatprep.mubr.f32.mxu0 0.0
    %2676 = vmatmul.mubr.f32.gmra.mxu0 %v1026
    %v2677 = vpop.f32.mrf.mxu0
    %v2678 = vadd.f32 0.0, %v2677
    %v2679 = vpop.f32.mrf.mxu0
    %2680 = vmatprep.mubr.f32.mxu0 0.0
    %2681 = vmatmul.mubr.f32.gmra.mxu0 %v1029
    %v2682 = vpop.f32.mrf.mxu0
    %v2683 = vadd.f32 0.0, %v2682
    %v2684 = vpop.f32.mrf.mxu0
    %2685 = vmatprep.mubr.f32.mxu0 0.0
    %2686 = vmatmul.mubr.f32.gmra.mxu0 %v1032
    %v2687 = vpop.f32.mrf.mxu0
    %v2688 = vadd.f32 0.0, %v2687
    %v2689 = vpop.f32.mrf.mxu0
    %2690 = vmatprep.mubr.f32.mxu0 0.0
    %2691 = vmatmul.mubr.f32.gmra.mxu0 %v1035
    %v2692 = vpop.f32.mrf.mxu0
    %v2693 = vadd.f32 0.0, %v2692
    %v2694 = vpop.f32.mrf.mxu0
    %2695 = vmatprep.mubr.f32.mxu0 0.0
    %2696 = vmatmul.mubr.f32.gmra.mxu0 %v1038
    %v2697 = vpop.f32.mrf.mxu0
    %v2698 = vadd.f32 0.0, %v2697
    %v2699 = vpop.f32.mrf.mxu0
    %2700 = vmatprep.mubr.f32.mxu0 0.0
    %2701 = vmatmul.mubr.f32.gmra.mxu0 %v1041
    %v2702 = vpop.f32.mrf.mxu0
    %v2703 = vadd.f32 0.0, %v2702
    %v2704 = vpop.f32.mrf.mxu0
    %2705 = vmatprep.mubr.f32.mxu0 0.0
    %2706 = vmatmul.mubr.f32.gmra.mxu0 %v1044
    %v2707 = vpop.f32.mrf.mxu0
    %v2708 = vadd.f32 0.0, %v2707
    %v2709 = vpop.f32.mrf.mxu0
    %2710 = vmatprep.mubr.f32.mxu0 0.0
    %2711 = vmatmul.mubr.f32.gmra.mxu0 %v1047
    %v2712 = vpop.f32.mrf.mxu0
    %v2713 = vadd.f32 0.0, %v2712
    %v2714 = vpop.f32.mrf.mxu0
    %2715 = vmatprep.mubr.f32.mxu0 0.0
    %2716 = vmatmul.mubr.f32.gmra.mxu0 %v1050
    %v2717 = vpop.f32.mrf.mxu0
    %v2718 = vadd.f32 0.0, %v2717
    %v2719 = vpop.f32.mrf.mxu0
    %2720 = vmatprep.mubr.f32.mxu0 0.0
    %2721 = vmatmul.mubr.f32.gmra.mxu0 %v1053
    %v2722 = vpop.f32.mrf.mxu0
    %v2723 = vadd.f32 0.0, %v2722
    %v2724 = vpop.f32.mrf.mxu0
    %2725 = vmatprep.mubr.f32.mxu0 0.0
    %2726 = vmatmul.mubr.f32.gmra.mxu0 %v1056
    %v2727 = vpop.f32.mrf.mxu0
    %v2728 = vadd.f32 0.0, %v2727
    %v2729 = vpop.f32.mrf.mxu0
    %2730 = vmatprep.mubr.f32.mxu0 0.0
    %2731 = vmatmul.mubr.f32.gmra.mxu0 %v1059
    %v2732 = vpop.f32.mrf.mxu0
    %v2733 = vadd.f32 0.0, %v2732
    %v2734 = vpop.f32.mrf.mxu0
    %2735 = vmatprep.mubr.f32.mxu0 0.0
    %2736 = vmatmul.mubr.f32.gmra.mxu0 %v1062
    %v2737 = vpop.f32.mrf.mxu0
    %v2738 = vadd.f32 0.0, %v2737
    %v2739 = vpop.f32.mrf.mxu0
    %2740 = vmatprep.mubr.f32.mxu0 0.0
    %2741 = vmatmul.mubr.f32.gmra.mxu0 %v1065
    %v2742 = vpop.f32.mrf.mxu0
    %v2743 = vadd.f32 0.0, %v2742
    %v2744 = vpop.f32.mrf.mxu0
    %2745 = vmatprep.mubr.f32.mxu0 0.0
    %2746 = vmatmul.mubr.f32.gmra.mxu0 %v1068
    %v2747 = vpop.f32.mrf.mxu0
    %v2748 = vadd.f32 0.0, %v2747
    %v2749 = vpop.f32.mrf.mxu0
    %2750 = vmatprep.mubr.f32.mxu0 0.0
    %2751 = vmatmul.mubr.f32.gmra.mxu0 %v1071
    %v2752 = vpop.f32.mrf.mxu0
    %v2753 = vadd.f32 0.0, %v2752
    %v2754 = vpop.f32.mrf.mxu0
    %2755 = vdwg.mxu0
    %v2756 = vadd.f32 %v2595, %v2678
    %v2757 = vadd.f32 %v2596, %v2683
    %v2758 = vadd.f32 %v2597, %v2688
    %v2759 = vadd.f32 %v2598, %v2693
    %v2760 = vadd.f32 %v2599, %v2698
    %v2761 = vadd.f32 %v2600, %v2703
    %v2762 = vadd.f32 %v2601, %v2708
    %v2763 = vadd.f32 %v2602, %v2713
    %v2764 = vadd.f32 %v2603, %v2718
    %v2765 = vadd.f32 %v2604, %v2723
    %v2766 = vadd.f32 %v2605, %v2728
    %v2767 = vadd.f32 %v2606, %v2733
    %v2768 = vadd.f32 %v2607, %v2738
    %v2769 = vadd.f32 %v2608, %v2743
    %v2770 = vadd.f32 %v2609, %v2748
    %v2771 = vadd.f32 %v2610, %v2753
    %v2772 = vtanh.pop %v2756
    %v2773 = vtanh.pop %v2757
    %v2774 = vtanh.pop %v2758
    %v2775 = vtanh.pop %v2759
    %v2776 = vtanh.pop %v2760
    %v2777 = vtanh.pop %v2761
    %v2778 = vtanh.pop %v2762
    %v2779 = vtanh.pop %v2763
    %v2780 = vtanh.pop %v2764
    %v2781 = vtanh.pop %v2765
    %v2782 = vtanh.pop %v2766
    %v2783 = vtanh.pop %v2767
    %v2784 = vtanh.pop %v2768
    %v2785 = vtanh.pop %v2769
    %v2786 = vtanh.pop %v2770
    %v2787 = vtanh.pop %v2771
    %v2788 = vmul.f32 %v2772, 0.5
    %v2789 = vmul.f32 %v2773, 0.5
    %v2790 = vmul.f32 %v2774, 0.5
    %v2791 = vmul.f32 %v2775, 0.5
    %v2792 = vadd.f32 %v2788, 0.5
    %v2793 = vadd.f32 %v2789, 0.5
    %v2794 = vadd.f32 %v2790, 0.5
    %v2795 = vadd.f32 %v2791, 0.5
    %v2796 = vmul.f32 %v2776, 0.5
    %v2797 = vmul.f32 %v2777, 0.5
    %v2798 = vmul.f32 %v2778, 0.5
    %v2799 = vmul.f32 %v2779, 0.5
    %v2800 = vadd.f32 %v2796, 0.5
    %v2801 = vadd.f32 %v2797, 0.5
    %v2802 = vadd.f32 %v2798, 0.5
    %v2803 = vadd.f32 %v2799, 0.5
    %v2804 = vmul.f32 %v2784, 0.5
    %v2805 = vmul.f32 %v2785, 0.5
    %v2806 = vmul.f32 %v2786, 0.5
    %v2807 = vmul.f32 %v2787, 0.5
    %v2808 = vadd.f32 %v2804, 0.5
    %v2809 = vadd.f32 %v2805, 0.5
    %v2810 = vadd.f32 %v2806, 0.5
    %v2811 = vadd.f32 %v2807, 0.5
    %v2812 = vmul.f32 %v2800, %v2051
    %v2813 = vmul.f32 %v2801, %v2052
    %v2814 = vmul.f32 %v2802, %v2053
    %v2815 = vmul.f32 %v2803, %v2054
    %v2816 = vmul.f32 %v2792, %v2780
    %v2817 = vmul.f32 %v2793, %v2781
    %v2818 = vmul.f32 %v2794, %v2782
    %v2819 = vmul.f32 %v2795, %v2783
    %v2820 = vadd.f32 %v2812, %v2816
    %v2821 = vadd.f32 %v2813, %v2817
    %v2822 = vadd.f32 %v2814, %v2818
    %v2823 = vadd.f32 %v2815, %v2819
    %v2824 = vtanh.pop %v2820
    %v2825 = vtanh.pop %v2821
    %v2826 = vtanh.pop %v2822
    %v2827 = vtanh.pop %v2823
    %v2828 = vmul.f32 %v2808, %v2824
    %v2829 = vmul.f32 %v2809, %v2825
    %v2830 = vmul.f32 %v2810, %v2826
    %v2831 = vmul.f32 %v2811, %v2827
    %s2832 = scalar_lea.vmem %s0, 24
    %v2833 = vld [vmem:[%s2832] sm:$0xf]
    %v2834 = vld [vmem:[%s2832 + $0x4] sm:$0xf]
    %v2835 = vunpack.c.l.bf16 %v2833
    %v2836 = vunpack.c.l.bf16 %v2834
    %2837 = vmatprep.subr.mxu0 0.0
    %2838 = vmatpush1.msra.mxu0 0.0
    %2839 = vmatprep.subr.mxu0 0.0
    %2840 = vmatpush1.msra.mxu0 0.0
    %2841 = vmatprep.subr.mxu0 0.0
    %2842 = vmatpush1.msra.mxu0 0.0
    %2843 = vmatprep.subr.mxu0 0.0
    %2844 = vmatpush1.msra.mxu0 0.0
    %2845 = vmatprep.subr.mxu0 0.0
    %2846 = vmatpush1.msra.mxu0 0.0
    %2847 = vmatprep.subr.mxu0 0.0
    %2848 = vmatpush1.msra.mxu0 0.0
    %2849 = vmatprep.subr.mxu0 0.0
    %2850 = vmatpush1.msra.mxu0 0.0
    %2851 = vmatprep.subr.mxu0 0.0
    %2852 = vmatpush1.msra.mxu0 0.0
    %2853 = vmatprep.subr.mxu0 0.0
    %2854 = vmatpush1.msra.mxu0 0.0
    %2855 = vmatprep.subr.mxu0 0.0
    %2856 = vmatpush1.msra.mxu0 0.0
    %2857 = vmatprep.subr.mxu0 0.0
    %2858 = vmatpush1.msra.mxu0 0.0
    %2859 = vmatprep.subr.mxu0 0.0
    %2860 = vmatpush1.msra.mxu0 0.0
    %2861 = vmatprep.subr.mxu0 0.0
    %2862 = vmatpush1.msra.mxu0 0.0
    %2863 = vmatprep.subr.mxu0 0.0
    %2864 = vmatpush1.msra.mxu0 0.0
    %2865 = vmatprep.subr.mxu0 0.0
    %2866 = vmatpush1.msra.mxu0 %v2836
    %2867 = vmatprep.subr.mxu0 0.0
    %2868 = vmatpush1.msra.mxu0 %v2835
    %2869 = vmatprep.subr.mxu0 0.0
    %2870 = vmatpush2.msra.mxu0 0.0
    %2871 = vmatprep.subr.mxu0 0.0
    %2872 = vmatpush2.msra.mxu0 0.0
    %2873 = vmatprep.subr.mxu0 0.0
    %2874 = vmatpush2.msra.mxu0 0.0
    %2875 = vmatprep.subr.mxu0 0.0
    %2876 = vmatpush2.msra.mxu0 0.0
    %2877 = vmatprep.subr.mxu0 0.0
    %2878 = vmatpush2.msra.mxu0 0.0
    %2879 = vmatprep.subr.mxu0 0.0
    %2880 = vmatpush2.msra.mxu0 0.0
    %2881 = vmatprep.subr.mxu0 0.0
    %2882 = vmatpush2.msra.mxu0 0.0
    %2883 = vmatprep.subr.mxu0 0.0
    %2884 = vmatpush2.msra.mxu0 0.0
    %2885 = vmatprep.subr.mxu0 0.0
    %2886 = vmatpush2.msra.mxu0 0.0
    %2887 = vmatprep.subr.mxu0 0.0
    %2888 = vmatpush2.msra.mxu0 0.0
    %2889 = vmatprep.subr.mxu0 0.0
    %2890 = vmatpush2.msra.mxu0 0.0
    %2891 = vmatprep.subr.mxu0 0.0
    %2892 = vmatpush2.msra.mxu0 0.0
    %2893 = vmatprep.subr.mxu0 0.0
    %2894 = vmatpush2.msra.mxu0 0.0
    %2895 = vmatprep.subr.mxu0 0.0
    %2896 = vmatpush2.msra.mxu0 0.0
    %2897 = vmatprep.subr.mxu0 0.0
    %2898 = vmatpush2.msra.mxu0 0.0
    %2899 = vmatprep.subr.mxu0 0.0
    %2900 = vmatpush2.msra.mxu0 0.0
    %2901 = vmatprep.mubr.f32.mxu0 0.0
    %2902 = vmatmul.mubr.f32.gmra.mxu0 %v338
    %v2903 = vpop.f32.mrf.mxu0
    %v2904 = vadd.f32 0.0, %v2903
    %v2905 = vpop.f32.mrf.mxu0
    %2906 = vmatprep.mubr.f32.mxu0 0.0
    %2907 = vmatmul.mubr.f32.gmra.mxu0 %v341
    %v2908 = vpop.f32.mrf.mxu0
    %v2909 = vadd.f32 0.0, %v2908
    %v2910 = vpop.f32.mrf.mxu0
    %2911 = vmatprep.mubr.f32.mxu0 0.0
    %2912 = vmatmul.mubr.f32.gmra.mxu0 %v344
    %v2913 = vpop.f32.mrf.mxu0
    %v2914 = vadd.f32 0.0, %v2913
    %v2915 = vpop.f32.mrf.mxu0
    %2916 = vmatprep.mubr.f32.mxu0 0.0
    %2917 = vmatmul.mubr.f32.gmra.mxu0 %v347
    %v2918 = vpop.f32.mrf.mxu0
    %v2919 = vadd.f32 0.0, %v2918
    %v2920 = vpop.f32.mrf.mxu0
    %2921 = vmatprep.mubr.f32.mxu0 0.0
    %2922 = vmatmul.mubr.f32.gmra.mxu0 %v350
    %v2923 = vpop.f32.mrf.mxu0
    %v2924 = vadd.f32 0.0, %v2923
    %v2925 = vpop.f32.mrf.mxu0
    %2926 = vmatprep.mubr.f32.mxu0 0.0
    %2927 = vmatmul.mubr.f32.gmra.mxu0 %v353
    %v2928 = vpop.f32.mrf.mxu0
    %v2929 = vadd.f32 0.0, %v2928
    %v2930 = vpop.f32.mrf.mxu0
    %2931 = vmatprep.mubr.f32.mxu0 0.0
    %2932 = vmatmul.mubr.f32.gmra.mxu0 %v356
    %v2933 = vpop.f32.mrf.mxu0
    %v2934 = vadd.f32 0.0, %v2933
    %v2935 = vpop.f32.mrf.mxu0
    %2936 = vmatprep.mubr.f32.mxu0 0.0
    %2937 = vmatmul.mubr.f32.gmra.mxu0 %v359
    %v2938 = vpop.f32.mrf.mxu0
    %v2939 = vadd.f32 0.0, %v2938
    %v2940 = vpop.f32.mrf.mxu0
    %2941 = vmatprep.mubr.f32.mxu0 0.0
    %2942 = vmatmul.mubr.f32.gmra.mxu0 %v362
    %v2943 = vpop.f32.mrf.mxu0
    %v2944 = vadd.f32 0.0, %v2943
    %v2945 = vpop.f32.mrf.mxu0
    %2946 = vmatprep.mubr.f32.mxu0 0.0
    %2947 = vmatmul.mubr.f32.gmra.mxu0 %v365
    %v2948 = vpop.f32.mrf.mxu0
    %v2949 = vadd.f32 0.0, %v2948
    %v2950 = vpop.f32.mrf.mxu0
    %2951 = vmatprep.mubr.f32.mxu0 0.0
    %2952 = vmatmul.mubr.f32.gmra.mxu0 %v368
    %v2953 = vpop.f32.mrf.mxu0
    %v2954 = vadd.f32 0.0, %v2953
    %v2955 = vpop.f32.mrf.mxu0
    %2956 = vmatprep.mubr.f32.mxu0 0.0
    %2957 = vmatmul.mubr.f32.gmra.mxu0 %v371
    %v2958 = vpop.f32.mrf.mxu0
    %v2959 = vadd.f32 0.0, %v2958
    %v2960 = vpop.f32.mrf.mxu0
    %2961 = vmatprep.mubr.f32.mxu0 0.0
    %2962 = vmatmul.mubr.f32.gmra.mxu0 %v374
    %v2963 = vpop.f32.mrf.mxu0
    %v2964 = vadd.f32 0.0, %v2963
    %v2965 = vpop.f32.mrf.mxu0
    %2966 = vmatprep.mubr.f32.mxu0 0.0
    %2967 = vmatmul.mubr.f32.gmra.mxu0 %v377
    %v2968 = vpop.f32.mrf.mxu0
    %v2969 = vadd.f32 0.0, %v2968
    %v2970 = vpop.f32.mrf.mxu0
    %2971 = vmatprep.mubr.f32.mxu0 0.0
    %2972 = vmatmul.mubr.f32.gmra.mxu0 %v380
    %v2973 = vpop.f32.mrf.mxu0
    %v2974 = vadd.f32 0.0, %v2973
    %v2975 = vpop.f32.mrf.mxu0
    %2976 = vmatprep.mubr.f32.mxu0 0.0
    %2977 = vmatmul.mubr.f32.gmra.mxu0 %v383
    %v2978 = vpop.f32.mrf.mxu0
    %v2979 = vadd.f32 0.0, %v2978
    %v2980 = vpop.f32.mrf.mxu0
    %2981 = vdwg.mxu0
    %v2982 = vadd.f32 %v143, %v2904
    %v2983 = vadd.f32 %v148, %v2909
    %v2984 = vadd.f32 %v153, %v2914
    %v2985 = vadd.f32 %v158, %v2919
    %v2986 = vadd.f32 %v163, %v2924
    %v2987 = vadd.f32 %v168, %v2929
    %v2988 = vadd.f32 %v173, %v2934
    %v2989 = vadd.f32 %v178, %v2939
    %v2990 = vadd.f32 %v183, %v2944
    %v2991 = vadd.f32 %v188, %v2949
    %v2992 = vadd.f32 %v193, %v2954
    %v2993 = vadd.f32 %v198, %v2959
    %v2994 = vadd.f32 %v203, %v2964
    %v2995 = vadd.f32 %v208, %v2969
    %v2996 = vadd.f32 %v213, %v2974
    %v2997 = vadd.f32 %v218, %v2979
    %2998 = vmatprep.subr.mxu0 0.0
    %2999 = vmatpush1.msra.mxu0 0.0
    %3000 = vmatprep.subr.mxu0 0.0
    %3001 = vmatpush1.msra.mxu0 0.0
    %3002 = vmatprep.subr.mxu0 0.0
    %3003 = vmatpush1.msra.mxu0 0.0
    %3004 = vmatprep.subr.mxu0 0.0
    %3005 = vmatpush1.msra.mxu0 0.0
    %3006 = vmatprep.subr.mxu0 0.0
    %3007 = vmatpush1.msra.mxu0 0.0
    %3008 = vmatprep.subr.mxu0 0.0
    %3009 = vmatpush1.msra.mxu0 0.0
    %3010 = vmatprep.subr.mxu0 0.0
    %3011 = vmatpush1.msra.mxu0 0.0
    %3012 = vmatprep.subr.mxu0 0.0
    %3013 = vmatpush1.msra.mxu0 0.0
    %3014 = vmatprep.subr.mxu0 0.0
    %3015 = vmatpush1.msra.mxu0 0.0
    %3016 = vmatprep.subr.mxu0 0.0
    %3017 = vmatpush1.msra.mxu0 0.0
    %3018 = vmatprep.subr.mxu0 0.0
    %3019 = vmatpush1.msra.mxu0 0.0
    %3020 = vmatprep.subr.mxu0 0.0
    %3021 = vmatpush1.msra.mxu0 0.0
    %3022 = vmatprep.subr.mxu0 0.0
    %3023 = vmatpush1.msra.mxu0 %v2449
    %3024 = vmatprep.subr.mxu0 0.0
    %3025 = vmatpush1.msra.mxu0 %v2448
    %3026 = vmatprep.subr.mxu0 0.0
    %3027 = vmatpush1.msra.mxu0 %v2447
    %3028 = vmatprep.subr.mxu0 0.0
    %3029 = vmatpush1.msra.mxu0 %v2446
    %3030 = vmatprep.subr.mxu0 0.0
    %3031 = vmatpush2.msra.mxu0 0.0
    %3032 = vmatprep.subr.mxu0 0.0
    %3033 = vmatpush2.msra.mxu0 0.0
    %3034 = vmatprep.subr.mxu0 0.0
    %3035 = vmatpush2.msra.mxu0 0.0
    %3036 = vmatprep.subr.mxu0 0.0
    %3037 = vmatpush2.msra.mxu0 0.0
    %3038 = vmatprep.subr.mxu0 0.0
    %3039 = vmatpush2.msra.mxu0 0.0
    %3040 = vmatprep.subr.mxu0 0.0
    %3041 = vmatpush2.msra.mxu0 0.0
    %3042 = vmatprep.subr.mxu0 0.0
    %3043 = vmatpush2.msra.mxu0 0.0
    %3044 = vmatprep.subr.mxu0 0.0
    %3045 = vmatpush2.msra.mxu0 0.0
    %3046 = vmatprep.subr.mxu0 0.0
    %3047 = vmatpush2.msra.mxu0 0.0
    %3048 = vmatprep.subr.mxu0 0.0
    %3049 = vmatpush2.msra.mxu0 0.0
    %3050 = vmatprep.subr.mxu0 0.0
    %3051 = vmatpush2.msra.mxu0 0.0
    %3052 = vmatprep.subr.mxu0 0.0
    %3053 = vmatpush2.msra.mxu0 0.0
    %3054 = vmatprep.subr.mxu0 0.0
    %3055 = vmatpush2.msra.mxu0 0.0
    %3056 = vmatprep.subr.mxu0 0.0
    %3057 = vmatpush2.msra.mxu0 0.0
    %3058 = vmatprep.subr.mxu0 0.0
    %3059 = vmatpush2.msra.mxu0 0.0
    %3060 = vmatprep.subr.mxu0 0.0
    %3061 = vmatpush2.msra.mxu0 0.0
    %3062 = vmatprep.mubr.f32.mxu0 0.0
    %3063 = vmatmul.mubr.f32.gmra.mxu0 %v548
    %v3064 = vpop.f32.mrf.mxu0
    %v3065 = vadd.f32 0.0, %v3064
    %v3066 = vpop.f32.mrf.mxu0
    %3067 = vmatprep.mubr.f32.mxu0 0.0
    %3068 = vmatmul.mubr.f32.gmra.mxu0 %v551
    %v3069 = vpop.f32.mrf.mxu0
    %v3070 = vadd.f32 0.0, %v3069
    %v3071 = vpop.f32.mrf.mxu0
    %3072 = vmatprep.mubr.f32.mxu0 0.0
    %3073 = vmatmul.mubr.f32.gmra.mxu0 %v554
    %v3074 = vpop.f32.mrf.mxu0
    %v3075 = vadd.f32 0.0, %v3074
    %v3076 = vpop.f32.mrf.mxu0
    %3077 = vmatprep.mubr.f32.mxu0 0.0
    %3078 = vmatmul.mubr.f32.gmra.mxu0 %v557
    %v3079 = vpop.f32.mrf.mxu0
    %v3080 = vadd.f32 0.0, %v3079
    %v3081 = vpop.f32.mrf.mxu0
    %3082 = vmatprep.mubr.f32.mxu0 0.0
    %3083 = vmatmul.mubr.f32.gmra.mxu0 %v560
    %v3084 = vpop.f32.mrf.mxu0
    %v3085 = vadd.f32 0.0, %v3084
    %v3086 = vpop.f32.mrf.mxu0
    %3087 = vmatprep.mubr.f32.mxu0 0.0
    %3088 = vmatmul.mubr.f32.gmra.mxu0 %v563
    %v3089 = vpop.f32.mrf.mxu0
    %v3090 = vadd.f32 0.0, %v3089
    %v3091 = vpop.f32.mrf.mxu0
    %3092 = vmatprep.mubr.f32.mxu0 0.0
    %3093 = vmatmul.mubr.f32.gmra.mxu0 %v566
    %v3094 = vpop.f32.mrf.mxu0
    %v3095 = vadd.f32 0.0, %v3094
    %v3096 = vpop.f32.mrf.mxu0
    %3097 = vmatprep.mubr.f32.mxu0 0.0
    %3098 = vmatmul.mubr.f32.gmra.mxu0 %v569
    %v3099 = vpop.f32.mrf.mxu0
    %v3100 = vadd.f32 0.0, %v3099
    %v3101 = vpop.f32.mrf.mxu0
    %3102 = vmatprep.mubr.f32.mxu0 0.0
    %3103 = vmatmul.mubr.f32.gmra.mxu0 %v572
    %v3104 = vpop.f32.mrf.mxu0
    %v3105 = vadd.f32 0.0, %v3104
    %v3106 = vpop.f32.mrf.mxu0
    %3107 = vmatprep.mubr.f32.mxu0 0.0
    %3108 = vmatmul.mubr.f32.gmra.mxu0 %v575
    %v3109 = vpop.f32.mrf.mxu0
    %v3110 = vadd.f32 0.0, %v3109
    %v3111 = vpop.f32.mrf.mxu0
    %3112 = vmatprep.mubr.f32.mxu0 0.0
    %3113 = vmatmul.mubr.f32.gmra.mxu0 %v578
    %v3114 = vpop.f32.mrf.mxu0
    %v3115 = vadd.f32 0.0, %v3114
    %v3116 = vpop.f32.mrf.mxu0
    %3117 = vmatprep.mubr.f32.mxu0 0.0
    %3118 = vmatmul.mubr.f32.gmra.mxu0 %v581
    %v3119 = vpop.f32.mrf.mxu0
    %v3120 = vadd.f32 0.0, %v3119
    %v3121 = vpop.f32.mrf.mxu0
    %3122 = vmatprep.mubr.f32.mxu0 0.0
    %3123 = vmatmul.mubr.f32.gmra.mxu0 %v584
    %v3124 = vpop.f32.mrf.mxu0
    %v3125 = vadd.f32 0.0, %v3124
    %v3126 = vpop.f32.mrf.mxu0
    %3127 = vmatprep.mubr.f32.mxu0 0.0
    %3128 = vmatmul.mubr.f32.gmra.mxu0 %v587
    %v3129 = vpop.f32.mrf.mxu0
    %v3130 = vadd.f32 0.0, %v3129
    %v3131 = vpop.f32.mrf.mxu0
    %3132 = vmatprep.mubr.f32.mxu0 0.0
    %3133 = vmatmul.mubr.f32.gmra.mxu0 %v590
    %v3134 = vpop.f32.mrf.mxu0
    %v3135 = vadd.f32 0.0, %v3134
    %v3136 = vpop.f32.mrf.mxu0
    %3137 = vmatprep.mubr.f32.mxu0 0.0
    %3138 = vmatmul.mubr.f32.gmra.mxu0 %v593
    %v3139 = vpop.f32.mrf.mxu0
    %v3140 = vadd.f32 0.0, %v3139
    %v3141 = vpop.f32.mrf.mxu0
    %3142 = vdwg.mxu0
    %v3143 = vadd.f32 %v2982, %v3065
    %v3144 = vadd.f32 %v2983, %v3070
    %v3145 = vadd.f32 %v2984, %v3075
    %v3146 = vadd.f32 %v2985, %v3080
    %v3147 = vadd.f32 %v2986, %v3085
    %v3148 = vadd.f32 %v2987, %v3090
    %v3149 = vadd.f32 %v2988, %v3095
    %v3150 = vadd.f32 %v2989, %v3100
    %v3151 = vadd.f32 %v2990, %v3105
    %v3152 = vadd.f32 %v2991, %v3110
    %v3153 = vadd.f32 %v2992, %v3115
    %v3154 = vadd.f32 %v2993, %v3120
    %v3155 = vadd.f32 %v2994, %v3125
    %v3156 = vadd.f32 %v2995, %v3130
    %v3157 = vadd.f32 %v2996, %v3135
    %v3158 = vadd.f32 %v2997, %v3140
    %v3159 = vtanh.pop %v3143
    %v3160 = vtanh.pop %v3144
    %v3161 = vtanh.pop %v3145
    %v3162 = vtanh.pop %v3146
    %v3163 = vtanh.pop %v3147
    %v3164 = vtanh.pop %v3148
    %v3165 = vtanh.pop %v3149
    %v3166 = vtanh.pop %v3150
    %v3167 = vtanh.pop %v3151
    %v3168 = vtanh.pop %v3152
    %v3169 = vtanh.pop %v3153
    %v3170 = vtanh.pop %v3154
    %v3171 = vtanh.pop %v3155
    %v3172 = vtanh.pop %v3156
    %v3173 = vtanh.pop %v3157
    %v3174 = vtanh.pop %v3158
    %v3175 = vmul.f32 %v3159, 0.5
    %v3176 = vmul.f32 %v3160, 0.5
    %v3177 = vmul.f32 %v3161, 0.5
    %v3178 = vmul.f32 %v3162, 0.5
    %v3179 = vadd.f32 %v3175, 0.5
    %v3180 = vadd.f32 %v3176, 0.5
    %v3181 = vadd.f32 %v3177, 0.5
    %v3182 = vadd.f32 %v3178, 0.5
    %v3183 = vmul.f32 %v3163, 0.5
    %v3184 = vmul.f32 %v3164, 0.5
    %v3185 = vmul.f32 %v3165, 0.5
    %v3186 = vmul.f32 %v3166, 0.5
    %v3187 = vadd.f32 %v3183, 0.5
    %v3188 = vadd.f32 %v3184, 0.5
    %v3189 = vadd.f32 %v3185, 0.5
    %v3190 = vadd.f32 %v3186, 0.5
    %v3191 = vmul.f32 %v3171, 0.5
    %v3192 = vmul.f32 %v3172, 0.5
    %v3193 = vmul.f32 %v3173, 0.5
    %v3194 = vmul.f32 %v3174, 0.5
    %v3195 = vadd.f32 %v3191, 0.5
    %v3196 = vadd.f32 %v3192, 0.5
    %v3197 = vadd.f32 %v3193, 0.5
    %v3198 = vadd.f32 %v3194, 0.5
    %v3199 = vmul.f32 %v3187, %v2438
    %v3200 = vmul.f32 %v3188, %v2439
    %v3201 = vmul.f32 %v3189, %v2440
    %v3202 = vmul.f32 %v3190, %v2441
    %v3203 = vmul.f32 %v3179, %v3167
    %v3204 = vmul.f32 %v3180, %v3168
    %v3205 = vmul.f32 %v3181, %v3169
    %v3206 = vmul.f32 %v3182, %v3170
    %v3207 = vadd.f32 %v3199, %v3203
    %v3208 = vadd.f32 %v3200, %v3204
    %v3209 = vadd.f32 %v3201, %v3205
    %v3210 = vadd.f32 %v3202, %v3206
    %v3211 = vtanh.pop %v3207
    %v3212 = vtanh.pop %v3208
    %v3213 = vtanh.pop %v3209
    %v3214 = vtanh.pop %v3210
    %v3215 = vmul.f32 %v3195, %v3211
    %v3216 = vmul.f32 %v3196, %v3212
    %v3217 = vmul.f32 %v3197, %v3213
    %v3218 = vmul.f32 %v3198, %v3214
    %3219 = vmatprep.subr.mxu0 0.0
    %3220 = vmatpush1.msra.mxu0 0.0
    %3221 = vmatprep.subr.mxu0 0.0
    %3222 = vmatpush1.msra.mxu0 0.0
    %3223 = vmatprep.subr.mxu0 0.0
    %3224 = vmatpush1.msra.mxu0 0.0
    %3225 = vmatprep.subr.mxu0 0.0
    %3226 = vmatpush1.msra.mxu0 0.0
    %3227 = vmatprep.subr.mxu0 0.0
    %3228 = vmatpush1.msra.mxu0 0.0
    %3229 = vmatprep.subr.mxu0 0.0
    %3230 = vmatpush1.msra.mxu0 0.0
    %3231 = vmatprep.subr.mxu0 0.0
    %3232 = vmatpush1.msra.mxu0 0.0
    %3233 = vmatprep.subr.mxu0 0.0
    %3234 = vmatpush1.msra.mxu0 0.0
    %3235 = vmatprep.subr.mxu0 0.0
    %3236 = vmatpush1.msra.mxu0 0.0
    %3237 = vmatprep.subr.mxu0 0.0
    %3238 = vmatpush1.msra.mxu0 0.0
    %3239 = vmatprep.subr.mxu0 0.0
    %3240 = vmatpush1.msra.mxu0 0.0
    %3241 = vmatprep.subr.mxu0 0.0
    %3242 = vmatpush1.msra.mxu0 0.0
    %3243 = vmatprep.subr.mxu0 0.0
    %3244 = vmatpush1.msra.mxu0 %v3218
    %3245 = vmatprep.subr.mxu0 0.0
    %3246 = vmatpush1.msra.mxu0 %v3217
    %3247 = vmatprep.subr.mxu0 0.0
    %3248 = vmatpush1.msra.mxu0 %v3216
    %3249 = vmatprep.subr.mxu0 0.0
    %3250 = vmatpush1.msra.mxu0 %v3215
    %3251 = vmatprep.subr.mxu0 0.0
    %3252 = vmatpush2.msra.mxu0 0.0
    %3253 = vmatprep.subr.mxu0 0.0
    %3254 = vmatpush2.msra.mxu0 0.0
    %3255 = vmatprep.subr.mxu0 0.0
    %3256 = vmatpush2.msra.mxu0 0.0
    %3257 = vmatprep.subr.mxu0 0.0
    %3258 = vmatpush2.msra.mxu0 0.0
    %3259 = vmatprep.subr.mxu0 0.0
    %3260 = vmatpush2.msra.mxu0 0.0
    %3261 = vmatprep.subr.mxu0 0.0
    %3262 = vmatpush2.msra.mxu0 0.0
    %3263 = vmatprep.subr.mxu0 0.0
    %3264 = vmatpush2.msra.mxu0 0.0
    %3265 = vmatprep.subr.mxu0 0.0
    %3266 = vmatpush2.msra.mxu0 0.0
    %3267 = vmatprep.subr.mxu0 0.0
    %3268 = vmatpush2.msra.mxu0 0.0
    %3269 = vmatprep.subr.mxu0 0.0
    %3270 = vmatpush2.msra.mxu0 0.0
    %3271 = vmatprep.subr.mxu0 0.0
    %3272 = vmatpush2.msra.mxu0 0.0
    %3273 = vmatprep.subr.mxu0 0.0
    %3274 = vmatpush2.msra.mxu0 0.0
    %3275 = vmatprep.subr.mxu0 0.0
    %3276 = vmatpush2.msra.mxu0 0.0
    %3277 = vmatprep.subr.mxu0 0.0
    %3278 = vmatpush2.msra.mxu0 0.0
    %3279 = vmatprep.subr.mxu0 0.0
    %3280 = vmatpush2.msra.mxu0 0.0
    %3281 = vmatprep.subr.mxu0 0.0
    %3282 = vmatpush2.msra.mxu0 0.0
    %3283 = vmatprep.mubr.f32.mxu0 0.0
    %3284 = vmatmul.mubr.f32.gmra.mxu0 %v817
    %v3285 = vpop.f32.mrf.mxu0
    %v3286 = vadd.f32 0.0, %v3285
    %v3287 = vpop.f32.mrf.mxu0
    %3288 = vmatprep.mubr.f32.mxu0 0.0
    %3289 = vmatmul.mubr.f32.gmra.mxu0 %v820
    %v3290 = vpop.f32.mrf.mxu0
    %v3291 = vadd.f32 0.0, %v3290
    %v3292 = vpop.f32.mrf.mxu0
    %3293 = vmatprep.mubr.f32.mxu0 0.0
    %3294 = vmatmul.mubr.f32.gmra.mxu0 %v823
    %v3295 = vpop.f32.mrf.mxu0
    %v3296 = vadd.f32 0.0, %v3295
    %v3297 = vpop.f32.mrf.mxu0
    %3298 = vmatprep.mubr.f32.mxu0 0.0
    %3299 = vmatmul.mubr.f32.gmra.mxu0 %v826
    %v3300 = vpop.f32.mrf.mxu0
    %v3301 = vadd.f32 0.0, %v3300
    %v3302 = vpop.f32.mrf.mxu0
    %3303 = vmatprep.mubr.f32.mxu0 0.0
    %3304 = vmatmul.mubr.f32.gmra.mxu0 %v829
    %v3305 = vpop.f32.mrf.mxu0
    %v3306 = vadd.f32 0.0, %v3305
    %v3307 = vpop.f32.mrf.mxu0
    %3308 = vmatprep.mubr.f32.mxu0 0.0
    %3309 = vmatmul.mubr.f32.gmra.mxu0 %v832
    %v3310 = vpop.f32.mrf.mxu0
    %v3311 = vadd.f32 0.0, %v3310
    %v3312 = vpop.f32.mrf.mxu0
    %3313 = vmatprep.mubr.f32.mxu0 0.0
    %3314 = vmatmul.mubr.f32.gmra.mxu0 %v835
    %v3315 = vpop.f32.mrf.mxu0
    %v3316 = vadd.f32 0.0, %v3315
    %v3317 = vpop.f32.mrf.mxu0
    %3318 = vmatprep.mubr.f32.mxu0 0.0
    %3319 = vmatmul.mubr.f32.gmra.mxu0 %v838
    %v3320 = vpop.f32.mrf.mxu0
    %v3321 = vadd.f32 0.0, %v3320
    %v3322 = vpop.f32.mrf.mxu0
    %3323 = vmatprep.mubr.f32.mxu0 0.0
    %3324 = vmatmul.mubr.f32.gmra.mxu0 %v841
    %v3325 = vpop.f32.mrf.mxu0
    %v3326 = vadd.f32 0.0, %v3325
    %v3327 = vpop.f32.mrf.mxu0
    %3328 = vmatprep.mubr.f32.mxu0 0.0
    %3329 = vmatmul.mubr.f32.gmra.mxu0 %v844
    %v3330 = vpop.f32.mrf.mxu0
    %v3331 = vadd.f32 0.0, %v3330
    %v3332 = vpop.f32.mrf.mxu0
    %3333 = vmatprep.mubr.f32.mxu0 0.0
    %3334 = vmatmul.mubr.f32.gmra.mxu0 %v847
    %v3335 = vpop.f32.mrf.mxu0
    %v3336 = vadd.f32 0.0, %v3335
    %v3337 = vpop.f32.mrf.mxu0
    %3338 = vmatprep.mubr.f32.mxu0 0.0
    %3339 = vmatmul.mubr.f32.gmra.mxu0 %v850
    %v3340 = vpop.f32.mrf.mxu0
    %v3341 = vadd.f32 0.0, %v3340
    %v3342 = vpop.f32.mrf.mxu0
    %3343 = vmatprep.mubr.f32.mxu0 0.0
    %3344 = vmatmul.mubr.f32.gmra.mxu0 %v853
    %v3345 = vpop.f32.mrf.mxu0
    %v3346 = vadd.f32 0.0, %v3345
    %v3347 = vpop.f32.mrf.mxu0
    %3348 = vmatprep.mubr.f32.mxu0 0.0
    %3349 = vmatmul.mubr.f32.gmra.mxu0 %v856
    %v3350 = vpop.f32.mrf.mxu0
    %v3351 = vadd.f32 0.0, %v3350
    %v3352 = vpop.f32.mrf.mxu0
    %3353 = vmatprep.mubr.f32.mxu0 0.0
    %3354 = vmatmul.mubr.f32.gmra.mxu0 %v859
    %v3355 = vpop.f32.mrf.mxu0
    %v3356 = vadd.f32 0.0, %v3355
    %v3357 = vpop.f32.mrf.mxu0
    %3358 = vmatprep.mubr.f32.mxu0 0.0
    %3359 = vmatmul.mubr.f32.gmra.mxu0 %v862
    %v3360 = vpop.f32.mrf.mxu0
    %v3361 = vadd.f32 0.0, %v3360
    %v3362 = vpop.f32.mrf.mxu0
    %3363 = vdwg.mxu0
    %v3364 = vadd.f32 %v239, %v3286
    %v3365 = vadd.f32 %v244, %v3291
    %v3366 = vadd.f32 %v249, %v3296
    %v3367 = vadd.f32 %v254, %v3301
    %v3368 = vadd.f32 %v259, %v3306
    %v3369 = vadd.f32 %v264, %v3311
    %v3370 = vadd.f32 %v269, %v3316
    %v3371 = vadd.f32 %v274, %v3321
    %v3372 = vadd.f32 %v279, %v3326
    %v3373 = vadd.f32 %v284, %v3331
    %v3374 = vadd.f32 %v289, %v3336
    %v3375 = vadd.f32 %v294, %v3341
    %v3376 = vadd.f32 %v299, %v3346
    %v3377 = vadd.f32 %v304, %v3351
    %v3378 = vadd.f32 %v309, %v3356
    %v3379 = vadd.f32 %v314, %v3361
    %3380 = vmatprep.subr.mxu0 0.0
    %3381 = vmatpush1.msra.mxu0 0.0
    %3382 = vmatprep.subr.mxu0 0.0
    %3383 = vmatpush1.msra.mxu0 0.0
    %3384 = vmatprep.subr.mxu0 0.0
    %3385 = vmatpush1.msra.mxu0 0.0
    %3386 = vmatprep.subr.mxu0 0.0
    %3387 = vmatpush1.msra.mxu0 0.0
    %3388 = vmatprep.subr.mxu0 0.0
    %3389 = vmatpush1.msra.mxu0 0.0
    %3390 = vmatprep.subr.mxu0 0.0
    %3391 = vmatpush1.msra.mxu0 0.0
    %3392 = vmatprep.subr.mxu0 0.0
    %3393 = vmatpush1.msra.mxu0 0.0
    %3394 = vmatprep.subr.mxu0 0.0
    %3395 = vmatpush1.msra.mxu0 0.0
    %3396 = vmatprep.subr.mxu0 0.0
    %3397 = vmatpush1.msra.mxu0 0.0
    %3398 = vmatprep.subr.mxu0 0.0
    %3399 = vmatpush1.msra.mxu0 0.0
    %3400 = vmatprep.subr.mxu0 0.0
    %3401 = vmatpush1.msra.mxu0 0.0
    %3402 = vmatprep.subr.mxu0 0.0
    %3403 = vmatpush1.msra.mxu0 0.0
    %3404 = vmatprep.subr.mxu0 0.0
    %3405 = vmatpush1.msra.mxu0 %v2831
    %3406 = vmatprep.subr.mxu0 0.0
    %3407 = vmatpush1.msra.mxu0 %v2830
    %3408 = vmatprep.subr.mxu0 0.0
    %3409 = vmatpush1.msra.mxu0 %v2829
    %3410 = vmatprep.subr.mxu0 0.0
    %3411 = vmatpush1.msra.mxu0 %v2828
    %3412 = vmatprep.subr.mxu0 0.0
    %3413 = vmatpush2.msra.mxu0 0.0
    %3414 = vmatprep.subr.mxu0 0.0
    %3415 = vmatpush2.msra.mxu0 0.0
    %3416 = vmatprep.subr.mxu0 0.0
    %3417 = vmatpush2.msra.mxu0 0.0
    %3418 = vmatprep.subr.mxu0 0.0
    %3419 = vmatpush2.msra.mxu0 0.0
    %3420 = vmatprep.subr.mxu0 0.0
    %3421 = vmatpush2.msra.mxu0 0.0
    %3422 = vmatprep.subr.mxu0 0.0
    %3423 = vmatpush2.msra.mxu0 0.0
    %3424 = vmatprep.subr.mxu0 0.0
    %3425 = vmatpush2.msra.mxu0 0.0
    %3426 = vmatprep.subr.mxu0 0.0
    %3427 = vmatpush2.msra.mxu0 0.0
    %3428 = vmatprep.subr.mxu0 0.0
    %3429 = vmatpush2.msra.mxu0 0.0
    %3430 = vmatprep.subr.mxu0 0.0
    %3431 = vmatpush2.msra.mxu0 0.0
    %3432 = vmatprep.subr.mxu0 0.0
    %3433 = vmatpush2.msra.mxu0 0.0
    %3434 = vmatprep.subr.mxu0 0.0
    %3435 = vmatpush2.msra.mxu0 0.0
    %3436 = vmatprep.subr.mxu0 0.0
    %3437 = vmatpush2.msra.mxu0 0.0
    %3438 = vmatprep.subr.mxu0 0.0
    %3439 = vmatpush2.msra.mxu0 0.0
    %3440 = vmatprep.subr.mxu0 0.0
    %3441 = vmatpush2.msra.mxu0 0.0
    %3442 = vmatprep.subr.mxu0 0.0
    %3443 = vmatpush2.msra.mxu0 0.0
    %3444 = vmatprep.mubr.f32.mxu0 0.0
    %3445 = vmatmul.mubr.f32.gmra.mxu0 %v1026
    %v3446 = vpop.f32.mrf.mxu0
    %v3447 = vadd.f32 0.0, %v3446
    %v3448 = vpop.f32.mrf.mxu0
    %3449 = vmatprep.mubr.f32.mxu0 0.0
    %3450 = vmatmul.mubr.f32.gmra.mxu0 %v1029
    %v3451 = vpop.f32.mrf.mxu0
    %v3452 = vadd.f32 0.0, %v3451
    %v3453 = vpop.f32.mrf.mxu0
    %3454 = vmatprep.mubr.f32.mxu0 0.0
    %3455 = vmatmul.mubr.f32.gmra.mxu0 %v1032
    %v3456 = vpop.f32.mrf.mxu0
    %v3457 = vadd.f32 0.0, %v3456
    %v3458 = vpop.f32.mrf.mxu0
    %3459 = vmatprep.mubr.f32.mxu0 0.0
    %3460 = vmatmul.mubr.f32.gmra.mxu0 %v1035
    %v3461 = vpop.f32.mrf.mxu0
    %v3462 = vadd.f32 0.0, %v3461
    %v3463 = vpop.f32.mrf.mxu0
    %3464 = vmatprep.mubr.f32.mxu0 0.0
    %3465 = vmatmul.mubr.f32.gmra.mxu0 %v1038
    %v3466 = vpop.f32.mrf.mxu0
    %v3467 = vadd.f32 0.0, %v3466
    %v3468 = vpop.f32.mrf.mxu0
    %3469 = vmatprep.mubr.f32.mxu0 0.0
    %3470 = vmatmul.mubr.f32.gmra.mxu0 %v1041
    %v3471 = vpop.f32.mrf.mxu0
    %v3472 = vadd.f32 0.0, %v3471
    %v3473 = vpop.f32.mrf.mxu0
    %3474 = vmatprep.mubr.f32.mxu0 0.0
    %3475 = vmatmul.mubr.f32.gmra.mxu0 %v1044
    %v3476 = vpop.f32.mrf.mxu0
    %v3477 = vadd.f32 0.0, %v3476
    %v3478 = vpop.f32.mrf.mxu0
    %3479 = vmatprep.mubr.f32.mxu0 0.0
    %3480 = vmatmul.mubr.f32.gmra.mxu0 %v1047
    %v3481 = vpop.f32.mrf.mxu0
    %v3482 = vadd.f32 0.0, %v3481
    %v3483 = vpop.f32.mrf.mxu0
    %3484 = vmatprep.mubr.f32.mxu0 0.0
    %3485 = vmatmul.mubr.f32.gmra.mxu0 %v1050
    %v3486 = vpop.f32.mrf.mxu0
    %v3487 = vadd.f32 0.0, %v3486
    %v3488 = vpop.f32.mrf.mxu0
    %3489 = vmatprep.mubr.f32.mxu0 0.0
    %3490 = vmatmul.mubr.f32.gmra.mxu0 %v1053
    %v3491 = vpop.f32.mrf.mxu0
    %v3492 = vadd.f32 0.0, %v3491
    %v3493 = vpop.f32.mrf.mxu0
    %3494 = vmatprep.mubr.f32.mxu0 0.0
    %3495 = vmatmul.mubr.f32.gmra.mxu0 %v1056
    %v3496 = vpop.f32.mrf.mxu0
    %v3497 = vadd.f32 0.0, %v3496
    %v3498 = vpop.f32.mrf.mxu0
    %3499 = vmatprep.mubr.f32.mxu0 0.0
    %3500 = vmatmul.mubr.f32.gmra.mxu0 %v1059
    %v3501 = vpop.f32.mrf.mxu0
    %v3502 = vadd.f32 0.0, %v3501
    %v3503 = vpop.f32.mrf.mxu0
    %3504 = vmatprep.mubr.f32.mxu0 0.0
    %3505 = vmatmul.mubr.f32.gmra.mxu0 %v1062
    %v3506 = vpop.f32.mrf.mxu0
    %v3507 = vadd.f32 0.0, %v3506
    %v3508 = vpop.f32.mrf.mxu0
    %3509 = vmatprep.mubr.f32.mxu0 0.0
    %3510 = vmatmul.mubr.f32.gmra.mxu0 %v1065
    %v3511 = vpop.f32.mrf.mxu0
    %v3512 = vadd.f32 0.0, %v3511
    %v3513 = vpop.f32.mrf.mxu0
    %3514 = vmatprep.mubr.f32.mxu0 0.0
    %3515 = vmatmul.mubr.f32.gmra.mxu0 %v1068
    %v3516 = vpop.f32.mrf.mxu0
    %v3517 = vadd.f32 0.0, %v3516
    %v3518 = vpop.f32.mrf.mxu0
    %3519 = vmatprep.mubr.f32.mxu0 0.0
    %3520 = vmatmul.mubr.f32.gmra.mxu0 %v1071
    %v3521 = vpop.f32.mrf.mxu0
    %v3522 = vadd.f32 0.0, %v3521
    %v3523 = vpop.f32.mrf.mxu0
    %3524 = vdwg.mxu0
    %v3525 = vadd.f32 %v3364, %v3447
    %v3526 = vadd.f32 %v3365, %v3452
    %v3527 = vadd.f32 %v3366, %v3457
    %v3528 = vadd.f32 %v3367, %v3462
    %v3529 = vadd.f32 %v3368, %v3467
    %v3530 = vadd.f32 %v3369, %v3472
    %v3531 = vadd.f32 %v3370, %v3477
    %v3532 = vadd.f32 %v3371, %v3482
    %v3533 = vadd.f32 %v3372, %v3487
    %v3534 = vadd.f32 %v3373, %v3492
    %v3535 = vadd.f32 %v3374, %v3497
    %v3536 = vadd.f32 %v3375, %v3502
    %v3537 = vadd.f32 %v3376, %v3507
    %v3538 = vadd.f32 %v3377, %v3512
    %v3539 = vadd.f32 %v3378, %v3517
    %v3540 = vadd.f32 %v3379, %v3522
    %v3541 = vtanh.pop %v3525
    %v3542 = vtanh.pop %v3526
    %v3543 = vtanh.pop %v3527
    %v3544 = vtanh.pop %v3528
    %v3545 = vtanh.pop %v3529
    %v3546 = vtanh.pop %v3530
    %v3547 = vtanh.pop %v3531
    %v3548 = vtanh.pop %v3532
    %v3549 = vtanh.pop %v3533
    %v3550 = vtanh.pop %v3534
    %v3551 = vtanh.pop %v3535
    %v3552 = vtanh.pop %v3536
    %v3553 = vtanh.pop %v3537
    %v3554 = vtanh.pop %v3538
    %v3555 = vtanh.pop %v3539
    %v3556 = vtanh.pop %v3540
    %v3557 = vmul.f32 %v3541, 0.5
    %v3558 = vmul.f32 %v3542, 0.5
    %v3559 = vmul.f32 %v3543, 0.5
    %v3560 = vmul.f32 %v3544, 0.5
    %v3561 = vadd.f32 %v3557, 0.5
    %v3562 = vadd.f32 %v3558, 0.5
    %v3563 = vadd.f32 %v3559, 0.5
    %v3564 = vadd.f32 %v3560, 0.5
    %v3565 = vmul.f32 %v3545, 0.5
    %v3566 = vmul.f32 %v3546, 0.5
    %v3567 = vmul.f32 %v3547, 0.5
    %v3568 = vmul.f32 %v3548, 0.5
    %v3569 = vadd.f32 %v3565, 0.5
    %v3570 = vadd.f32 %v3566, 0.5
    %v3571 = vadd.f32 %v3567, 0.5
    %v3572 = vadd.f32 %v3568, 0.5
    %v3573 = vmul.f32 %v3553, 0.5
    %v3574 = vmul.f32 %v3554, 0.5
    %v3575 = vmul.f32 %v3555, 0.5
    %v3576 = vmul.f32 %v3556, 0.5
    %v3577 = vadd.f32 %v3573, 0.5
    %v3578 = vadd.f32 %v3574, 0.5
    %v3579 = vadd.f32 %v3575, 0.5
    %v3580 = vadd.f32 %v3576, 0.5
    %v3581 = vmul.f32 %v3569, %v2820
    %v3582 = vmul.f32 %v3570, %v2821
    %v3583 = vmul.f32 %v3571, %v2822
    %v3584 = vmul.f32 %v3572, %v2823
    %v3585 = vmul.f32 %v3561, %v3549
    %v3586 = vmul.f32 %v3562, %v3550
    %v3587 = vmul.f32 %v3563, %v3551
    %v3588 = vmul.f32 %v3564, %v3552
    %v3589 = vadd.f32 %v3581, %v3585
    %v3590 = vadd.f32 %v3582, %v3586
    %v3591 = vadd.f32 %v3583, %v3587
    %v3592 = vadd.f32 %v3584, %v3588
    %v3593 = vtanh.pop %v3589
    %v3594 = vtanh.pop %v3590
    %v3595 = vtanh.pop %v3591
    %v3596 = vtanh.pop %v3592
    %v3597 = vmul.f32 %v3577, %v3593
    %v3598 = vmul.f32 %v3578, %v3594
    %v3599 = vmul.f32 %v3579, %v3595
    %v3600 = vmul.f32 %v3580, %v3596
    %s3601 = scalar_lea.vmem %s0, 32
    %v3602 = vld [vmem:[%s3601] sm:$0xf]
    %v3603 = vld [vmem:[%s3601 + $0x4] sm:$0xf]
    %v3604 = vunpack.c.l.bf16 %v3602
    %v3605 = vunpack.c.l.bf16 %v3603
    %3606 = vmatprep.subr.mxu0 0.0
    %3607 = vmatpush1.msra.mxu0 0.0
    %3608 = vmatprep.subr.mxu0 0.0
    %3609 = vmatpush1.msra.mxu0 0.0
    %3610 = vmatprep.subr.mxu0 0.0
    %3611 = vmatpush1.msra.mxu0 0.0
    %3612 = vmatprep.subr.mxu0 0.0
    %3613 = vmatpush1.msra.mxu0 0.0
    %3614 = vmatprep.subr.mxu0 0.0
    %3615 = vmatpush1.msra.mxu0 0.0
    %3616 = vmatprep.subr.mxu0 0.0
    %3617 = vmatpush1.msra.mxu0 0.0
    %3618 = vmatprep.subr.mxu0 0.0
    %3619 = vmatpush1.msra.mxu0 0.0
    %3620 = vmatprep.subr.mxu0 0.0
    %3621 = vmatpush1.msra.mxu0 0.0
    %3622 = vmatprep.subr.mxu0 0.0
    %3623 = vmatpush1.msra.mxu0 0.0
    %3624 = vmatprep.subr.mxu0 0.0
    %3625 = vmatpush1.msra.mxu0 0.0
    %3626 = vmatprep.subr.mxu0 0.0
    %3627 = vmatpush1.msra.mxu0 0.0
    %3628 = vmatprep.subr.mxu0 0.0
    %3629 = vmatpush1.msra.mxu0 0.0
    %3630 = vmatprep.subr.mxu0 0.0
    %3631 = vmatpush1.msra.mxu0 0.0
    %3632 = vmatprep.subr.mxu0 0.0
    %3633 = vmatpush1.msra.mxu0 0.0
    %3634 = vmatprep.subr.mxu0 0.0
    %3635 = vmatpush1.msra.mxu0 %v3605
    %3636 = vmatprep.subr.mxu0 0.0
    %3637 = vmatpush1.msra.mxu0 %v3604
    %3638 = vmatprep.subr.mxu0 0.0
    %3639 = vmatpush2.msra.mxu0 0.0
    %3640 = vmatprep.subr.mxu0 0.0
    %3641 = vmatpush2.msra.mxu0 0.0
    %3642 = vmatprep.subr.mxu0 0.0
    %3643 = vmatpush2.msra.mxu0 0.0
    %3644 = vmatprep.subr.mxu0 0.0
    %3645 = vmatpush2.msra.mxu0 0.0
    %3646 = vmatprep.subr.mxu0 0.0
    %3647 = vmatpush2.msra.mxu0 0.0
    %3648 = vmatprep.subr.mxu0 0.0
    %3649 = vmatpush2.msra.mxu0 0.0
    %3650 = vmatprep.subr.mxu0 0.0
    %3651 = vmatpush2.msra.mxu0 0.0
    %3652 = vmatprep.subr.mxu0 0.0
    %3653 = vmatpush2.msra.mxu0 0.0
    %3654 = vmatprep.subr.mxu0 0.0
    %3655 = vmatpush2.msra.mxu0 0.0
    %3656 = vmatprep.subr.mxu0 0.0
    %3657 = vmatpush2.msra.mxu0 0.0
    %3658 = vmatprep.subr.mxu0 0.0
    %3659 = vmatpush2.msra.mxu0 0.0
    %3660 = vmatprep.subr.mxu0 0.0
    %3661 = vmatpush2.msra.mxu0 0.0
    %3662 = vmatprep.subr.mxu0 0.0
    %3663 = vmatpush2.msra.mxu0 0.0
    %3664 = vmatprep.subr.mxu0 0.0
    %3665 = vmatpush2.msra.mxu0 0.0
    %3666 = vmatprep.subr.mxu0 0.0
    %3667 = vmatpush2.msra.mxu0 0.0
    %3668 = vmatprep.subr.mxu0 0.0
    %3669 = vmatpush2.msra.mxu0 0.0
    %3670 = vmatprep.mubr.f32.mxu0 0.0
    %3671 = vmatmul.mubr.f32.gmra.mxu0 %v338
    %v3672 = vpop.f32.mrf.mxu0
    %v3673 = vadd.f32 0.0, %v3672
    %v3674 = vpop.f32.mrf.mxu0
    %3675 = vmatprep.mubr.f32.mxu0 0.0
    %3676 = vmatmul.mubr.f32.gmra.mxu0 %v341
    %v3677 = vpop.f32.mrf.mxu0
    %v3678 = vadd.f32 0.0, %v3677
    %v3679 = vpop.f32.mrf.mxu0
    %3680 = vmatprep.mubr.f32.mxu0 0.0
    %3681 = vmatmul.mubr.f32.gmra.mxu0 %v344
    %v3682 = vpop.f32.mrf.mxu0
    %v3683 = vadd.f32 0.0, %v3682
    %v3684 = vpop.f32.mrf.mxu0
    %3685 = vmatprep.mubr.f32.mxu0 0.0
    %3686 = vmatmul.mubr.f32.gmra.mxu0 %v347
    %v3687 = vpop.f32.mrf.mxu0
    %v3688 = vadd.f32 0.0, %v3687
    %v3689 = vpop.f32.mrf.mxu0
    %3690 = vmatprep.mubr.f32.mxu0 0.0
    %3691 = vmatmul.mubr.f32.gmra.mxu0 %v350
    %v3692 = vpop.f32.mrf.mxu0
    %v3693 = vadd.f32 0.0, %v3692
    %v3694 = vpop.f32.mrf.mxu0
    %3695 = vmatprep.mubr.f32.mxu0 0.0
    %3696 = vmatmul.mubr.f32.gmra.mxu0 %v353
    %v3697 = vpop.f32.mrf.mxu0
    %v3698 = vadd.f32 0.0, %v3697
    %v3699 = vpop.f32.mrf.mxu0
    %3700 = vmatprep.mubr.f32.mxu0 0.0
    %3701 = vmatmul.mubr.f32.gmra.mxu0 %v356
    %v3702 = vpop.f32.mrf.mxu0
    %v3703 = vadd.f32 0.0, %v3702
    %v3704 = vpop.f32.mrf.mxu0
    %3705 = vmatprep.mubr.f32.mxu0 0.0
    %3706 = vmatmul.mubr.f32.gmra.mxu0 %v359
    %v3707 = vpop.f32.mrf.mxu0
    %v3708 = vadd.f32 0.0, %v3707
    %v3709 = vpop.f32.mrf.mxu0
    %3710 = vmatprep.mubr.f32.mxu0 0.0
    %3711 = vmatmul.mubr.f32.gmra.mxu0 %v362
    %v3712 = vpop.f32.mrf.mxu0
    %v3713 = vadd.f32 0.0, %v3712
    %v3714 = vpop.f32.mrf.mxu0
    %3715 = vmatprep.mubr.f32.mxu0 0.0
    %3716 = vmatmul.mubr.f32.gmra.mxu0 %v365
    %v3717 = vpop.f32.mrf.mxu0
    %v3718 = vadd.f32 0.0, %v3717
    %v3719 = vpop.f32.mrf.mxu0
    %3720 = vmatprep.mubr.f32.mxu0 0.0
    %3721 = vmatmul.mubr.f32.gmra.mxu0 %v368
    %v3722 = vpop.f32.mrf.mxu0
    %v3723 = vadd.f32 0.0, %v3722
    %v3724 = vpop.f32.mrf.mxu0
    %3725 = vmatprep.mubr.f32.mxu0 0.0
    %3726 = vmatmul.mubr.f32.gmra.mxu0 %v371
    %v3727 = vpop.f32.mrf.mxu0
    %v3728 = vadd.f32 0.0, %v3727
    %v3729 = vpop.f32.mrf.mxu0
    %3730 = vmatprep.mubr.f32.mxu0 0.0
    %3731 = vmatmul.mubr.f32.gmra.mxu0 %v374
    %v3732 = vpop.f32.mrf.mxu0
    %v3733 = vadd.f32 0.0, %v3732
    %v3734 = vpop.f32.mrf.mxu0
    %3735 = vmatprep.mubr.f32.mxu0 0.0
    %3736 = vmatmul.mubr.f32.gmra.mxu0 %v377
    %v3737 = vpop.f32.mrf.mxu0
    %v3738 = vadd.f32 0.0, %v3737
    %v3739 = vpop.f32.mrf.mxu0
    %3740 = vmatprep.mubr.f32.mxu0 0.0
    %3741 = vmatmul.mubr.f32.gmra.mxu0 %v380
    %v3742 = vpop.f32.mrf.mxu0
    %v3743 = vadd.f32 0.0, %v3742
    %v3744 = vpop.f32.mrf.mxu0
    %3745 = vmatprep.mubr.f32.mxu0 0.0
    %3746 = vmatmul.mubr.f32.gmra.mxu0 %v383
    %v3747 = vpop.f32.mrf.mxu0
    %v3748 = vadd.f32 0.0, %v3747
    %v3749 = vpop.f32.mrf.mxu0
    %3750 = vdwg.mxu0
    %v3751 = vadd.f32 %v143, %v3673
    %v3752 = vadd.f32 %v148, %v3678
    %v3753 = vadd.f32 %v153, %v3683
    %v3754 = vadd.f32 %v158, %v3688
    %v3755 = vadd.f32 %v163, %v3693
    %v3756 = vadd.f32 %v168, %v3698
    %v3757 = vadd.f32 %v173, %v3703
    %v3758 = vadd.f32 %v178, %v3708
    %v3759 = vadd.f32 %v183, %v3713
    %v3760 = vadd.f32 %v188, %v3718
    %v3761 = vadd.f32 %v193, %v3723
    %v3762 = vadd.f32 %v198, %v3728
    %v3763 = vadd.f32 %v203, %v3733
    %v3764 = vadd.f32 %v208, %v3738
    %v3765 = vadd.f32 %v213, %v3743
    %v3766 = vadd.f32 %v218, %v3748
    %3767 = vmatprep.subr.mxu0 0.0
    %3768 = vmatpush1.msra.mxu0 0.0
    %3769 = vmatprep.subr.mxu0 0.0
    %3770 = vmatpush1.msra.mxu0 0.0
    %3771 = vmatprep.subr.mxu0 0.0
    %3772 = vmatpush1.msra.mxu0 0.0
    %3773 = vmatprep.subr.mxu0 0.0
    %3774 = vmatpush1.msra.mxu0 0.0
    %3775 = vmatprep.subr.mxu0 0.0
    %3776 = vmatpush1.msra.mxu0 0.0
    %3777 = vmatprep.subr.mxu0 0.0
    %3778 = vmatpush1.msra.mxu0 0.0
    %3779 = vmatprep.subr.mxu0 0.0
    %3780 = vmatpush1.msra.mxu0 0.0
    %3781 = vmatprep.subr.mxu0 0.0
    %3782 = vmatpush1.msra.mxu0 0.0
    %3783 = vmatprep.subr.mxu0 0.0
    %3784 = vmatpush1.msra.mxu0 0.0
    %3785 = vmatprep.subr.mxu0 0.0
    %3786 = vmatpush1.msra.mxu0 0.0
    %3787 = vmatprep.subr.mxu0 0.0
    %3788 = vmatpush1.msra.mxu0 0.0
    %3789 = vmatprep.subr.mxu0 0.0
    %3790 = vmatpush1.msra.mxu0 0.0
    %3791 = vmatprep.subr.mxu0 0.0
    %3792 = vmatpush1.msra.mxu0 %v3218
    %3793 = vmatprep.subr.mxu0 0.0
    %3794 = vmatpush1.msra.mxu0 %v3217
    %3795 = vmatprep.subr.mxu0 0.0
    %3796 = vmatpush1.msra.mxu0 %v3216
    %3797 = vmatprep.subr.mxu0 0.0
    %3798 = vmatpush1.msra.mxu0 %v3215
    %3799 = vmatprep.subr.mxu0 0.0
    %3800 = vmatpush2.msra.mxu0 0.0
    %3801 = vmatprep.subr.mxu0 0.0
    %3802 = vmatpush2.msra.mxu0 0.0
    %3803 = vmatprep.subr.mxu0 0.0
    %3804 = vmatpush2.msra.mxu0 0.0
    %3805 = vmatprep.subr.mxu0 0.0
    %3806 = vmatpush2.msra.mxu0 0.0
    %3807 = vmatprep.subr.mxu0 0.0
    %3808 = vmatpush2.msra.mxu0 0.0
    %3809 = vmatprep.subr.mxu0 0.0
    %3810 = vmatpush2.msra.mxu0 0.0
    %3811 = vmatprep.subr.mxu0 0.0
    %3812 = vmatpush2.msra.mxu0 0.0
    %3813 = vmatprep.subr.mxu0 0.0
    %3814 = vmatpush2.msra.mxu0 0.0
    %3815 = vmatprep.subr.mxu0 0.0
    %3816 = vmatpush2.msra.mxu0 0.0
    %3817 = vmatprep.subr.mxu0 0.0
    %3818 = vmatpush2.msra.mxu0 0.0
    %3819 = vmatprep.subr.mxu0 0.0
    %3820 = vmatpush2.msra.mxu0 0.0
    %3821 = vmatprep.subr.mxu0 0.0
    %3822 = vmatpush2.msra.mxu0 0.0
    %3823 = vmatprep.subr.mxu0 0.0
    %3824 = vmatpush2.msra.mxu0 0.0
    %3825 = vmatprep.subr.mxu0 0.0
    %3826 = vmatpush2.msra.mxu0 0.0
    %3827 = vmatprep.subr.mxu0 0.0
    %3828 = vmatpush2.msra.mxu0 0.0
    %3829 = vmatprep.subr.mxu0 0.0
    %3830 = vmatpush2.msra.mxu0 0.0
    %3831 = vmatprep.mubr.f32.mxu0 0.0
    %3832 = vmatmul.mubr.f32.gmra.mxu0 %v548
    %v3833 = vpop.f32.mrf.mxu0
    %v3834 = vadd.f32 0.0, %v3833
    %v3835 = vpop.f32.mrf.mxu0
    %3836 = vmatprep.mubr.f32.mxu0 0.0
    %3837 = vmatmul.mubr.f32.gmra.mxu0 %v551
    %v3838 = vpop.f32.mrf.mxu0
    %v3839 = vadd.f32 0.0, %v3838
    %v3840 = vpop.f32.mrf.mxu0
    %3841 = vmatprep.mubr.f32.mxu0 0.0
    %3842 = vmatmul.mubr.f32.gmra.mxu0 %v554
    %v3843 = vpop.f32.mrf.mxu0
    %v3844 = vadd.f32 0.0, %v3843
    %v3845 = vpop.f32.mrf.mxu0
    %3846 = vmatprep.mubr.f32.mxu0 0.0
    %3847 = vmatmul.mubr.f32.gmra.mxu0 %v557
    %v3848 = vpop.f32.mrf.mxu0
    %v3849 = vadd.f32 0.0, %v3848
    %v3850 = vpop.f32.mrf.mxu0
    %3851 = vmatprep.mubr.f32.mxu0 0.0
    %3852 = vmatmul.mubr.f32.gmra.mxu0 %v560
    %v3853 = vpop.f32.mrf.mxu0
    %v3854 = vadd.f32 0.0, %v3853
    %v3855 = vpop.f32.mrf.mxu0
    %3856 = vmatprep.mubr.f32.mxu0 0.0
    %3857 = vmatmul.mubr.f32.gmra.mxu0 %v563
    %v3858 = vpop.f32.mrf.mxu0
    %v3859 = vadd.f32 0.0, %v3858
    %v3860 = vpop.f32.mrf.mxu0
    %3861 = vmatprep.mubr.f32.mxu0 0.0
    %3862 = vmatmul.mubr.f32.gmra.mxu0 %v566
    %v3863 = vpop.f32.mrf.mxu0
    %v3864 = vadd.f32 0.0, %v3863
    %v3865 = vpop.f32.mrf.mxu0
    %3866 = vmatprep.mubr.f32.mxu0 0.0
    %3867 = vmatmul.mubr.f32.gmra.mxu0 %v569
    %v3868 = vpop.f32.mrf.mxu0
    %v3869 = vadd.f32 0.0, %v3868
    %v3870 = vpop.f32.mrf.mxu0
    %3871 = vmatprep.mubr.f32.mxu0 0.0
    %3872 = vmatmul.mubr.f32.gmra.mxu0 %v572
    %v3873 = vpop.f32.mrf.mxu0
    %v3874 = vadd.f32 0.0, %v3873
    %v3875 = vpop.f32.mrf.mxu0
    %3876 = vmatprep.mubr.f32.mxu0 0.0
    %3877 = vmatmul.mubr.f32.gmra.mxu0 %v575
    %v3878 = vpop.f32.mrf.mxu0
    %v3879 = vadd.f32 0.0, %v3878
    %v3880 = vpop.f32.mrf.mxu0
    %3881 = vmatprep.mubr.f32.mxu0 0.0
    %3882 = vmatmul.mubr.f32.gmra.mxu0 %v578
    %v3883 = vpop.f32.mrf.mxu0
    %v3884 = vadd.f32 0.0, %v3883
    %v3885 = vpop.f32.mrf.mxu0
    %3886 = vmatprep.mubr.f32.mxu0 0.0
    %3887 = vmatmul.mubr.f32.gmra.mxu0 %v581
    %v3888 = vpop.f32.mrf.mxu0
    %v3889 = vadd.f32 0.0, %v3888
    %v3890 = vpop.f32.mrf.mxu0
    %3891 = vmatprep.mubr.f32.mxu0 0.0
    %3892 = vmatmul.mubr.f32.gmra.mxu0 %v584
    %v3893 = vpop.f32.mrf.mxu0
    %v3894 = vadd.f32 0.0, %v3893
    %v3895 = vpop.f32.mrf.mxu0
    %3896 = vmatprep.mubr.f32.mxu0 0.0
    %3897 = vmatmul.mubr.f32.gmra.mxu0 %v587
    %v3898 = vpop.f32.mrf.mxu0
    %v3899 = vadd.f32 0.0, %v3898
    %v3900 = vpop.f32.mrf.mxu0
    %3901 = vmatprep.mubr.f32.mxu0 0.0
    %3902 = vmatmul.mubr.f32.gmra.mxu0 %v590
    %v3903 = vpop.f32.mrf.mxu0
    %v3904 = vadd.f32 0.0, %v3903
    %v3905 = vpop.f32.mrf.mxu0
    %3906 = vmatprep.mubr.f32.mxu0 0.0
    %3907 = vmatmul.mubr.f32.gmra.mxu0 %v593
    %v3908 = vpop.f32.mrf.mxu0
    %v3909 = vadd.f32 0.0, %v3908
    %v3910 = vpop.f32.mrf.mxu0
    %3911 = vdwg.mxu0
    %v3912 = vadd.f32 %v3751, %v3834
    %v3913 = vadd.f32 %v3752, %v3839
    %v3914 = vadd.f32 %v3753, %v3844
    %v3915 = vadd.f32 %v3754, %v3849
    %v3916 = vadd.f32 %v3755, %v3854
    %v3917 = vadd.f32 %v3756, %v3859
    %v3918 = vadd.f32 %v3757, %v3864
    %v3919 = vadd.f32 %v3758, %v3869
    %v3920 = vadd.f32 %v3759, %v3874
    %v3921 = vadd.f32 %v3760, %v3879
    %v3922 = vadd.f32 %v3761, %v3884
    %v3923 = vadd.f32 %v3762, %v3889
    %v3924 = vadd.f32 %v3763, %v3894
    %v3925 = vadd.f32 %v3764, %v3899
    %v3926 = vadd.f32 %v3765, %v3904
    %v3927 = vadd.f32 %v3766, %v3909
    %v3928 = vtanh.pop %v3912
    %v3929 = vtanh.pop %v3913
    %v3930 = vtanh.pop %v3914
    %v3931 = vtanh.pop %v3915
    %v3932 = vtanh.pop %v3916
    %v3933 = vtanh.pop %v3917
    %v3934 = vtanh.pop %v3918
    %v3935 = vtanh.pop %v3919
    %v3936 = vtanh.pop %v3920
    %v3937 = vtanh.pop %v3921
    %v3938 = vtanh.pop %v3922
    %v3939 = vtanh.pop %v3923
    %v3940 = vtanh.pop %v3924
    %v3941 = vtanh.pop %v3925
    %v3942 = vtanh.pop %v3926
    %v3943 = vtanh.pop %v3927
    %v3944 = vmul.f32 %v3928, 0.5
    %v3945 = vmul.f32 %v3929, 0.5
    %v3946 = vmul.f32 %v3930, 0.5
    %v3947 = vmul.f32 %v3931, 0.5
    %v3948 = vadd.f32 %v3944, 0.5
    %v3949 = vadd.f32 %v3945, 0.5
    %v3950 = vadd.f32 %v3946, 0.5
    %v3951 = vadd.f32 %v3947, 0.5
    %v3952 = vmul.f32 %v3932, 0.5
    %v3953 = vmul.f32 %v3933, 0.5
    %v3954 = vmul.f32 %v3934, 0.5
    %v3955 = vmul.f32 %v3935, 0.5
    %v3956 = vadd.f32 %v3952, 0.5
    %v3957 = vadd.f32 %v3953, 0.5
    %v3958 = vadd.f32 %v3954, 0.5
    %v3959 = vadd.f32 %v3955, 0.5
    %v3960 = vmul.f32 %v3940, 0.5
    %v3961 = vmul.f32 %v3941, 0.5
    %v3962 = vmul.f32 %v3942, 0.5
    %v3963 = vmul.f32 %v3943, 0.5
    %v3964 = vadd.f32 %v3960, 0.5
    %v3965 = vadd.f32 %v3961, 0.5
    %v3966 = vadd.f32 %v3962, 0.5
    %v3967 = vadd.f32 %v3963, 0.5
    %v3968 = vmul.f32 %v3956, %v3207
    %v3969 = vmul.f32 %v3957, %v3208
    %v3970 = vmul.f32 %v3958, %v3209
    %v3971 = vmul.f32 %v3959, %v3210
    %v3972 = vmul.f32 %v3948, %v3936
    %v3973 = vmul.f32 %v3949, %v3937
    %v3974 = vmul.f32 %v3950, %v3938
    %v3975 = vmul.f32 %v3951, %v3939
    %v3976 = vadd.f32 %v3968, %v3972
    %v3977 = vadd.f32 %v3969, %v3973
    %v3978 = vadd.f32 %v3970, %v3974
    %v3979 = vadd.f32 %v3971, %v3975
    %v3980 = vtanh.pop %v3976
    %v3981 = vtanh.pop %v3977
    %v3982 = vtanh.pop %v3978
    %v3983 = vtanh.pop %v3979
    %v3984 = vmul.f32 %v3964, %v3980
    %v3985 = vmul.f32 %v3965, %v3981
    %v3986 = vmul.f32 %v3966, %v3982
    %v3987 = vmul.f32 %v3967, %v3983
    %3988 = vmatprep.subr.mxu0 0.0
    %3989 = vmatpush1.msra.mxu0 0.0
    %3990 = vmatprep.subr.mxu0 0.0
    %3991 = vmatpush1.msra.mxu0 0.0
    %3992 = vmatprep.subr.mxu0 0.0
    %3993 = vmatpush1.msra.mxu0 0.0
    %3994 = vmatprep.subr.mxu0 0.0
    %3995 = vmatpush1.msra.mxu0 0.0
    %3996 = vmatprep.subr.mxu0 0.0
    %3997 = vmatpush1.msra.mxu0 0.0
    %3998 = vmatprep.subr.mxu0 0.0
    %3999 = vmatpush1.msra.mxu0 0.0
    %4000 = vmatprep.subr.mxu0 0.0
    %4001 = vmatpush1.msra.mxu0 0.0
    %4002 = vmatprep.subr.mxu0 0.0
    %4003 = vmatpush1.msra.mxu0 0.0
    %4004 = vmatprep.subr.mxu0 0.0
    %4005 = vmatpush1.msra.mxu0 0.0
    %4006 = vmatprep.subr.mxu0 0.0
    %4007 = vmatpush1.msra.mxu0 0.0
    %4008 = vmatprep.subr.mxu0 0.0
    %4009 = vmatpush1.msra.mxu0 0.0
    %4010 = vmatprep.subr.mxu0 0.0
    %4011 = vmatpush1.msra.mxu0 0.0
    %4012 = vmatprep.subr.mxu0 0.0
    %4013 = vmatpush1.msra.mxu0 %v3987
    %4014 = vmatprep.subr.mxu0 0.0
    %4015 = vmatpush1.msra.mxu0 %v3986
    %4016 = vmatprep.subr.mxu0 0.0
    %4017 = vmatpush1.msra.mxu0 %v3985
    %4018 = vmatprep.subr.mxu0 0.0
    %4019 = vmatpush1.msra.mxu0 %v3984
    %4020 = vmatprep.subr.mxu0 0.0
    %4021 = vmatpush2.msra.mxu0 0.0
    %4022 = vmatprep.subr.mxu0 0.0
    %4023 = vmatpush2.msra.mxu0 0.0
    %4024 = vmatprep.subr.mxu0 0.0
    %4025 = vmatpush2.msra.mxu0 0.0
    %4026 = vmatprep.subr.mxu0 0.0
    %4027 = vmatpush2.msra.mxu0 0.0
    %4028 = vmatprep.subr.mxu0 0.0
    %4029 = vmatpush2.msra.mxu0 0.0
    %4030 = vmatprep.subr.mxu0 0.0
    %4031 = vmatpush2.msra.mxu0 0.0
    %4032 = vmatprep.subr.mxu0 0.0
    %4033 = vmatpush2.msra.mxu0 0.0
    %4034 = vmatprep.subr.mxu0 0.0
    %4035 = vmatpush2.msra.mxu0 0.0
    %4036 = vmatprep.subr.mxu0 0.0
    %4037 = vmatpush2.msra.mxu0 0.0
    %4038 = vmatprep.subr.mxu0 0.0
    %4039 = vmatpush2.msra.mxu0 0.0
    %4040 = vmatprep.subr.mxu0 0.0
    %4041 = vmatpush2.msra.mxu0 0.0
    %4042 = vmatprep.subr.mxu0 0.0
    %4043 = vmatpush2.msra.mxu0 0.0
    %4044 = vmatprep.subr.mxu0 0.0
    %4045 = vmatpush2.msra.mxu0 0.0
    %4046 = vmatprep.subr.mxu0 0.0
    %4047 = vmatpush2.msra.mxu0 0.0
    %4048 = vmatprep.subr.mxu0 0.0
    %4049 = vmatpush2.msra.mxu0 0.0
    %4050 = vmatprep.subr.mxu0 0.0
    %4051 = vmatpush2.msra.mxu0 0.0
    %4052 = vmatprep.mubr.f32.mxu0 0.0
    %4053 = vmatmul.mubr.f32.gmra.mxu0 %v817
    %v4054 = vpop.f32.mrf.mxu0
    %v4055 = vadd.f32 0.0, %v4054
    %v4056 = vpop.f32.mrf.mxu0
    %4057 = vmatprep.mubr.f32.mxu0 0.0
    %4058 = vmatmul.mubr.f32.gmra.mxu0 %v820
    %v4059 = vpop.f32.mrf.mxu0
    %v4060 = vadd.f32 0.0, %v4059
    %v4061 = vpop.f32.mrf.mxu0
    %4062 = vmatprep.mubr.f32.mxu0 0.0
    %4063 = vmatmul.mubr.f32.gmra.mxu0 %v823
    %v4064 = vpop.f32.mrf.mxu0
    %v4065 = vadd.f32 0.0, %v4064
    %v4066 = vpop.f32.mrf.mxu0
    %4067 = vmatprep.mubr.f32.mxu0 0.0
    %4068 = vmatmul.mubr.f32.gmra.mxu0 %v826
    %v4069 = vpop.f32.mrf.mxu0
    %v4070 = vadd.f32 0.0, %v4069
    %v4071 = vpop.f32.mrf.mxu0
    %4072 = vmatprep.mubr.f32.mxu0 0.0
    %4073 = vmatmul.mubr.f32.gmra.mxu0 %v829
    %v4074 = vpop.f32.mrf.mxu0
    %v4075 = vadd.f32 0.0, %v4074
    %v4076 = vpop.f32.mrf.mxu0
    %4077 = vmatprep.mubr.f32.mxu0 0.0
    %4078 = vmatmul.mubr.f32.gmra.mxu0 %v832
    %v4079 = vpop.f32.mrf.mxu0
    %v4080 = vadd.f32 0.0, %v4079
    %v4081 = vpop.f32.mrf.mxu0
    %4082 = vmatprep.mubr.f32.mxu0 0.0
    %4083 = vmatmul.mubr.f32.gmra.mxu0 %v835
    %v4084 = vpop.f32.mrf.mxu0
    %v4085 = vadd.f32 0.0, %v4084
    %v4086 = vpop.f32.mrf.mxu0
    %4087 = vmatprep.mubr.f32.mxu0 0.0
    %4088 = vmatmul.mubr.f32.gmra.mxu0 %v838
    %v4089 = vpop.f32.mrf.mxu0
    %v4090 = vadd.f32 0.0, %v4089
    %v4091 = vpop.f32.mrf.mxu0
    %4092 = vmatprep.mubr.f32.mxu0 0.0
    %4093 = vmatmul.mubr.f32.gmra.mxu0 %v841
    %v4094 = vpop.f32.mrf.mxu0
    %v4095 = vadd.f32 0.0, %v4094
    %v4096 = vpop.f32.mrf.mxu0
    %4097 = vmatprep.mubr.f32.mxu0 0.0
    %4098 = vmatmul.mubr.f32.gmra.mxu0 %v844
    %v4099 = vpop.f32.mrf.mxu0
    %v4100 = vadd.f32 0.0, %v4099
    %v4101 = vpop.f32.mrf.mxu0
    %4102 = vmatprep.mubr.f32.mxu0 0.0
    %4103 = vmatmul.mubr.f32.gmra.mxu0 %v847
    %v4104 = vpop.f32.mrf.mxu0
    %v4105 = vadd.f32 0.0, %v4104
    %v4106 = vpop.f32.mrf.mxu0
    %4107 = vmatprep.mubr.f32.mxu0 0.0
    %4108 = vmatmul.mubr.f32.gmra.mxu0 %v850
    %v4109 = vpop.f32.mrf.mxu0
    %v4110 = vadd.f32 0.0, %v4109
    %v4111 = vpop.f32.mrf.mxu0
    %4112 = vmatprep.mubr.f32.mxu0 0.0
    %4113 = vmatmul.mubr.f32.gmra.mxu0 %v853
    %v4114 = vpop.f32.mrf.mxu0
    %v4115 = vadd.f32 0.0, %v4114
    %v4116 = vpop.f32.mrf.mxu0
    %4117 = vmatprep.mubr.f32.mxu0 0.0
    %4118 = vmatmul.mubr.f32.gmra.mxu0 %v856
    %v4119 = vpop.f32.mrf.mxu0
    %v4120 = vadd.f32 0.0, %v4119
    %v4121 = vpop.f32.mrf.mxu0
    %4122 = vmatprep.mubr.f32.mxu0 0.0
    %4123 = vmatmul.mubr.f32.gmra.mxu0 %v859
    %v4124 = vpop.f32.mrf.mxu0
    %v4125 = vadd.f32 0.0, %v4124
    %v4126 = vpop.f32.mrf.mxu0
    %4127 = vmatprep.mubr.f32.mxu0 0.0
    %4128 = vmatmul.mubr.f32.gmra.mxu0 %v862
    %v4129 = vpop.f32.mrf.mxu0
    %v4130 = vadd.f32 0.0, %v4129
    %v4131 = vpop.f32.mrf.mxu0
    %4132 = vdwg.mxu0
    %v4133 = vadd.f32 %v239, %v4055
    %v4134 = vadd.f32 %v244, %v4060
    %v4135 = vadd.f32 %v249, %v4065
    %v4136 = vadd.f32 %v254, %v4070
    %v4137 = vadd.f32 %v259, %v4075
    %v4138 = vadd.f32 %v264, %v4080
    %v4139 = vadd.f32 %v269, %v4085
    %v4140 = vadd.f32 %v274, %v4090
    %v4141 = vadd.f32 %v279, %v4095
    %v4142 = vadd.f32 %v284, %v4100
    %v4143 = vadd.f32 %v289, %v4105
    %v4144 = vadd.f32 %v294, %v4110
    %v4145 = vadd.f32 %v299, %v4115
    %v4146 = vadd.f32 %v304, %v4120
    %v4147 = vadd.f32 %v309, %v4125
    %v4148 = vadd.f32 %v314, %v4130
    %4149 = vmatprep.subr.mxu0 0.0
    %4150 = vmatpush1.msra.mxu0 0.0
    %4151 = vmatprep.subr.mxu0 0.0
    %4152 = vmatpush1.msra.mxu0 0.0
    %4153 = vmatprep.subr.mxu0 0.0
    %4154 = vmatpush1.msra.mxu0 0.0
    %4155 = vmatprep.subr.mxu0 0.0
    %4156 = vmatpush1.msra.mxu0 0.0
    %4157 = vmatprep.subr.mxu0 0.0
    %4158 = vmatpush1.msra.mxu0 0.0
    %4159 = vmatprep.subr.mxu0 0.0
    %4160 = vmatpush1.msra.mxu0 0.0
    %4161 = vmatprep.subr.mxu0 0.0
    %4162 = vmatpush1.msra.mxu0 0.0
    %4163 = vmatprep.subr.mxu0 0.0
    %4164 = vmatpush1.msra.mxu0 0.0
    %4165 = vmatprep.subr.mxu0 0.0
    %4166 = vmatpush1.msra.mxu0 0.0
    %4167 = vmatprep.subr.mxu0 0.0
    %4168 = vmatpush1.msra.mxu0 0.0
    %4169 = vmatprep.subr.mxu0 0.0
    %4170 = vmatpush1.msra.mxu0 0.0
    %4171 = vmatprep.subr.mxu0 0.0
    %4172 = vmatpush1.msra.mxu0 0.0
    %4173 = vmatprep.subr.mxu0 0.0
    %4174 = vmatpush1.msra.mxu0 %v3600
    %4175 = vmatprep.subr.mxu0 0.0
    %4176 = vmatpush1.msra.mxu0 %v3599
    %4177 = vmatprep.subr.mxu0 0.0
    %4178 = vmatpush1.msra.mxu0 %v3598
    %4179 = vmatprep.subr.mxu0 0.0
    %4180 = vmatpush1.msra.mxu0 %v3597
    %4181 = vmatprep.subr.mxu0 0.0
    %4182 = vmatpush2.msra.mxu0 0.0
    %4183 = vmatprep.subr.mxu0 0.0
    %4184 = vmatpush2.msra.mxu0 0.0
    %4185 = vmatprep.subr.mxu0 0.0
    %4186 = vmatpush2.msra.mxu0 0.0
    %4187 = vmatprep.subr.mxu0 0.0
    %4188 = vmatpush2.msra.mxu0 0.0
    %4189 = vmatprep.subr.mxu0 0.0
    %4190 = vmatpush2.msra.mxu0 0.0
    %4191 = vmatprep.subr.mxu0 0.0
    %4192 = vmatpush2.msra.mxu0 0.0
    %4193 = vmatprep.subr.mxu0 0.0
    %4194 = vmatpush2.msra.mxu0 0.0
    %4195 = vmatprep.subr.mxu0 0.0
    %4196 = vmatpush2.msra.mxu0 0.0
    %4197 = vmatprep.subr.mxu0 0.0
    %4198 = vmatpush2.msra.mxu0 0.0
    %4199 = vmatprep.subr.mxu0 0.0
    %4200 = vmatpush2.msra.mxu0 0.0
    %4201 = vmatprep.subr.mxu0 0.0
    %4202 = vmatpush2.msra.mxu0 0.0
    %4203 = vmatprep.subr.mxu0 0.0
    %4204 = vmatpush2.msra.mxu0 0.0
    %4205 = vmatprep.subr.mxu0 0.0
    %4206 = vmatpush2.msra.mxu0 0.0
    %4207 = vmatprep.subr.mxu0 0.0
    %4208 = vmatpush2.msra.mxu0 0.0
    %4209 = vmatprep.subr.mxu0 0.0
    %4210 = vmatpush2.msra.mxu0 0.0
    %4211 = vmatprep.subr.mxu0 0.0
    %4212 = vmatpush2.msra.mxu0 0.0
    %4213 = vmatprep.mubr.f32.mxu0 0.0
    %4214 = vmatmul.mubr.f32.gmra.mxu0 %v1026
    %v4215 = vpop.f32.mrf.mxu0
    %v4216 = vadd.f32 0.0, %v4215
    %v4217 = vpop.f32.mrf.mxu0
    %4218 = vmatprep.mubr.f32.mxu0 0.0
    %4219 = vmatmul.mubr.f32.gmra.mxu0 %v1029
    %v4220 = vpop.f32.mrf.mxu0
    %v4221 = vadd.f32 0.0, %v4220
    %v4222 = vpop.f32.mrf.mxu0
    %4223 = vmatprep.mubr.f32.mxu0 0.0
    %4224 = vmatmul.mubr.f32.gmra.mxu0 %v1032
    %v4225 = vpop.f32.mrf.mxu0
    %v4226 = vadd.f32 0.0, %v4225
    %v4227 = vpop.f32.mrf.mxu0
    %4228 = vmatprep.mubr.f32.mxu0 0.0
    %4229 = vmatmul.mubr.f32.gmra.mxu0 %v1035
    %v4230 = vpop.f32.mrf.mxu0
    %v4231 = vadd.f32 0.0, %v4230
    %v4232 = vpop.f32.mrf.mxu0
    %4233 = vmatprep.mubr.f32.mxu0 0.0
    %4234 = vmatmul.mubr.f32.gmra.mxu0 %v1038
    %v4235 = vpop.f32.mrf.mxu0
    %v4236 = vadd.f32 0.0, %v4235
    %v4237 = vpop.f32.mrf.mxu0
    %4238 = vmatprep.mubr.f32.mxu0 0.0
    %4239 = vmatmul.mubr.f32.gmra.mxu0 %v1041
    %v4240 = vpop.f32.mrf.mxu0
    %v4241 = vadd.f32 0.0, %v4240
    %v4242 = vpop.f32.mrf.mxu0
    %4243 = vmatprep.mubr.f32.mxu0 0.0
    %4244 = vmatmul.mubr.f32.gmra.mxu0 %v1044
    %v4245 = vpop.f32.mrf.mxu0
    %v4246 = vadd.f32 0.0, %v4245
    %v4247 = vpop.f32.mrf.mxu0
    %4248 = vmatprep.mubr.f32.mxu0 0.0
    %4249 = vmatmul.mubr.f32.gmra.mxu0 %v1047
    %v4250 = vpop.f32.mrf.mxu0
    %v4251 = vadd.f32 0.0, %v4250
    %v4252 = vpop.f32.mrf.mxu0
    %4253 = vmatprep.mubr.f32.mxu0 0.0
    %4254 = vmatmul.mubr.f32.gmra.mxu0 %v1050
    %v4255 = vpop.f32.mrf.mxu0
    %v4256 = vadd.f32 0.0, %v4255
    %v4257 = vpop.f32.mrf.mxu0
    %4258 = vmatprep.mubr.f32.mxu0 0.0
    %4259 = vmatmul.mubr.f32.gmra.mxu0 %v1053
    %v4260 = vpop.f32.mrf.mxu0
    %v4261 = vadd.f32 0.0, %v4260
    %v4262 = vpop.f32.mrf.mxu0
    %4263 = vmatprep.mubr.f32.mxu0 0.0
    %4264 = vmatmul.mubr.f32.gmra.mxu0 %v1056
    %v4265 = vpop.f32.mrf.mxu0
    %v4266 = vadd.f32 0.0, %v4265
    %v4267 = vpop.f32.mrf.mxu0
    %4268 = vmatprep.mubr.f32.mxu0 0.0
    %4269 = vmatmul.mubr.f32.gmra.mxu0 %v1059
    %v4270 = vpop.f32.mrf.mxu0
    %v4271 = vadd.f32 0.0, %v4270
    %v4272 = vpop.f32.mrf.mxu0
    %4273 = vmatprep.mubr.f32.mxu0 0.0
    %4274 = vmatmul.mubr.f32.gmra.mxu0 %v1062
    %v4275 = vpop.f32.mrf.mxu0
    %v4276 = vadd.f32 0.0, %v4275
    %v4277 = vpop.f32.mrf.mxu0
    %4278 = vmatprep.mubr.f32.mxu0 0.0
    %4279 = vmatmul.mubr.f32.gmra.mxu0 %v1065
    %v4280 = vpop.f32.mrf.mxu0
    %v4281 = vadd.f32 0.0, %v4280
    %v4282 = vpop.f32.mrf.mxu0
    %4283 = vmatprep.mubr.f32.mxu0 0.0
    %4284 = vmatmul.mubr.f32.gmra.mxu0 %v1068
    %v4285 = vpop.f32.mrf.mxu0
    %v4286 = vadd.f32 0.0, %v4285
    %v4287 = vpop.f32.mrf.mxu0
    %4288 = vmatprep.mubr.f32.mxu0 0.0
    %4289 = vmatmul.mubr.f32.gmra.mxu0 %v1071
    %v4290 = vpop.f32.mrf.mxu0
    %v4291 = vadd.f32 0.0, %v4290
    %v4292 = vpop.f32.mrf.mxu0
    %4293 = vdwg.mxu0
    %v4294 = vadd.f32 %v4133, %v4216
    %v4295 = vadd.f32 %v4134, %v4221
    %v4296 = vadd.f32 %v4135, %v4226
    %v4297 = vadd.f32 %v4136, %v4231
    %v4298 = vadd.f32 %v4137, %v4236
    %v4299 = vadd.f32 %v4138, %v4241
    %v4300 = vadd.f32 %v4139, %v4246
    %v4301 = vadd.f32 %v4140, %v4251
    %v4302 = vadd.f32 %v4141, %v4256
    %v4303 = vadd.f32 %v4142, %v4261
    %v4304 = vadd.f32 %v4143, %v4266
    %v4305 = vadd.f32 %v4144, %v4271
    %v4306 = vadd.f32 %v4145, %v4276
    %v4307 = vadd.f32 %v4146, %v4281
    %v4308 = vadd.f32 %v4147, %v4286
    %v4309 = vadd.f32 %v4148, %v4291
    %v4310 = vtanh.pop %v4294
    %v4311 = vtanh.pop %v4295
    %v4312 = vtanh.pop %v4296
    %v4313 = vtanh.pop %v4297
    %v4314 = vtanh.pop %v4298
    %v4315 = vtanh.pop %v4299
    %v4316 = vtanh.pop %v4300
    %v4317 = vtanh.pop %v4301
    %v4318 = vtanh.pop %v4302
    %v4319 = vtanh.pop %v4303
    %v4320 = vtanh.pop %v4304
    %v4321 = vtanh.pop %v4305
    %v4322 = vtanh.pop %v4306
    %v4323 = vtanh.pop %v4307
    %v4324 = vtanh.pop %v4308
    %v4325 = vtanh.pop %v4309
    %v4326 = vmul.f32 %v4310, 0.5
    %v4327 = vmul.f32 %v4311, 0.5
    %v4328 = vmul.f32 %v4312, 0.5
    %v4329 = vmul.f32 %v4313, 0.5
    %v4330 = vadd.f32 %v4326, 0.5
    %v4331 = vadd.f32 %v4327, 0.5
    %v4332 = vadd.f32 %v4328, 0.5
    %v4333 = vadd.f32 %v4329, 0.5
    %v4334 = vmul.f32 %v4314, 0.5
    %v4335 = vmul.f32 %v4315, 0.5
    %v4336 = vmul.f32 %v4316, 0.5
    %v4337 = vmul.f32 %v4317, 0.5
    %v4338 = vadd.f32 %v4334, 0.5
    %v4339 = vadd.f32 %v4335, 0.5
    %v4340 = vadd.f32 %v4336, 0.5
    %v4341 = vadd.f32 %v4337, 0.5
    %v4342 = vmul.f32 %v4322, 0.5
    %v4343 = vmul.f32 %v4323, 0.5
    %v4344 = vmul.f32 %v4324, 0.5
    %v4345 = vmul.f32 %v4325, 0.5
    %v4346 = vadd.f32 %v4342, 0.5
    %v4347 = vadd.f32 %v4343, 0.5
    %v4348 = vadd.f32 %v4344, 0.5
    %v4349 = vadd.f32 %v4345, 0.5
    %v4350 = vmul.f32 %v4338, %v3589
    %v4351 = vmul.f32 %v4339, %v3590
    %v4352 = vmul.f32 %v4340, %v3591
    %v4353 = vmul.f32 %v4341, %v3592
    %v4354 = vmul.f32 %v4330, %v4318
    %v4355 = vmul.f32 %v4331, %v4319
    %v4356 = vmul.f32 %v4332, %v4320
    %v4357 = vmul.f32 %v4333, %v4321
    %v4358 = vadd.f32 %v4350, %v4354
    %v4359 = vadd.f32 %v4351, %v4355
    %v4360 = vadd.f32 %v4352, %v4356
    %v4361 = vadd.f32 %v4353, %v4357
    %v4362 = vtanh.pop %v4358
    %v4363 = vtanh.pop %v4359
    %v4364 = vtanh.pop %v4360
    %v4365 = vtanh.pop %v4361
    %v4366 = vmul.f32 %v4346, %v4362
    %v4367 = vmul.f32 %v4347, %v4363
    %v4368 = vmul.f32 %v4348, %v4364
    %v4369 = vmul.f32 %v4349, %v4365
    %s4370 = scalar_lea.vmem %s0, 40
    %v4371 = vld [vmem:[%s4370] sm:$0xf]
    %v4372 = vld [vmem:[%s4370 + $0x4] sm:$0xf]
    %v4373 = vunpack.c.l.bf16 %v4371
    %v4374 = vunpack.c.l.bf16 %v4372
    %4375 = vmatprep.subr.mxu0 0.0
    %4376 = vmatpush1.msra.mxu0 0.0
    %4377 = vmatprep.subr.mxu0 0.0
    %4378 = vmatpush1.msra.mxu0 0.0
    %4379 = vmatprep.subr.mxu0 0.0
    %4380 = vmatpush1.msra.mxu0 0.0
    %4381 = vmatprep.subr.mxu0 0.0
    %4382 = vmatpush1.msra.mxu0 0.0
    %4383 = vmatprep.subr.mxu0 0.0
    %4384 = vmatpush1.msra.mxu0 0.0
    %4385 = vmatprep.subr.mxu0 0.0
    %4386 = vmatpush1.msra.mxu0 0.0
    %4387 = vmatprep.subr.mxu0 0.0
    %4388 = vmatpush1.msra.mxu0 0.0
    %4389 = vmatprep.subr.mxu0 0.0
    %4390 = vmatpush1.msra.mxu0 0.0
    %4391 = vmatprep.subr.mxu0 0.0
    %4392 = vmatpush1.msra.mxu0 0.0
    %4393 = vmatprep.subr.mxu0 0.0
    %4394 = vmatpush1.msra.mxu0 0.0
    %4395 = vmatprep.subr.mxu0 0.0
    %4396 = vmatpush1.msra.mxu0 0.0
    %4397 = vmatprep.subr.mxu0 0.0
    %4398 = vmatpush1.msra.mxu0 0.0
    %4399 = vmatprep.subr.mxu0 0.0
    %4400 = vmatpush1.msra.mxu0 0.0
    %4401 = vmatprep.subr.mxu0 0.0
    %4402 = vmatpush1.msra.mxu0 0.0
    %4403 = vmatprep.subr.mxu0 0.0
    %4404 = vmatpush1.msra.mxu0 %v4374
    %4405 = vmatprep.subr.mxu0 0.0
    %4406 = vmatpush1.msra.mxu0 %v4373
    %4407 = vmatprep.subr.mxu0 0.0
    %4408 = vmatpush2.msra.mxu0 0.0
    %4409 = vmatprep.subr.mxu0 0.0
    %4410 = vmatpush2.msra.mxu0 0.0
    %4411 = vmatprep.subr.mxu0 0.0
    %4412 = vmatpush2.msra.mxu0 0.0
    %4413 = vmatprep.subr.mxu0 0.0
    %4414 = vmatpush2.msra.mxu0 0.0
    %4415 = vmatprep.subr.mxu0 0.0
    %4416 = vmatpush2.msra.mxu0 0.0
    %4417 = vmatprep.subr.mxu0 0.0
    %4418 = vmatpush2.msra.mxu0 0.0
    %4419 = vmatprep.subr.mxu0 0.0
    %4420 = vmatpush2.msra.mxu0 0.0
    %4421 = vmatprep.subr.mxu0 0.0
    %4422 = vmatpush2.msra.mxu0 0.0
    %4423 = vmatprep.subr.mxu0 0.0
    %4424 = vmatpush2.msra.mxu0 0.0
    %4425 = vmatprep.subr.mxu0 0.0
    %4426 = vmatpush2.msra.mxu0 0.0
    %4427 = vmatprep.subr.mxu0 0.0
    %4428 = vmatpush2.msra.mxu0 0.0
    %4429 = vmatprep.subr.mxu0 0.0
    %4430 = vmatpush2.msra.mxu0 0.0
    %4431 = vmatprep.subr.mxu0 0.0
    %4432 = vmatpush2.msra.mxu0 0.0
    %4433 = vmatprep.subr.mxu0 0.0
    %4434 = vmatpush2.msra.mxu0 0.0
    %4435 = vmatprep.subr.mxu0 0.0
    %4436 = vmatpush2.msra.mxu0 0.0
    %4437 = vmatprep.subr.mxu0 0.0
    %4438 = vmatpush2.msra.mxu0 0.0
    %4439 = vmatprep.mubr.f32.mxu0 0.0
    %4440 = vmatmul.mubr.f32.gmra.mxu0 %v338
    %v4441 = vpop.f32.mrf.mxu0
    %v4442 = vadd.f32 0.0, %v4441
    %v4443 = vpop.f32.mrf.mxu0
    %4444 = vmatprep.mubr.f32.mxu0 0.0
    %4445 = vmatmul.mubr.f32.gmra.mxu0 %v341
    %v4446 = vpop.f32.mrf.mxu0
    %v4447 = vadd.f32 0.0, %v4446
    %v4448 = vpop.f32.mrf.mxu0
    %4449 = vmatprep.mubr.f32.mxu0 0.0
    %4450 = vmatmul.mubr.f32.gmra.mxu0 %v344
    %v4451 = vpop.f32.mrf.mxu0
    %v4452 = vadd.f32 0.0, %v4451
    %v4453 = vpop.f32.mrf.mxu0
    %4454 = vmatprep.mubr.f32.mxu0 0.0
    %4455 = vmatmul.mubr.f32.gmra.mxu0 %v347
    %v4456 = vpop.f32.mrf.mxu0
    %v4457 = vadd.f32 0.0, %v4456
    %v4458 = vpop.f32.mrf.mxu0
    %4459 = vmatprep.mubr.f32.mxu0 0.0
    %4460 = vmatmul.mubr.f32.gmra.mxu0 %v350
    %v4461 = vpop.f32.mrf.mxu0
    %v4462 = vadd.f32 0.0, %v4461
    %v4463 = vpop.f32.mrf.mxu0
    %4464 = vmatprep.mubr.f32.mxu0 0.0
    %4465 = vmatmul.mubr.f32.gmra.mxu0 %v353
    %v4466 = vpop.f32.mrf.mxu0
    %v4467 = vadd.f32 0.0, %v4466
    %v4468 = vpop.f32.mrf.mxu0
    %4469 = vmatprep.mubr.f32.mxu0 0.0
    %4470 = vmatmul.mubr.f32.gmra.mxu0 %v356
    %v4471 = vpop.f32.mrf.mxu0
    %v4472 = vadd.f32 0.0, %v4471
    %v4473 = vpop.f32.mrf.mxu0
    %4474 = vmatprep.mubr.f32.mxu0 0.0
    %4475 = vmatmul.mubr.f32.gmra.mxu0 %v359
    %v4476 = vpop.f32.mrf.mxu0
    %v4477 = vadd.f32 0.0, %v4476
    %v4478 = vpop.f32.mrf.mxu0
    %4479 = vmatprep.mubr.f32.mxu0 0.0
    %4480 = vmatmul.mubr.f32.gmra.mxu0 %v362
    %v4481 = vpop.f32.mrf.mxu0
    %v4482 = vadd.f32 0.0, %v4481
    %v4483 = vpop.f32.mrf.mxu0
    %4484 = vmatprep.mubr.f32.mxu0 0.0
    %4485 = vmatmul.mubr.f32.gmra.mxu0 %v365
    %v4486 = vpop.f32.mrf.mxu0
    %v4487 = vadd.f32 0.0, %v4486
    %v4488 = vpop.f32.mrf.mxu0
    %4489 = vmatprep.mubr.f32.mxu0 0.0
    %4490 = vmatmul.mubr.f32.gmra.mxu0 %v368
    %v4491 = vpop.f32.mrf.mxu0
    %v4492 = vadd.f32 0.0, %v4491
    %v4493 = vpop.f32.mrf.mxu0
    %4494 = vmatprep.mubr.f32.mxu0 0.0
    %4495 = vmatmul.mubr.f32.gmra.mxu0 %v371
    %v4496 = vpop.f32.mrf.mxu0
    %v4497 = vadd.f32 0.0, %v4496
    %v4498 = vpop.f32.mrf.mxu0
    %4499 = vmatprep.mubr.f32.mxu0 0.0
    %4500 = vmatmul.mubr.f32.gmra.mxu0 %v374
    %v4501 = vpop.f32.mrf.mxu0
    %v4502 = vadd.f32 0.0, %v4501
    %v4503 = vpop.f32.mrf.mxu0
    %4504 = vmatprep.mubr.f32.mxu0 0.0
    %4505 = vmatmul.mubr.f32.gmra.mxu0 %v377
    %v4506 = vpop.f32.mrf.mxu0
    %v4507 = vadd.f32 0.0, %v4506
    %v4508 = vpop.f32.mrf.mxu0
    %4509 = vmatprep.mubr.f32.mxu0 0.0
    %4510 = vmatmul.mubr.f32.gmra.mxu0 %v380
    %v4511 = vpop.f32.mrf.mxu0
    %v4512 = vadd.f32 0.0, %v4511
    %v4513 = vpop.f32.mrf.mxu0
    %4514 = vmatprep.mubr.f32.mxu0 0.0
    %4515 = vmatmul.mubr.f32.gmra.mxu0 %v383
    %v4516 = vpop.f32.mrf.mxu0
    %v4517 = vadd.f32 0.0, %v4516
    %v4518 = vpop.f32.mrf.mxu0
    %4519 = vdwg.mxu0
    %v4520 = vadd.f32 %v143, %v4442
    %v4521 = vadd.f32 %v148, %v4447
    %v4522 = vadd.f32 %v153, %v4452
    %v4523 = vadd.f32 %v158, %v4457
    %v4524 = vadd.f32 %v163, %v4462
    %v4525 = vadd.f32 %v168, %v4467
    %v4526 = vadd.f32 %v173, %v4472
    %v4527 = vadd.f32 %v178, %v4477
    %v4528 = vadd.f32 %v183, %v4482
    %v4529 = vadd.f32 %v188, %v4487
    %v4530 = vadd.f32 %v193, %v4492
    %v4531 = vadd.f32 %v198, %v4497
    %v4532 = vadd.f32 %v203, %v4502
    %v4533 = vadd.f32 %v208, %v4507
    %v4534 = vadd.f32 %v213, %v4512
    %v4535 = vadd.f32 %v218, %v4517
    %4536 = vmatprep.subr.mxu0 0.0
    %4537 = vmatpush1.msra.mxu0 0.0
    %4538 = vmatprep.subr.mxu0 0.0
    %4539 = vmatpush1.msra.mxu0 0.0
    %4540 = vmatprep.subr.mxu0 0.0
    %4541 = vmatpush1.msra.mxu0 0.0
    %4542 = vmatprep.subr.mxu0 0.0
    %4543 = vmatpush1.msra.mxu0 0.0
    %4544 = vmatprep.subr.mxu0 0.0
    %4545 = vmatpush1.msra.mxu0 0.0
    %4546 = vmatprep.subr.mxu0 0.0
    %4547 = vmatpush1.msra.mxu0 0.0
    %4548 = vmatprep.subr.mxu0 0.0
    %4549 = vmatpush1.msra.mxu0 0.0
    %4550 = vmatprep.subr.mxu0 0.0
    %4551 = vmatpush1.msra.mxu0 0.0
    %4552 = vmatprep.subr.mxu0 0.0
    %4553 = vmatpush1.msra.mxu0 0.0
    %4554 = vmatprep.subr.mxu0 0.0
    %4555 = vmatpush1.msra.mxu0 0.0
    %4556 = vmatprep.subr.mxu0 0.0
    %4557 = vmatpush1.msra.mxu0 0.0
    %4558 = vmatprep.subr.mxu0 0.0
    %4559 = vmatpush1.msra.mxu0 0.0
    %4560 = vmatprep.subr.mxu0 0.0
    %4561 = vmatpush1.msra.mxu0 %v3987
    %4562 = vmatprep.subr.mxu0 0.0
    %4563 = vmatpush1.msra.mxu0 %v3986
    %4564 = vmatprep.subr.mxu0 0.0
    %4565 = vmatpush1.msra.mxu0 %v3985
    %4566 = vmatprep.subr.mxu0 0.0
    %4567 = vmatpush1.msra.mxu0 %v3984
    %4568 = vmatprep.subr.mxu0 0.0
    %4569 = vmatpush2.msra.mxu0 0.0
    %4570 = vmatprep.subr.mxu0 0.0
    %4571 = vmatpush2.msra.mxu0 0.0
    %4572 = vmatprep.subr.mxu0 0.0
    %4573 = vmatpush2.msra.mxu0 0.0
    %4574 = vmatprep.subr.mxu0 0.0
    %4575 = vmatpush2.msra.mxu0 0.0
    %4576 = vmatprep.subr.mxu0 0.0
    %4577 = vmatpush2.msra.mxu0 0.0
    %4578 = vmatprep.subr.mxu0 0.0
    %4579 = vmatpush2.msra.mxu0 0.0
    %4580 = vmatprep.subr.mxu0 0.0
    %4581 = vmatpush2.msra.mxu0 0.0
    %4582 = vmatprep.subr.mxu0 0.0
    %4583 = vmatpush2.msra.mxu0 0.0
    %4584 = vmatprep.subr.mxu0 0.0
    %4585 = vmatpush2.msra.mxu0 0.0
    %4586 = vmatprep.subr.mxu0 0.0
    %4587 = vmatpush2.msra.mxu0 0.0
    %4588 = vmatprep.subr.mxu0 0.0
    %4589 = vmatpush2.msra.mxu0 0.0
    %4590 = vmatprep.subr.mxu0 0.0
    %4591 = vmatpush2.msra.mxu0 0.0
    %4592 = vmatprep.subr.mxu0 0.0
    %4593 = vmatpush2.msra.mxu0 0.0
    %4594 = vmatprep.subr.mxu0 0.0
    %4595 = vmatpush2.msra.mxu0 0.0
    %4596 = vmatprep.subr.mxu0 0.0
    %4597 = vmatpush2.msra.mxu0 0.0
    %4598 = vmatprep.subr.mxu0 0.0
    %4599 = vmatpush2.msra.mxu0 0.0
    %4600 = vmatprep.mubr.f32.mxu0 0.0
    %4601 = vmatmul.mubr.f32.gmra.mxu0 %v548
    %v4602 = vpop.f32.mrf.mxu0
    %v4603 = vadd.f32 0.0, %v4602
    %v4604 = vpop.f32.mrf.mxu0
    %4605 = vmatprep.mubr.f32.mxu0 0.0
    %4606 = vmatmul.mubr.f32.gmra.mxu0 %v551
    %v4607 = vpop.f32.mrf.mxu0
    %v4608 = vadd.f32 0.0, %v4607
    %v4609 = vpop.f32.mrf.mxu0
    %4610 = vmatprep.mubr.f32.mxu0 0.0
    %4611 = vmatmul.mubr.f32.gmra.mxu0 %v554
    %v4612 = vpop.f32.mrf.mxu0
    %v4613 = vadd.f32 0.0, %v4612
    %v4614 = vpop.f32.mrf.mxu0
    %4615 = vmatprep.mubr.f32.mxu0 0.0
    %4616 = vmatmul.mubr.f32.gmra.mxu0 %v557
    %v4617 = vpop.f32.mrf.mxu0
    %v4618 = vadd.f32 0.0, %v4617
    %v4619 = vpop.f32.mrf.mxu0
    %4620 = vmatprep.mubr.f32.mxu0 0.0
    %4621 = vmatmul.mubr.f32.gmra.mxu0 %v560
    %v4622 = vpop.f32.mrf.mxu0
    %v4623 = vadd.f32 0.0, %v4622
    %v4624 = vpop.f32.mrf.mxu0
    %4625 = vmatprep.mubr.f32.mxu0 0.0
    %4626 = vmatmul.mubr.f32.gmra.mxu0 %v563
    %v4627 = vpop.f32.mrf.mxu0
    %v4628 = vadd.f32 0.0, %v4627
    %v4629 = vpop.f32.mrf.mxu0
    %4630 = vmatprep.mubr.f32.mxu0 0.0
    %4631 = vmatmul.mubr.f32.gmra.mxu0 %v566
    %v4632 = vpop.f32.mrf.mxu0
    %v4633 = vadd.f32 0.0, %v4632
    %v4634 = vpop.f32.mrf.mxu0
    %4635 = vmatprep.mubr.f32.mxu0 0.0
    %4636 = vmatmul.mubr.f32.gmra.mxu0 %v569
    %v4637 = vpop.f32.mrf.mxu0
    %v4638 = vadd.f32 0.0, %v4637
    %v4639 = vpop.f32.mrf.mxu0
    %4640 = vmatprep.mubr.f32.mxu0 0.0
    %4641 = vmatmul.mubr.f32.gmra.mxu0 %v572
    %v4642 = vpop.f32.mrf.mxu0
    %v4643 = vadd.f32 0.0, %v4642
    %v4644 = vpop.f32.mrf.mxu0
    %4645 = vmatprep.mubr.f32.mxu0 0.0
    %4646 = vmatmul.mubr.f32.gmra.mxu0 %v575
    %v4647 = vpop.f32.mrf.mxu0
    %v4648 = vadd.f32 0.0, %v4647
    %v4649 = vpop.f32.mrf.mxu0
    %4650 = vmatprep.mubr.f32.mxu0 0.0
    %4651 = vmatmul.mubr.f32.gmra.mxu0 %v578
    %v4652 = vpop.f32.mrf.mxu0
    %v4653 = vadd.f32 0.0, %v4652
    %v4654 = vpop.f32.mrf.mxu0
    %4655 = vmatprep.mubr.f32.mxu0 0.0
    %4656 = vmatmul.mubr.f32.gmra.mxu0 %v581
    %v4657 = vpop.f32.mrf.mxu0
    %v4658 = vadd.f32 0.0, %v4657
    %v4659 = vpop.f32.mrf.mxu0
    %4660 = vmatprep.mubr.f32.mxu0 0.0
    %4661 = vmatmul.mubr.f32.gmra.mxu0 %v584
    %v4662 = vpop.f32.mrf.mxu0
    %v4663 = vadd.f32 0.0, %v4662
    %v4664 = vpop.f32.mrf.mxu0
    %4665 = vmatprep.mubr.f32.mxu0 0.0
    %4666 = vmatmul.mubr.f32.gmra.mxu0 %v587
    %v4667 = vpop.f32.mrf.mxu0
    %v4668 = vadd.f32 0.0, %v4667
    %v4669 = vpop.f32.mrf.mxu0
    %4670 = vmatprep.mubr.f32.mxu0 0.0
    %4671 = vmatmul.mubr.f32.gmra.mxu0 %v590
    %v4672 = vpop.f32.mrf.mxu0
    %v4673 = vadd.f32 0.0, %v4672
    %v4674 = vpop.f32.mrf.mxu0
    %4675 = vmatprep.mubr.f32.mxu0 0.0
    %4676 = vmatmul.mubr.f32.gmra.mxu0 %v593
    %v4677 = vpop.f32.mrf.mxu0
    %v4678 = vadd.f32 0.0, %v4677
    %v4679 = vpop.f32.mrf.mxu0
    %4680 = vdwg.mxu0
    %v4681 = vadd.f32 %v4520, %v4603
    %v4682 = vadd.f32 %v4521, %v4608
    %v4683 = vadd.f32 %v4522, %v4613
    %v4684 = vadd.f32 %v4523, %v4618
    %v4685 = vadd.f32 %v4524, %v4623
    %v4686 = vadd.f32 %v4525, %v4628
    %v4687 = vadd.f32 %v4526, %v4633
    %v4688 = vadd.f32 %v4527, %v4638
    %v4689 = vadd.f32 %v4528, %v4643
    %v4690 = vadd.f32 %v4529, %v4648
    %v4691 = vadd.f32 %v4530, %v4653
    %v4692 = vadd.f32 %v4531, %v4658
    %v4693 = vadd.f32 %v4532, %v4663
    %v4694 = vadd.f32 %v4533, %v4668
    %v4695 = vadd.f32 %v4534, %v4673
    %v4696 = vadd.f32 %v4535, %v4678
    %v4697 = vtanh.pop %v4681
    %v4698 = vtanh.pop %v4682
    %v4699 = vtanh.pop %v4683
    %v4700 = vtanh.pop %v4684
    %v4701 = vtanh.pop %v4685
    %v4702 = vtanh.pop %v4686
    %v4703 = vtanh.pop %v4687
    %v4704 = vtanh.pop %v4688
    %v4705 = vtanh.pop %v4689
    %v4706 = vtanh.pop %v4690
    %v4707 = vtanh.pop %v4691
    %v4708 = vtanh.pop %v4692
    %v4709 = vtanh.pop %v4693
    %v4710 = vtanh.pop %v4694
    %v4711 = vtanh.pop %v4695
    %v4712 = vtanh.pop %v4696
    %v4713 = vmul.f32 %v4697, 0.5
    %v4714 = vmul.f32 %v4698, 0.5
    %v4715 = vmul.f32 %v4699, 0.5
    %v4716 = vmul.f32 %v4700, 0.5
    %v4717 = vadd.f32 %v4713, 0.5
    %v4718 = vadd.f32 %v4714, 0.5
    %v4719 = vadd.f32 %v4715, 0.5
    %v4720 = vadd.f32 %v4716, 0.5
    %v4721 = vmul.f32 %v4701, 0.5
    %v4722 = vmul.f32 %v4702, 0.5
    %v4723 = vmul.f32 %v4703, 0.5
    %v4724 = vmul.f32 %v4704, 0.5
    %v4725 = vadd.f32 %v4721, 0.5
    %v4726 = vadd.f32 %v4722, 0.5
    %v4727 = vadd.f32 %v4723, 0.5
    %v4728 = vadd.f32 %v4724, 0.5
    %v4729 = vmul.f32 %v4709, 0.5
    %v4730 = vmul.f32 %v4710, 0.5
    %v4731 = vmul.f32 %v4711, 0.5
    %v4732 = vmul.f32 %v4712, 0.5
    %v4733 = vadd.f32 %v4729, 0.5
    %v4734 = vadd.f32 %v4730, 0.5
    %v4735 = vadd.f32 %v4731, 0.5
    %v4736 = vadd.f32 %v4732, 0.5
    %v4737 = vmul.f32 %v4725, %v3976
    %v4738 = vmul.f32 %v4726, %v3977
    %v4739 = vmul.f32 %v4727, %v3978
    %v4740 = vmul.f32 %v4728, %v3979
    %v4741 = vmul.f32 %v4717, %v4705
    %v4742 = vmul.f32 %v4718, %v4706
    %v4743 = vmul.f32 %v4719, %v4707
    %v4744 = vmul.f32 %v4720, %v4708
    %v4745 = vadd.f32 %v4737, %v4741
    %v4746 = vadd.f32 %v4738, %v4742
    %v4747 = vadd.f32 %v4739, %v4743
    %v4748 = vadd.f32 %v4740, %v4744
    %v4749 = vtanh.pop %v4745
    %v4750 = vtanh.pop %v4746
    %v4751 = vtanh.pop %v4747
    %v4752 = vtanh.pop %v4748
    %v4753 = vmul.f32 %v4733, %v4749
    %v4754 = vmul.f32 %v4734, %v4750
    %v4755 = vmul.f32 %v4735, %v4751
    %v4756 = vmul.f32 %v4736, %v4752
    %4757 = vmatprep.subr.mxu0 0.0
    %4758 = vmatpush1.msra.mxu0 0.0
    %4759 = vmatprep.subr.mxu0 0.0
    %4760 = vmatpush1.msra.mxu0 0.0
    %4761 = vmatprep.subr.mxu0 0.0
    %4762 = vmatpush1.msra.mxu0 0.0
    %4763 = vmatprep.subr.mxu0 0.0
    %4764 = vmatpush1.msra.mxu0 0.0
    %4765 = vmatprep.subr.mxu0 0.0
    %4766 = vmatpush1.msra.mxu0 0.0
    %4767 = vmatprep.subr.mxu0 0.0
    %4768 = vmatpush1.msra.mxu0 0.0
    %4769 = vmatprep.subr.mxu0 0.0
    %4770 = vmatpush1.msra.mxu0 0.0
    %4771 = vmatprep.subr.mxu0 0.0
    %4772 = vmatpush1.msra.mxu0 0.0
    %4773 = vmatprep.subr.mxu0 0.0
    %4774 = vmatpush1.msra.mxu0 0.0
    %4775 = vmatprep.subr.mxu0 0.0
    %4776 = vmatpush1.msra.mxu0 0.0
    %4777 = vmatprep.subr.mxu0 0.0
    %4778 = vmatpush1.msra.mxu0 0.0
    %4779 = vmatprep.subr.mxu0 0.0
    %4780 = vmatpush1.msra.mxu0 0.0
    %4781 = vmatprep.subr.mxu0 0.0
    %4782 = vmatpush1.msra.mxu0 %v4756
    %4783 = vmatprep.subr.mxu0 0.0
    %4784 = vmatpush1.msra.mxu0 %v4755
    %4785 = vmatprep.subr.mxu0 0.0
    %4786 = vmatpush1.msra.mxu0 %v4754
    %4787 = vmatprep.subr.mxu0 0.0
    %4788 = vmatpush1.msra.mxu0 %v4753
    %4789 = vmatprep.subr.mxu0 0.0
    %4790 = vmatpush2.msra.mxu0 0.0
    %4791 = vmatprep.subr.mxu0 0.0
    %4792 = vmatpush2.msra.mxu0 0.0
    %4793 = vmatprep.subr.mxu0 0.0
    %4794 = vmatpush2.msra.mxu0 0.0
    %4795 = vmatprep.subr.mxu0 0.0
    %4796 = vmatpush2.msra.mxu0 0.0
    %4797 = vmatprep.subr.mxu0 0.0
    %4798 = vmatpush2.msra.mxu0 0.0
    %4799 = vmatprep.subr.mxu0 0.0
    %4800 = vmatpush2.msra.mxu0 0.0
    %4801 = vmatprep.subr.mxu0 0.0
    %4802 = vmatpush2.msra.mxu0 0.0
    %4803 = vmatprep.subr.mxu0 0.0
    %4804 = vmatpush2.msra.mxu0 0.0
    %4805 = vmatprep.subr.mxu0 0.0
    %4806 = vmatpush2.msra.mxu0 0.0
    %4807 = vmatprep.subr.mxu0 0.0
    %4808 = vmatpush2.msra.mxu0 0.0
    %4809 = vmatprep.subr.mxu0 0.0
    %4810 = vmatpush2.msra.mxu0 0.0
    %4811 = vmatprep.subr.mxu0 0.0
    %4812 = vmatpush2.msra.mxu0 0.0
    %4813 = vmatprep.subr.mxu0 0.0
    %4814 = vmatpush2.msra.mxu0 0.0
    %4815 = vmatprep.subr.mxu0 0.0
    %4816 = vmatpush2.msra.mxu0 0.0
    %4817 = vmatprep.subr.mxu0 0.0
    %4818 = vmatpush2.msra.mxu0 0.0
    %4819 = vmatprep.subr.mxu0 0.0
    %4820 = vmatpush2.msra.mxu0 0.0
    %4821 = vmatprep.mubr.f32.mxu0 0.0
    %4822 = vmatmul.mubr.f32.gmra.mxu0 %v817
    %v4823 = vpop.f32.mrf.mxu0
    %v4824 = vadd.f32 0.0, %v4823
    %v4825 = vpop.f32.mrf.mxu0
    %4826 = vmatprep.mubr.f32.mxu0 0.0
    %4827 = vmatmul.mubr.f32.gmra.mxu0 %v820
    %v4828 = vpop.f32.mrf.mxu0
    %v4829 = vadd.f32 0.0, %v4828
    %v4830 = vpop.f32.mrf.mxu0
    %4831 = vmatprep.mubr.f32.mxu0 0.0
    %4832 = vmatmul.mubr.f32.gmra.mxu0 %v823
    %v4833 = vpop.f32.mrf.mxu0
    %v4834 = vadd.f32 0.0, %v4833
    %v4835 = vpop.f32.mrf.mxu0
    %4836 = vmatprep.mubr.f32.mxu0 0.0
    %4837 = vmatmul.mubr.f32.gmra.mxu0 %v826
    %v4838 = vpop.f32.mrf.mxu0
    %v4839 = vadd.f32 0.0, %v4838
    %v4840 = vpop.f32.mrf.mxu0
    %4841 = vmatprep.mubr.f32.mxu0 0.0
    %4842 = vmatmul.mubr.f32.gmra.mxu0 %v829
    %v4843 = vpop.f32.mrf.mxu0
    %v4844 = vadd.f32 0.0, %v4843
    %v4845 = vpop.f32.mrf.mxu0
    %4846 = vmatprep.mubr.f32.mxu0 0.0
    %4847 = vmatmul.mubr.f32.gmra.mxu0 %v832
    %v4848 = vpop.f32.mrf.mxu0
    %v4849 = vadd.f32 0.0, %v4848
    %v4850 = vpop.f32.mrf.mxu0
    %4851 = vmatprep.mubr.f32.mxu0 0.0
    %4852 = vmatmul.mubr.f32.gmra.mxu0 %v835
    %v4853 = vpop.f32.mrf.mxu0
    %v4854 = vadd.f32 0.0, %v4853
    %v4855 = vpop.f32.mrf.mxu0
    %4856 = vmatprep.mubr.f32.mxu0 0.0
    %4857 = vmatmul.mubr.f32.gmra.mxu0 %v838
    %v4858 = vpop.f32.mrf.mxu0
    %v4859 = vadd.f32 0.0, %v4858
    %v4860 = vpop.f32.mrf.mxu0
    %4861 = vmatprep.mubr.f32.mxu0 0.0
    %4862 = vmatmul.mubr.f32.gmra.mxu0 %v841
    %v4863 = vpop.f32.mrf.mxu0
    %v4864 = vadd.f32 0.0, %v4863
    %v4865 = vpop.f32.mrf.mxu0
    %4866 = vmatprep.mubr.f32.mxu0 0.0
    %4867 = vmatmul.mubr.f32.gmra.mxu0 %v844
    %v4868 = vpop.f32.mrf.mxu0
    %v4869 = vadd.f32 0.0, %v4868
    %v4870 = vpop.f32.mrf.mxu0
    %4871 = vmatprep.mubr.f32.mxu0 0.0
    %4872 = vmatmul.mubr.f32.gmra.mxu0 %v847
    %v4873 = vpop.f32.mrf.mxu0
    %v4874 = vadd.f32 0.0, %v4873
    %v4875 = vpop.f32.mrf.mxu0
    %4876 = vmatprep.mubr.f32.mxu0 0.0
    %4877 = vmatmul.mubr.f32.gmra.mxu0 %v850
    %v4878 = vpop.f32.mrf.mxu0
    %v4879 = vadd.f32 0.0, %v4878
    %v4880 = vpop.f32.mrf.mxu0
    %4881 = vmatprep.mubr.f32.mxu0 0.0
    %4882 = vmatmul.mubr.f32.gmra.mxu0 %v853
    %v4883 = vpop.f32.mrf.mxu0
    %v4884 = vadd.f32 0.0, %v4883
    %v4885 = vpop.f32.mrf.mxu0
    %4886 = vmatprep.mubr.f32.mxu0 0.0
    %4887 = vmatmul.mubr.f32.gmra.mxu0 %v856
    %v4888 = vpop.f32.mrf.mxu0
    %v4889 = vadd.f32 0.0, %v4888
    %v4890 = vpop.f32.mrf.mxu0
    %4891 = vmatprep.mubr.f32.mxu0 0.0
    %4892 = vmatmul.mubr.f32.gmra.mxu0 %v859
    %v4893 = vpop.f32.mrf.mxu0
    %v4894 = vadd.f32 0.0, %v4893
    %v4895 = vpop.f32.mrf.mxu0
    %4896 = vmatprep.mubr.f32.mxu0 0.0
    %4897 = vmatmul.mubr.f32.gmra.mxu0 %v862
    %v4898 = vpop.f32.mrf.mxu0
    %v4899 = vadd.f32 0.0, %v4898
    %v4900 = vpop.f32.mrf.mxu0
    %4901 = vdwg.mxu0
    %v4902 = vadd.f32 %v239, %v4824
    %v4903 = vadd.f32 %v244, %v4829
    %v4904 = vadd.f32 %v249, %v4834
    %v4905 = vadd.f32 %v254, %v4839
    %v4906 = vadd.f32 %v259, %v4844
    %v4907 = vadd.f32 %v264, %v4849
    %v4908 = vadd.f32 %v269, %v4854
    %v4909 = vadd.f32 %v274, %v4859
    %v4910 = vadd.f32 %v279, %v4864
    %v4911 = vadd.f32 %v284, %v4869
    %v4912 = vadd.f32 %v289, %v4874
    %v4913 = vadd.f32 %v294, %v4879
    %v4914 = vadd.f32 %v299, %v4884
    %v4915 = vadd.f32 %v304, %v4889
    %v4916 = vadd.f32 %v309, %v4894
    %v4917 = vadd.f32 %v314, %v4899
    %4918 = vmatprep.subr.mxu0 0.0
    %4919 = vmatpush1.msra.mxu0 0.0
    %4920 = vmatprep.subr.mxu0 0.0
    %4921 = vmatpush1.msra.mxu0 0.0
    %4922 = vmatprep.subr.mxu0 0.0
    %4923 = vmatpush1.msra.mxu0 0.0
    %4924 = vmatprep.subr.mxu0 0.0
    %4925 = vmatpush1.msra.mxu0 0.0
    %4926 = vmatprep.subr.mxu0 0.0
    %4927 = vmatpush1.msra.mxu0 0.0
    %4928 = vmatprep.subr.mxu0 0.0
    %4929 = vmatpush1.msra.mxu0 0.0
    %4930 = vmatprep.subr.mxu0 0.0
    %4931 = vmatpush1.msra.mxu0 0.0
    %4932 = vmatprep.subr.mxu0 0.0
    %4933 = vmatpush1.msra.mxu0 0.0
    %4934 = vmatprep.subr.mxu0 0.0
    %4935 = vmatpush1.msra.mxu0 0.0
    %4936 = vmatprep.subr.mxu0 0.0
    %4937 = vmatpush1.msra.mxu0 0.0
    %4938 = vmatprep.subr.mxu0 0.0
    %4939 = vmatpush1.msra.mxu0 0.0
    %4940 = vmatprep.subr.mxu0 0.0
    %4941 = vmatpush1.msra.mxu0 0.0
    %4942 = vmatprep.subr.mxu0 0.0
    %4943 = vmatpush1.msra.mxu0 %v4369
    %4944 = vmatprep.subr.mxu0 0.0
    %4945 = vmatpush1.msra.mxu0 %v4368
    %4946 = vmatprep.subr.mxu0 0.0
    %4947 = vmatpush1.msra.mxu0 %v4367
    %4948 = vmatprep.subr.mxu0 0.0
    %4949 = vmatpush1.msra.mxu0 %v4366
    %4950 = vmatprep.subr.mxu0 0.0
    %4951 = vmatpush2.msra.mxu0 0.0
    %4952 = vmatprep.subr.mxu0 0.0
    %4953 = vmatpush2.msra.mxu0 0.0
    %4954 = vmatprep.subr.mxu0 0.0
    %4955 = vmatpush2.msra.mxu0 0.0
    %4956 = vmatprep.subr.mxu0 0.0
    %4957 = vmatpush2.msra.mxu0 0.0
    %4958 = vmatprep.subr.mxu0 0.0
    %4959 = vmatpush2.msra.mxu0 0.0
    %4960 = vmatprep.subr.mxu0 0.0
    %4961 = vmatpush2.msra.mxu0 0.0
    %4962 = vmatprep.subr.mxu0 0.0
    %4963 = vmatpush2.msra.mxu0 0.0
    %4964 = vmatprep.subr.mxu0 0.0
    %4965 = vmatpush2.msra.mxu0 0.0
    %4966 = vmatprep.subr.mxu0 0.0
    %4967 = vmatpush2.msra.mxu0 0.0
    %4968 = vmatprep.subr.mxu0 0.0
    %4969 = vmatpush2.msra.mxu0 0.0
    %4970 = vmatprep.subr.mxu0 0.0
    %4971 = vmatpush2.msra.mxu0 0.0
    %4972 = vmatprep.subr.mxu0 0.0
    %4973 = vmatpush2.msra.mxu0 0.0
    %4974 = vmatprep.subr.mxu0 0.0
    %4975 = vmatpush2.msra.mxu0 0.0
    %4976 = vmatprep.subr.mxu0 0.0
    %4977 = vmatpush2.msra.mxu0 0.0
    %4978 = vmatprep.subr.mxu0 0.0
    %4979 = vmatpush2.msra.mxu0 0.0
    %4980 = vmatprep.subr.mxu0 0.0
    %4981 = vmatpush2.msra.mxu0 0.0
    %4982 = vmatprep.mubr.f32.mxu0 0.0
    %4983 = vmatmul.mubr.f32.gmra.mxu0 %v1026
    %v4984 = vpop.f32.mrf.mxu0
    %v4985 = vadd.f32 0.0, %v4984
    %v4986 = vpop.f32.mrf.mxu0
    %4987 = vmatprep.mubr.f32.mxu0 0.0
    %4988 = vmatmul.mubr.f32.gmra.mxu0 %v1029
    %v4989 = vpop.f32.mrf.mxu0
    %v4990 = vadd.f32 0.0, %v4989
    %v4991 = vpop.f32.mrf.mxu0
    %4992 = vmatprep.mubr.f32.mxu0 0.0
    %4993 = vmatmul.mubr.f32.gmra.mxu0 %v1032
    %v4994 = vpop.f32.mrf.mxu0
    %v4995 = vadd.f32 0.0, %v4994
    %v4996 = vpop.f32.mrf.mxu0
    %4997 = vmatprep.mubr.f32.mxu0 0.0
    %4998 = vmatmul.mubr.f32.gmra.mxu0 %v1035
    %v4999 = vpop.f32.mrf.mxu0
    %v5000 = vadd.f32 0.0, %v4999
    %v5001 = vpop.f32.mrf.mxu0
    %5002 = vmatprep.mubr.f32.mxu0 0.0
    %5003 = vmatmul.mubr.f32.gmra.mxu0 %v1038
    %v5004 = vpop.f32.mrf.mxu0
    %v5005 = vadd.f32 0.0, %v5004
    %v5006 = vpop.f32.mrf.mxu0
    %5007 = vmatprep.mubr.f32.mxu0 0.0
    %5008 = vmatmul.mubr.f32.gmra.mxu0 %v1041
    %v5009 = vpop.f32.mrf.mxu0
    %v5010 = vadd.f32 0.0, %v5009
    %v5011 = vpop.f32.mrf.mxu0
    %5012 = vmatprep.mubr.f32.mxu0 0.0
    %5013 = vmatmul.mubr.f32.gmra.mxu0 %v1044
    %v5014 = vpop.f32.mrf.mxu0
    %v5015 = vadd.f32 0.0, %v5014
    %v5016 = vpop.f32.mrf.mxu0
    %5017 = vmatprep.mubr.f32.mxu0 0.0
    %5018 = vmatmul.mubr.f32.gmra.mxu0 %v1047
    %v5019 = vpop.f32.mrf.mxu0
    %v5020 = vadd.f32 0.0, %v5019
    %v5021 = vpop.f32.mrf.mxu0
    %5022 = vmatprep.mubr.f32.mxu0 0.0
    %5023 = vmatmul.mubr.f32.gmra.mxu0 %v1050
    %v5024 = vpop.f32.mrf.mxu0
    %v5025 = vadd.f32 0.0, %v5024
    %v5026 = vpop.f32.mrf.mxu0
    %5027 = vmatprep.mubr.f32.mxu0 0.0
    %5028 = vmatmul.mubr.f32.gmra.mxu0 %v1053
    %v5029 = vpop.f32.mrf.mxu0
    %v5030 = vadd.f32 0.0, %v5029
    %v5031 = vpop.f32.mrf.mxu0
    %5032 = vmatprep.mubr.f32.mxu0 0.0
    %5033 = vmatmul.mubr.f32.gmra.mxu0 %v1056
    %v5034 = vpop.f32.mrf.mxu0
    %v5035 = vadd.f32 0.0, %v5034
    %v5036 = vpop.f32.mrf.mxu0
    %5037 = vmatprep.mubr.f32.mxu0 0.0
    %5038 = vmatmul.mubr.f32.gmra.mxu0 %v1059
    %v5039 = vpop.f32.mrf.mxu0
    %v5040 = vadd.f32 0.0, %v5039
    %v5041 = vpop.f32.mrf.mxu0
    %5042 = vmatprep.mubr.f32.mxu0 0.0
    %5043 = vmatmul.mubr.f32.gmra.mxu0 %v1062
    %v5044 = vpop.f32.mrf.mxu0
    %v5045 = vadd.f32 0.0, %v5044
    %v5046 = vpop.f32.mrf.mxu0
    %5047 = vmatprep.mubr.f32.mxu0 0.0
    %5048 = vmatmul.mubr.f32.gmra.mxu0 %v1065
    %v5049 = vpop.f32.mrf.mxu0
    %v5050 = vadd.f32 0.0, %v5049
    %v5051 = vpop.f32.mrf.mxu0
    %5052 = vmatprep.mubr.f32.mxu0 0.0
    %5053 = vmatmul.mubr.f32.gmra.mxu0 %v1068
    %v5054 = vpop.f32.mrf.mxu0
    %v5055 = vadd.f32 0.0, %v5054
    %v5056 = vpop.f32.mrf.mxu0
    %5057 = vmatprep.mubr.f32.mxu0 0.0
    %5058 = vmatmul.mubr.f32.gmra.mxu0 %v1071
    %v5059 = vpop.f32.mrf.mxu0
    %v5060 = vadd.f32 0.0, %v5059
    %v5061 = vpop.f32.mrf.mxu0
    %5062 = vdwg.mxu0
    %v5063 = vadd.f32 %v4902, %v4985
    %v5064 = vadd.f32 %v4903, %v4990
    %v5065 = vadd.f32 %v4904, %v4995
    %v5066 = vadd.f32 %v4905, %v5000
    %v5067 = vadd.f32 %v4906, %v5005
    %v5068 = vadd.f32 %v4907, %v5010
    %v5069 = vadd.f32 %v4908, %v5015
    %v5070 = vadd.f32 %v4909, %v5020
    %v5071 = vadd.f32 %v4910, %v5025
    %v5072 = vadd.f32 %v4911, %v5030
    %v5073 = vadd.f32 %v4912, %v5035
    %v5074 = vadd.f32 %v4913, %v5040
    %v5075 = vadd.f32 %v4914, %v5045
    %v5076 = vadd.f32 %v4915, %v5050
    %v5077 = vadd.f32 %v4916, %v5055
    %v5078 = vadd.f32 %v4917, %v5060
    %v5079 = vtanh.pop %v5063
    %v5080 = vtanh.pop %v5064
    %v5081 = vtanh.pop %v5065
    %v5082 = vtanh.pop %v5066
    %v5083 = vtanh.pop %v5067
    %v5084 = vtanh.pop %v5068
    %v5085 = vtanh.pop %v5069
    %v5086 = vtanh.pop %v5070
    %v5087 = vtanh.pop %v5071
    %v5088 = vtanh.pop %v5072
    %v5089 = vtanh.pop %v5073
    %v5090 = vtanh.pop %v5074
    %v5091 = vtanh.pop %v5075
    %v5092 = vtanh.pop %v5076
    %v5093 = vtanh.pop %v5077
    %v5094 = vtanh.pop %v5078
    %v5095 = vmul.f32 %v5079, 0.5
    %v5096 = vmul.f32 %v5080, 0.5
    %v5097 = vmul.f32 %v5081, 0.5
    %v5098 = vmul.f32 %v5082, 0.5
    %v5099 = vadd.f32 %v5095, 0.5
    %v5100 = vadd.f32 %v5096, 0.5
    %v5101 = vadd.f32 %v5097, 0.5
    %v5102 = vadd.f32 %v5098, 0.5
    %v5103 = vmul.f32 %v5083, 0.5
    %v5104 = vmul.f32 %v5084, 0.5
    %v5105 = vmul.f32 %v5085, 0.5
    %v5106 = vmul.f32 %v5086, 0.5
    %v5107 = vadd.f32 %v5103, 0.5
    %v5108 = vadd.f32 %v5104, 0.5
    %v5109 = vadd.f32 %v5105, 0.5
    %v5110 = vadd.f32 %v5106, 0.5
    %v5111 = vmul.f32 %v5091, 0.5
    %v5112 = vmul.f32 %v5092, 0.5
    %v5113 = vmul.f32 %v5093, 0.5
    %v5114 = vmul.f32 %v5094, 0.5
    %v5115 = vadd.f32 %v5111, 0.5
    %v5116 = vadd.f32 %v5112, 0.5
    %v5117 = vadd.f32 %v5113, 0.5
    %v5118 = vadd.f32 %v5114, 0.5
    %v5119 = vmul.f32 %v5107, %v4358
    %v5120 = vmul.f32 %v5108, %v4359
    %v5121 = vmul.f32 %v5109, %v4360
    %v5122 = vmul.f32 %v5110, %v4361
    %v5123 = vmul.f32 %v5099, %v5087
    %v5124 = vmul.f32 %v5100, %v5088
    %v5125 = vmul.f32 %v5101, %v5089
    %v5126 = vmul.f32 %v5102, %v5090
    %v5127 = vadd.f32 %v5119, %v5123
    %v5128 = vadd.f32 %v5120, %v5124
    %v5129 = vadd.f32 %v5121, %v5125
    %v5130 = vadd.f32 %v5122, %v5126
    %v5131 = vtanh.pop %v5127
    %v5132 = vtanh.pop %v5128
    %v5133 = vtanh.pop %v5129
    %v5134 = vtanh.pop %v5130
    %v5135 = vmul.f32 %v5115, %v5131
    %v5136 = vmul.f32 %v5116, %v5132
    %v5137 = vmul.f32 %v5117, %v5133
    %v5138 = vmul.f32 %v5118, %v5134
    %s5139 = scalar_lea.vmem %s0, 48
    %v5140 = vld [vmem:[%s5139] sm:$0xf]
    %v5141 = vld [vmem:[%s5139 + $0x4] sm:$0xf]
    %v5142 = vunpack.c.l.bf16 %v5140
    %v5143 = vunpack.c.l.bf16 %v5141
    %5144 = vmatprep.subr.mxu0 0.0
    %5145 = vmatpush1.msra.mxu0 0.0
    %5146 = vmatprep.subr.mxu0 0.0
    %5147 = vmatpush1.msra.mxu0 0.0
    %5148 = vmatprep.subr.mxu0 0.0
    %5149 = vmatpush1.msra.mxu0 0.0
    %5150 = vmatprep.subr.mxu0 0.0
    %5151 = vmatpush1.msra.mxu0 0.0
    %5152 = vmatprep.subr.mxu0 0.0
    %5153 = vmatpush1.msra.mxu0 0.0
    %5154 = vmatprep.subr.mxu0 0.0
    %5155 = vmatpush1.msra.mxu0 0.0
    %5156 = vmatprep.subr.mxu0 0.0
    %5157 = vmatpush1.msra.mxu0 0.0
    %5158 = vmatprep.subr.mxu0 0.0
    %5159 = vmatpush1.msra.mxu0 0.0
    %5160 = vmatprep.subr.mxu0 0.0
    %5161 = vmatpush1.msra.mxu0 0.0
    %5162 = vmatprep.subr.mxu0 0.0
    %5163 = vmatpush1.msra.mxu0 0.0
    %5164 = vmatprep.subr.mxu0 0.0
    %5165 = vmatpush1.msra.mxu0 0.0
    %5166 = vmatprep.subr.mxu0 0.0
    %5167 = vmatpush1.msra.mxu0 0.0
    %5168 = vmatprep.subr.mxu0 0.0
    %5169 = vmatpush1.msra.mxu0 0.0
    %5170 = vmatprep.subr.mxu0 0.0
    %5171 = vmatpush1.msra.mxu0 0.0
    %5172 = vmatprep.subr.mxu0 0.0
    %5173 = vmatpush1.msra.mxu0 %v5143
    %5174 = vmatprep.subr.mxu0 0.0
    %5175 = vmatpush1.msra.mxu0 %v5142
    %5176 = vmatprep.subr.mxu0 0.0
    %5177 = vmatpush2.msra.mxu0 0.0
    %5178 = vmatprep.subr.mxu0 0.0
    %5179 = vmatpush2.msra.mxu0 0.0
    %5180 = vmatprep.subr.mxu0 0.0
    %5181 = vmatpush2.msra.mxu0 0.0
    %5182 = vmatprep.subr.mxu0 0.0
    %5183 = vmatpush2.msra.mxu0 0.0
    %5184 = vmatprep.subr.mxu0 0.0
    %5185 = vmatpush2.msra.mxu0 0.0
    %5186 = vmatprep.subr.mxu0 0.0
    %5187 = vmatpush2.msra.mxu0 0.0
    %5188 = vmatprep.subr.mxu0 0.0
    %5189 = vmatpush2.msra.mxu0 0.0
    %5190 = vmatprep.subr.mxu0 0.0
    %5191 = vmatpush2.msra.mxu0 0.0
    %5192 = vmatprep.subr.mxu0 0.0
    %5193 = vmatpush2.msra.mxu0 0.0
    %5194 = vmatprep.subr.mxu0 0.0
    %5195 = vmatpush2.msra.mxu0 0.0
    %5196 = vmatprep.subr.mxu0 0.0
    %5197 = vmatpush2.msra.mxu0 0.0
    %5198 = vmatprep.subr.mxu0 0.0
    %5199 = vmatpush2.msra.mxu0 0.0
    %5200 = vmatprep.subr.mxu0 0.0
    %5201 = vmatpush2.msra.mxu0 0.0
    %5202 = vmatprep.subr.mxu0 0.0
    %5203 = vmatpush2.msra.mxu0 0.0
    %5204 = vmatprep.subr.mxu0 0.0
    %5205 = vmatpush2.msra.mxu0 0.0
    %5206 = vmatprep.subr.mxu0 0.0
    %5207 = vmatpush2.msra.mxu0 0.0
    %5208 = vmatprep.mubr.f32.mxu0 0.0
    %5209 = vmatmul.mubr.f32.gmra.mxu0 %v338
    %v5210 = vpop.f32.mrf.mxu0
    %v5211 = vadd.f32 0.0, %v5210
    %v5212 = vpop.f32.mrf.mxu0
    %5213 = vmatprep.mubr.f32.mxu0 0.0
    %5214 = vmatmul.mubr.f32.gmra.mxu0 %v341
    %v5215 = vpop.f32.mrf.mxu0
    %v5216 = vadd.f32 0.0, %v5215
    %v5217 = vpop.f32.mrf.mxu0
    %5218 = vmatprep.mubr.f32.mxu0 0.0
    %5219 = vmatmul.mubr.f32.gmra.mxu0 %v344
    %v5220 = vpop.f32.mrf.mxu0
    %v5221 = vadd.f32 0.0, %v5220
    %v5222 = vpop.f32.mrf.mxu0
    %5223 = vmatprep.mubr.f32.mxu0 0.0
    %5224 = vmatmul.mubr.f32.gmra.mxu0 %v347
    %v5225 = vpop.f32.mrf.mxu0
    %v5226 = vadd.f32 0.0, %v5225
    %v5227 = vpop.f32.mrf.mxu0
    %5228 = vmatprep.mubr.f32.mxu0 0.0
    %5229 = vmatmul.mubr.f32.gmra.mxu0 %v350
    %v5230 = vpop.f32.mrf.mxu0
    %v5231 = vadd.f32 0.0, %v5230
    %v5232 = vpop.f32.mrf.mxu0
    %5233 = vmatprep.mubr.f32.mxu0 0.0
    %5234 = vmatmul.mubr.f32.gmra.mxu0 %v353
    %v5235 = vpop.f32.mrf.mxu0
    %v5236 = vadd.f32 0.0, %v5235
    %v5237 = vpop.f32.mrf.mxu0
    %5238 = vmatprep.mubr.f32.mxu0 0.0
    %5239 = vmatmul.mubr.f32.gmra.mxu0 %v356
    %v5240 = vpop.f32.mrf.mxu0
    %v5241 = vadd.f32 0.0, %v5240
    %v5242 = vpop.f32.mrf.mxu0
    %5243 = vmatprep.mubr.f32.mxu0 0.0
    %5244 = vmatmul.mubr.f32.gmra.mxu0 %v359
    %v5245 = vpop.f32.mrf.mxu0
    %v5246 = vadd.f32 0.0, %v5245
    %v5247 = vpop.f32.mrf.mxu0
    %5248 = vmatprep.mubr.f32.mxu0 0.0
    %5249 = vmatmul.mubr.f32.gmra.mxu0 %v362
    %v5250 = vpop.f32.mrf.mxu0
    %v5251 = vadd.f32 0.0, %v5250
    %v5252 = vpop.f32.mrf.mxu0
    %5253 = vmatprep.mubr.f32.mxu0 0.0
    %5254 = vmatmul.mubr.f32.gmra.mxu0 %v365
    %v5255 = vpop.f32.mrf.mxu0
    %v5256 = vadd.f32 0.0, %v5255
    %v5257 = vpop.f32.mrf.mxu0
    %5258 = vmatprep.mubr.f32.mxu0 0.0
    %5259 = vmatmul.mubr.f32.gmra.mxu0 %v368
    %v5260 = vpop.f32.mrf.mxu0
    %v5261 = vadd.f32 0.0, %v5260
    %v5262 = vpop.f32.mrf.mxu0
    %5263 = vmatprep.mubr.f32.mxu0 0.0
    %5264 = vmatmul.mubr.f32.gmra.mxu0 %v371
    %v5265 = vpop.f32.mrf.mxu0
    %v5266 = vadd.f32 0.0, %v5265
    %v5267 = vpop.f32.mrf.mxu0
    %5268 = vmatprep.mubr.f32.mxu0 0.0
    %5269 = vmatmul.mubr.f32.gmra.mxu0 %v374
    %v5270 = vpop.f32.mrf.mxu0
    %v5271 = vadd.f32 0.0, %v5270
    %v5272 = vpop.f32.mrf.mxu0
    %5273 = vmatprep.mubr.f32.mxu0 0.0
    %5274 = vmatmul.mubr.f32.gmra.mxu0 %v377
    %v5275 = vpop.f32.mrf.mxu0
    %v5276 = vadd.f32 0.0, %v5275
    %v5277 = vpop.f32.mrf.mxu0
    %5278 = vmatprep.mubr.f32.mxu0 0.0
    %5279 = vmatmul.mubr.f32.gmra.mxu0 %v380
    %v5280 = vpop.f32.mrf.mxu0
    %v5281 = vadd.f32 0.0, %v5280
    %v5282 = vpop.f32.mrf.mxu0
    %5283 = vmatprep.mubr.f32.mxu0 0.0
    %5284 = vmatmul.mubr.f32.gmra.mxu0 %v383
    %v5285 = vpop.f32.mrf.mxu0
    %v5286 = vadd.f32 0.0, %v5285
    %v5287 = vpop.f32.mrf.mxu0
    %5288 = vdwg.mxu0
    %v5289 = vadd.f32 %v143, %v5211
    %v5290 = vadd.f32 %v148, %v5216
    %v5291 = vadd.f32 %v153, %v5221
    %v5292 = vadd.f32 %v158, %v5226
    %v5293 = vadd.f32 %v163, %v5231
    %v5294 = vadd.f32 %v168, %v5236
    %v5295 = vadd.f32 %v173, %v5241
    %v5296 = vadd.f32 %v178, %v5246
    %v5297 = vadd.f32 %v183, %v5251
    %v5298 = vadd.f32 %v188, %v5256
    %v5299 = vadd.f32 %v193, %v5261
    %v5300 = vadd.f32 %v198, %v5266
    %v5301 = vadd.f32 %v203, %v5271
    %v5302 = vadd.f32 %v208, %v5276
    %v5303 = vadd.f32 %v213, %v5281
    %v5304 = vadd.f32 %v218, %v5286
    %5305 = vmatprep.subr.mxu0 0.0
    %5306 = vmatpush1.msra.mxu0 0.0
    %5307 = vmatprep.subr.mxu0 0.0
    %5308 = vmatpush1.msra.mxu0 0.0
    %5309 = vmatprep.subr.mxu0 0.0
    %5310 = vmatpush1.msra.mxu0 0.0
    %5311 = vmatprep.subr.mxu0 0.0
    %5312 = vmatpush1.msra.mxu0 0.0
    %5313 = vmatprep.subr.mxu0 0.0
    %5314 = vmatpush1.msra.mxu0 0.0
    %5315 = vmatprep.subr.mxu0 0.0
    %5316 = vmatpush1.msra.mxu0 0.0
    %5317 = vmatprep.subr.mxu0 0.0
    %5318 = vmatpush1.msra.mxu0 0.0
    %5319 = vmatprep.subr.mxu0 0.0
    %5320 = vmatpush1.msra.mxu0 0.0
    %5321 = vmatprep.subr.mxu0 0.0
    %5322 = vmatpush1.msra.mxu0 0.0
    %5323 = vmatprep.subr.mxu0 0.0
    %5324 = vmatpush1.msra.mxu0 0.0
    %5325 = vmatprep.subr.mxu0 0.0
    %5326 = vmatpush1.msra.mxu0 0.0
    %5327 = vmatprep.subr.mxu0 0.0
    %5328 = vmatpush1.msra.mxu0 0.0
    %5329 = vmatprep.subr.mxu0 0.0
    %5330 = vmatpush1.msra.mxu0 %v4756
    %5331 = vmatprep.subr.mxu0 0.0
    %5332 = vmatpush1.msra.mxu0 %v4755
    %5333 = vmatprep.subr.mxu0 0.0
    %5334 = vmatpush1.msra.mxu0 %v4754
    %5335 = vmatprep.subr.mxu0 0.0
    %5336 = vmatpush1.msra.mxu0 %v4753
    %5337 = vmatprep.subr.mxu0 0.0
    %5338 = vmatpush2.msra.mxu0 0.0
    %5339 = vmatprep.subr.mxu0 0.0
    %5340 = vmatpush2.msra.mxu0 0.0
    %5341 = vmatprep.subr.mxu0 0.0
    %5342 = vmatpush2.msra.mxu0 0.0
    %5343 = vmatprep.subr.mxu0 0.0
    %5344 = vmatpush2.msra.mxu0 0.0
    %5345 = vmatprep.subr.mxu0 0.0
    %5346 = vmatpush2.msra.mxu0 0.0
    %5347 = vmatprep.subr.mxu0 0.0
    %5348 = vmatpush2.msra.mxu0 0.0
    %5349 = vmatprep.subr.mxu0 0.0
    %5350 = vmatpush2.msra.mxu0 0.0
    %5351 = vmatprep.subr.mxu0 0.0
    %5352 = vmatpush2.msra.mxu0 0.0
    %5353 = vmatprep.subr.mxu0 0.0
    %5354 = vmatpush2.msra.mxu0 0.0
    %5355 = vmatprep.subr.mxu0 0.0
    %5356 = vmatpush2.msra.mxu0 0.0
    %5357 = vmatprep.subr.mxu0 0.0
    %5358 = vmatpush2.msra.mxu0 0.0
    %5359 = vmatprep.subr.mxu0 0.0
    %5360 = vmatpush2.msra.mxu0 0.0
    %5361 = vmatprep.subr.mxu0 0.0
    %5362 = vmatpush2.msra.mxu0 0.0
    %5363 = vmatprep.subr.mxu0 0.0
    %5364 = vmatpush2.msra.mxu0 0.0
    %5365 = vmatprep.subr.mxu0 0.0
    %5366 = vmatpush2.msra.mxu0 0.0
    %5367 = vmatprep.subr.mxu0 0.0
    %5368 = vmatpush2.msra.mxu0 0.0
    %5369 = vmatprep.mubr.f32.mxu0 0.0
    %5370 = vmatmul.mubr.f32.gmra.mxu0 %v548
    %v5371 = vpop.f32.mrf.mxu0
    %v5372 = vadd.f32 0.0, %v5371
    %v5373 = vpop.f32.mrf.mxu0
    %5374 = vmatprep.mubr.f32.mxu0 0.0
    %5375 = vmatmul.mubr.f32.gmra.mxu0 %v551
    %v5376 = vpop.f32.mrf.mxu0
    %v5377 = vadd.f32 0.0, %v5376
    %v5378 = vpop.f32.mrf.mxu0
    %5379 = vmatprep.mubr.f32.mxu0 0.0
    %5380 = vmatmul.mubr.f32.gmra.mxu0 %v554
    %v5381 = vpop.f32.mrf.mxu0
    %v5382 = vadd.f32 0.0, %v5381
    %v5383 = vpop.f32.mrf.mxu0
    %5384 = vmatprep.mubr.f32.mxu0 0.0
    %5385 = vmatmul.mubr.f32.gmra.mxu0 %v557
    %v5386 = vpop.f32.mrf.mxu0
    %v5387 = vadd.f32 0.0, %v5386
    %v5388 = vpop.f32.mrf.mxu0
    %5389 = vmatprep.mubr.f32.mxu0 0.0
    %5390 = vmatmul.mubr.f32.gmra.mxu0 %v560
    %v5391 = vpop.f32.mrf.mxu0
    %v5392 = vadd.f32 0.0, %v5391
    %v5393 = vpop.f32.mrf.mxu0
    %5394 = vmatprep.mubr.f32.mxu0 0.0
    %5395 = vmatmul.mubr.f32.gmra.mxu0 %v563
    %v5396 = vpop.f32.mrf.mxu0
    %v5397 = vadd.f32 0.0, %v5396
    %v5398 = vpop.f32.mrf.mxu0
    %5399 = vmatprep.mubr.f32.mxu0 0.0
    %5400 = vmatmul.mubr.f32.gmra.mxu0 %v566
    %v5401 = vpop.f32.mrf.mxu0
    %v5402 = vadd.f32 0.0, %v5401
    %v5403 = vpop.f32.mrf.mxu0
    %5404 = vmatprep.mubr.f32.mxu0 0.0
    %5405 = vmatmul.mubr.f32.gmra.mxu0 %v569
    %v5406 = vpop.f32.mrf.mxu0
    %v5407 = vadd.f32 0.0, %v5406
    %v5408 = vpop.f32.mrf.mxu0
    %5409 = vmatprep.mubr.f32.mxu0 0.0
    %5410 = vmatmul.mubr.f32.gmra.mxu0 %v572
    %v5411 = vpop.f32.mrf.mxu0
    %v5412 = vadd.f32 0.0, %v5411
    %v5413 = vpop.f32.mrf.mxu0
    %5414 = vmatprep.mubr.f32.mxu0 0.0
    %5415 = vmatmul.mubr.f32.gmra.mxu0 %v575
    %v5416 = vpop.f32.mrf.mxu0
    %v5417 = vadd.f32 0.0, %v5416
    %v5418 = vpop.f32.mrf.mxu0
    %5419 = vmatprep.mubr.f32.mxu0 0.0
    %5420 = vmatmul.mubr.f32.gmra.mxu0 %v578
    %v5421 = vpop.f32.mrf.mxu0
    %v5422 = vadd.f32 0.0, %v5421
    %v5423 = vpop.f32.mrf.mxu0
    %5424 = vmatprep.mubr.f32.mxu0 0.0
    %5425 = vmatmul.mubr.f32.gmra.mxu0 %v581
    %v5426 = vpop.f32.mrf.mxu0
    %v5427 = vadd.f32 0.0, %v5426
    %v5428 = vpop.f32.mrf.mxu0
    %5429 = vmatprep.mubr.f32.mxu0 0.0
    %5430 = vmatmul.mubr.f32.gmra.mxu0 %v584
    %v5431 = vpop.f32.mrf.mxu0
    %v5432 = vadd.f32 0.0, %v5431
    %v5433 = vpop.f32.mrf.mxu0
    %5434 = vmatprep.mubr.f32.mxu0 0.0
    %5435 = vmatmul.mubr.f32.gmra.mxu0 %v587
    %v5436 = vpop.f32.mrf.mxu0
    %v5437 = vadd.f32 0.0, %v5436
    %v5438 = vpop.f32.mrf.mxu0
    %5439 = vmatprep.mubr.f32.mxu0 0.0
    %5440 = vmatmul.mubr.f32.gmra.mxu0 %v590
    %v5441 = vpop.f32.mrf.mxu0
    %v5442 = vadd.f32 0.0, %v5441
    %v5443 = vpop.f32.mrf.mxu0
    %5444 = vmatprep.mubr.f32.mxu0 0.0
    %5445 = vmatmul.mubr.f32.gmra.mxu0 %v593
    %v5446 = vpop.f32.mrf.mxu0
    %v5447 = vadd.f32 0.0, %v5446
    %v5448 = vpop.f32.mrf.mxu0
    %5449 = vdwg.mxu0
    %v5450 = vadd.f32 %v5289, %v5372
    %v5451 = vadd.f32 %v5290, %v5377
    %v5452 = vadd.f32 %v5291, %v5382
    %v5453 = vadd.f32 %v5292, %v5387
    %v5454 = vadd.f32 %v5293, %v5392
    %v5455 = vadd.f32 %v5294, %v5397
    %v5456 = vadd.f32 %v5295, %v5402
    %v5457 = vadd.f32 %v5296, %v5407
    %v5458 = vadd.f32 %v5297, %v5412
    %v5459 = vadd.f32 %v5298, %v5417
    %v5460 = vadd.f32 %v5299, %v5422
    %v5461 = vadd.f32 %v5300, %v5427
    %v5462 = vadd.f32 %v5301, %v5432
    %v5463 = vadd.f32 %v5302, %v5437
    %v5464 = vadd.f32 %v5303, %v5442
    %v5465 = vadd.f32 %v5304, %v5447
    %v5466 = vtanh.pop %v5450
    %v5467 = vtanh.pop %v5451
    %v5468 = vtanh.pop %v5452
    %v5469 = vtanh.pop %v5453
    %v5470 = vtanh.pop %v5454
    %v5471 = vtanh.pop %v5455
    %v5472 = vtanh.pop %v5456
    %v5473 = vtanh.pop %v5457
    %v5474 = vtanh.pop %v5458
    %v5475 = vtanh.pop %v5459
    %v5476 = vtanh.pop %v5460
    %v5477 = vtanh.pop %v5461
    %v5478 = vtanh.pop %v5462
    %v5479 = vtanh.pop %v5463
    %v5480 = vtanh.pop %v5464
    %v5481 = vtanh.pop %v5465
    %v5482 = vmul.f32 %v5466, 0.5
    %v5483 = vmul.f32 %v5467, 0.5
    %v5484 = vmul.f32 %v5468, 0.5
    %v5485 = vmul.f32 %v5469, 0.5
    %v5486 = vadd.f32 %v5482, 0.5
    %v5487 = vadd.f32 %v5483, 0.5
    %v5488 = vadd.f32 %v5484, 0.5
    %v5489 = vadd.f32 %v5485, 0.5
    %v5490 = vmul.f32 %v5470, 0.5
    %v5491 = vmul.f32 %v5471, 0.5
    %v5492 = vmul.f32 %v5472, 0.5
    %v5493 = vmul.f32 %v5473, 0.5
    %v5494 = vadd.f32 %v5490, 0.5
    %v5495 = vadd.f32 %v5491, 0.5
    %v5496 = vadd.f32 %v5492, 0.5
    %v5497 = vadd.f32 %v5493, 0.5
    %v5498 = vmul.f32 %v5478, 0.5
    %v5499 = vmul.f32 %v5479, 0.5
    %v5500 = vmul.f32 %v5480, 0.5
    %v5501 = vmul.f32 %v5481, 0.5
    %v5502 = vadd.f32 %v5498, 0.5
    %v5503 = vadd.f32 %v5499, 0.5
    %v5504 = vadd.f32 %v5500, 0.5
    %v5505 = vadd.f32 %v5501, 0.5
    %v5506 = vmul.f32 %v5494, %v4745
    %v5507 = vmul.f32 %v5495, %v4746
    %v5508 = vmul.f32 %v5496, %v4747
    %v5509 = vmul.f32 %v5497, %v4748
    %v5510 = vmul.f32 %v5486, %v5474
    %v5511 = vmul.f32 %v5487, %v5475
    %v5512 = vmul.f32 %v5488, %v5476
    %v5513 = vmul.f32 %v5489, %v5477
    %v5514 = vadd.f32 %v5506, %v5510
    %v5515 = vadd.f32 %v5507, %v5511
    %v5516 = vadd.f32 %v5508, %v5512
    %v5517 = vadd.f32 %v5509, %v5513
    %v5518 = vtanh.pop %v5514
    %v5519 = vtanh.pop %v5515
    %v5520 = vtanh.pop %v5516
    %v5521 = vtanh.pop %v5517
    %v5522 = vmul.f32 %v5502, %v5518
    %v5523 = vmul.f32 %v5503, %v5519
    %v5524 = vmul.f32 %v5504, %v5520
    %v5525 = vmul.f32 %v5505, %v5521
    %5526 = vmatprep.subr.mxu0 0.0
    %5527 = vmatpush1.msra.mxu0 0.0
    %5528 = vmatprep.subr.mxu0 0.0
    %5529 = vmatpush1.msra.mxu0 0.0
    %5530 = vmatprep.subr.mxu0 0.0
    %5531 = vmatpush1.msra.mxu0 0.0
    %5532 = vmatprep.subr.mxu0 0.0
    %5533 = vmatpush1.msra.mxu0 0.0
    %5534 = vmatprep.subr.mxu0 0.0
    %5535 = vmatpush1.msra.mxu0 0.0
    %5536 = vmatprep.subr.mxu0 0.0
    %5537 = vmatpush1.msra.mxu0 0.0
    %5538 = vmatprep.subr.mxu0 0.0
    %5539 = vmatpush1.msra.mxu0 0.0
    %5540 = vmatprep.subr.mxu0 0.0
    %5541 = vmatpush1.msra.mxu0 0.0
    %5542 = vmatprep.subr.mxu0 0.0
    %5543 = vmatpush1.msra.mxu0 0.0
    %5544 = vmatprep.subr.mxu0 0.0
    %5545 = vmatpush1.msra.mxu0 0.0
    %5546 = vmatprep.subr.mxu0 0.0
    %5547 = vmatpush1.msra.mxu0 0.0
    %5548 = vmatprep.subr.mxu0 0.0
    %5549 = vmatpush1.msra.mxu0 0.0
    %5550 = vmatprep.subr.mxu0 0.0
    %5551 = vmatpush1.msra.mxu0 %v5525
    %5552 = vmatprep.subr.mxu0 0.0
    %5553 = vmatpush1.msra.mxu0 %v5524
    %5554 = vmatprep.subr.mxu0 0.0
    %5555 = vmatpush1.msra.mxu0 %v5523
    %5556 = vmatprep.subr.mxu0 0.0
    %5557 = vmatpush1.msra.mxu0 %v5522
    %5558 = vmatprep.subr.mxu0 0.0
    %5559 = vmatpush2.msra.mxu0 0.0
    %5560 = vmatprep.subr.mxu0 0.0
    %5561 = vmatpush2.msra.mxu0 0.0
    %5562 = vmatprep.subr.mxu0 0.0
    %5563 = vmatpush2.msra.mxu0 0.0
    %5564 = vmatprep.subr.mxu0 0.0
    %5565 = vmatpush2.msra.mxu0 0.0
    %5566 = vmatprep.subr.mxu0 0.0
    %5567 = vmatpush2.msra.mxu0 0.0
    %5568 = vmatprep.subr.mxu0 0.0
    %5569 = vmatpush2.msra.mxu0 0.0
    %5570 = vmatprep.subr.mxu0 0.0
    %5571 = vmatpush2.msra.mxu0 0.0
    %5572 = vmatprep.subr.mxu0 0.0
    %5573 = vmatpush2.msra.mxu0 0.0
    %5574 = vmatprep.subr.mxu0 0.0
    %5575 = vmatpush2.msra.mxu0 0.0
    %5576 = vmatprep.subr.mxu0 0.0
    %5577 = vmatpush2.msra.mxu0 0.0
    %5578 = vmatprep.subr.mxu0 0.0
    %5579 = vmatpush2.msra.mxu0 0.0
    %5580 = vmatprep.subr.mxu0 0.0
    %5581 = vmatpush2.msra.mxu0 0.0
    %5582 = vmatprep.subr.mxu0 0.0
    %5583 = vmatpush2.msra.mxu0 0.0
    %5584 = vmatprep.subr.mxu0 0.0
    %5585 = vmatpush2.msra.mxu0 0.0
    %5586 = vmatprep.subr.mxu0 0.0
    %5587 = vmatpush2.msra.mxu0 0.0
    %5588 = vmatprep.subr.mxu0 0.0
    %5589 = vmatpush2.msra.mxu0 0.0
    %5590 = vmatprep.mubr.f32.mxu0 0.0
    %5591 = vmatmul.mubr.f32.gmra.mxu0 %v817
    %v5592 = vpop.f32.mrf.mxu0
    %v5593 = vadd.f32 0.0, %v5592
    %v5594 = vpop.f32.mrf.mxu0
    %5595 = vmatprep.mubr.f32.mxu0 0.0
    %5596 = vmatmul.mubr.f32.gmra.mxu0 %v820
    %v5597 = vpop.f32.mrf.mxu0
    %v5598 = vadd.f32 0.0, %v5597
    %v5599 = vpop.f32.mrf.mxu0
    %5600 = vmatprep.mubr.f32.mxu0 0.0
    %5601 = vmatmul.mubr.f32.gmra.mxu0 %v823
    %v5602 = vpop.f32.mrf.mxu0
    %v5603 = vadd.f32 0.0, %v5602
    %v5604 = vpop.f32.mrf.mxu0
    %5605 = vmatprep.mubr.f32.mxu0 0.0
    %5606 = vmatmul.mubr.f32.gmra.mxu0 %v826
    %v5607 = vpop.f32.mrf.mxu0
    %v5608 = vadd.f32 0.0, %v5607
    %v5609 = vpop.f32.mrf.mxu0
    %5610 = vmatprep.mubr.f32.mxu0 0.0
    %5611 = vmatmul.mubr.f32.gmra.mxu0 %v829
    %v5612 = vpop.f32.mrf.mxu0
    %v5613 = vadd.f32 0.0, %v5612
    %v5614 = vpop.f32.mrf.mxu0
    %5615 = vmatprep.mubr.f32.mxu0 0.0
    %5616 = vmatmul.mubr.f32.gmra.mxu0 %v832
    %v5617 = vpop.f32.mrf.mxu0
    %v5618 = vadd.f32 0.0, %v5617
    %v5619 = vpop.f32.mrf.mxu0
    %5620 = vmatprep.mubr.f32.mxu0 0.0
    %5621 = vmatmul.mubr.f32.gmra.mxu0 %v835
    %v5622 = vpop.f32.mrf.mxu0
    %v5623 = vadd.f32 0.0, %v5622
    %v5624 = vpop.f32.mrf.mxu0
    %5625 = vmatprep.mubr.f32.mxu0 0.0
    %5626 = vmatmul.mubr.f32.gmra.mxu0 %v838
    %v5627 = vpop.f32.mrf.mxu0
    %v5628 = vadd.f32 0.0, %v5627
    %v5629 = vpop.f32.mrf.mxu0
    %5630 = vmatprep.mubr.f32.mxu0 0.0
    %5631 = vmatmul.mubr.f32.gmra.mxu0 %v841
    %v5632 = vpop.f32.mrf.mxu0
    %v5633 = vadd.f32 0.0, %v5632
    %v5634 = vpop.f32.mrf.mxu0
    %5635 = vmatprep.mubr.f32.mxu0 0.0
    %5636 = vmatmul.mubr.f32.gmra.mxu0 %v844
    %v5637 = vpop.f32.mrf.mxu0
    %v5638 = vadd.f32 0.0, %v5637
    %v5639 = vpop.f32.mrf.mxu0
    %5640 = vmatprep.mubr.f32.mxu0 0.0
    %5641 = vmatmul.mubr.f32.gmra.mxu0 %v847
    %v5642 = vpop.f32.mrf.mxu0
    %v5643 = vadd.f32 0.0, %v5642
    %v5644 = vpop.f32.mrf.mxu0
    %5645 = vmatprep.mubr.f32.mxu0 0.0
    %5646 = vmatmul.mubr.f32.gmra.mxu0 %v850
    %v5647 = vpop.f32.mrf.mxu0
    %v5648 = vadd.f32 0.0, %v5647
    %v5649 = vpop.f32.mrf.mxu0
    %5650 = vmatprep.mubr.f32.mxu0 0.0
    %5651 = vmatmul.mubr.f32.gmra.mxu0 %v853
    %v5652 = vpop.f32.mrf.mxu0
    %v5653 = vadd.f32 0.0, %v5652
    %v5654 = vpop.f32.mrf.mxu0
    %5655 = vmatprep.mubr.f32.mxu0 0.0
    %5656 = vmatmul.mubr.f32.gmra.mxu0 %v856
    %v5657 = vpop.f32.mrf.mxu0
    %v5658 = vadd.f32 0.0, %v5657
    %v5659 = vpop.f32.mrf.mxu0
    %5660 = vmatprep.mubr.f32.mxu0 0.0
    %5661 = vmatmul.mubr.f32.gmra.mxu0 %v859
    %v5662 = vpop.f32.mrf.mxu0
    %v5663 = vadd.f32 0.0, %v5662
    %v5664 = vpop.f32.mrf.mxu0
    %5665 = vmatprep.mubr.f32.mxu0 0.0
    %5666 = vmatmul.mubr.f32.gmra.mxu0 %v862
    %v5667 = vpop.f32.mrf.mxu0
    %v5668 = vadd.f32 0.0, %v5667
    %v5669 = vpop.f32.mrf.mxu0
    %5670 = vdwg.mxu0
    %v5671 = vadd.f32 %v239, %v5593
    %v5672 = vadd.f32 %v244, %v5598
    %v5673 = vadd.f32 %v249, %v5603
    %v5674 = vadd.f32 %v254, %v5608
    %v5675 = vadd.f32 %v259, %v5613
    %v5676 = vadd.f32 %v264, %v5618
    %v5677 = vadd.f32 %v269, %v5623
    %v5678 = vadd.f32 %v274, %v5628
    %v5679 = vadd.f32 %v279, %v5633
    %v5680 = vadd.f32 %v284, %v5638
    %v5681 = vadd.f32 %v289, %v5643
    %v5682 = vadd.f32 %v294, %v5648
    %v5683 = vadd.f32 %v299, %v5653
    %v5684 = vadd.f32 %v304, %v5658
    %v5685 = vadd.f32 %v309, %v5663
    %v5686 = vadd.f32 %v314, %v5668
    %5687 = vmatprep.subr.mxu0 0.0
    %5688 = vmatpush1.msra.mxu0 0.0
    %5689 = vmatprep.subr.mxu0 0.0
    %5690 = vmatpush1.msra.mxu0 0.0
    %5691 = vmatprep.subr.mxu0 0.0
    %5692 = vmatpush1.msra.mxu0 0.0
    %5693 = vmatprep.subr.mxu0 0.0
    %5694 = vmatpush1.msra.mxu0 0.0
    %5695 = vmatprep.subr.mxu0 0.0
    %5696 = vmatpush1.msra.mxu0 0.0
    %5697 = vmatprep.subr.mxu0 0.0
    %5698 = vmatpush1.msra.mxu0 0.0
    %5699 = vmatprep.subr.mxu0 0.0
    %5700 = vmatpush1.msra.mxu0 0.0
    %5701 = vmatprep.subr.mxu0 0.0
    %5702 = vmatpush1.msra.mxu0 0.0
    %5703 = vmatprep.subr.mxu0 0.0
    %5704 = vmatpush1.msra.mxu0 0.0
    %5705 = vmatprep.subr.mxu0 0.0
    %5706 = vmatpush1.msra.mxu0 0.0
    %5707 = vmatprep.subr.mxu0 0.0
    %5708 = vmatpush1.msra.mxu0 0.0
    %5709 = vmatprep.subr.mxu0 0.0
    %5710 = vmatpush1.msra.mxu0 0.0
    %5711 = vmatprep.subr.mxu0 0.0
    %5712 = vmatpush1.msra.mxu0 %v5138
    %5713 = vmatprep.subr.mxu0 0.0
    %5714 = vmatpush1.msra.mxu0 %v5137
    %5715 = vmatprep.subr.mxu0 0.0
    %5716 = vmatpush1.msra.mxu0 %v5136
    %5717 = vmatprep.subr.mxu0 0.0
    %5718 = vmatpush1.msra.mxu0 %v5135
    %5719 = vmatprep.subr.mxu0 0.0
    %5720 = vmatpush2.msra.mxu0 0.0
    %5721 = vmatprep.subr.mxu0 0.0
    %5722 = vmatpush2.msra.mxu0 0.0
    %5723 = vmatprep.subr.mxu0 0.0
    %5724 = vmatpush2.msra.mxu0 0.0
    %5725 = vmatprep.subr.mxu0 0.0
    %5726 = vmatpush2.msra.mxu0 0.0
    %5727 = vmatprep.subr.mxu0 0.0
    %5728 = vmatpush2.msra.mxu0 0.0
    %5729 = vmatprep.subr.mxu0 0.0
    %5730 = vmatpush2.msra.mxu0 0.0
    %5731 = vmatprep.subr.mxu0 0.0
    %5732 = vmatpush2.msra.mxu0 0.0
    %5733 = vmatprep.subr.mxu0 0.0
    %5734 = vmatpush2.msra.mxu0 0.0
    %5735 = vmatprep.subr.mxu0 0.0
    %5736 = vmatpush2.msra.mxu0 0.0
    %5737 = vmatprep.subr.mxu0 0.0
    %5738 = vmatpush2.msra.mxu0 0.0
    %5739 = vmatprep.subr.mxu0 0.0
    %5740 = vmatpush2.msra.mxu0 0.0
    %5741 = vmatprep.subr.mxu0 0.0
    %5742 = vmatpush2.msra.mxu0 0.0
    %5743 = vmatprep.subr.mxu0 0.0
    %5744 = vmatpush2.msra.mxu0 0.0
    %5745 = vmatprep.subr.mxu0 0.0
    %5746 = vmatpush2.msra.mxu0 0.0
    %5747 = vmatprep.subr.mxu0 0.0
    %5748 = vmatpush2.msra.mxu0 0.0
    %5749 = vmatprep.subr.mxu0 0.0
    %5750 = vmatpush2.msra.mxu0 0.0
    %5751 = vmatprep.mubr.f32.mxu0 0.0
    %5752 = vmatmul.mubr.f32.gmra.mxu0 %v1026
    %v5753 = vpop.f32.mrf.mxu0
    %v5754 = vadd.f32 0.0, %v5753
    %v5755 = vpop.f32.mrf.mxu0
    %5756 = vmatprep.mubr.f32.mxu0 0.0
    %5757 = vmatmul.mubr.f32.gmra.mxu0 %v1029
    %v5758 = vpop.f32.mrf.mxu0
    %v5759 = vadd.f32 0.0, %v5758
    %v5760 = vpop.f32.mrf.mxu0
    %5761 = vmatprep.mubr.f32.mxu0 0.0
    %5762 = vmatmul.mubr.f32.gmra.mxu0 %v1032
    %v5763 = vpop.f32.mrf.mxu0
    %v5764 = vadd.f32 0.0, %v5763
    %v5765 = vpop.f32.mrf.mxu0
    %5766 = vmatprep.mubr.f32.mxu0 0.0
    %5767 = vmatmul.mubr.f32.gmra.mxu0 %v1035
    %v5768 = vpop.f32.mrf.mxu0
    %v5769 = vadd.f32 0.0, %v5768
    %v5770 = vpop.f32.mrf.mxu0
    %5771 = vmatprep.mubr.f32.mxu0 0.0
    %5772 = vmatmul.mubr.f32.gmra.mxu0 %v1038
    %v5773 = vpop.f32.mrf.mxu0
    %v5774 = vadd.f32 0.0, %v5773
    %v5775 = vpop.f32.mrf.mxu0
    %5776 = vmatprep.mubr.f32.mxu0 0.0
    %5777 = vmatmul.mubr.f32.gmra.mxu0 %v1041
    %v5778 = vpop.f32.mrf.mxu0
    %v5779 = vadd.f32 0.0, %v5778
    %v5780 = vpop.f32.mrf.mxu0
    %5781 = vmatprep.mubr.f32.mxu0 0.0
    %5782 = vmatmul.mubr.f32.gmra.mxu0 %v1044
    %v5783 = vpop.f32.mrf.mxu0
    %v5784 = vadd.f32 0.0, %v5783
    %v5785 = vpop.f32.mrf.mxu0
    %5786 = vmatprep.mubr.f32.mxu0 0.0
    %5787 = vmatmul.mubr.f32.gmra.mxu0 %v1047
    %v5788 = vpop.f32.mrf.mxu0
    %v5789 = vadd.f32 0.0, %v5788
    %v5790 = vpop.f32.mrf.mxu0
    %5791 = vmatprep.mubr.f32.mxu0 0.0
    %5792 = vmatmul.mubr.f32.gmra.mxu0 %v1050
    %v5793 = vpop.f32.mrf.mxu0
    %v5794 = vadd.f32 0.0, %v5793
    %v5795 = vpop.f32.mrf.mxu0
    %5796 = vmatprep.mubr.f32.mxu0 0.0
    %5797 = vmatmul.mubr.f32.gmra.mxu0 %v1053
    %v5798 = vpop.f32.mrf.mxu0
    %v5799 = vadd.f32 0.0, %v5798
    %v5800 = vpop.f32.mrf.mxu0
    %5801 = vmatprep.mubr.f32.mxu0 0.0
    %5802 = vmatmul.mubr.f32.gmra.mxu0 %v1056
    %v5803 = vpop.f32.mrf.mxu0
    %v5804 = vadd.f32 0.0, %v5803
    %v5805 = vpop.f32.mrf.mxu0
    %5806 = vmatprep.mubr.f32.mxu0 0.0
    %5807 = vmatmul.mubr.f32.gmra.mxu0 %v1059
    %v5808 = vpop.f32.mrf.mxu0
    %v5809 = vadd.f32 0.0, %v5808
    %v5810 = vpop.f32.mrf.mxu0
    %5811 = vmatprep.mubr.f32.mxu0 0.0
    %5812 = vmatmul.mubr.f32.gmra.mxu0 %v1062
    %v5813 = vpop.f32.mrf.mxu0
    %v5814 = vadd.f32 0.0, %v5813
    %v5815 = vpop.f32.mrf.mxu0
    %5816 = vmatprep.mubr.f32.mxu0 0.0
    %5817 = vmatmul.mubr.f32.gmra.mxu0 %v1065
    %v5818 = vpop.f32.mrf.mxu0
    %v5819 = vadd.f32 0.0, %v5818
    %v5820 = vpop.f32.mrf.mxu0
    %5821 = vmatprep.mubr.f32.mxu0 0.0
    %5822 = vmatmul.mubr.f32.gmra.mxu0 %v1068
    %v5823 = vpop.f32.mrf.mxu0
    %v5824 = vadd.f32 0.0, %v5823
    %v5825 = vpop.f32.mrf.mxu0
    %5826 = vmatprep.mubr.f32.mxu0 0.0
    %5827 = vmatmul.mubr.f32.gmra.mxu0 %v1071
    %v5828 = vpop.f32.mrf.mxu0
    %v5829 = vadd.f32 0.0, %v5828
    %v5830 = vpop.f32.mrf.mxu0
    %5831 = vdwg.mxu0
    %v5832 = vadd.f32 %v5671, %v5754
    %v5833 = vadd.f32 %v5672, %v5759
    %v5834 = vadd.f32 %v5673, %v5764
    %v5835 = vadd.f32 %v5674, %v5769
    %v5836 = vadd.f32 %v5675, %v5774
    %v5837 = vadd.f32 %v5676, %v5779
    %v5838 = vadd.f32 %v5677, %v5784
    %v5839 = vadd.f32 %v5678, %v5789
    %v5840 = vadd.f32 %v5679, %v5794
    %v5841 = vadd.f32 %v5680, %v5799
    %v5842 = vadd.f32 %v5681, %v5804
    %v5843 = vadd.f32 %v5682, %v5809
    %v5844 = vadd.f32 %v5683, %v5814
    %v5845 = vadd.f32 %v5684, %v5819
    %v5846 = vadd.f32 %v5685, %v5824
    %v5847 = vadd.f32 %v5686, %v5829
    %v5848 = vtanh.pop %v5832
    %v5849 = vtanh.pop %v5833
    %v5850 = vtanh.pop %v5834
    %v5851 = vtanh.pop %v5835
    %v5852 = vtanh.pop %v5836
    %v5853 = vtanh.pop %v5837
    %v5854 = vtanh.pop %v5838
    %v5855 = vtanh.pop %v5839
    %v5856 = vtanh.pop %v5840
    %v5857 = vtanh.pop %v5841
    %v5858 = vtanh.pop %v5842
    %v5859 = vtanh.pop %v5843
    %v5860 = vtanh.pop %v5844
    %v5861 = vtanh.pop %v5845
    %v5862 = vtanh.pop %v5846
    %v5863 = vtanh.pop %v5847
    %v5864 = vmul.f32 %v5848, 0.5
    %v5865 = vmul.f32 %v5849, 0.5
    %v5866 = vmul.f32 %v5850, 0.5
    %v5867 = vmul.f32 %v5851, 0.5
    %v5868 = vadd.f32 %v5864, 0.5
    %v5869 = vadd.f32 %v5865, 0.5
    %v5870 = vadd.f32 %v5866, 0.5
    %v5871 = vadd.f32 %v5867, 0.5
    %v5872 = vmul.f32 %v5852, 0.5
    %v5873 = vmul.f32 %v5853, 0.5
    %v5874 = vmul.f32 %v5854, 0.5
    %v5875 = vmul.f32 %v5855, 0.5
    %v5876 = vadd.f32 %v5872, 0.5
    %v5877 = vadd.f32 %v5873, 0.5
    %v5878 = vadd.f32 %v5874, 0.5
    %v5879 = vadd.f32 %v5875, 0.5
    %v5880 = vmul.f32 %v5860, 0.5
    %v5881 = vmul.f32 %v5861, 0.5
    %v5882 = vmul.f32 %v5862, 0.5
    %v5883 = vmul.f32 %v5863, 0.5
    %v5884 = vadd.f32 %v5880, 0.5
    %v5885 = vadd.f32 %v5881, 0.5
    %v5886 = vadd.f32 %v5882, 0.5
    %v5887 = vadd.f32 %v5883, 0.5
    %v5888 = vmul.f32 %v5876, %v5127
    %v5889 = vmul.f32 %v5877, %v5128
    %v5890 = vmul.f32 %v5878, %v5129
    %v5891 = vmul.f32 %v5879, %v5130
    %v5892 = vmul.f32 %v5868, %v5856
    %v5893 = vmul.f32 %v5869, %v5857
    %v5894 = vmul.f32 %v5870, %v5858
    %v5895 = vmul.f32 %v5871, %v5859
    %v5896 = vadd.f32 %v5888, %v5892
    %v5897 = vadd.f32 %v5889, %v5893
    %v5898 = vadd.f32 %v5890, %v5894
    %v5899 = vadd.f32 %v5891, %v5895
    %v5900 = vtanh.pop %v5896
    %v5901 = vtanh.pop %v5897
    %v5902 = vtanh.pop %v5898
    %v5903 = vtanh.pop %v5899
    %v5904 = vmul.f32 %v5884, %v5900
    %v5905 = vmul.f32 %v5885, %v5901
    %v5906 = vmul.f32 %v5886, %v5902
    %v5907 = vmul.f32 %v5887, %v5903
    %s5908 = scalar_lea.vmem %s0, 56
    %v5909 = vld [vmem:[%s5908] sm:$0xf]
    %v5910 = vld [vmem:[%s5908 + $0x4] sm:$0xf]
    %v5911 = vunpack.c.l.bf16 %v5909
    %v5912 = vunpack.c.l.bf16 %v5910
    %5913 = vmatprep.subr.mxu0 0.0
    %5914 = vmatpush1.msra.mxu0 0.0
    %5915 = vmatprep.subr.mxu0 0.0
    %5916 = vmatpush1.msra.mxu0 0.0
    %5917 = vmatprep.subr.mxu0 0.0
    %5918 = vmatpush1.msra.mxu0 0.0
    %5919 = vmatprep.subr.mxu0 0.0
    %5920 = vmatpush1.msra.mxu0 0.0
    %5921 = vmatprep.subr.mxu0 0.0
    %5922 = vmatpush1.msra.mxu0 0.0
    %5923 = vmatprep.subr.mxu0 0.0
    %5924 = vmatpush1.msra.mxu0 0.0
    %5925 = vmatprep.subr.mxu0 0.0
    %5926 = vmatpush1.msra.mxu0 0.0
    %5927 = vmatprep.subr.mxu0 0.0
    %5928 = vmatpush1.msra.mxu0 0.0
    %5929 = vmatprep.subr.mxu0 0.0
    %5930 = vmatpush1.msra.mxu0 0.0
    %5931 = vmatprep.subr.mxu0 0.0
    %5932 = vmatpush1.msra.mxu0 0.0
    %5933 = vmatprep.subr.mxu0 0.0
    %5934 = vmatpush1.msra.mxu0 0.0
    %5935 = vmatprep.subr.mxu0 0.0
    %5936 = vmatpush1.msra.mxu0 0.0
    %5937 = vmatprep.subr.mxu0 0.0
    %5938 = vmatpush1.msra.mxu0 0.0
    %5939 = vmatprep.subr.mxu0 0.0
    %5940 = vmatpush1.msra.mxu0 0.0
    %5941 = vmatprep.subr.mxu0 0.0
    %5942 = vmatpush1.msra.mxu0 %v5912
    %5943 = vmatprep.subr.mxu0 0.0
    %5944 = vmatpush1.msra.mxu0 %v5911
    %5945 = vmatprep.subr.mxu0 0.0
    %5946 = vmatpush2.msra.mxu0 0.0
    %5947 = vmatprep.subr.mxu0 0.0
    %5948 = vmatpush2.msra.mxu0 0.0
    %5949 = vmatprep.subr.mxu0 0.0
    %5950 = vmatpush2.msra.mxu0 0.0
    %5951 = vmatprep.subr.mxu0 0.0
    %5952 = vmatpush2.msra.mxu0 0.0
    %5953 = vmatprep.subr.mxu0 0.0
    %5954 = vmatpush2.msra.mxu0 0.0
    %5955 = vmatprep.subr.mxu0 0.0
    %5956 = vmatpush2.msra.mxu0 0.0
    %5957 = vmatprep.subr.mxu0 0.0
    %5958 = vmatpush2.msra.mxu0 0.0
    %5959 = vmatprep.subr.mxu0 0.0
    %5960 = vmatpush2.msra.mxu0 0.0
    %5961 = vmatprep.subr.mxu0 0.0
    %5962 = vmatpush2.msra.mxu0 0.0
    %5963 = vmatprep.subr.mxu0 0.0
    %5964 = vmatpush2.msra.mxu0 0.0
    %5965 = vmatprep.subr.mxu0 0.0
    %5966 = vmatpush2.msra.mxu0 0.0
    %5967 = vmatprep.subr.mxu0 0.0
    %5968 = vmatpush2.msra.mxu0 0.0
    %5969 = vmatprep.subr.mxu0 0.0
    %5970 = vmatpush2.msra.mxu0 0.0
    %5971 = vmatprep.subr.mxu0 0.0
    %5972 = vmatpush2.msra.mxu0 0.0
    %5973 = vmatprep.subr.mxu0 0.0
    %5974 = vmatpush2.msra.mxu0 0.0
    %5975 = vmatprep.subr.mxu0 0.0
    %5976 = vmatpush2.msra.mxu0 0.0
    %5977 = vmatprep.mubr.f32.mxu0 0.0
    %5978 = vmatmul.mubr.f32.gmra.mxu0 %v338
    %v5979 = vpop.f32.mrf.mxu0
    %v5980 = vadd.f32 0.0, %v5979
    %v5981 = vpop.f32.mrf.mxu0
    %5982 = vmatprep.mubr.f32.mxu0 0.0
    %5983 = vmatmul.mubr.f32.gmra.mxu0 %v341
    %v5984 = vpop.f32.mrf.mxu0
    %v5985 = vadd.f32 0.0, %v5984
    %v5986 = vpop.f32.mrf.mxu0
    %5987 = vmatprep.mubr.f32.mxu0 0.0
    %5988 = vmatmul.mubr.f32.gmra.mxu0 %v344
    %v5989 = vpop.f32.mrf.mxu0
    %v5990 = vadd.f32 0.0, %v5989
    %v5991 = vpop.f32.mrf.mxu0
    %5992 = vmatprep.mubr.f32.mxu0 0.0
    %5993 = vmatmul.mubr.f32.gmra.mxu0 %v347
    %v5994 = vpop.f32.mrf.mxu0
    %v5995 = vadd.f32 0.0, %v5994
    %v5996 = vpop.f32.mrf.mxu0
    %5997 = vmatprep.mubr.f32.mxu0 0.0
    %5998 = vmatmul.mubr.f32.gmra.mxu0 %v350
    %v5999 = vpop.f32.mrf.mxu0
    %v6000 = vadd.f32 0.0, %v5999
    %v6001 = vpop.f32.mrf.mxu0
    %6002 = vmatprep.mubr.f32.mxu0 0.0
    %6003 = vmatmul.mubr.f32.gmra.mxu0 %v353
    %v6004 = vpop.f32.mrf.mxu0
    %v6005 = vadd.f32 0.0, %v6004
    %v6006 = vpop.f32.mrf.mxu0
    %6007 = vmatprep.mubr.f32.mxu0 0.0
    %6008 = vmatmul.mubr.f32.gmra.mxu0 %v356
    %v6009 = vpop.f32.mrf.mxu0
    %v6010 = vadd.f32 0.0, %v6009
    %v6011 = vpop.f32.mrf.mxu0
    %6012 = vmatprep.mubr.f32.mxu0 0.0
    %6013 = vmatmul.mubr.f32.gmra.mxu0 %v359
    %v6014 = vpop.f32.mrf.mxu0
    %v6015 = vadd.f32 0.0, %v6014
    %v6016 = vpop.f32.mrf.mxu0
    %6017 = vmatprep.mubr.f32.mxu0 0.0
    %6018 = vmatmul.mubr.f32.gmra.mxu0 %v362
    %v6019 = vpop.f32.mrf.mxu0
    %v6020 = vadd.f32 0.0, %v6019
    %v6021 = vpop.f32.mrf.mxu0
    %6022 = vmatprep.mubr.f32.mxu0 0.0
    %6023 = vmatmul.mubr.f32.gmra.mxu0 %v365
    %v6024 = vpop.f32.mrf.mxu0
    %v6025 = vadd.f32 0.0, %v6024
    %v6026 = vpop.f32.mrf.mxu0
    %6027 = vmatprep.mubr.f32.mxu0 0.0
    %6028 = vmatmul.mubr.f32.gmra.mxu0 %v368
    %v6029 = vpop.f32.mrf.mxu0
    %v6030 = vadd.f32 0.0, %v6029
    %v6031 = vpop.f32.mrf.mxu0
    %6032 = vmatprep.mubr.f32.mxu0 0.0
    %6033 = vmatmul.mubr.f32.gmra.mxu0 %v371
    %v6034 = vpop.f32.mrf.mxu0
    %v6035 = vadd.f32 0.0, %v6034
    %v6036 = vpop.f32.mrf.mxu0
    %6037 = vmatprep.mubr.f32.mxu0 0.0
    %6038 = vmatmul.mubr.f32.gmra.mxu0 %v374
    %v6039 = vpop.f32.mrf.mxu0
    %v6040 = vadd.f32 0.0, %v6039
    %v6041 = vpop.f32.mrf.mxu0
    %6042 = vmatprep.mubr.f32.mxu0 0.0
    %6043 = vmatmul.mubr.f32.gmra.mxu0 %v377
    %v6044 = vpop.f32.mrf.mxu0
    %v6045 = vadd.f32 0.0, %v6044
    %v6046 = vpop.f32.mrf.mxu0
    %6047 = vmatprep.mubr.f32.mxu0 0.0
    %6048 = vmatmul.mubr.f32.gmra.mxu0 %v380
    %v6049 = vpop.f32.mrf.mxu0
    %v6050 = vadd.f32 0.0, %v6049
    %v6051 = vpop.f32.mrf.mxu0
    %6052 = vmatprep.mubr.f32.mxu0 0.0
    %6053 = vmatmul.mubr.f32.gmra.mxu0 %v383
    %v6054 = vpop.f32.mrf.mxu0
    %v6055 = vadd.f32 0.0, %v6054
    %v6056 = vpop.f32.mrf.mxu0
    %6057 = vdwg.mxu0
    %v6058 = vadd.f32 %v143, %v5980
    %v6059 = vadd.f32 %v148, %v5985
    %v6060 = vadd.f32 %v153, %v5990
    %v6061 = vadd.f32 %v158, %v5995
    %v6062 = vadd.f32 %v163, %v6000
    %v6063 = vadd.f32 %v168, %v6005
    %v6064 = vadd.f32 %v173, %v6010
    %v6065 = vadd.f32 %v178, %v6015
    %v6066 = vadd.f32 %v183, %v6020
    %v6067 = vadd.f32 %v188, %v6025
    %v6068 = vadd.f32 %v193, %v6030
    %v6069 = vadd.f32 %v198, %v6035
    %v6070 = vadd.f32 %v203, %v6040
    %v6071 = vadd.f32 %v208, %v6045
    %v6072 = vadd.f32 %v213, %v6050
    %v6073 = vadd.f32 %v218, %v6055
    %6074 = vmatprep.subr.mxu0 0.0
    %6075 = vmatpush1.msra.mxu0 0.0
    %6076 = vmatprep.subr.mxu0 0.0
    %6077 = vmatpush1.msra.mxu0 0.0
    %6078 = vmatprep.subr.mxu0 0.0
    %6079 = vmatpush1.msra.mxu0 0.0
    %6080 = vmatprep.subr.mxu0 0.0
    %6081 = vmatpush1.msra.mxu0 0.0
    %6082 = vmatprep.subr.mxu0 0.0
    %6083 = vmatpush1.msra.mxu0 0.0
    %6084 = vmatprep.subr.mxu0 0.0
    %6085 = vmatpush1.msra.mxu0 0.0
    %6086 = vmatprep.subr.mxu0 0.0
    %6087 = vmatpush1.msra.mxu0 0.0
    %6088 = vmatprep.subr.mxu0 0.0
    %6089 = vmatpush1.msra.mxu0 0.0
    %6090 = vmatprep.subr.mxu0 0.0
    %6091 = vmatpush1.msra.mxu0 0.0
    %6092 = vmatprep.subr.mxu0 0.0
    %6093 = vmatpush1.msra.mxu0 0.0
    %6094 = vmatprep.subr.mxu0 0.0
    %6095 = vmatpush1.msra.mxu0 0.0
    %6096 = vmatprep.subr.mxu0 0.0
    %6097 = vmatpush1.msra.mxu0 0.0
    %6098 = vmatprep.subr.mxu0 0.0
    %6099 = vmatpush1.msra.mxu0 %v5525
    %6100 = vmatprep.subr.mxu0 0.0
    %6101 = vmatpush1.msra.mxu0 %v5524
    %6102 = vmatprep.subr.mxu0 0.0
    %6103 = vmatpush1.msra.mxu0 %v5523
    %6104 = vmatprep.subr.mxu0 0.0
    %6105 = vmatpush1.msra.mxu0 %v5522
    %6106 = vmatprep.subr.mxu0 0.0
    %6107 = vmatpush2.msra.mxu0 0.0
    %6108 = vmatprep.subr.mxu0 0.0
    %6109 = vmatpush2.msra.mxu0 0.0
    %6110 = vmatprep.subr.mxu0 0.0
    %6111 = vmatpush2.msra.mxu0 0.0
    %6112 = vmatprep.subr.mxu0 0.0
    %6113 = vmatpush2.msra.mxu0 0.0
    %6114 = vmatprep.subr.mxu0 0.0
    %6115 = vmatpush2.msra.mxu0 0.0
    %6116 = vmatprep.subr.mxu0 0.0
    %6117 = vmatpush2.msra.mxu0 0.0
    %6118 = vmatprep.subr.mxu0 0.0
    %6119 = vmatpush2.msra.mxu0 0.0
    %6120 = vmatprep.subr.mxu0 0.0
    %6121 = vmatpush2.msra.mxu0 0.0
    %6122 = vmatprep.subr.mxu0 0.0
    %6123 = vmatpush2.msra.mxu0 0.0
    %6124 = vmatprep.subr.mxu0 0.0
    %6125 = vmatpush2.msra.mxu0 0.0
    %6126 = vmatprep.subr.mxu0 0.0
    %6127 = vmatpush2.msra.mxu0 0.0
    %6128 = vmatprep.subr.mxu0 0.0
    %6129 = vmatpush2.msra.mxu0 0.0
    %6130 = vmatprep.subr.mxu0 0.0
    %6131 = vmatpush2.msra.mxu0 0.0
    %6132 = vmatprep.subr.mxu0 0.0
    %6133 = vmatpush2.msra.mxu0 0.0
    %6134 = vmatprep.subr.mxu0 0.0
    %6135 = vmatpush2.msra.mxu0 0.0
    %6136 = vmatprep.subr.mxu0 0.0
    %6137 = vmatpush2.msra.mxu0 0.0
    %6138 = vmatprep.mubr.f32.mxu0 0.0
    %6139 = vmatmul.mubr.f32.gmra.mxu0 %v548
    %v6140 = vpop.f32.mrf.mxu0
    %v6141 = vadd.f32 0.0, %v6140
    %v6142 = vpop.f32.mrf.mxu0
    %6143 = vmatprep.mubr.f32.mxu0 0.0
    %6144 = vmatmul.mubr.f32.gmra.mxu0 %v551
    %v6145 = vpop.f32.mrf.mxu0
    %v6146 = vadd.f32 0.0, %v6145
    %v6147 = vpop.f32.mrf.mxu0
    %6148 = vmatprep.mubr.f32.mxu0 0.0
    %6149 = vmatmul.mubr.f32.gmra.mxu0 %v554
    %v6150 = vpop.f32.mrf.mxu0
    %v6151 = vadd.f32 0.0, %v6150
    %v6152 = vpop.f32.mrf.mxu0
    %6153 = vmatprep.mubr.f32.mxu0 0.0
    %6154 = vmatmul.mubr.f32.gmra.mxu0 %v557
    %v6155 = vpop.f32.mrf.mxu0
    %v6156 = vadd.f32 0.0, %v6155
    %v6157 = vpop.f32.mrf.mxu0
    %6158 = vmatprep.mubr.f32.mxu0 0.0
    %6159 = vmatmul.mubr.f32.gmra.mxu0 %v560
    %v6160 = vpop.f32.mrf.mxu0
    %v6161 = vadd.f32 0.0, %v6160
    %v6162 = vpop.f32.mrf.mxu0
    %6163 = vmatprep.mubr.f32.mxu0 0.0
    %6164 = vmatmul.mubr.f32.gmra.mxu0 %v563
    %v6165 = vpop.f32.mrf.mxu0
    %v6166 = vadd.f32 0.0, %v6165
    %v6167 = vpop.f32.mrf.mxu0
    %6168 = vmatprep.mubr.f32.mxu0 0.0
    %6169 = vmatmul.mubr.f32.gmra.mxu0 %v566
    %v6170 = vpop.f32.mrf.mxu0
    %v6171 = vadd.f32 0.0, %v6170
    %v6172 = vpop.f32.mrf.mxu0
    %6173 = vmatprep.mubr.f32.mxu0 0.0
    %6174 = vmatmul.mubr.f32.gmra.mxu0 %v569
    %v6175 = vpop.f32.mrf.mxu0
    %v6176 = vadd.f32 0.0, %v6175
    %v6177 = vpop.f32.mrf.mxu0
    %6178 = vmatprep.mubr.f32.mxu0 0.0
    %6179 = vmatmul.mubr.f32.gmra.mxu0 %v572
    %v6180 = vpop.f32.mrf.mxu0
    %v6181 = vadd.f32 0.0, %v6180
    %v6182 = vpop.f32.mrf.mxu0
    %6183 = vmatprep.mubr.f32.mxu0 0.0
    %6184 = vmatmul.mubr.f32.gmra.mxu0 %v575
    %v6185 = vpop.f32.mrf.mxu0
    %v6186 = vadd.f32 0.0, %v6185
    %v6187 = vpop.f32.mrf.mxu0
    %6188 = vmatprep.mubr.f32.mxu0 0.0
    %6189 = vmatmul.mubr.f32.gmra.mxu0 %v578
    %v6190 = vpop.f32.mrf.mxu0
    %v6191 = vadd.f32 0.0, %v6190
    %v6192 = vpop.f32.mrf.mxu0
    %6193 = vmatprep.mubr.f32.mxu0 0.0
    %6194 = vmatmul.mubr.f32.gmra.mxu0 %v581
    %v6195 = vpop.f32.mrf.mxu0
    %v6196 = vadd.f32 0.0, %v6195
    %v6197 = vpop.f32.mrf.mxu0
    %6198 = vmatprep.mubr.f32.mxu0 0.0
    %6199 = vmatmul.mubr.f32.gmra.mxu0 %v584
    %v6200 = vpop.f32.mrf.mxu0
    %v6201 = vadd.f32 0.0, %v6200
    %v6202 = vpop.f32.mrf.mxu0
    %6203 = vmatprep.mubr.f32.mxu0 0.0
    %6204 = vmatmul.mubr.f32.gmra.mxu0 %v587
    %v6205 = vpop.f32.mrf.mxu0
    %v6206 = vadd.f32 0.0, %v6205
    %v6207 = vpop.f32.mrf.mxu0
    %6208 = vmatprep.mubr.f32.mxu0 0.0
    %6209 = vmatmul.mubr.f32.gmra.mxu0 %v590
    %v6210 = vpop.f32.mrf.mxu0
    %v6211 = vadd.f32 0.0, %v6210
    %v6212 = vpop.f32.mrf.mxu0
    %6213 = vmatprep.mubr.f32.mxu0 0.0
    %6214 = vmatmul.mubr.f32.gmra.mxu0 %v593
    %v6215 = vpop.f32.mrf.mxu0
    %v6216 = vadd.f32 0.0, %v6215
    %v6217 = vpop.f32.mrf.mxu0
    %6218 = vdwg.mxu0
    %v6219 = vadd.f32 %v6058, %v6141
    %v6220 = vadd.f32 %v6059, %v6146
    %v6221 = vadd.f32 %v6060, %v6151
    %v6222 = vadd.f32 %v6061, %v6156
    %v6223 = vadd.f32 %v6062, %v6161
    %v6224 = vadd.f32 %v6063, %v6166
    %v6225 = vadd.f32 %v6064, %v6171
    %v6226 = vadd.f32 %v6065, %v6176
    %v6227 = vadd.f32 %v6066, %v6181
    %v6228 = vadd.f32 %v6067, %v6186
    %v6229 = vadd.f32 %v6068, %v6191
    %v6230 = vadd.f32 %v6069, %v6196
    %v6231 = vadd.f32 %v6070, %v6201
    %v6232 = vadd.f32 %v6071, %v6206
    %v6233 = vadd.f32 %v6072, %v6211
    %v6234 = vadd.f32 %v6073, %v6216
    %v6235 = vtanh.pop %v6219
    %v6236 = vtanh.pop %v6220
    %v6237 = vtanh.pop %v6221
    %v6238 = vtanh.pop %v6222
    %v6239 = vtanh.pop %v6223
    %v6240 = vtanh.pop %v6224
    %v6241 = vtanh.pop %v6225
    %v6242 = vtanh.pop %v6226
    %v6243 = vtanh.pop %v6227
    %v6244 = vtanh.pop %v6228
    %v6245 = vtanh.pop %v6229
    %v6246 = vtanh.pop %v6230
    %v6247 = vtanh.pop %v6231
    %v6248 = vtanh.pop %v6232
    %v6249 = vtanh.pop %v6233
    %v6250 = vtanh.pop %v6234
    %v6251 = vmul.f32 %v6235, 0.5
    %v6252 = vmul.f32 %v6236, 0.5
    %v6253 = vmul.f32 %v6237, 0.5
    %v6254 = vmul.f32 %v6238, 0.5
    %v6255 = vadd.f32 %v6251, 0.5
    %v6256 = vadd.f32 %v6252, 0.5
    %v6257 = vadd.f32 %v6253, 0.5
    %v6258 = vadd.f32 %v6254, 0.5
    %v6259 = vmul.f32 %v6239, 0.5
    %v6260 = vmul.f32 %v6240, 0.5
    %v6261 = vmul.f32 %v6241, 0.5
    %v6262 = vmul.f32 %v6242, 0.5
    %v6263 = vadd.f32 %v6259, 0.5
    %v6264 = vadd.f32 %v6260, 0.5
    %v6265 = vadd.f32 %v6261, 0.5
    %v6266 = vadd.f32 %v6262, 0.5
    %v6267 = vmul.f32 %v6247, 0.5
    %v6268 = vmul.f32 %v6248, 0.5
    %v6269 = vmul.f32 %v6249, 0.5
    %v6270 = vmul.f32 %v6250, 0.5
    %v6271 = vadd.f32 %v6267, 0.5
    %v6272 = vadd.f32 %v6268, 0.5
    %v6273 = vadd.f32 %v6269, 0.5
    %v6274 = vadd.f32 %v6270, 0.5
    %v6275 = vmul.f32 %v6263, %v5514
    %v6276 = vmul.f32 %v6264, %v5515
    %v6277 = vmul.f32 %v6265, %v5516
    %v6278 = vmul.f32 %v6266, %v5517
    %v6279 = vmul.f32 %v6255, %v6243
    %v6280 = vmul.f32 %v6256, %v6244
    %v6281 = vmul.f32 %v6257, %v6245
    %v6282 = vmul.f32 %v6258, %v6246
    %v6283 = vadd.f32 %v6275, %v6279
    %v6284 = vadd.f32 %v6276, %v6280
    %v6285 = vadd.f32 %v6277, %v6281
    %v6286 = vadd.f32 %v6278, %v6282
    %v6287 = vtanh.pop %v6283
    %v6288 = vtanh.pop %v6284
    %v6289 = vtanh.pop %v6285
    %v6290 = vtanh.pop %v6286
    %v6291 = vmul.f32 %v6271, %v6287
    %v6292 = vmul.f32 %v6272, %v6288
    %v6293 = vmul.f32 %v6273, %v6289
    %v6294 = vmul.f32 %v6274, %v6290
    %6295 = vmatprep.subr.mxu0 0.0
    %6296 = vmatpush1.msra.mxu0 0.0
    %6297 = vmatprep.subr.mxu0 0.0
    %6298 = vmatpush1.msra.mxu0 0.0
    %6299 = vmatprep.subr.mxu0 0.0
    %6300 = vmatpush1.msra.mxu0 0.0
    %6301 = vmatprep.subr.mxu0 0.0
    %6302 = vmatpush1.msra.mxu0 0.0
    %6303 = vmatprep.subr.mxu0 0.0
    %6304 = vmatpush1.msra.mxu0 0.0
    %6305 = vmatprep.subr.mxu0 0.0
    %6306 = vmatpush1.msra.mxu0 0.0
    %6307 = vmatprep.subr.mxu0 0.0
    %6308 = vmatpush1.msra.mxu0 0.0
    %6309 = vmatprep.subr.mxu0 0.0
    %6310 = vmatpush1.msra.mxu0 0.0
    %6311 = vmatprep.subr.mxu0 0.0
    %6312 = vmatpush1.msra.mxu0 0.0
    %6313 = vmatprep.subr.mxu0 0.0
    %6314 = vmatpush1.msra.mxu0 0.0
    %6315 = vmatprep.subr.mxu0 0.0
    %6316 = vmatpush1.msra.mxu0 0.0
    %6317 = vmatprep.subr.mxu0 0.0
    %6318 = vmatpush1.msra.mxu0 0.0
    %6319 = vmatprep.subr.mxu0 0.0
    %6320 = vmatpush1.msra.mxu0 %v6294
    %6321 = vmatprep.subr.mxu0 0.0
    %6322 = vmatpush1.msra.mxu0 %v6293
    %6323 = vmatprep.subr.mxu0 0.0
    %6324 = vmatpush1.msra.mxu0 %v6292
    %6325 = vmatprep.subr.mxu0 0.0
    %6326 = vmatpush1.msra.mxu0 %v6291
    %6327 = vmatprep.subr.mxu0 0.0
    %6328 = vmatpush2.msra.mxu0 0.0
    %6329 = vmatprep.subr.mxu0 0.0
    %6330 = vmatpush2.msra.mxu0 0.0
    %6331 = vmatprep.subr.mxu0 0.0
    %6332 = vmatpush2.msra.mxu0 0.0
    %6333 = vmatprep.subr.mxu0 0.0
    %6334 = vmatpush2.msra.mxu0 0.0
    %6335 = vmatprep.subr.mxu0 0.0
    %6336 = vmatpush2.msra.mxu0 0.0
    %6337 = vmatprep.subr.mxu0 0.0
    %6338 = vmatpush2.msra.mxu0 0.0
    %6339 = vmatprep.subr.mxu0 0.0
    %6340 = vmatpush2.msra.mxu0 0.0
    %6341 = vmatprep.subr.mxu0 0.0
    %6342 = vmatpush2.msra.mxu0 0.0
    %6343 = vmatprep.subr.mxu0 0.0
    %6344 = vmatpush2.msra.mxu0 0.0
    %6345 = vmatprep.subr.mxu0 0.0
    %6346 = vmatpush2.msra.mxu0 0.0
    %6347 = vmatprep.subr.mxu0 0.0
    %6348 = vmatpush2.msra.mxu0 0.0
    %6349 = vmatprep.subr.mxu0 0.0
    %6350 = vmatpush2.msra.mxu0 0.0
    %6351 = vmatprep.subr.mxu0 0.0
    %6352 = vmatpush2.msra.mxu0 0.0
    %6353 = vmatprep.subr.mxu0 0.0
    %6354 = vmatpush2.msra.mxu0 0.0
    %6355 = vmatprep.subr.mxu0 0.0
    %6356 = vmatpush2.msra.mxu0 0.0
    %6357 = vmatprep.subr.mxu0 0.0
    %6358 = vmatpush2.msra.mxu0 0.0
    %6359 = vmatprep.mubr.f32.mxu0 0.0
    %6360 = vmatmul.mubr.f32.gmra.mxu0 %v817
    %v6361 = vpop.f32.mrf.mxu0
    %v6362 = vadd.f32 0.0, %v6361
    %v6363 = vpop.f32.mrf.mxu0
    %6364 = vmatprep.mubr.f32.mxu0 0.0
    %6365 = vmatmul.mubr.f32.gmra.mxu0 %v820
    %v6366 = vpop.f32.mrf.mxu0
    %v6367 = vadd.f32 0.0, %v6366
    %v6368 = vpop.f32.mrf.mxu0
    %6369 = vmatprep.mubr.f32.mxu0 0.0
    %6370 = vmatmul.mubr.f32.gmra.mxu0 %v823
    %v6371 = vpop.f32.mrf.mxu0
    %v6372 = vadd.f32 0.0, %v6371
    %v6373 = vpop.f32.mrf.mxu0
    %6374 = vmatprep.mubr.f32.mxu0 0.0
    %6375 = vmatmul.mubr.f32.gmra.mxu0 %v826
    %v6376 = vpop.f32.mrf.mxu0
    %v6377 = vadd.f32 0.0, %v6376
    %v6378 = vpop.f32.mrf.mxu0
    %6379 = vmatprep.mubr.f32.mxu0 0.0
    %6380 = vmatmul.mubr.f32.gmra.mxu0 %v829
    %v6381 = vpop.f32.mrf.mxu0
    %v6382 = vadd.f32 0.0, %v6381
    %v6383 = vpop.f32.mrf.mxu0
    %6384 = vmatprep.mubr.f32.mxu0 0.0
    %6385 = vmatmul.mubr.f32.gmra.mxu0 %v832
    %v6386 = vpop.f32.mrf.mxu0
    %v6387 = vadd.f32 0.0, %v6386
    %v6388 = vpop.f32.mrf.mxu0
    %6389 = vmatprep.mubr.f32.mxu0 0.0
    %6390 = vmatmul.mubr.f32.gmra.mxu0 %v835
    %v6391 = vpop.f32.mrf.mxu0
    %v6392 = vadd.f32 0.0, %v6391
    %v6393 = vpop.f32.mrf.mxu0
    %6394 = vmatprep.mubr.f32.mxu0 0.0
    %6395 = vmatmul.mubr.f32.gmra.mxu0 %v838
    %v6396 = vpop.f32.mrf.mxu0
    %v6397 = vadd.f32 0.0, %v6396
    %v6398 = vpop.f32.mrf.mxu0
    %6399 = vmatprep.mubr.f32.mxu0 0.0
    %6400 = vmatmul.mubr.f32.gmra.mxu0 %v841
    %v6401 = vpop.f32.mrf.mxu0
    %v6402 = vadd.f32 0.0, %v6401
    %v6403 = vpop.f32.mrf.mxu0
    %6404 = vmatprep.mubr.f32.mxu0 0.0
    %6405 = vmatmul.mubr.f32.gmra.mxu0 %v844
    %v6406 = vpop.f32.mrf.mxu0
    %v6407 = vadd.f32 0.0, %v6406
    %v6408 = vpop.f32.mrf.mxu0
    %6409 = vmatprep.mubr.f32.mxu0 0.0
    %6410 = vmatmul.mubr.f32.gmra.mxu0 %v847
    %v6411 = vpop.f32.mrf.mxu0
    %v6412 = vadd.f32 0.0, %v6411
    %v6413 = vpop.f32.mrf.mxu0
    %6414 = vmatprep.mubr.f32.mxu0 0.0
    %6415 = vmatmul.mubr.f32.gmra.mxu0 %v850
    %v6416 = vpop.f32.mrf.mxu0
    %v6417 = vadd.f32 0.0, %v6416
    %v6418 = vpop.f32.mrf.mxu0
    %6419 = vmatprep.mubr.f32.mxu0 0.0
    %6420 = vmatmul.mubr.f32.gmra.mxu0 %v853
    %v6421 = vpop.f32.mrf.mxu0
    %v6422 = vadd.f32 0.0, %v6421
    %v6423 = vpop.f32.mrf.mxu0
    %6424 = vmatprep.mubr.f32.mxu0 0.0
    %6425 = vmatmul.mubr.f32.gmra.mxu0 %v856
    %v6426 = vpop.f32.mrf.mxu0
    %v6427 = vadd.f32 0.0, %v6426
    %v6428 = vpop.f32.mrf.mxu0
    %6429 = vmatprep.mubr.f32.mxu0 0.0
    %6430 = vmatmul.mubr.f32.gmra.mxu0 %v859
    %v6431 = vpop.f32.mrf.mxu0
    %v6432 = vadd.f32 0.0, %v6431
    %v6433 = vpop.f32.mrf.mxu0
    %6434 = vmatprep.mubr.f32.mxu0 0.0
    %6435 = vmatmul.mubr.f32.gmra.mxu0 %v862
    %v6436 = vpop.f32.mrf.mxu0
    %v6437 = vadd.f32 0.0, %v6436
    %v6438 = vpop.f32.mrf.mxu0
    %6439 = vdwg.mxu0
    %v6440 = vadd.f32 %v239, %v6362
    %v6441 = vadd.f32 %v244, %v6367
    %v6442 = vadd.f32 %v249, %v6372
    %v6443 = vadd.f32 %v254, %v6377
    %v6444 = vadd.f32 %v259, %v6382
    %v6445 = vadd.f32 %v264, %v6387
    %v6446 = vadd.f32 %v269, %v6392
    %v6447 = vadd.f32 %v274, %v6397
    %v6448 = vadd.f32 %v279, %v6402
    %v6449 = vadd.f32 %v284, %v6407
    %v6450 = vadd.f32 %v289, %v6412
    %v6451 = vadd.f32 %v294, %v6417
    %v6452 = vadd.f32 %v299, %v6422
    %v6453 = vadd.f32 %v304, %v6427
    %v6454 = vadd.f32 %v309, %v6432
    %v6455 = vadd.f32 %v314, %v6437
    %6456 = vmatprep.subr.mxu0 0.0
    %6457 = vmatpush1.msra.mxu0 0.0
    %6458 = vmatprep.subr.mxu0 0.0
    %6459 = vmatpush1.msra.mxu0 0.0
    %6460 = vmatprep.subr.mxu0 0.0
    %6461 = vmatpush1.msra.mxu0 0.0
    %6462 = vmatprep.subr.mxu0 0.0
    %6463 = vmatpush1.msra.mxu0 0.0
    %6464 = vmatprep.subr.mxu0 0.0
    %6465 = vmatpush1.msra.mxu0 0.0
    %6466 = vmatprep.subr.mxu0 0.0
    %6467 = vmatpush1.msra.mxu0 0.0
    %6468 = vmatprep.subr.mxu0 0.0
    %6469 = vmatpush1.msra.mxu0 0.0
    %6470 = vmatprep.subr.mxu0 0.0
    %6471 = vmatpush1.msra.mxu0 0.0
    %6472 = vmatprep.subr.mxu0 0.0
    %6473 = vmatpush1.msra.mxu0 0.0
    %6474 = vmatprep.subr.mxu0 0.0
    %6475 = vmatpush1.msra.mxu0 0.0
    %6476 = vmatprep.subr.mxu0 0.0
    %6477 = vmatpush1.msra.mxu0 0.0
    %6478 = vmatprep.subr.mxu0 0.0
    %6479 = vmatpush1.msra.mxu0 0.0
    %6480 = vmatprep.subr.mxu0 0.0
    %6481 = vmatpush1.msra.mxu0 %v5907
    %6482 = vmatprep.subr.mxu0 0.0
    %6483 = vmatpush1.msra.mxu0 %v5906
    %6484 = vmatprep.subr.mxu0 0.0
    %6485 = vmatpush1.msra.mxu0 %v5905
    %6486 = vmatprep.subr.mxu0 0.0
    %6487 = vmatpush1.msra.mxu0 %v5904
    %6488 = vmatprep.subr.mxu0 0.0
    %6489 = vmatpush2.msra.mxu0 0.0
    %6490 = vmatprep.subr.mxu0 0.0
    %6491 = vmatpush2.msra.mxu0 0.0
    %6492 = vmatprep.subr.mxu0 0.0
    %6493 = vmatpush2.msra.mxu0 0.0
    %6494 = vmatprep.subr.mxu0 0.0
    %6495 = vmatpush2.msra.mxu0 0.0
    %6496 = vmatprep.subr.mxu0 0.0
    %6497 = vmatpush2.msra.mxu0 0.0
    %6498 = vmatprep.subr.mxu0 0.0
    %6499 = vmatpush2.msra.mxu0 0.0
    %6500 = vmatprep.subr.mxu0 0.0
    %6501 = vmatpush2.msra.mxu0 0.0
    %6502 = vmatprep.subr.mxu0 0.0
    %6503 = vmatpush2.msra.mxu0 0.0
    %6504 = vmatprep.subr.mxu0 0.0
    %6505 = vmatpush2.msra.mxu0 0.0
    %6506 = vmatprep.subr.mxu0 0.0
    %6507 = vmatpush2.msra.mxu0 0.0
    %6508 = vmatprep.subr.mxu0 0.0
    %6509 = vmatpush2.msra.mxu0 0.0
    %6510 = vmatprep.subr.mxu0 0.0
    %6511 = vmatpush2.msra.mxu0 0.0
    %6512 = vmatprep.subr.mxu0 0.0
    %6513 = vmatpush2.msra.mxu0 0.0
    %6514 = vmatprep.subr.mxu0 0.0
    %6515 = vmatpush2.msra.mxu0 0.0
    %6516 = vmatprep.subr.mxu0 0.0
    %6517 = vmatpush2.msra.mxu0 0.0
    %6518 = vmatprep.subr.mxu0 0.0
    %6519 = vmatpush2.msra.mxu0 0.0
    %6520 = vmatprep.mubr.f32.mxu0 0.0
    %6521 = vmatmul.mubr.f32.gmra.mxu0 %v1026
    %v6522 = vpop.f32.mrf.mxu0
    %v6523 = vadd.f32 0.0, %v6522
    %v6524 = vpop.f32.mrf.mxu0
    %6525 = vmatprep.mubr.f32.mxu0 0.0
    %6526 = vmatmul.mubr.f32.gmra.mxu0 %v1029
    %v6527 = vpop.f32.mrf.mxu0
    %v6528 = vadd.f32 0.0, %v6527
    %v6529 = vpop.f32.mrf.mxu0
    %6530 = vmatprep.mubr.f32.mxu0 0.0
    %6531 = vmatmul.mubr.f32.gmra.mxu0 %v1032
    %v6532 = vpop.f32.mrf.mxu0
    %v6533 = vadd.f32 0.0, %v6532
    %v6534 = vpop.f32.mrf.mxu0
    %6535 = vmatprep.mubr.f32.mxu0 0.0
    %6536 = vmatmul.mubr.f32.gmra.mxu0 %v1035
    %v6537 = vpop.f32.mrf.mxu0
    %v6538 = vadd.f32 0.0, %v6537
    %v6539 = vpop.f32.mrf.mxu0
    %6540 = vmatprep.mubr.f32.mxu0 0.0
    %6541 = vmatmul.mubr.f32.gmra.mxu0 %v1038
    %v6542 = vpop.f32.mrf.mxu0
    %v6543 = vadd.f32 0.0, %v6542
    %v6544 = vpop.f32.mrf.mxu0
    %6545 = vmatprep.mubr.f32.mxu0 0.0
    %6546 = vmatmul.mubr.f32.gmra.mxu0 %v1041
    %v6547 = vpop.f32.mrf.mxu0
    %v6548 = vadd.f32 0.0, %v6547
    %v6549 = vpop.f32.mrf.mxu0
    %6550 = vmatprep.mubr.f32.mxu0 0.0
    %6551 = vmatmul.mubr.f32.gmra.mxu0 %v1044
    %v6552 = vpop.f32.mrf.mxu0
    %v6553 = vadd.f32 0.0, %v6552
    %v6554 = vpop.f32.mrf.mxu0
    %6555 = vmatprep.mubr.f32.mxu0 0.0
    %6556 = vmatmul.mubr.f32.gmra.mxu0 %v1047
    %v6557 = vpop.f32.mrf.mxu0
    %v6558 = vadd.f32 0.0, %v6557
    %v6559 = vpop.f32.mrf.mxu0
    %6560 = vmatprep.mubr.f32.mxu0 0.0
    %6561 = vmatmul.mubr.f32.gmra.mxu0 %v1050
    %v6562 = vpop.f32.mrf.mxu0
    %v6563 = vadd.f32 0.0, %v6562
    %v6564 = vpop.f32.mrf.mxu0
    %6565 = vmatprep.mubr.f32.mxu0 0.0
    %6566 = vmatmul.mubr.f32.gmra.mxu0 %v1053
    %v6567 = vpop.f32.mrf.mxu0
    %v6568 = vadd.f32 0.0, %v6567
    %v6569 = vpop.f32.mrf.mxu0
    %6570 = vmatprep.mubr.f32.mxu0 0.0
    %6571 = vmatmul.mubr.f32.gmra.mxu0 %v1056
    %v6572 = vpop.f32.mrf.mxu0
    %v6573 = vadd.f32 0.0, %v6572
    %v6574 = vpop.f32.mrf.mxu0
    %6575 = vmatprep.mubr.f32.mxu0 0.0
    %6576 = vmatmul.mubr.f32.gmra.mxu0 %v1059
    %v6577 = vpop.f32.mrf.mxu0
    %v6578 = vadd.f32 0.0, %v6577
    %v6579 = vpop.f32.mrf.mxu0
    %6580 = vmatprep.mubr.f32.mxu0 0.0
    %6581 = vmatmul.mubr.f32.gmra.mxu0 %v1062
    %v6582 = vpop.f32.mrf.mxu0
    %v6583 = vadd.f32 0.0, %v6582
    %v6584 = vpop.f32.mrf.mxu0
    %6585 = vmatprep.mubr.f32.mxu0 0.0
    %6586 = vmatmul.mubr.f32.gmra.mxu0 %v1065
    %v6587 = vpop.f32.mrf.mxu0
    %v6588 = vadd.f32 0.0, %v6587
    %v6589 = vpop.f32.mrf.mxu0
    %6590 = vmatprep.mubr.f32.mxu0 0.0
    %6591 = vmatmul.mubr.f32.gmra.mxu0 %v1068
    %v6592 = vpop.f32.mrf.mxu0
    %v6593 = vadd.f32 0.0, %v6592
    %v6594 = vpop.f32.mrf.mxu0
    %6595 = vmatprep.mubr.f32.mxu0 0.0
    %6596 = vmatmul.mubr.f32.gmra.mxu0 %v1071
    %v6597 = vpop.f32.mrf.mxu0
    %v6598 = vadd.f32 0.0, %v6597
    %v6599 = vpop.f32.mrf.mxu0
    %6600 = vdwg.mxu0
    %v6601 = vadd.f32 %v6440, %v6523
    %v6602 = vadd.f32 %v6441, %v6528
    %v6603 = vadd.f32 %v6442, %v6533
    %v6604 = vadd.f32 %v6443, %v6538
    %v6605 = vadd.f32 %v6444, %v6543
    %v6606 = vadd.f32 %v6445, %v6548
    %v6607 = vadd.f32 %v6446, %v6553
    %v6608 = vadd.f32 %v6447, %v6558
    %v6609 = vadd.f32 %v6448, %v6563
    %v6610 = vadd.f32 %v6449, %v6568
    %v6611 = vadd.f32 %v6450, %v6573
    %v6612 = vadd.f32 %v6451, %v6578
    %v6613 = vadd.f32 %v6452, %v6583
    %v6614 = vadd.f32 %v6453, %v6588
    %v6615 = vadd.f32 %v6454, %v6593
    %v6616 = vadd.f32 %v6455, %v6598
    %v6617 = vtanh.pop %v6601
    %v6618 = vtanh.pop %v6602
    %v6619 = vtanh.pop %v6603
    %v6620 = vtanh.pop %v6604
    %v6621 = vtanh.pop %v6605
    %v6622 = vtanh.pop %v6606
    %v6623 = vtanh.pop %v6607
    %v6624 = vtanh.pop %v6608
    %v6625 = vtanh.pop %v6609
    %v6626 = vtanh.pop %v6610
    %v6627 = vtanh.pop %v6611
    %v6628 = vtanh.pop %v6612
    %v6629 = vtanh.pop %v6613
    %v6630 = vtanh.pop %v6614
    %v6631 = vtanh.pop %v6615
    %v6632 = vtanh.pop %v6616
    %v6633 = vmul.f32 %v6617, 0.5
    %v6634 = vmul.f32 %v6618, 0.5
    %v6635 = vmul.f32 %v6619, 0.5
    %v6636 = vmul.f32 %v6620, 0.5
    %v6637 = vadd.f32 %v6633, 0.5
    %v6638 = vadd.f32 %v6634, 0.5
    %v6639 = vadd.f32 %v6635, 0.5
    %v6640 = vadd.f32 %v6636, 0.5
    %v6641 = vmul.f32 %v6621, 0.5
    %v6642 = vmul.f32 %v6622, 0.5
    %v6643 = vmul.f32 %v6623, 0.5
    %v6644 = vmul.f32 %v6624, 0.5
    %v6645 = vadd.f32 %v6641, 0.5
    %v6646 = vadd.f32 %v6642, 0.5
    %v6647 = vadd.f32 %v6643, 0.5
    %v6648 = vadd.f32 %v6644, 0.5
    %v6649 = vmul.f32 %v6629, 0.5
    %v6650 = vmul.f32 %v6630, 0.5
    %v6651 = vmul.f32 %v6631, 0.5
    %v6652 = vmul.f32 %v6632, 0.5
    %v6653 = vadd.f32 %v6649, 0.5
    %v6654 = vadd.f32 %v6650, 0.5
    %v6655 = vadd.f32 %v6651, 0.5
    %v6656 = vadd.f32 %v6652, 0.5
    %v6657 = vmul.f32 %v6645, %v5896
    %v6658 = vmul.f32 %v6646, %v5897
    %v6659 = vmul.f32 %v6647, %v5898
    %v6660 = vmul.f32 %v6648, %v5899
    %v6661 = vmul.f32 %v6637, %v6625
    %v6662 = vmul.f32 %v6638, %v6626
    %v6663 = vmul.f32 %v6639, %v6627
    %v6664 = vmul.f32 %v6640, %v6628
    %v6665 = vadd.f32 %v6657, %v6661
    %v6666 = vadd.f32 %v6658, %v6662
    %v6667 = vadd.f32 %v6659, %v6663
    %v6668 = vadd.f32 %v6660, %v6664
    %v6669 = vtanh.pop %v6665
    %v6670 = vtanh.pop %v6666
    %v6671 = vtanh.pop %v6667
    %v6672 = vtanh.pop %v6668
    %v6673 = vmul.f32 %v6653, %v6669
    %v6674 = vmul.f32 %v6654, %v6670
    %v6675 = vmul.f32 %v6655, %v6671
    %v6676 = vmul.f32 %v6656, %v6672
    %vm6677 = vcmask 64512
    %6678 = vst.msk [vmem:[#allocation2] sm:$0xff] %vm6677, %v6291
    %6679 = vst.msk [vmem:[#allocation2 + $0x8] sm:$0xff] %vm6677, %v6292
    %6680 = vst.msk [vmem:[#allocation2 + $0x10] sm:$0xff] %vm6677, %v6293
    %6681 = vst.msk [vmem:[#allocation2 + $0x18] sm:$0xff] %vm6677, %v6294
    %6682 = vst.msk [vmem:[#allocation3] sm:$0xff] %vm6677, %v6283
    %6683 = vst.msk [vmem:[#allocation3 + $0x8] sm:$0xff] %vm6677, %v6284
    %6684 = vst.msk [vmem:[#allocation3 + $0x10] sm:$0xff] %vm6677, %v6285
    %6685 = vst.msk [vmem:[#allocation3 + $0x18] sm:$0xff] %vm6677, %v6286
    %6686 = vst.msk [vmem:[#allocation4] sm:$0xff] %vm6677, %v6673
    %6687 = vst.msk [vmem:[#allocation4 + $0x8] sm:$0xff] %vm6677, %v6674
    %6688 = vst.msk [vmem:[#allocation4 + $0x10] sm:$0xff] %vm6677, %v6675
    %6689 = vst.msk [vmem:[#allocation4 + $0x18] sm:$0xff] %vm6677, %v6676
    %6690 = vst.msk [vmem:[#allocation5] sm:$0xff] %vm6677, %v6665
    %6691 = vst.msk [vmem:[#allocation5 + $0x8] sm:$0xff] %vm6677, %v6666
    %6692 = vst.msk [vmem:[#allocation5 + $0x10] sm:$0xff] %vm6677, %v6667
    %6693 = vst.msk [vmem:[#allocation5 + $0x18] sm:$0xff] %vm6677, %v6668
    // Predicated region
    $region50: #{tpu_custom_call.1} parent=1 // pred_check
      %p6694 = pneg %p39
    $region51: #{tpu_custom_call.1} parent=1 // pred_check_branch
      %6696 = sbr.rel (%p6694) target = $region53
    $region52: #{tpu_custom_call.1} parent=1 // pred_region
      %v6697 = vld [vmem:[%s7] sm:$0xff]
      %v6698 = vld [vmem:[%s7 + $0x8] sm:$0xff]
      %v6699 = vld [vmem:[%s7 + $0x10] sm:$0xff]
      %v6700 = vld [vmem:[%s7 + $0x18] sm:$0xff]
      %v6701 = vld [vmem:[%s7 + $0x20] sm:$0xff]
      %v6702 = vld [vmem:[%s7 + $0x28] sm:$0xff]
      %v6703 = vld [vmem:[%s7 + $0x30] sm:$0xff]
      %v6704 = vld [vmem:[%s7 + $0x38] sm:$0xff]
      %v6705 = vld [vmem:[%s8] sm:$0xff]
      %v6706 = vld [vmem:[%s8 + $0x8] sm:$0xff]
      %v6707 = vld [vmem:[%s8 + $0x10] sm:$0xff]
      %v6708 = vld [vmem:[%s8 + $0x18] sm:$0xff]
      %v6709 = vld [vmem:[%s8 + $0x20] sm:$0xff]
      %v6710 = vld [vmem:[%s8 + $0x28] sm:$0xff]
      %v6711 = vld [vmem:[%s8 + $0x30] sm:$0xff]
      %v6712 = vld [vmem:[%s8 + $0x38] sm:$0xff]
      %6714 = vset.pattern.permute.xlu0 0
      %6715 = vperm.xlu0 %6714, %v6705
      %v6716 = vpop.permute.xlu0 %6715
      %6719 = vset.pattern.permute.xlu0 0
      %6720 = vperm.xlu0 %6719, %v6706
      %v6721 = vpop.permute.xlu0 %6720
      %6724 = vset.pattern.permute.xlu0 0
      %6725 = vperm.xlu0 %6724, %v6707
      %v6726 = vpop.permute.xlu0 %6725
      %6729 = vset.pattern.permute.xlu0 0
      %6730 = vperm.xlu0 %6729, %v6708
      %v6731 = vpop.permute.xlu0 %6730
      %6734 = vset.pattern.permute.xlu0 0
      %6735 = vperm.xlu0 %6734, %v6709
      %v6736 = vpop.permute.xlu0 %6735
      %6739 = vset.pattern.permute.xlu0 0
      %6740 = vperm.xlu0 %6739, %v6710
      %v6741 = vpop.permute.xlu0 %6740
      %6744 = vset.pattern.permute.xlu0 0
      %6745 = vperm.xlu0 %6744, %v6711
      %v6746 = vpop.permute.xlu0 %6745
      %6749 = vset.pattern.permute.xlu0 0
      %6750 = vperm.xlu0 %6749, %v6712
      %v6751 = vpop.permute.xlu0 %6750
      %v6754 = vsel %vm546, %v6697, 0
      %v6757 = vsel %vm546, %v6698, 0
      %v6760 = vsel %vm546, %v6699, 0
      %v6763 = vsel %vm546, %v6700, 0
      %v6766 = vsel %vm546, %v6701, 0
      %v6769 = vsel %vm546, %v6702, 0
      %v6772 = vsel %vm546, %v6703, 0
      %v6775 = vsel %vm546, %v6704, 0
      %6777 = vmatprep.subr.mxu0 0.0
      %6778 = vmatpush1.msra.mxu0 0.0
      %6779 = vmatprep.subr.mxu0 0.0
      %6780 = vmatpush1.msra.mxu0 0.0
      %6781 = vmatprep.subr.mxu0 0.0
      %6782 = vmatpush1.msra.mxu0 0.0
      %6783 = vmatprep.subr.mxu0 0.0
      %6784 = vmatpush1.msra.mxu0 0.0
      %6785 = vmatprep.subr.mxu0 0.0
      %6786 = vmatpush1.msra.mxu0 0.0
      %6787 = vmatprep.subr.mxu0 0.0
      %6788 = vmatpush1.msra.mxu0 0.0
      %6789 = vmatprep.subr.mxu0 0.0
      %6790 = vmatpush1.msra.mxu0 0.0
      %6791 = vmatprep.subr.mxu0 0.0
      %6792 = vmatpush1.msra.mxu0 0.0
      %6793 = vmatprep.subr.mxu0 0.0
      %6794 = vmatpush1.msra.mxu0 0.0
      %6795 = vmatprep.subr.mxu0 0.0
      %6796 = vmatpush1.msra.mxu0 0.0
      %6797 = vmatprep.subr.mxu0 0.0
      %6798 = vmatpush1.msra.mxu0 0.0
      %6799 = vmatprep.subr.mxu0 0.0
      %6800 = vmatpush1.msra.mxu0 0.0
      %6801 = vmatprep.subr.mxu0 0.0
      %6802 = vmatpush1.msra.mxu0 %v6676
      %6803 = vmatprep.subr.mxu0 0.0
      %6804 = vmatpush1.msra.mxu0 %v6675
      %6805 = vmatprep.subr.mxu0 0.0
      %6806 = vmatpush1.msra.mxu0 %v6674
      %6807 = vmatprep.subr.mxu0 0.0
      %6808 = vmatpush1.msra.mxu0 %v6673
      %6809 = vmatprep.subr.mxu0 0.0
      %6810 = vmatpush2.msra.mxu0 0.0
      %6811 = vmatprep.subr.mxu0 0.0
      %6812 = vmatpush2.msra.mxu0 0.0
      %6813 = vmatprep.subr.mxu0 0.0
      %6814 = vmatpush2.msra.mxu0 0.0
      %6815 = vmatprep.subr.mxu0 0.0
      %6816 = vmatpush2.msra.mxu0 0.0
      %6817 = vmatprep.subr.mxu0 0.0
      %6818 = vmatpush2.msra.mxu0 0.0
      %6819 = vmatprep.subr.mxu0 0.0
      %6820 = vmatpush2.msra.mxu0 0.0
      %6821 = vmatprep.subr.mxu0 0.0
      %6822 = vmatpush2.msra.mxu0 0.0
      %6823 = vmatprep.subr.mxu0 0.0
      %6824 = vmatpush2.msra.mxu0 0.0
      %6825 = vmatprep.subr.mxu0 0.0
      %6826 = vmatpush2.msra.mxu0 0.0
      %6827 = vmatprep.subr.mxu0 0.0
      %6828 = vmatpush2.msra.mxu0 0.0
      %6829 = vmatprep.subr.mxu0 0.0
      %6830 = vmatpush2.msra.mxu0 0.0
      %6831 = vmatprep.subr.mxu0 0.0
      %6832 = vmatpush2.msra.mxu0 0.0
      %6833 = vmatprep.subr.mxu0 0.0
      %6834 = vmatpush2.msra.mxu0 0.0
      %6835 = vmatprep.subr.mxu0 0.0
      %6836 = vmatpush2.msra.mxu0 0.0
      %6837 = vmatprep.subr.mxu0 0.0
      %6838 = vmatpush2.msra.mxu0 0.0
      %6839 = vmatprep.subr.mxu0 0.0
      %6840 = vmatpush2.msra.mxu0 0.0
      %6841 = vmatprep.mubr.f32.mxu0 0.0
      %6842 = vmatmul.mubr.f32.gmra.mxu0 %v6754
      %v6843 = vpop.f32.mrf.mxu0
      %v6844 = vadd.f32 %v6716, %v6843
      %v6845 = vpop.f32.mrf.mxu0
      %6846 = vmatprep.mubr.f32.mxu0 0.0
      %6847 = vmatmul.mubr.f32.gmra.mxu0 %v6757
      %v6848 = vpop.f32.mrf.mxu0
      %v6849 = vadd.f32 %v6721, %v6848
      %v6850 = vpop.f32.mrf.mxu0
      %6851 = vmatprep.mubr.f32.mxu0 0.0
      %6852 = vmatmul.mubr.f32.gmra.mxu0 %v6760
      %v6853 = vpop.f32.mrf.mxu0
      %v6854 = vadd.f32 %v6726, %v6853
      %v6855 = vpop.f32.mrf.mxu0
      %6856 = vmatprep.mubr.f32.mxu0 0.0
      %6857 = vmatmul.mubr.f32.gmra.mxu0 %v6763
      %v6858 = vpop.f32.mrf.mxu0
      %v6859 = vadd.f32 %v6731, %v6858
      %v6860 = vpop.f32.mrf.mxu0
      %6861 = vmatprep.mubr.f32.mxu0 0.0
      %6862 = vmatmul.mubr.f32.gmra.mxu0 %v6766
      %v6863 = vpop.f32.mrf.mxu0
      %v6864 = vadd.f32 %v6736, %v6863
      %v6865 = vpop.f32.mrf.mxu0
      %6866 = vmatprep.mubr.f32.mxu0 0.0
      %6867 = vmatmul.mubr.f32.gmra.mxu0 %v6769
      %v6868 = vpop.f32.mrf.mxu0
      %v6869 = vadd.f32 %v6741, %v6868
      %v6870 = vpop.f32.mrf.mxu0
      %6871 = vmatprep.mubr.f32.mxu0 0.0
      %6872 = vmatmul.mubr.f32.gmra.mxu0 %v6772
      %v6873 = vpop.f32.mrf.mxu0
      %v6874 = vadd.f32 %v6746, %v6873
      %v6875 = vpop.f32.mrf.mxu0
      %6876 = vmatprep.mubr.f32.mxu0 0.0
      %6877 = vmatmul.mubr.f32.gmra.mxu0 %v6775
      %v6878 = vpop.f32.mrf.mxu0
      %v6879 = vadd.f32 %v6751, %v6878
      %v6880 = vpop.f32.mrf.mxu0
      %6881 = vdwg.mxu0
      %v6882 = vmax.f32 %v6844, 0.0
      %v6883 = vmax.f32 %v6849, 0.0
      %v6884 = vmax.f32 %v6854, 0.0
      %v6885 = vmax.f32 %v6859, 0.0
      %v6886 = vmax.f32 %v6864, 0.0
      %v6887 = vmax.f32 %v6869, 0.0
      %v6888 = vmax.f32 %v6874, 0.0
      %v6889 = vmax.f32 %v6879, 0.0
      %v6890 = vld [vmem:[%s9] sm:$0x3]
      %v6891 = vld [vmem:[%s10] sm:$0x3]
      %6893 = vset.pattern.permute.xlu0 0
      %6894 = vperm.xlu0 %6893, %v6891
      %v6895 = vpop.permute.xlu0 %6894
      %vm6897 = vcmask 523264
      %v6899 = vsel %vm6897, %v6890, 0
      %6901 = vmatprep.subr.mxu0 0.0
      %6902 = vmatpush1.msra.mxu0 0.0
      %6903 = vmatprep.subr.mxu0 0.0
      %6904 = vmatpush1.msra.mxu0 0.0
      %6905 = vmatprep.subr.mxu0 0.0
      %6906 = vmatpush1.msra.mxu0 0.0
      %6907 = vmatprep.subr.mxu0 0.0
      %6908 = vmatpush1.msra.mxu0 0.0
      %6909 = vmatprep.subr.mxu0 0.0
      %6910 = vmatpush1.msra.mxu0 0.0
      %6911 = vmatprep.subr.mxu0 0.0
      %6912 = vmatpush1.msra.mxu0 0.0
      %6913 = vmatprep.subr.mxu0 0.0
      %6914 = vmatpush1.msra.mxu0 0.0
      %6915 = vmatprep.subr.mxu0 0.0
      %6916 = vmatpush1.msra.mxu0 0.0
      %6917 = vmatprep.subr.mxu0 0.0
      %6918 = vmatpush1.msra.mxu0 %v6889
      %6919 = vmatprep.subr.mxu0 0.0
      %6920 = vmatpush1.msra.mxu0 %v6888
      %6921 = vmatprep.subr.mxu0 0.0
      %6922 = vmatpush1.msra.mxu0 %v6887
      %6923 = vmatprep.subr.mxu0 0.0
      %6924 = vmatpush1.msra.mxu0 %v6886
      %6925 = vmatprep.subr.mxu0 0.0
      %6926 = vmatpush1.msra.mxu0 %v6885
      %6927 = vmatprep.subr.mxu0 0.0
      %6928 = vmatpush1.msra.mxu0 %v6884
      %6929 = vmatprep.subr.mxu0 0.0
      %6930 = vmatpush1.msra.mxu0 %v6883
      %6931 = vmatprep.subr.mxu0 0.0
      %6932 = vmatpush1.msra.mxu0 %v6882
      %6933 = vmatprep.subr.mxu0 0.0
      %6934 = vmatpush2.msra.mxu0 0.0
      %6935 = vmatprep.subr.mxu0 0.0
      %6936 = vmatpush2.msra.mxu0 0.0
      %6937 = vmatprep.subr.mxu0 0.0
      %6938 = vmatpush2.msra.mxu0 0.0
      %6939 = vmatprep.subr.mxu0 0.0
      %6940 = vmatpush2.msra.mxu0 0.0
      %6941 = vmatprep.subr.mxu0 0.0
      %6942 = vmatpush2.msra.mxu0 0.0
      %6943 = vmatprep.subr.mxu0 0.0
      %6944 = vmatpush2.msra.mxu0 0.0
      %6945 = vmatprep.subr.mxu0 0.0
      %6946 = vmatpush2.msra.mxu0 0.0
      %6947 = vmatprep.subr.mxu0 0.0
      %6948 = vmatpush2.msra.mxu0 0.0
      %6949 = vmatprep.subr.mxu0 0.0
      %6950 = vmatpush2.msra.mxu0 0.0
      %6951 = vmatprep.subr.mxu0 0.0
      %6952 = vmatpush2.msra.mxu0 0.0
      %6953 = vmatprep.subr.mxu0 0.0
      %6954 = vmatpush2.msra.mxu0 0.0
      %6955 = vmatprep.subr.mxu0 0.0
      %6956 = vmatpush2.msra.mxu0 0.0
      %6957 = vmatprep.subr.mxu0 0.0
      %6958 = vmatpush2.msra.mxu0 0.0
      %6959 = vmatprep.subr.mxu0 0.0
      %6960 = vmatpush2.msra.mxu0 0.0
      %6961 = vmatprep.subr.mxu0 0.0
      %6962 = vmatpush2.msra.mxu0 0.0
      %6963 = vmatprep.subr.mxu0 0.0
      %6964 = vmatpush2.msra.mxu0 0.0
      %6965 = vmatprep.mubr.f32.mxu0 0.0
      %6966 = vmatmul.mubr.f32.gmra.mxu0 %v6899
      %v6967 = vpop.f32.mrf.mxu0
      %v6968 = vadd.f32 %v6895, %v6967
      %v6969 = vpop.f32.mrf.mxu0
      %6970 = vdwg.mxu0
      %vm6971 = vcmask 58368
      %6972 = vst.msk [vmem:[#allocation6] sm:$0x3] %vm6971, %v6968
    $region53: #{tpu_custom_call.1} parent=1 // pred_fallthru
      _
    // Predicated region
    $region54: #{tpu_custom_call.1} parent=1 // pred_check
      _
    $region55: #{tpu_custom_call.1} parent=1 // pred_check_branch
      %6974 = sbr.rel (0) target = $region57
    $region56: #{tpu_custom_call.1} parent=1 // pred_region
      %s6976 = ssub.s32 32, 32
      %6977 = vsyncadd [#allocation7], %s6976
      %s6979 = sshll.u32 [#allocation6], 4
      %s6980 = int_to_ptr.vmem [resolvable:$true] %s6979
      %6982 = dma.vmem_to_hbm [thread:$0]  %s6980, 32, %s11, [#allocation7]
    $region57: #{tpu_custom_call.1} parent=1 // pred_fallthru
      _
    // Predicated region
    $region58: #{tpu_custom_call.1} parent=1 // pred_check
      _
    $region59: #{tpu_custom_call.1} parent=1 // pred_check_branch
      %6984 = sbr.rel (0) target = $region61
    $region60: #{tpu_custom_call.1} parent=1 // pred_region
      %6985 = dma.done [#allocation7], 32
    $region61: #{tpu_custom_call.1} parent=1 // pred_fallthru
      _
    %6986 = vsyncpa [#allocation7], 1

</llo_original>
